<compile_context>
chip_gen: v7x
topology: tpu7x:2x2x1
jax: 0.10.0
libtpu: 0.0.40
codegen_flags: <defaults>
</compile_context>

<pallas_src>
import functools
import math

import jax
import jax.numpy as jnp
import numpy as np
from jax.experimental import pallas as pl
from jax.experimental.pallas import tpu as pltpu


def _round_up(x, m):
    return (x + m - 1) // m * m


# ----------------------------------------------------------------------------
# Kernel: one block of BW windows per grid step.
# ----------------------------------------------------------------------------
def _window_attn_kernel(x_ref, qkv_w_ref, qkv_b_ref, rpb_ref,
                        proj_w_ref, proj_b_ref, o_ref,
                        *, bw, n, num_heads, head_dim):
    C = num_heads * head_dim
    rows = bw * n

    # Fused qkv projection for all windows in the block: (rows, C) @ (C, 3C_pad).
    # x is already bf16 (cast in the wrapper); accumulate in f32 on the MXU.
    x = x_ref[...]
    qkv = jnp.dot(x, qkv_w_ref[...], preferred_element_type=jnp.float32)
    qkv = (qkv + qkv_b_ref[...]).astype(jnp.bfloat16)      # single cast; f32 qkv not kept live
    # (qk scale was folded into the q columns of qkv_w / qkv_b during prep.)

    # Per-head attention, windows batched inside each einsum. Head contexts are
    # lane-concatenated and projected with ONE full-C matmul (no per-head K=hd
    # matmuls, no per-head accumulate chain).
    ctx_heads = []
    for h in range(num_heads):                             # static unroll (bw bounded for VMEM)
        lo = h * head_dim
        q = qkv[:, lo:lo + head_dim].reshape(bw, n, head_dim)
        k = qkv[:, C + lo:C + lo + head_dim].reshape(bw, n, head_dim)
        v = qkv[:, 2 * C + lo:2 * C + lo + head_dim].reshape(bw, n, head_dim)

        # Scores batched over windows; contraction on head_dim, no explicit transpose.
        s = jnp.einsum('bnd,bmd->bnm', q, k,
                       preferred_element_type=jnp.float32)             # (bw, n, n) f32
        s = s + rpb_ref[h][None, :, :]                                 # relative position bias

        # Numerically stable softmax in f32 (safe on v5e: no bf16 EUP there);
        # normalization via EUP approx reciprocal.
        s = s - jnp.max(s, axis=-1, keepdims=True)
        e = jnp.exp(s)
        p = (e * pl.reciprocal(jnp.sum(e, axis=-1, keepdims=True),
                               approx=True)).astype(jnp.bfloat16)

        ctx = jnp.einsum('bnm,bmd->bnd', p, v,
                         preferred_element_type=jnp.float32)           # (bw, n, hd) f32
        ctx_heads.append(ctx.reshape(rows, head_dim))

    ctx_all = jnp.concatenate(ctx_heads, axis=-1).astype(jnp.bfloat16)  # (rows, C) lane concat
    out = jnp.dot(ctx_all, proj_w_ref[...], preferred_element_type=jnp.float32)
    out = out + proj_b_ref[...]
    o_ref[...] = out.astype(o_ref.dtype)                   # lane-dense (rows, C_pad) store


# ----------------------------------------------------------------------------
# One-time (weight-only) preprocessing — hoisted out of the per-call path.
# ----------------------------------------------------------------------------
def prepare_window_attention_params(params, window_size, num_heads):
    """Transpose/pad/scale-fold weights and materialize the rel-pos bias table."""
    Wh, Ww, Wd = window_size
    N = Wh * Ww * Wd
    C = params["proj_w"].shape[0]
    assert C % num_heads == 0
    head_dim = C // num_heads
    scale = head_dim ** (-0.5)

    C_pad = _round_up(C, 128)          # lane-dense output columns
    qkv_pad = _round_up(3 * C, 128)    # lane-dense qkv matmul result

    scale_vec = jnp.concatenate([jnp.full((C,), scale, jnp.float32),
                                 jnp.ones((2 * C,), jnp.float32)])
    qkv_w_t = params["qkv_w"].astype(jnp.float32).T * scale_vec[None, :]        # (C, 3C)
    qkv_w_t = jnp.pad(qkv_w_t, ((0, 0), (0, qkv_pad - 3 * C))).astype(jnp.bfloat16)
    qkv_b = params["qkv_b"].astype(jnp.float32) * scale_vec
    qkv_b = jnp.pad(qkv_b, (0, qkv_pad - 3 * C)).reshape(1, qkv_pad)

    proj_w_t = jnp.pad(params["proj_w"].astype(jnp.float32).T,
                       ((0, 0), (0, C_pad - C))).astype(jnp.bfloat16)            # (C, C_pad)
    proj_b = jnp.pad(params["proj_b"].astype(jnp.float32),
                     (0, C_pad - C)).reshape(1, C_pad)

    # Relative position bias gather (N*N, nH) -> (nH, N, N). Pure weight-static glue.
    rpb = params["rpb_table"][params["rel_pos_index"].reshape(-1)]
    rpb = rpb.reshape(N, N, num_heads).transpose(2, 0, 1).astype(jnp.float32)

    return dict(qkv_w_t=qkv_w_t, qkv_b=qkv_b, proj_w_t=proj_w_t, proj_b=proj_b,
                rpb=rpb, N=N, C=C, C_pad=C_pad, qkv_pad=qkv_pad,
                num_heads=num_heads, head_dim=head_dim)


# ----------------------------------------------------------------------------
# Window-batch (bw) choice: biggest tile under an explicit VMEM budget,
# preferring an even-length grid >= 2 (balanced work for 2-TC v7x chips).
# ----------------------------------------------------------------------------
def _choose_block_windows(B_, N, C_pad, qkv_pad, num_heads,
                          target_rows=1024, vmem_budget_bytes=24 << 20):
    def est(bw):
        rows = bw * N
        io = 2 * rows * C_pad * 2 + 2 * rows * C_pad * 4          # double-buffered x(bf16)+out(f32)
        inter = (rows * qkv_pad * (4 + 2)                         # qkv f32 result + bf16 copy
                 + num_heads * bw * N * N * 4 * 2                 # all heads' scores may stay live
                 + rows * C_pad * 4)                              # projection result
        return io + inter

    cands = [d for d in range(1, B_ + 1)
             if B_ % d == 0 and d * N <= target_rows and est(d) <= vmem_budget_bytes]
    if not cands:
        return 1
    even_ge2 = [d for d in cands if (B_ // d) >= 2 and (B_ // d) % 2 == 0]
    ge2 = [d for d in cands if (B_ // d) >= 2]
    return max(even_ge2 or ge2 or cands)


# ----------------------------------------------------------------------------
# Wrapper: calls the kernel on a window-batched grid.
# ----------------------------------------------------------------------------
def window_attention_pallas(x, prepared, *, mask=None, block_windows=None,
                            vmem_limit_bytes=48 * 1024 * 1024):
    """x: (B_, N, C) with N == Wh*Ww*Wd.  prepared: output of prepare_window_attention_params."""
    if mask is not None:
        # TODO(synk): shifted-window (SW-MSA) mask branch not implemented.
        raise NotImplementedError("mask (SW-MSA) path is not implemented")

    B_, N, C = x.shape
    assert N == prepared["N"] and C == prepared["C"]
    num_heads, head_dim = prepared["num_heads"], prepared["head_dim"]
    C_pad, qkv_pad = prepared["C_pad"], prepared["qkv_pad"]

    bw = block_windows if block_windows else _choose_block_windows(
        B_, N, C_pad, qkv_pad, num_heads)
    assert B_ % bw == 0
    grid = (B_ // bw,)

    # bf16 streaming of the grid-varying operand (kernel math is bf16 anyway).
    x2d = x.reshape(B_ * N, C).astype(jnp.bfloat16)

    kernel = functools.partial(_window_attn_kernel, bw=bw, n=N,
                               num_heads=num_heads, head_dim=head_dim)

    out_flat = pl.pallas_call(
        kernel,
        out_shape=jax.ShapeDtypeStruct((B_ * N, C_pad), x.dtype),
        grid_spec=pltpu.PrefetchScalarGridSpec(
            num_scalar_prefetch=0,
            grid=grid,
            in_specs=[
                pl.BlockSpec((bw * N, C), lambda b: (b, 0)),            # x rows (BW windows)
                pl.BlockSpec((C, qkv_pad), lambda b: (0, 0)),           # qkv weight^T (bf16, padded)
                pl.BlockSpec((1, qkv_pad), lambda b: (0, 0)),           # qkv bias (f32, padded)
                pl.BlockSpec((num_heads, N, N), lambda b: (0, 0, 0)),   # rel-pos bias
                pl.BlockSpec((C, C_pad), lambda b: (0, 0)),             # proj weight^T (bf16, padded)
                pl.BlockSpec((1, C_pad), lambda b: (0, 0)),             # proj bias (f32, padded)
            ],
            out_specs=pl.BlockSpec((bw * N, C_pad), lambda b: (b, 0)),  # lane-dense output
        ),
        compiler_params=pltpu.CompilerParams(
            dimension_semantics=("parallel",),
            vmem_limit_bytes=vmem_limit_bytes,
        ),
    )(x2d, prepared["qkv_w_t"], prepared["qkv_b"], prepared["rpb"],
      prepared["proj_w_t"], prepared["proj_b"])

    out = out_flat[:, :C] if C_pad != C else out_flat
    return out.reshape(B_, N, C)


# ----------------------------------------------------------------------------
# Parameter init + relative position index (mirrors the PyTorch __init__).
# ----------------------------------------------------------------------------
def make_relative_position_index(window_size):
    Wh, Ww, Wd = window_size
    coords = np.stack(np.meshgrid(np.arange(Wh), np.arange(Ww), np.arange(Wd),
                                  indexing="ij"))                        # (3, Wh, Ww, Wd)
    coords_flat = coords.reshape(3, -1)                                  # (3, N)
    rel = coords_flat[:, :, None] - coords_flat[:, None, :]              # (3, N, N)
    rel = rel.transpose(1, 2, 0).astype(np.int64)                        # (N, N, 3)
    rel[:, :, 0] += Wh - 1
    rel[:, :, 1] += Ww - 1
    rel[:, :, 2] += Wd - 1
    rel[:, :, 0] *= 3 * Ww - 1   # faithfully reproduces the original module's indexing
    return jnp.asarray(rel.sum(-1), dtype=jnp.int32)                     # (N, N)


def init_params(key, dim, window_size, num_heads):
    Wh, Ww, Wd = window_size
    table_len = (3 * Wh - 1) * (3 * Ww - 1) * (3 * Wd - 1)
    k1, k2, k3, k4, k5 = jax.random.split(key, 5)
    bound_qkv = 1.0 / math.sqrt(dim)
    return {
        "rpb_table": 0.02 * jax.random.truncated_normal(
            k1, -2.0, 2.0, (table_len, num_heads), dtype=jnp.float32),
        "qkv_w": jax.random.uniform(k2, (3 * dim, dim), jnp.float32, -bound_qkv, bound_qkv),
        "qkv_b": jax.random.uniform(k3, (3 * dim,), jnp.float32, -bound_qkv, bound_qkv),
        "proj_w": jax.random.uniform(k4, (dim, dim), jnp.float32, -bound_qkv, bound_qkv),
        "proj_b": jax.random.uniform(k5, (dim,), jnp.float32, -bound_qkv, bound_qkv),
        "rel_pos_index": make_relative_position_index(window_size),
    }


# ----------------------------------------------------------------------------
# Pure-JAX reference (mirrors the PyTorch forward, mask=None, eval mode, f32).
# ----------------------------------------------------------------------------
def window_attention_ref(x, params, window_size, num_heads):
    B_, N, C = x.shape
    hd = C // num_heads
    scale = hd ** (-0.5)
    qkv = x @ params["qkv_w"].T + params["qkv_b"]                        # (B_, N, 3C)
    qkv = qkv.reshape(B_, N, 3, num_heads, hd).transpose(2, 0, 3, 1, 4)
    q, k, v = qkv[0], qkv[1], qkv[2]                                     # (B_, nH, N, hd)
    attn = (q * scale) @ k.transpose(0, 1, 3, 2)                         # (B_, nH, N, N)
    rpb = params["rpb_table"][params["rel_pos_index"].reshape(-1)]
    rpb = rpb.reshape(N, N, num_heads).transpose(2, 0, 1)
    attn = attn + rpb[None]
    attn = jax.nn.softmax(attn, axis=-1)
    out = (attn @ v).transpose(0, 2, 1, 3).reshape(B_, N, C)
    return out @ params["proj_w"].T + params["proj_b"]


if __name__ == "__main__":
    # Small, module-consistent shapes: 3D window (2,2,2) -> N = 8 tokens,
    # dim = 32, num_heads = 4, B_ = num_windows * batch = 32.
    dim = 32
    window_size = (2, 2, 2)
    num_heads = 4
    N = window_size[0] * window_size[1] * window_size[2]
    B_ = 32   # -> window-batch bw=16 per grid step, even grid of length 2

    key = jax.random.PRNGKey(0)
    kx, kp = jax.random.split(key)
    x = jax.random.normal(kx, (B_, N, dim), dtype=jnp.float32)
    params = init_params(kp, dim, window_size, num_heads)

    prepared = prepare_window_attention_params(params, window_size, num_heads)
    out = window_attention_pallas(x, prepared)
    out = jax.block_until_ready(out)

    ref = window_attention_ref(x, params, window_size, num_heads)
    # bf16 matmul operands + approx reciprocal => relaxed (but tight-for-bf16) tolerance.
    np.testing.assert_allclose(np.asarray(out), np.asarray(ref), rtol=3e-2, atol=3e-2)
    print("KERNEL_OK")
</pallas_src>

<mosaic_0001>
module attributes {stable_mosaic.version = 11 : i64} {
  func.func @_window_attn_kernel(%arg0: i32, %arg1: memref<128x32xbf16, #tpu.memory_space<vmem>>, %arg2: memref<32x128xbf16, #tpu.memory_space<vmem>>, %arg3: memref<1x128xf32, #tpu.memory_space<vmem>>, %arg4: memref<4x8x8xf32, #tpu.memory_space<vmem>>, %arg5: memref<32x128xbf16, #tpu.memory_space<vmem>>, %arg6: memref<1x128xf32, #tpu.memory_space<vmem>>, %arg7: memref<128x128xf32, #tpu.memory_space<vmem>>) attributes {dimension_semantics = [#tpu.dimension_semantics<parallel>], iteration_bounds = array<i64: 2>, scalar_prefetch = 0 : i64, scratch_operands = 0 : i64, tpu.core_type = #tpu.core_type<tc>, window_params = [{transform_indices = @transform_0, window_bounds = array<i64: 128, 32>}, {pipeline_mode = #tpu.pipeline_mode<synchronous>, transform_indices = @transform_1, window_bounds = array<i64: 32, 128>}, {pipeline_mode = #tpu.pipeline_mode<synchronous>, transform_indices = @transform_2, window_bounds = array<i64: 1, 128>}, {pipeline_mode = #tpu.pipeline_mode<synchronous>, transform_indices = @transform_3, window_bounds = array<i64: 4, 8, 8>}, {pipeline_mode = #tpu.pipeline_mode<synchronous>, transform_indices = @transform_4, window_bounds = array<i64: 32, 128>}, {pipeline_mode = #tpu.pipeline_mode<synchronous>, transform_indices = @transform_5, window_bounds = array<i64: 1, 128>}, {transform_indices = @transform_6, window_bounds = array<i64: 128, 128>}]} {
    %c0 = arith.constant 0 : index
    %c0_0 = arith.constant 0 : index
    %0 = vector.load %arg1[%c0, %c0_0] : memref<128x32xbf16, #tpu.memory_space<vmem>>, vector<128x32xbf16>
    %c0_1 = arith.constant 0 : index
    %c0_2 = arith.constant 0 : index
    %1 = vector.load %arg2[%c0_1, %c0_2] : memref<32x128xbf16, #tpu.memory_space<vmem>>, vector<32x128xbf16>
    %cst = arith.constant dense<0.000000e+00> : vector<128x128xf32>
    %2 = tpu.matmul %0, %1, %cst {dimension_numbers = #tpu.dot_dimension_numbers<[1], [0], [0], [1], [0, 0, 1, 1], [], []>} : vector<128x32xbf16>, vector<32x128xbf16>, vector<128x128xf32> -> vector<128x128xf32>
    %c0_3 = arith.constant 0 : index
    %c0_4 = arith.constant 0 : index
    %3 = vector.load %arg3[%c0_3, %c0_4] : memref<1x128xf32, #tpu.memory_space<vmem>>, vector<1x128xf32>
    %4 = vector.broadcast %3 : vector<1x128xf32> to vector<128x128xf32>
    %5 = arith.addf %2, %4 : vector<128x128xf32>
    %6 = arith.truncf %5 : vector<128x128xf32> to vector<128x128xbf16>
    %7 = vector.extract_strided_slice %6 {offsets = [0, 0], sizes = [128, 8], strides = [1, 1]} : vector<128x128xbf16> to vector<128x8xbf16>
    %8 = vector.shape_cast %7 : vector<128x8xbf16> to vector<16x8x8xbf16>
    %9 = vector.extract_strided_slice %6 {offsets = [0, 32], sizes = [128, 8], strides = [1, 1]} : vector<128x128xbf16> to vector<128x8xbf16>
    %10 = vector.shape_cast %9 : vector<128x8xbf16> to vector<16x8x8xbf16>
    %11 = vector.extract_strided_slice %6 {offsets = [0, 64], sizes = [128, 8], strides = [1, 1]} : vector<128x128xbf16> to vector<128x8xbf16>
    %12 = vector.shape_cast %11 : vector<128x8xbf16> to vector<16x8x8xbf16>
    "tpu.trace_start"() <{level = 10 : i32, message = "bnd,bmd->bnm"}> : () -> ()
    %cst_5 = arith.constant dense<0.000000e+00> : vector<16x8x8xf32>
    %13 = tpu.matmul %8, %10, %cst_5 {dimension_numbers = #tpu.dot_dimension_numbers<[2], [2], [1], [1], [0, 0, 0, 1, 1, 1], [0], [0]>} : vector<16x8x8xbf16>, vector<16x8x8xbf16>, vector<16x8x8xf32> -> vector<16x8x8xf32>
    "tpu.trace_stop"() : () -> ()
    %c0_6 = arith.constant 0 : index
    %c0_7 = arith.constant 0 : index
    %c0_8 = arith.constant 0 : index
    %14 = vector.load %arg4[%c0_6, %c0_7, %c0_8] : memref<4x8x8xf32, #tpu.memory_space<vmem>>, vector<1x8x8xf32>
    %15 = vector.shape_cast %14 : vector<1x8x8xf32> to vector<8x8xf32>
    %16 = vector.shape_cast %15 : vector<8x8xf32> to vector<1x8x8xf32>
    %17 = vector.broadcast %16 : vector<1x8x8xf32> to vector<16x8x8xf32>
    %18 = arith.addf %13, %17 : vector<16x8x8xf32>
    %cst_9 = arith.constant dense<0xFF800000> : vector<16x8xf32>
    %19 = vector.multi_reduction <maximumf>, %18, %cst_9 [2] : vector<16x8x8xf32> to vector<16x8xf32>
    %20 = vector.shape_cast %19 : vector<16x8xf32> to vector<16x8x1xf32>
    %21 = vector.broadcast %20 : vector<16x8x1xf32> to vector<16x8x8xf32>
    %22 = arith.subf %18, %21 : vector<16x8x8xf32>
    %23 = math.exp %22 : vector<16x8x8xf32>
    %cst_10 = arith.constant dense<0.000000e+00> : vector<16x8xf32>
    %24 = vector.multi_reduction <add>, %23, %cst_10 [2] : vector<16x8x8xf32> to vector<16x8xf32>
    %25 = vector.shape_cast %24 : vector<16x8xf32> to vector<16x8x1xf32>
    %26 = tpu.reciprocal %25 {approx = true} : vector<16x8x1xf32> -> vector<16x8x1xf32>
    %27 = vector.broadcast %26 : vector<16x8x1xf32> to vector<16x8x8xf32>
    %28 = arith.mulf %23, %27 : vector<16x8x8xf32>
    %29 = arith.truncf %28 : vector<16x8x8xf32> to vector<16x8x8xbf16>
    "tpu.trace_start"() <{level = 10 : i32, message = "bnm,bmd->bnd"}> : () -> ()
    %cst_11 = arith.constant dense<0.000000e+00> : vector<16x8x8xf32>
    %30 = tpu.matmul %29, %12, %cst_11 {dimension_numbers = #tpu.dot_dimension_numbers<[2], [1], [1], [2], [0, 0, 0, 1, 1, 2], [0], [0]>} : vector<16x8x8xbf16>, vector<16x8x8xbf16>, vector<16x8x8xf32> -> vector<16x8x8xf32>
    "tpu.trace_stop"() : () -> ()
    %31 = vector.shape_cast %30 : vector<16x8x8xf32> to vector<128x8xf32>
    %32 = vector.extract_strided_slice %6 {offsets = [0, 8], sizes = [128, 8], strides = [1, 1]} : vector<128x128xbf16> to vector<128x8xbf16>
    %33 = vector.shape_cast %32 : vector<128x8xbf16> to vector<16x8x8xbf16>
    %34 = vector.extract_strided_slice %6 {offsets = [0, 40], sizes = [128, 8], strides = [1, 1]} : vector<128x128xbf16> to vector<128x8xbf16>
    %35 = vector.shape_cast %34 : vector<128x8xbf16> to vector<16x8x8xbf16>
    %36 = vector.extract_strided_slice %6 {offsets = [0, 72], sizes = [128, 8], strides = [1, 1]} : vector<128x128xbf16> to vector<128x8xbf16>
    %37 = vector.shape_cast %36 : vector<128x8xbf16> to vector<16x8x8xbf16>
    "tpu.trace_start"() <{level = 10 : i32, message = "bnd,bmd->bnm"}> : () -> ()
    %cst_12 = arith.constant dense<0.000000e+00> : vector<16x8x8xf32>
    %38 = tpu.matmul %33, %35, %cst_12 {dimension_numbers = #tpu.dot_dimension_numbers<[2], [2], [1], [1], [0, 0, 0, 1, 1, 1], [0], [0]>} : vector<16x8x8xbf16>, vector<16x8x8xbf16>, vector<16x8x8xf32> -> vector<16x8x8xf32>
    "tpu.trace_stop"() : () -> ()
    %c1 = arith.constant 1 : index
    %c0_13 = arith.constant 0 : index
    %c0_14 = arith.constant 0 : index
    %39 = vector.load %arg4[%c1, %c0_13, %c0_14] : memref<4x8x8xf32, #tpu.memory_space<vmem>>, vector<1x8x8xf32>
    %40 = vector.shape_cast %39 : vector<1x8x8xf32> to vector<8x8xf32>
    %41 = vector.shape_cast %40 : vector<8x8xf32> to vector<1x8x8xf32>
    %42 = vector.broadcast %41 : vector<1x8x8xf32> to vector<16x8x8xf32>
    %43 = arith.addf %38, %42 : vector<16x8x8xf32>
    %cst_15 = arith.constant dense<0xFF800000> : vector<16x8xf32>
    %44 = vector.multi_reduction <maximumf>, %43, %cst_15 [2] : vector<16x8x8xf32> to vector<16x8xf32>
    %45 = vector.shape_cast %44 : vector<16x8xf32> to vector<16x8x1xf32>
    %46 = vector.broadcast %45 : vector<16x8x1xf32> to vector<16x8x8xf32>
    %47 = arith.subf %43, %46 : vector<16x8x8xf32>
    %48 = math.exp %47 : vector<16x8x8xf32>
    %cst_16 = arith.constant dense<0.000000e+00> : vector<16x8xf32>
    %49 = vector.multi_reduction <add>, %48, %cst_16 [2] : vector<16x8x8xf32> to vector<16x8xf32>
    %50 = vector.shape_cast %49 : vector<16x8xf32> to vector<16x8x1xf32>
    %51 = tpu.reciprocal %50 {approx = true} : vector<16x8x1xf32> -> vector<16x8x1xf32>
    %52 = vector.broadcast %51 : vector<16x8x1xf32> to vector<16x8x8xf32>
    %53 = arith.mulf %48, %52 : vector<16x8x8xf32>
    %54 = arith.truncf %53 : vector<16x8x8xf32> to vector<16x8x8xbf16>
    "tpu.trace_start"() <{level = 10 : i32, message = "bnm,bmd->bnd"}> : () -> ()
    %cst_17 = arith.constant dense<0.000000e+00> : vector<16x8x8xf32>
    %55 = tpu.matmul %54, %37, %cst_17 {dimension_numbers = #tpu.dot_dimension_numbers<[2], [1], [1], [2], [0, 0, 0, 1, 1, 2], [0], [0]>} : vector<16x8x8xbf16>, vector<16x8x8xbf16>, vector<16x8x8xf32> -> vector<16x8x8xf32>
    "tpu.trace_stop"() : () -> ()
    %56 = vector.shape_cast %55 : vector<16x8x8xf32> to vector<128x8xf32>
    %57 = vector.extract_strided_slice %6 {offsets = [0, 16], sizes = [128, 8], strides = [1, 1]} : vector<128x128xbf16> to vector<128x8xbf16>
    %58 = vector.shape_cast %57 : vector<128x8xbf16> to vector<16x8x8xbf16>
    %59 = vector.extract_strided_slice %6 {offsets = [0, 48], sizes = [128, 8], strides = [1, 1]} : vector<128x128xbf16> to vector<128x8xbf16>
    %60 = vector.shape_cast %59 : vector<128x8xbf16> to vector<16x8x8xbf16>
    %61 = vector.extract_strided_slice %6 {offsets = [0, 80], sizes = [128, 8], strides = [1, 1]} : vector<128x128xbf16> to vector<128x8xbf16>
    %62 = vector.shape_cast %61 : vector<128x8xbf16> to vector<16x8x8xbf16>
    "tpu.trace_start"() <{level = 10 : i32, message = "bnd,bmd->bnm"}> : () -> ()
    %cst_18 = arith.constant dense<0.000000e+00> : vector<16x8x8xf32>
    %63 = tpu.matmul %58, %60, %cst_18 {dimension_numbers = #tpu.dot_dimension_numbers<[2], [2], [1], [1], [0, 0, 0, 1, 1, 1], [0], [0]>} : vector<16x8x8xbf16>, vector<16x8x8xbf16>, vector<16x8x8xf32> -> vector<16x8x8xf32>
    "tpu.trace_stop"() : () -> ()
    %c2 = arith.constant 2 : index
    %c0_19 = arith.constant 0 : index
    %c0_20 = arith.constant 0 : index
    %64 = vector.load %arg4[%c2, %c0_19, %c0_20] : memref<4x8x8xf32, #tpu.memory_space<vmem>>, vector<1x8x8xf32>
    %65 = vector.shape_cast %64 : vector<1x8x8xf32> to vector<8x8xf32>
    %66 = vector.shape_cast %65 : vector<8x8xf32> to vector<1x8x8xf32>
    %67 = vector.broadcast %66 : vector<1x8x8xf32> to vector<16x8x8xf32>
    %68 = arith.addf %63, %67 : vector<16x8x8xf32>
    %cst_21 = arith.constant dense<0xFF800000> : vector<16x8xf32>
    %69 = vector.multi_reduction <maximumf>, %68, %cst_21 [2] : vector<16x8x8xf32> to vector<16x8xf32>
    %70 = vector.shape_cast %69 : vector<16x8xf32> to vector<16x8x1xf32>
    %71 = vector.broadcast %70 : vector<16x8x1xf32> to vector<16x8x8xf32>
    %72 = arith.subf %68, %71 : vector<16x8x8xf32>
    %73 = math.exp %72 : vector<16x8x8xf32>
    %cst_22 = arith.constant dense<0.000000e+00> : vector<16x8xf32>
    %74 = vector.multi_reduction <add>, %73, %cst_22 [2] : vector<16x8x8xf32> to vector<16x8xf32>
    %75 = vector.shape_cast %74 : vector<16x8xf32> to vector<16x8x1xf32>
    %76 = tpu.reciprocal %75 {approx = true} : vector<16x8x1xf32> -> vector<16x8x1xf32>
    %77 = vector.broadcast %76 : vector<16x8x1xf32> to vector<16x8x8xf32>
    %78 = arith.mulf %73, %77 : vector<16x8x8xf32>
    %79 = arith.truncf %78 : vector<16x8x8xf32> to vector<16x8x8xbf16>
    "tpu.trace_start"() <{level = 10 : i32, message = "bnm,bmd->bnd"}> : () -> ()
    %cst_23 = arith.constant dense<0.000000e+00> : vector<16x8x8xf32>
    %80 = tpu.matmul %79, %62, %cst_23 {dimension_numbers = #tpu.dot_dimension_numbers<[2], [1], [1], [2], [0, 0, 0, 1, 1, 2], [0], [0]>} : vector<16x8x8xbf16>, vector<16x8x8xbf16>, vector<16x8x8xf32> -> vector<16x8x8xf32>
    "tpu.trace_stop"() : () -> ()
    %81 = vector.shape_cast %80 : vector<16x8x8xf32> to vector<128x8xf32>
    %82 = vector.extract_strided_slice %6 {offsets = [0, 24], sizes = [128, 8], strides = [1, 1]} : vector<128x128xbf16> to vector<128x8xbf16>
    %83 = vector.shape_cast %82 : vector<128x8xbf16> to vector<16x8x8xbf16>
    %84 = vector.extract_strided_slice %6 {offsets = [0, 56], sizes = [128, 8], strides = [1, 1]} : vector<128x128xbf16> to vector<128x8xbf16>
    %85 = vector.shape_cast %84 : vector<128x8xbf16> to vector<16x8x8xbf16>
    %86 = vector.extract_strided_slice %6 {offsets = [0, 88], sizes = [128, 8], strides = [1, 1]} : vector<128x128xbf16> to vector<128x8xbf16>
    %87 = vector.shape_cast %86 : vector<128x8xbf16> to vector<16x8x8xbf16>
    "tpu.trace_start"() <{level = 10 : i32, message = "bnd,bmd->bnm"}> : () -> ()
    %cst_24 = arith.constant dense<0.000000e+00> : vector<16x8x8xf32>
    %88 = tpu.matmul %83, %85, %cst_24 {dimension_numbers = #tpu.dot_dimension_numbers<[2], [2], [1], [1], [0, 0, 0, 1, 1, 1], [0], [0]>} : vector<16x8x8xbf16>, vector<16x8x8xbf16>, vector<16x8x8xf32> -> vector<16x8x8xf32>
    "tpu.trace_stop"() : () -> ()
    %c3 = arith.constant 3 : index
    %c0_25 = arith.constant 0 : index
    %c0_26 = arith.constant 0 : index
    %89 = vector.load %arg4[%c3, %c0_25, %c0_26] : memref<4x8x8xf32, #tpu.memory_space<vmem>>, vector<1x8x8xf32>
    %90 = vector.shape_cast %89 : vector<1x8x8xf32> to vector<8x8xf32>
    %91 = vector.shape_cast %90 : vector<8x8xf32> to vector<1x8x8xf32>
    %92 = vector.broadcast %91 : vector<1x8x8xf32> to vector<16x8x8xf32>
    %93 = arith.addf %88, %92 : vector<16x8x8xf32>
    %cst_27 = arith.constant dense<0xFF800000> : vector<16x8xf32>
    %94 = vector.multi_reduction <maximumf>, %93, %cst_27 [2] : vector<16x8x8xf32> to vector<16x8xf32>
    %95 = vector.shape_cast %94 : vector<16x8xf32> to vector<16x8x1xf32>
    %96 = vector.broadcast %95 : vector<16x8x1xf32> to vector<16x8x8xf32>
    %97 = arith.subf %93, %96 : vector<16x8x8xf32>
    %98 = math.exp %97 : vector<16x8x8xf32>
    %cst_28 = arith.constant dense<0.000000e+00> : vector<16x8xf32>
    %99 = vector.multi_reduction <add>, %98, %cst_28 [2] : vector<16x8x8xf32> to vector<16x8xf32>
    %100 = vector.shape_cast %99 : vector<16x8xf32> to vector<16x8x1xf32>
    %101 = tpu.reciprocal %100 {approx = true} : vector<16x8x1xf32> -> vector<16x8x1xf32>
    %102 = vector.broadcast %101 : vector<16x8x1xf32> to vector<16x8x8xf32>
    %103 = arith.mulf %98, %102 : vector<16x8x8xf32>
    %104 = arith.truncf %103 : vector<16x8x8xf32> to vector<16x8x8xbf16>
    "tpu.trace_start"() <{level = 10 : i32, message = "bnm,bmd->bnd"}> : () -> ()
    %cst_29 = arith.constant dense<0.000000e+00> : vector<16x8x8xf32>
    %105 = tpu.matmul %104, %87, %cst_29 {dimension_numbers = #tpu.dot_dimension_numbers<[2], [1], [1], [2], [0, 0, 0, 1, 1, 2], [0], [0]>} : vector<16x8x8xbf16>, vector<16x8x8xbf16>, vector<16x8x8xf32> -> vector<16x8x8xf32>
    "tpu.trace_stop"() : () -> ()
    %106 = vector.shape_cast %105 : vector<16x8x8xf32> to vector<128x8xf32>
    %107 = tpu.concatenate %31, %56, %81, %106 in 1 : vector<128x8xf32>, vector<128x8xf32>, vector<128x8xf32>, vector<128x8xf32> -> vector<128x32xf32>
    %108 = arith.truncf %107 : vector<128x32xf32> to vector<128x32xbf16>
    %c0_30 = arith.constant 0 : index
    %c0_31 = arith.constant 0 : index
    %109 = vector.load %arg5[%c0_30, %c0_31] : memref<32x128xbf16, #tpu.memory_space<vmem>>, vector<32x128xbf16>
    %cst_32 = arith.constant dense<0.000000e+00> : vector<128x128xf32>
    %110 = tpu.matmul %108, %109, %cst_32 {dimension_numbers = #tpu.dot_dimension_numbers<[1], [0], [0], [1], [0, 0, 1, 1], [], []>} : vector<128x32xbf16>, vector<32x128xbf16>, vector<128x128xf32> -> vector<128x128xf32>
    %c0_33 = arith.constant 0 : index
    %c0_34 = arith.constant 0 : index
    %111 = vector.load %arg6[%c0_33, %c0_34] : memref<1x128xf32, #tpu.memory_space<vmem>>, vector<1x128xf32>
    %112 = vector.broadcast %111 : vector<1x128xf32> to vector<128x128xf32>
    %113 = arith.addf %110, %112 : vector<128x128xf32>
    %c0_35 = arith.constant 0 : index
    %c0_36 = arith.constant 0 : index
    %114 = vector.load %arg7[%c0_35, %c0_36] : memref<128x128xf32, #tpu.memory_space<vmem>>, vector<128x128xf32>
    tpu.vector_store %arg7[%c0_35, %c0_36], %113 {strides = array<i32>} : memref<128x128xf32, #tpu.memory_space<vmem>>, vector<128x128xf32>,
    return
  }
  func.func @transform_0(%arg0: i32) -> (i32, i32) {
    %c0_i32 = arith.constant 0 : i32
    %c0_i32_0 = arith.constant 0 : i32
    return %arg0, %c0_i32 : i32, i32
  }
  func.func @transform_1(%arg0: i32) -> (i32, i32) {
    %c0_i32 = arith.constant 0 : i32
    %c0_i32_0 = arith.constant 0 : i32
    %c0_i32_1 = arith.constant 0 : i32
    return %c0_i32, %c0_i32_0 : i32, i32
  }
  func.func @transform_2(%arg0: i32) -> (i32, i32) {
    %c0_i32 = arith.constant 0 : i32
    %c0_i32_0 = arith.constant 0 : i32
    %c0_i32_1 = arith.constant 0 : i32
    return %c0_i32, %c0_i32_0 : i32, i32
  }
  func.func @transform_3(%arg0: i32) -> (i32, i32, i32) {
    %c0_i32 = arith.constant 0 : i32
    %c0_i32_0 = arith.constant 0 : i32
    %c0_i32_1 = arith.constant 0 : i32
    %c0_i32_2 = arith.constant 0 : i32
    return %c0_i32, %c0_i32_0, %c0_i32_1 : i32, i32, i32
  }
  func.func @transform_4(%arg0: i32) -> (i32, i32) {
    %c0_i32 = arith.constant 0 : i32
    %c0_i32_0 = arith.constant 0 : i32
    %c0_i32_1 = arith.constant 0 : i32
    return %c0_i32, %c0_i32_0 : i32, i32
  }
  func.func @transform_5(%arg0: i32) -> (i32, i32) {
    %c0_i32 = arith.constant 0 : i32
    %c0_i32_0 = arith.constant 0 : i32
    %c0_i32_1 = arith.constant 0 : i32
    return %c0_i32, %c0_i32_0 : i32, i32
  }
  func.func @transform_6(%arg0: i32) -> (i32, i32) {
    %c0_i32 = arith.constant 0 : i32
    %c0_i32_0 = arith.constant 0 : i32
    return %arg0, %c0_i32 : i32, i32
  }
}

</mosaic_0001>

<llo_original>
// kernel: tpu_custom_call.1
$region0: #{tpu_custom_call.1}
  #allocation0 [shape = 'u32[]', space=smem, size = 0x4, offset = 0x4, fixed_abs, tag = 'smem constant byte address 0x4 - core index']
  #allocation1 [shape = 'u32[144,128]{1,0:T(1,128)}', space=vmem, size = 0x12000, scoped, tag = 'internal scratch']
  %s0 = inlined_call_operand.vmem [shape: bf16[256,32], index: 0, kind: input, shape index: {}]
  %s1 = inlined_call_operand.vmem [shape: bf16[32,128], index: 1, kind: input, shape index: {}]
  %s2 = inlined_call_operand.vmem [shape: f32[1,128], index: 2, kind: input, shape index: {}]
  %s3 = inlined_call_operand.vmem [shape: f32[4,8,8], index: 3, kind: input, shape index: {}]
  %s4 = inlined_call_operand.vmem [shape: bf16[32,128], index: 4, kind: input, shape index: {}]
  %s5 = inlined_call_operand.vmem [shape: f32[1,128], index: 5, kind: input, shape index: {}]
  %s6 = inlined_call_operand.hbm [shape: f32[256,128], index: 6, kind: output, shape index: {}]
  %s7 = sld [smem:[#allocation0]]
  $region57: #{tpu_custom_call.1} parent=0
    _
  %s9 = ssub.s32 1, %s7
  %s10 = scalar_select 0, %s9, %s7
  $region1: #{tpu_custom_call.1} parent=0
    #allocation2 [shape = 'u8[131072]{0}', space=vmem, size = 0x20000, scoped, tag = 'output window, operand 0']
    #allocation3 [shape = 's32[2]{0}', space=sflag, size = 0x8, scoped, tag = 'scoped memory for tpu_custom_call.1']
    %11 = vsyncpa [#allocation3], 0
    %s12 = scalar_lea.sflag [#allocation3], 1
    %13 = vsyncpa %s12, 0
    loop: start=0, step=1, limit=4
    $region2: #{tpu_custom_call.1} parent=1 // loop_pre_header
      _
    $region3: #{tpu_custom_call.1} parent=1 // loop_header
      %s15 = sphi 0, %s19
      %p16 = scmp.ge.s32.totalorder %s15, 4
      %s25 = sphi 0, %s27
      %s28 = sphi 0, %s25
      %s29 = sphi 0, %s28
      %s45 = sphi 0, %s29
      %s49 = sphi 0, %s49
      %s51 = sphi 0, %s49
      %s52 = sphi 0, %s51
      %s66 = sphi 0, %s52
      %s70 = sphi 0, %s70
      %s72 = sphi 0, %s70
      %s73 = sphi 0, %s72
      %s87 = sphi 0, %s73
      %s91 = sphi 0, %s91
      %s93 = sphi 0, %s91
      %s94 = sphi 0, %s93
      %s108 = sphi 0, %s94
      %s112 = sphi 0, %s112
      %s114 = sphi 0, %s112
      %s115 = sphi 0, %s114
      %s129 = sphi 0, %s115
      %s133 = sphi 0, %s133
      %s135 = sphi 0, %s133
      %s136 = sphi 0, %s135
      %s150 = sphi 0, %s136
      %s156 = sphi 0, %s158
      %s159 = sphi 0, %s156
      %s160 = sphi 0, %s159
      %s176 = sphi 0, %s160
    $region4: #{tpu_custom_call.1} parent=1 // loop_header_branch
      %18 = sbr.rel (%p16) target = $region8
    $region5: #{tpu_custom_call.1} parent=1 // loop_body
      %s20 = ssub.s32 %s15, 1
      %s21 = ssub.s32 %s15, 2
      %s22 = sadd.s32 %s15, 1
      %s23 = ssub.s32 %s15, %s22
      %p24 = scmp.eq.s32.totalorder %s23, 0
      %s26 = sadd.s32 %s25, 1
      %s27 = scalar_select %p24, %s25, %s26
      %p30 = pneg %p24
      %p31 = scmp.eq.s32.totalorder %s15, 1
      %p32 = por %p30, %p31
      %p33 = scmp.ne.s32.totalorder %s25, %s28
      %p34 = scmp.eq.s32.totalorder %s15, 0
      %p35 = por %p33, %p34
      %p36 = scmp.ne.s32.totalorder %s25, %s28
      %p37 = scmp.eq.s32.totalorder %s20, 1
      %p38 = por %p36, %p37
      %p39 = scmp.ne.s32.totalorder %s28, %s29
      %p40 = scmp.eq.s32.totalorder %s20, 0
      %p41 = por %p39, %p40
      %p42 = scmp.ne.s32.totalorder %s28, %s29
      %p43 = scmp.eq.s32.totalorder %s21, 1
      %p44 = por %p42, %p43
      %p46 = scmp.ne.s32.totalorder %s29, %s45
      %p47 = scmp.eq.s32.totalorder %s21, 0
      %p48 = por %p46, %p47
      %s50 = sadd.s32 %s49, 1
      %p53 = scmp.eq.s32.totalorder %s15, 1
      %p54 = scmp.ne.s32.totalorder %s49, %s51
      %p55 = scmp.eq.s32.totalorder %s15, 0
      %p56 = por %p54, %p55
      %p57 = scmp.ne.s32.totalorder %s49, %s51
      %p58 = scmp.eq.s32.totalorder %s20, 1
      %p59 = por %p57, %p58
      %p60 = scmp.ne.s32.totalorder %s51, %s52
      %p61 = scmp.eq.s32.totalorder %s20, 0
      %p62 = por %p60, %p61
      %p63 = scmp.ne.s32.totalorder %s51, %s52
      %p64 = scmp.eq.s32.totalorder %s21, 1
      %p65 = por %p63, %p64
      %p67 = scmp.ne.s32.totalorder %s52, %s66
      %p68 = scmp.eq.s32.totalorder %s21, 0
      %p69 = por %p67, %p68
      %s71 = sadd.s32 %s70, 1
      %p74 = scmp.eq.s32.totalorder %s15, 1
      %p75 = scmp.ne.s32.totalorder %s70, %s72
      %p76 = scmp.eq.s32.totalorder %s15, 0
      %p77 = por %p75, %p76
      %p78 = scmp.ne.s32.totalorder %s70, %s72
      %p79 = scmp.eq.s32.totalorder %s20, 1
      %p80 = por %p78, %p79
      %p81 = scmp.ne.s32.totalorder %s72, %s73
      %p82 = scmp.eq.s32.totalorder %s20, 0
      %p83 = por %p81, %p82
      %p84 = scmp.ne.s32.totalorder %s72, %s73
      %p85 = scmp.eq.s32.totalorder %s21, 1
      %p86 = por %p84, %p85
      %p88 = scmp.ne.s32.totalorder %s73, %s87
      %p89 = scmp.eq.s32.totalorder %s21, 0
      %p90 = por %p88, %p89
      %s92 = sadd.s32 %s91, 1
      %p95 = scmp.eq.s32.totalorder %s15, 1
      %p96 = scmp.ne.s32.totalorder %s91, %s93
      %p97 = scmp.eq.s32.totalorder %s15, 0
      %p98 = por %p96, %p97
      %p99 = scmp.ne.s32.totalorder %s91, %s93
      %p100 = scmp.eq.s32.totalorder %s20, 1
      %p101 = por %p99, %p100
      %p102 = scmp.ne.s32.totalorder %s93, %s94
      %p103 = scmp.eq.s32.totalorder %s20, 0
      %p104 = por %p102, %p103
      %p105 = scmp.ne.s32.totalorder %s93, %s94
      %p106 = scmp.eq.s32.totalorder %s21, 1
      %p107 = por %p105, %p106
      %p109 = scmp.ne.s32.totalorder %s94, %s108
      %p110 = scmp.eq.s32.totalorder %s21, 0
      %p111 = por %p109, %p110
      %s113 = sadd.s32 %s112, 1
      %p116 = scmp.eq.s32.totalorder %s15, 1
      %p117 = scmp.ne.s32.totalorder %s112, %s114
      %p118 = scmp.eq.s32.totalorder %s15, 0
      %p119 = por %p117, %p118
      %p120 = scmp.ne.s32.totalorder %s112, %s114
      %p121 = scmp.eq.s32.totalorder %s20, 1
      %p122 = por %p120, %p121
      %p123 = scmp.ne.s32.totalorder %s114, %s115
      %p124 = scmp.eq.s32.totalorder %s20, 0
      %p125 = por %p123, %p124
      %p126 = scmp.ne.s32.totalorder %s114, %s115
      %p127 = scmp.eq.s32.totalorder %s21, 1
      %p128 = por %p126, %p127
      %p130 = scmp.ne.s32.totalorder %s115, %s129
      %p131 = scmp.eq.s32.totalorder %s21, 0
      %p132 = por %p130, %p131
      %s134 = sadd.s32 %s133, 1
      %p137 = scmp.eq.s32.totalorder %s15, 1
      %p138 = scmp.ne.s32.totalorder %s133, %s135
      %p139 = scmp.eq.s32.totalorder %s15, 0
      %p140 = por %p138, %p139
      %p141 = scmp.ne.s32.totalorder %s133, %s135
      %p142 = scmp.eq.s32.totalorder %s20, 1
      %p143 = por %p141, %p142
      %p144 = scmp.ne.s32.totalorder %s135, %s136
      %p145 = scmp.eq.s32.totalorder %s20, 0
      %p146 = por %p144, %p145
      %p147 = scmp.ne.s32.totalorder %s135, %s136
      %p148 = scmp.eq.s32.totalorder %s21, 1
      %p149 = por %p147, %p148
      %p151 = scmp.ne.s32.totalorder %s136, %s150
      %p152 = scmp.eq.s32.totalorder %s21, 0
      %p153 = por %p151, %p152
      %s154 = ssub.s32 %s15, %s22
      %p155 = scmp.eq.s32.totalorder %s154, 0
      %s157 = sadd.s32 %s156, 1
      %s158 = scalar_select %p155, %s156, %s157
      %p161 = pneg %p155
      %p162 = scmp.eq.s32.totalorder %s15, 1
      %p163 = por %p161, %p162
      %p164 = scmp.ne.s32.totalorder %s156, %s159
      %p165 = scmp.eq.s32.totalorder %s15, 0
      %p166 = por %p164, %p165
      %p167 = scmp.ne.s32.totalorder %s156, %s159
      %p168 = scmp.eq.s32.totalorder %s20, 1
      %p169 = por %p167, %p168
      %p170 = scmp.ne.s32.totalorder %s159, %s160
      %p171 = scmp.eq.s32.totalorder %s20, 0
      %p172 = por %p170, %p171
      %p173 = scmp.ne.s32.totalorder %s159, %s160
      %p174 = scmp.eq.s32.totalorder %s21, 1
      %p175 = por %p173, %p174
      %p177 = scmp.ne.s32.totalorder %s160, %s176
      %p178 = scmp.eq.s32.totalorder %s21, 0
      %p179 = por %p177, %p178
      %p180 = scmp.le.s32.totalorder 1, %s15
      %p181 = scmp.lt.s32.totalorder %s15, 3
      %p182 = pnand %p180, %p181
      %p183 = pneg %p182
      // Predicated region
      $region9: #{tpu_custom_call.1} parent=5 // pred_check
        _
      $region10: #{tpu_custom_call.1} parent=5 // pred_check_branch
        %185 = sbr.rel (%p182) target = $region12
      $region11: #{tpu_custom_call.1} parent=5 // pred_region
        %s186 = ssub.s32 %s15, 1
        // Predicated region
        $region13: #{tpu_custom_call.1} parent=11 // pred_check
          %p187 = pneg %p62
        $region14: #{tpu_custom_call.1} parent=11 // pred_check_branch
          %189 = sbr.rel (%p187) target = $region16
        $region15: #{tpu_custom_call.1} parent=11 // pred_region
          _
        $region16: #{tpu_custom_call.1} parent=11 // pred_fallthru
          _
        // Predicated region
        $region17: #{tpu_custom_call.1} parent=11 // pred_check
          %p190 = pneg %p83
        $region18: #{tpu_custom_call.1} parent=11 // pred_check_branch
          %192 = sbr.rel (%p190) target = $region20
        $region19: #{tpu_custom_call.1} parent=11 // pred_region
          _
        $region20: #{tpu_custom_call.1} parent=11 // pred_fallthru
          _
        // Predicated region
        $region21: #{tpu_custom_call.1} parent=11 // pred_check
          %p193 = pneg %p104
        $region22: #{tpu_custom_call.1} parent=11 // pred_check_branch
          %195 = sbr.rel (%p193) target = $region24
        $region23: #{tpu_custom_call.1} parent=11 // pred_region
          _
        $region24: #{tpu_custom_call.1} parent=11 // pred_fallthru
          _
        // Predicated region
        $region25: #{tpu_custom_call.1} parent=11 // pred_check
          %p196 = pneg %p125
        $region26: #{tpu_custom_call.1} parent=11 // pred_check_branch
          %198 = sbr.rel (%p196) target = $region28
        $region27: #{tpu_custom_call.1} parent=11 // pred_region
          _
        $region28: #{tpu_custom_call.1} parent=11 // pred_fallthru
          _
        // Predicated region
        $region29: #{tpu_custom_call.1} parent=11 // pred_check
          %p199 = pneg %p146
        $region30: #{tpu_custom_call.1} parent=11 // pred_check_branch
          %201 = sbr.rel (%p199) target = $region32
        $region31: #{tpu_custom_call.1} parent=11 // pred_region
          _
        $region32: #{tpu_custom_call.1} parent=11 // pred_fallthru
          _
      $region12: #{tpu_custom_call.1} parent=5 // pred_fallthru
        _
      %p202 = scmp.lt.s32.totalorder %s15, 2
      // Predicated region
      $region33: #{tpu_custom_call.1} parent=5 // pred_check
        %p203 = pneg %p202
      $region34: #{tpu_custom_call.1} parent=5 // pred_check_branch
        %205 = sbr.rel (%p203) target = $region36
      $region35: #{tpu_custom_call.1} parent=5 // pred_region
        // Predicated region
        $region37: #{tpu_custom_call.1} parent=35 // pred_check
          %p206 = pneg %p35
        $region38: #{tpu_custom_call.1} parent=35 // pred_check_branch
          %208 = sbr.rel (%p206) target = $region40
        $region39: #{tpu_custom_call.1} parent=35 // pred_region
          %s209 = smul.u32 16, %s15
          %p210 = scmp.lt.s32.totalorder %s209, 31
          %s211 = scalar_select %p210, %s209, 31
          %s212 = smul.addr %s211, 4
          %s213 = scalar_lea.vmem %s0, %s212
          %s214 = smul.u32 16, %s15
        $region40: #{tpu_custom_call.1} parent=35 // pred_fallthru
          _
      $region36: #{tpu_custom_call.1} parent=5 // pred_fallthru
        _
      %p215 = scmp.le.s32.totalorder 1, %s15
      %p216 = scmp.lt.s32.totalorder %s15, 3
      %p217 = pnand %p215, %p216
      %p218 = pneg %p217
      // Predicated region
      $region41: #{tpu_custom_call.1} parent=5 // pred_check
        _
      $region42: #{tpu_custom_call.1} parent=5 // pred_check_branch
        %220 = sbr.rel (%p217) target = $region44
      $region43: #{tpu_custom_call.1} parent=5 // pred_region
        %s221 = ssub.s32 %s15, 1
        %s222 = smul.u32 16, %s20
        %p223 = scmp.lt.s32.totalorder %s222, 31
        %s224 = scalar_select %p223, %s222, 31
        %s225 = smul.addr %s224, 4
        %s226 = scalar_lea.vmem %s0, %s225
        %p227 = pneg %p41
        %p228 = pneg %p38
        %p229 = pneg %p62
        %p230 = pneg %p59
        %p231 = pneg %p83
        %p232 = pneg %p80
        %p233 = pneg %p104
        %p234 = pneg %p101
        %p235 = pneg %p125
        %p236 = pneg %p122
        %p237 = pneg %p146
        %p238 = pneg %p143
        %p239 = pneg %p172
        %p240 = pneg %p169
        %s241 = sand.u32 %s159, 1
        %s242 = scalar_lea.sflag [#allocation3], %s241
        %s243 = sand.u32 %s159, 1
        %s244 = smul.addr %s243, 128
        %s245 = scalar_lea.vmem [#allocation2], %s244
        %s246 = smul.u32 16, %s20
        %p247 = scmp.lt.s32.totalorder %s246, 31
        %s248 = scalar_select %p247, %s246, 31
        %s249 = smul.addr %s248, 4
        %s250 = scalar_lea.vmem %s0, %s249
        %s251 = smul.u32 16, %s20
        %s252 = smul.u32 16, %s20
        %v254 = vld [vmem:[%s250] sm:$0xf]
        %v255 = vld [vmem:[%s250 + $0x4] sm:$0xf]
        %v256 = vld [vmem:[%s250 + $0x8] sm:$0xf]
        %v257 = vld [vmem:[%s250 + $0xc] sm:$0xf]
        %v258 = vld [vmem:[%s250 + $0x10] sm:$0xf]
        %v259 = vld [vmem:[%s250 + $0x14] sm:$0xf]
        %v260 = vld [vmem:[%s250 + $0x18] sm:$0xf]
        %v261 = vld [vmem:[%s250 + $0x1c] sm:$0xf]
        %v262 = vld [vmem:[%s250 + $0x20] sm:$0xf]
        %v263 = vld [vmem:[%s250 + $0x24] sm:$0xf]
        %v264 = vld [vmem:[%s250 + $0x28] sm:$0xf]
        %v265 = vld [vmem:[%s250 + $0x2c] sm:$0xf]
        %v266 = vld [vmem:[%s250 + $0x30] sm:$0xf]
        %v267 = vld [vmem:[%s250 + $0x34] sm:$0xf]
        %v268 = vld [vmem:[%s250 + $0x38] sm:$0xf]
        %v269 = vld [vmem:[%s250 + $0x3c] sm:$0xf]
        %v270 = vld [vmem:[%s1] sm:$0xf]
        %v271 = vld [vmem:[%s1 + $0x4] sm:$0xf]
        %v272 = vld [vmem:[%s1 + $0x8] sm:$0xf]
        %v273 = vld [vmem:[%s1 + $0xc] sm:$0xf]
        %v274 = vld [vmem:[%s2] sm:$0x1]
        %v276 = vlaneseq
        %v277 = vshrl.u32 %v276, 7
        %v278 = vsub.s32 0, %v277
        %v279 = vrot.slane %v274, %v278
        %v297 = vunpack.c.l.b16 %v254
        %v298 = vunpack.c.l.b16 %v255
        %v299 = vunpack.c.l.b16 %v256
        %v300 = vunpack.c.l.b16 %v257
        %v301 = vunpack.c.l.b16 %v258
        %v302 = vunpack.c.l.b16 %v259
        %v303 = vunpack.c.l.b16 %v260
        %v304 = vunpack.c.l.b16 %v261
        %v305 = vunpack.c.l.b16 %v262
        %v306 = vunpack.c.l.b16 %v263
        %v307 = vunpack.c.l.b16 %v264
        %v308 = vunpack.c.l.b16 %v265
        %v309 = vunpack.c.l.b16 %v266
        %v310 = vunpack.c.l.b16 %v267
        %v311 = vunpack.c.l.b16 %v268
        %v312 = vunpack.c.l.b16 %v269
        %v313 = vpack.c.b16 %v298, %v297
        %v314 = vpack.c.b16 %v300, %v299
        %v315 = vpack.c.b16 %v302, %v301
        %v316 = vpack.c.b16 %v304, %v303
        %v317 = vpack.c.b16 %v306, %v305
        %v318 = vpack.c.b16 %v308, %v307
        %v319 = vpack.c.b16 %v310, %v309
        %v320 = vpack.c.b16 %v312, %v311
        %v325 = vunpack.c.l.b16 %v270
        %v326 = vunpack.c.l.b16 %v271
        %v327 = vunpack.c.l.b16 %v272
        %v328 = vunpack.c.l.b16 %v273
        %v329 = vpack.c.b16 %v326, %v325
        %v330 = vpack.c.b16 %v328, %v327
        %vm333 = vcmask 261120
        %v335 = vsel %vm333, %v313, 0
        %v338 = vsel %vm333, %v314, 0
        %v341 = vsel %vm333, %v315, 0
        %v344 = vsel %vm333, %v316, 0
        %v347 = vsel %vm333, %v317, 0
        %v350 = vsel %vm333, %v318, 0
        %v353 = vsel %vm333, %v319, 0
        %v356 = vsel %vm333, %v320, 0
        %358 = vmatprep.subr.bf16.mxu0 0
        %359 = vmatpush1.bf16.msra.mxu0 %v329
        %360 = vmatprep.subr.bf16.mxu0 0
        %361 = vmatpush1.bf16.msra.mxu0 %v330
        %362 = vmatprep.subr.bf16.mxu0 0
        %363 = vmatpush1.bf16.msra.mxu0 0
        %364 = vmatprep.subr.bf16.mxu0 0
        %365 = vmatpush1.bf16.msra.mxu0 0
        %366 = vmatprep.subr.bf16.mxu0 0
        %367 = vmatpush1.bf16.msra.mxu0 0
        %368 = vmatprep.subr.bf16.mxu0 0
        %369 = vmatpush1.bf16.msra.mxu0 0
        %370 = vmatprep.subr.bf16.mxu0 0
        %371 = vmatpush1.bf16.msra.mxu0 0
        %372 = vmatprep.subr.bf16.mxu0 0
        %373 = vmatpush1.bf16.msra.mxu0 0
        %374 = vmatprep.subr.bf16.mxu0 0
        %375 = vmatpush1.bf16.msra.mxu0 0
        %376 = vmatprep.subr.bf16.mxu0 0
        %377 = vmatpush1.bf16.msra.mxu0 0
        %378 = vmatprep.subr.bf16.mxu0 0
        %379 = vmatpush1.bf16.msra.mxu0 0
        %380 = vmatprep.subr.bf16.mxu0 0
        %381 = vmatpush1.bf16.msra.mxu0 0
        %382 = vmatprep.subr.bf16.mxu0 0
        %383 = vmatpush1.bf16.msra.mxu0 0
        %384 = vmatprep.subr.bf16.mxu0 0
        %385 = vmatpush1.bf16.msra.mxu0 0
        %386 = vmatprep.subr.bf16.mxu0 0
        %387 = vmatpush1.bf16.msra.mxu0 0
        %388 = vmatprep.subr.bf16.mxu0 0
        %389 = vmatpush1.bf16.msra.mxu0 0
        %390 = vmatprep.mubr.bf16.mxu0 0
        %391 = vmatmul.mubr.bf16.gmra.mrb[0].mxu0 %v335
        %v392 = vpop.f32.mrb[0].mxu0
        %v393 = vadd.f32 %v279, %v392
        %v394 = vpop.f32.mrb[0].mxu0
        %v395 = vpop.f32.mrb[0].mxu0
        %v396 = vadd.f32 %v279, %v395
        %v397 = vpop.f32.mrb[0].mxu0
        %398 = vmatprep.mubr.bf16.mxu0 0
        %399 = vmatmul.mubr.bf16.gmra.mrb[0].mxu0 %v338
        %v400 = vpop.f32.mrb[0].mxu0
        %v401 = vadd.f32 %v279, %v400
        %v402 = vpop.f32.mrb[0].mxu0
        %v403 = vpop.f32.mrb[0].mxu0
        %v404 = vadd.f32 %v279, %v403
        %v405 = vpop.f32.mrb[0].mxu0
        %406 = vmatprep.mubr.bf16.mxu0 0
        %407 = vmatmul.mubr.bf16.gmra.mrb[0].mxu0 %v341
        %v408 = vpop.f32.mrb[0].mxu0
        %v409 = vadd.f32 %v279, %v408
        %v410 = vpop.f32.mrb[0].mxu0
        %v411 = vpop.f32.mrb[0].mxu0
        %v412 = vadd.f32 %v279, %v411
        %v413 = vpop.f32.mrb[0].mxu0
        %414 = vmatprep.mubr.bf16.mxu0 0
        %415 = vmatmul.mubr.bf16.gmra.mrb[0].mxu0 %v344
        %v416 = vpop.f32.mrb[0].mxu0
        %v417 = vadd.f32 %v279, %v416
        %v418 = vpop.f32.mrb[0].mxu0
        %v419 = vpop.f32.mrb[0].mxu0
        %v420 = vadd.f32 %v279, %v419
        %v421 = vpop.f32.mrb[0].mxu0
        %422 = vmatprep.mubr.bf16.mxu0 0
        %423 = vmatmul.mubr.bf16.gmra.mrb[0].mxu0 %v347
        %v424 = vpop.f32.mrb[0].mxu0
        %v425 = vadd.f32 %v279, %v424
        %v426 = vpop.f32.mrb[0].mxu0
        %v427 = vpop.f32.mrb[0].mxu0
        %v428 = vadd.f32 %v279, %v427
        %v429 = vpop.f32.mrb[0].mxu0
        %430 = vmatprep.mubr.bf16.mxu0 0
        %431 = vmatmul.mubr.bf16.gmra.mrb[0].mxu0 %v350
        %v432 = vpop.f32.mrb[0].mxu0
        %v433 = vadd.f32 %v279, %v432
        %v434 = vpop.f32.mrb[0].mxu0
        %v435 = vpop.f32.mrb[0].mxu0
        %v436 = vadd.f32 %v279, %v435
        %v437 = vpop.f32.mrb[0].mxu0
        %438 = vmatprep.mubr.bf16.mxu0 0
        %439 = vmatmul.mubr.bf16.gmra.mrb[0].mxu0 %v353
        %v440 = vpop.f32.mrb[0].mxu0
        %v441 = vadd.f32 %v279, %v440
        %v442 = vpop.f32.mrb[0].mxu0
        %v443 = vpop.f32.mrb[0].mxu0
        %v444 = vadd.f32 %v279, %v443
        %v445 = vpop.f32.mrb[0].mxu0
        %446 = vmatprep.mubr.bf16.mxu0 0
        %447 = vmatmul.mubr.bf16.gmra.mrb[0].mxu0 %v356
        %v448 = vpop.f32.mrb[0].mxu0
        %v449 = vadd.f32 %v279, %v448
        %v450 = vpop.f32.mrb[0].mxu0
        %v451 = vpop.f32.mrb[0].mxu0
        %v452 = vadd.f32 %v279, %v451
        %v453 = vpop.f32.mrb[0].mxu0
        %454 = vdwg.mxu0
        %v455 = vpack.c.bf16 %v396, %v393
        %v456 = vpack.c.bf16 %v404, %v401
        %v457 = vpack.c.bf16 %v412, %v409
        %v458 = vpack.c.bf16 %v420, %v417
        %v459 = vpack.c.bf16 %v428, %v425
        %v460 = vpack.c.bf16 %v436, %v433
        %v461 = vpack.c.bf16 %v444, %v441
        %v462 = vpack.c.bf16 %v452, %v449
        %v471 = vunpack.c.l.b16 %v455
        %v472 = vunpack.c.h.b16 %v455
        %v473 = vunpack.c.l.b16 %v456
        %v474 = vunpack.c.h.b16 %v456
        %v475 = vunpack.c.l.b16 %v457
        %v476 = vunpack.c.h.b16 %v457
        %v477 = vunpack.c.l.b16 %v458
        %v478 = vunpack.c.h.b16 %v458
        %v479 = vunpack.c.l.b16 %v459
        %v480 = vunpack.c.h.b16 %v459
        %v481 = vunpack.c.l.b16 %v460
        %v482 = vunpack.c.h.b16 %v460
        %v483 = vunpack.c.l.b16 %v461
        %v484 = vunpack.c.h.b16 %v461
        %v485 = vunpack.c.l.b16 %v462
        %v486 = vunpack.c.h.b16 %v462
        %v487 = vpack.c.b16 %v471, %v471
        %v488 = vpack.c.b16 %v472, %v472
        %v489 = vpack.c.b16 %v473, %v473
        %v490 = vpack.c.b16 %v474, %v474
        %v491 = vpack.c.b16 %v475, %v475
        %v492 = vpack.c.b16 %v476, %v476
        %v493 = vpack.c.b16 %v477, %v477
        %v494 = vpack.c.b16 %v478, %v478
        %v495 = vpack.c.b16 %v479, %v479
        %v496 = vpack.c.b16 %v480, %v480
        %v497 = vpack.c.b16 %v481, %v481
        %v498 = vpack.c.b16 %v482, %v482
        %v499 = vpack.c.b16 %v483, %v483
        %v500 = vpack.c.b16 %v484, %v484
        %v501 = vpack.c.b16 %v485, %v485
        %v502 = vpack.c.b16 %v486, %v486
        %v503 = vld [vmem:[%s3] sm:$0xff]
        %504 = vrot.lane.b32.xlu0 %v487, 96
        %v505 = vpop.permute.xlu0 %504
        %vm506 = vcmask 64512
        %v508 = vsel %vm506, %v487, 0
        %v511 = vsel %vm506, %v505, 0
        %513 = vmatprep.subr.bf16.mxu0 0
        %514 = vmatpush1.bf16.xpose.msra.mxu0 %v511
        %515 = vmatprep.subr.bf16.mxu0 0
        %516 = vmatpush1.bf16.xpose.msra.mxu0 0
        %517 = vmatprep.subr.bf16.mxu0 0
        %518 = vmatpush1.bf16.xpose.msra.mxu0 0
        %519 = vmatprep.subr.bf16.mxu0 0
        %520 = vmatpush1.bf16.xpose.msra.mxu0 0
        %521 = vmatprep.subr.bf16.mxu0 0
        %522 = vmatpush1.bf16.xpose.msra.mxu0 0
        %523 = vmatprep.subr.bf16.mxu0 0
        %524 = vmatpush1.bf16.xpose.msra.mxu0 0
        %525 = vmatprep.subr.bf16.mxu0 0
        %526 = vmatpush1.bf16.xpose.msra.mxu0 0
        %527 = vmatprep.subr.bf16.mxu0 0
        %528 = vmatpush1.bf16.xpose.msra.mxu0 0
        %529 = vmatprep.subr.bf16.mxu0 0
        %530 = vmatpush1.bf16.xpose.msra.mxu0 0
        %531 = vmatprep.subr.bf16.mxu0 0
        %532 = vmatpush1.bf16.xpose.msra.mxu0 0
        %533 = vmatprep.subr.bf16.mxu0 0
        %534 = vmatpush1.bf16.xpose.msra.mxu0 0
        %535 = vmatprep.subr.bf16.mxu0 0
        %536 = vmatpush1.bf16.xpose.msra.mxu0 0
        %537 = vmatprep.subr.bf16.mxu0 0
        %538 = vmatpush1.bf16.xpose.msra.mxu0 0
        %539 = vmatprep.subr.bf16.mxu0 0
        %540 = vmatpush1.bf16.xpose.msra.mxu0 0
        %541 = vmatprep.subr.bf16.mxu0 0
        %542 = vmatpush1.bf16.xpose.msra.mxu0 0
        %543 = vmatprep.subr.bf16.mxu0 0
        %544 = vmatpush1.bf16.xpose.msra.mxu0 0
        %545 = vmatprep.mubr.bf16.mxu0 0
        %546 = vmatmul.mubr.bf16.gmra.mrb[0].mxu0 %v508
        %v547 = vpop.f32.mrb[0].mxu0
        %v548 = vadd.f32 %v503, %v547
        %v549 = vpop.f32.mrb[0].mxu0
        %v550 = vpop.f32.mrb[0].mxu0
        %v551 = vpop.f32.mrb[0].mxu0
        %552 = vdwg.mxu0
        %553 = vrot.lane.b32.xlu0 %v488, 96
        %v554 = vpop.permute.xlu0 %553
        %v556 = vsel %vm506, %v488, 0
        %v559 = vsel %vm506, %v554, 0
        %561 = vmatprep.subr.bf16.mxu0 0
        %562 = vmatpush1.bf16.xpose.msra.mxu0 %v559
        %563 = vmatprep.subr.bf16.mxu0 0
        %564 = vmatpush1.bf16.xpose.msra.mxu0 0
        %565 = vmatprep.subr.bf16.mxu0 0
        %566 = vmatpush1.bf16.xpose.msra.mxu0 0
        %567 = vmatprep.subr.bf16.mxu0 0
        %568 = vmatpush1.bf16.xpose.msra.mxu0 0
        %569 = vmatprep.subr.bf16.mxu0 0
        %570 = vmatpush1.bf16.xpose.msra.mxu0 0
        %571 = vmatprep.subr.bf16.mxu0 0
        %572 = vmatpush1.bf16.xpose.msra.mxu0 0
        %573 = vmatprep.subr.bf16.mxu0 0
        %574 = vmatpush1.bf16.xpose.msra.mxu0 0
        %575 = vmatprep.subr.bf16.mxu0 0
        %576 = vmatpush1.bf16.xpose.msra.mxu0 0
        %577 = vmatprep.subr.bf16.mxu0 0
        %578 = vmatpush1.bf16.xpose.msra.mxu0 0
        %579 = vmatprep.subr.bf16.mxu0 0
        %580 = vmatpush1.bf16.xpose.msra.mxu0 0
        %581 = vmatprep.subr.bf16.mxu0 0
        %582 = vmatpush1.bf16.xpose.msra.mxu0 0
        %583 = vmatprep.subr.bf16.mxu0 0
        %584 = vmatpush1.bf16.xpose.msra.mxu0 0
        %585 = vmatprep.subr.bf16.mxu0 0
        %586 = vmatpush1.bf16.xpose.msra.mxu0 0
        %587 = vmatprep.subr.bf16.mxu0 0
        %588 = vmatpush1.bf16.xpose.msra.mxu0 0
        %589 = vmatprep.subr.bf16.mxu0 0
        %590 = vmatpush1.bf16.xpose.msra.mxu0 0
        %591 = vmatprep.subr.bf16.mxu0 0
        %592 = vmatpush1.bf16.xpose.msra.mxu0 0
        %593 = vmatprep.mubr.bf16.mxu0 0
        %594 = vmatmul.mubr.bf16.gmra.mrb[0].mxu0 %v556
        %v595 = vpop.f32.mrb[0].mxu0
        %v596 = vadd.f32 %v503, %v595
        %v597 = vpop.f32.mrb[0].mxu0
        %v598 = vpop.f32.mrb[0].mxu0
        %v599 = vpop.f32.mrb[0].mxu0
        %600 = vdwg.mxu0
        %601 = vrot.lane.b32.xlu0 %v489, 96
        %v602 = vpop.permute.xlu0 %601
        %v604 = vsel %vm506, %v489, 0
        %v607 = vsel %vm506, %v602, 0
        %609 = vmatprep.subr.bf16.mxu0 0
        %610 = vmatpush1.bf16.xpose.msra.mxu0 %v607
        %611 = vmatprep.subr.bf16.mxu0 0
        %612 = vmatpush1.bf16.xpose.msra.mxu0 0
        %613 = vmatprep.subr.bf16.mxu0 0
        %614 = vmatpush1.bf16.xpose.msra.mxu0 0
        %615 = vmatprep.subr.bf16.mxu0 0
        %616 = vmatpush1.bf16.xpose.msra.mxu0 0
        %617 = vmatprep.subr.bf16.mxu0 0
        %618 = vmatpush1.bf16.xpose.msra.mxu0 0
        %619 = vmatprep.subr.bf16.mxu0 0
        %620 = vmatpush1.bf16.xpose.msra.mxu0 0
        %621 = vmatprep.subr.bf16.mxu0 0
        %622 = vmatpush1.bf16.xpose.msra.mxu0 0
        %623 = vmatprep.subr.bf16.mxu0 0
        %624 = vmatpush1.bf16.xpose.msra.mxu0 0
        %625 = vmatprep.subr.bf16.mxu0 0
        %626 = vmatpush1.bf16.xpose.msra.mxu0 0
        %627 = vmatprep.subr.bf16.mxu0 0
        %628 = vmatpush1.bf16.xpose.msra.mxu0 0
        %629 = vmatprep.subr.bf16.mxu0 0
        %630 = vmatpush1.bf16.xpose.msra.mxu0 0
        %631 = vmatprep.subr.bf16.mxu0 0
        %632 = vmatpush1.bf16.xpose.msra.mxu0 0
        %633 = vmatprep.subr.bf16.mxu0 0
        %634 = vmatpush1.bf16.xpose.msra.mxu0 0
        %635 = vmatprep.subr.bf16.mxu0 0
        %636 = vmatpush1.bf16.xpose.msra.mxu0 0
        %637 = vmatprep.subr.bf16.mxu0 0
        %638 = vmatpush1.bf16.xpose.msra.mxu0 0
        %639 = vmatprep.subr.bf16.mxu0 0
        %640 = vmatpush1.bf16.xpose.msra.mxu0 0
        %641 = vmatprep.mubr.bf16.mxu0 0
        %642 = vmatmul.mubr.bf16.gmra.mrb[0].mxu0 %v604
        %v643 = vpop.f32.mrb[0].mxu0
        %v644 = vadd.f32 %v503, %v643
        %v645 = vpop.f32.mrb[0].mxu0
        %v646 = vpop.f32.mrb[0].mxu0
        %v647 = vpop.f32.mrb[0].mxu0
        %648 = vdwg.mxu0
        %649 = vrot.lane.b32.xlu0 %v490, 96
        %v650 = vpop.permute.xlu0 %649
        %v652 = vsel %vm506, %v490, 0
        %v655 = vsel %vm506, %v650, 0
        %657 = vmatprep.subr.bf16.mxu0 0
        %658 = vmatpush1.bf16.xpose.msra.mxu0 %v655
        %659 = vmatprep.subr.bf16.mxu0 0
        %660 = vmatpush1.bf16.xpose.msra.mxu0 0
        %661 = vmatprep.subr.bf16.mxu0 0
        %662 = vmatpush1.bf16.xpose.msra.mxu0 0
        %663 = vmatprep.subr.bf16.mxu0 0
        %664 = vmatpush1.bf16.xpose.msra.mxu0 0
        %665 = vmatprep.subr.bf16.mxu0 0
        %666 = vmatpush1.bf16.xpose.msra.mxu0 0
        %667 = vmatprep.subr.bf16.mxu0 0
        %668 = vmatpush1.bf16.xpose.msra.mxu0 0
        %669 = vmatprep.subr.bf16.mxu0 0
        %670 = vmatpush1.bf16.xpose.msra.mxu0 0
        %671 = vmatprep.subr.bf16.mxu0 0
        %672 = vmatpush1.bf16.xpose.msra.mxu0 0
        %673 = vmatprep.subr.bf16.mxu0 0
        %674 = vmatpush1.bf16.xpose.msra.mxu0 0
        %675 = vmatprep.subr.bf16.mxu0 0
        %676 = vmatpush1.bf16.xpose.msra.mxu0 0
        %677 = vmatprep.subr.bf16.mxu0 0
        %678 = vmatpush1.bf16.xpose.msra.mxu0 0
        %679 = vmatprep.subr.bf16.mxu0 0
        %680 = vmatpush1.bf16.xpose.msra.mxu0 0
        %681 = vmatprep.subr.bf16.mxu0 0
        %682 = vmatpush1.bf16.xpose.msra.mxu0 0
        %683 = vmatprep.subr.bf16.mxu0 0
        %684 = vmatpush1.bf16.xpose.msra.mxu0 0
        %685 = vmatprep.subr.bf16.mxu0 0
        %686 = vmatpush1.bf16.xpose.msra.mxu0 0
        %687 = vmatprep.subr.bf16.mxu0 0
        %688 = vmatpush1.bf16.xpose.msra.mxu0 0
        %689 = vmatprep.mubr.bf16.mxu0 0
        %690 = vmatmul.mubr.bf16.gmra.mrb[0].mxu0 %v652
        %v691 = vpop.f32.mrb[0].mxu0
        %v692 = vadd.f32 %v503, %v691
        %v693 = vpop.f32.mrb[0].mxu0
        %v694 = vpop.f32.mrb[0].mxu0
        %v695 = vpop.f32.mrb[0].mxu0
        %696 = vdwg.mxu0
        %697 = vrot.lane.b32.xlu0 %v491, 96
        %v698 = vpop.permute.xlu0 %697
        %v700 = vsel %vm506, %v491, 0
        %v703 = vsel %vm506, %v698, 0
        %705 = vmatprep.subr.bf16.mxu0 0
        %706 = vmatpush1.bf16.xpose.msra.mxu0 %v703
        %707 = vmatprep.subr.bf16.mxu0 0
        %708 = vmatpush1.bf16.xpose.msra.mxu0 0
        %709 = vmatprep.subr.bf16.mxu0 0
        %710 = vmatpush1.bf16.xpose.msra.mxu0 0
        %711 = vmatprep.subr.bf16.mxu0 0
        %712 = vmatpush1.bf16.xpose.msra.mxu0 0
        %713 = vmatprep.subr.bf16.mxu0 0
        %714 = vmatpush1.bf16.xpose.msra.mxu0 0
        %715 = vmatprep.subr.bf16.mxu0 0
        %716 = vmatpush1.bf16.xpose.msra.mxu0 0
        %717 = vmatprep.subr.bf16.mxu0 0
        %718 = vmatpush1.bf16.xpose.msra.mxu0 0
        %719 = vmatprep.subr.bf16.mxu0 0
        %720 = vmatpush1.bf16.xpose.msra.mxu0 0
        %721 = vmatprep.subr.bf16.mxu0 0
        %722 = vmatpush1.bf16.xpose.msra.mxu0 0
        %723 = vmatprep.subr.bf16.mxu0 0
        %724 = vmatpush1.bf16.xpose.msra.mxu0 0
        %725 = vmatprep.subr.bf16.mxu0 0
        %726 = vmatpush1.bf16.xpose.msra.mxu0 0
        %727 = vmatprep.subr.bf16.mxu0 0
        %728 = vmatpush1.bf16.xpose.msra.mxu0 0
        %729 = vmatprep.subr.bf16.mxu0 0
        %730 = vmatpush1.bf16.xpose.msra.mxu0 0
        %731 = vmatprep.subr.bf16.mxu0 0
        %732 = vmatpush1.bf16.xpose.msra.mxu0 0
        %733 = vmatprep.subr.bf16.mxu0 0
        %734 = vmatpush1.bf16.xpose.msra.mxu0 0
        %735 = vmatprep.subr.bf16.mxu0 0
        %736 = vmatpush1.bf16.xpose.msra.mxu0 0
        %737 = vmatprep.mubr.bf16.mxu0 0
        %738 = vmatmul.mubr.bf16.gmra.mrb[0].mxu0 %v700
        %v739 = vpop.f32.mrb[0].mxu0
        %v740 = vadd.f32 %v503, %v739
        %v741 = vpop.f32.mrb[0].mxu0
        %v742 = vpop.f32.mrb[0].mxu0
        %v743 = vpop.f32.mrb[0].mxu0
        %744 = vdwg.mxu0
        %745 = vrot.lane.b32.xlu0 %v492, 96
        %v746 = vpop.permute.xlu0 %745
        %v748 = vsel %vm506, %v492, 0
        %v751 = vsel %vm506, %v746, 0
        %753 = vmatprep.subr.bf16.mxu0 0
        %754 = vmatpush1.bf16.xpose.msra.mxu0 %v751
        %755 = vmatprep.subr.bf16.mxu0 0
        %756 = vmatpush1.bf16.xpose.msra.mxu0 0
        %757 = vmatprep.subr.bf16.mxu0 0
        %758 = vmatpush1.bf16.xpose.msra.mxu0 0
        %759 = vmatprep.subr.bf16.mxu0 0
        %760 = vmatpush1.bf16.xpose.msra.mxu0 0
        %761 = vmatprep.subr.bf16.mxu0 0
        %762 = vmatpush1.bf16.xpose.msra.mxu0 0
        %763 = vmatprep.subr.bf16.mxu0 0
        %764 = vmatpush1.bf16.xpose.msra.mxu0 0
        %765 = vmatprep.subr.bf16.mxu0 0
        %766 = vmatpush1.bf16.xpose.msra.mxu0 0
        %767 = vmatprep.subr.bf16.mxu0 0
        %768 = vmatpush1.bf16.xpose.msra.mxu0 0
        %769 = vmatprep.subr.bf16.mxu0 0
        %770 = vmatpush1.bf16.xpose.msra.mxu0 0
        %771 = vmatprep.subr.bf16.mxu0 0
        %772 = vmatpush1.bf16.xpose.msra.mxu0 0
        %773 = vmatprep.subr.bf16.mxu0 0
        %774 = vmatpush1.bf16.xpose.msra.mxu0 0
        %775 = vmatprep.subr.bf16.mxu0 0
        %776 = vmatpush1.bf16.xpose.msra.mxu0 0
        %777 = vmatprep.subr.bf16.mxu0 0
        %778 = vmatpush1.bf16.xpose.msra.mxu0 0
        %779 = vmatprep.subr.bf16.mxu0 0
        %780 = vmatpush1.bf16.xpose.msra.mxu0 0
        %781 = vmatprep.subr.bf16.mxu0 0
        %782 = vmatpush1.bf16.xpose.msra.mxu0 0
        %783 = vmatprep.subr.bf16.mxu0 0
        %784 = vmatpush1.bf16.xpose.msra.mxu0 0
        %785 = vmatprep.mubr.bf16.mxu0 0
        %786 = vmatmul.mubr.bf16.gmra.mrb[0].mxu0 %v748
        %v787 = vpop.f32.mrb[0].mxu0
        %v788 = vadd.f32 %v503, %v787
        %v789 = vpop.f32.mrb[0].mxu0
        %v790 = vpop.f32.mrb[0].mxu0
        %v791 = vpop.f32.mrb[0].mxu0
        %792 = vdwg.mxu0
        %793 = vrot.lane.b32.xlu0 %v493, 96
        %v794 = vpop.permute.xlu0 %793
        %v796 = vsel %vm506, %v493, 0
        %v799 = vsel %vm506, %v794, 0
        %801 = vmatprep.subr.bf16.mxu0 0
        %802 = vmatpush1.bf16.xpose.msra.mxu0 %v799
        %803 = vmatprep.subr.bf16.mxu0 0
        %804 = vmatpush1.bf16.xpose.msra.mxu0 0
        %805 = vmatprep.subr.bf16.mxu0 0
        %806 = vmatpush1.bf16.xpose.msra.mxu0 0
        %807 = vmatprep.subr.bf16.mxu0 0
        %808 = vmatpush1.bf16.xpose.msra.mxu0 0
        %809 = vmatprep.subr.bf16.mxu0 0
        %810 = vmatpush1.bf16.xpose.msra.mxu0 0
        %811 = vmatprep.subr.bf16.mxu0 0
        %812 = vmatpush1.bf16.xpose.msra.mxu0 0
        %813 = vmatprep.subr.bf16.mxu0 0
        %814 = vmatpush1.bf16.xpose.msra.mxu0 0
        %815 = vmatprep.subr.bf16.mxu0 0
        %816 = vmatpush1.bf16.xpose.msra.mxu0 0
        %817 = vmatprep.subr.bf16.mxu0 0
        %818 = vmatpush1.bf16.xpose.msra.mxu0 0
        %819 = vmatprep.subr.bf16.mxu0 0
        %820 = vmatpush1.bf16.xpose.msra.mxu0 0
        %821 = vmatprep.subr.bf16.mxu0 0
        %822 = vmatpush1.bf16.xpose.msra.mxu0 0
        %823 = vmatprep.subr.bf16.mxu0 0
        %824 = vmatpush1.bf16.xpose.msra.mxu0 0
        %825 = vmatprep.subr.bf16.mxu0 0
        %826 = vmatpush1.bf16.xpose.msra.mxu0 0
        %827 = vmatprep.subr.bf16.mxu0 0
        %828 = vmatpush1.bf16.xpose.msra.mxu0 0
        %829 = vmatprep.subr.bf16.mxu0 0
        %830 = vmatpush1.bf16.xpose.msra.mxu0 0
        %831 = vmatprep.subr.bf16.mxu0 0
        %832 = vmatpush1.bf16.xpose.msra.mxu0 0
        %833 = vmatprep.mubr.bf16.mxu0 0
        %834 = vmatmul.mubr.bf16.gmra.mrb[0].mxu0 %v796
        %v835 = vpop.f32.mrb[0].mxu0
        %v836 = vadd.f32 %v503, %v835
        %v837 = vpop.f32.mrb[0].mxu0
        %v838 = vpop.f32.mrb[0].mxu0
        %v839 = vpop.f32.mrb[0].mxu0
        %840 = vdwg.mxu0
        %841 = vrot.lane.b32.xlu0 %v494, 96
        %v842 = vpop.permute.xlu0 %841
        %v844 = vsel %vm506, %v494, 0
        %v847 = vsel %vm506, %v842, 0
        %849 = vmatprep.subr.bf16.mxu0 0
        %850 = vmatpush1.bf16.xpose.msra.mxu0 %v847
        %851 = vmatprep.subr.bf16.mxu0 0
        %852 = vmatpush1.bf16.xpose.msra.mxu0 0
        %853 = vmatprep.subr.bf16.mxu0 0
        %854 = vmatpush1.bf16.xpose.msra.mxu0 0
        %855 = vmatprep.subr.bf16.mxu0 0
        %856 = vmatpush1.bf16.xpose.msra.mxu0 0
        %857 = vmatprep.subr.bf16.mxu0 0
        %858 = vmatpush1.bf16.xpose.msra.mxu0 0
        %859 = vmatprep.subr.bf16.mxu0 0
        %860 = vmatpush1.bf16.xpose.msra.mxu0 0
        %861 = vmatprep.subr.bf16.mxu0 0
        %862 = vmatpush1.bf16.xpose.msra.mxu0 0
        %863 = vmatprep.subr.bf16.mxu0 0
        %864 = vmatpush1.bf16.xpose.msra.mxu0 0
        %865 = vmatprep.subr.bf16.mxu0 0
        %866 = vmatpush1.bf16.xpose.msra.mxu0 0
        %867 = vmatprep.subr.bf16.mxu0 0
        %868 = vmatpush1.bf16.xpose.msra.mxu0 0
        %869 = vmatprep.subr.bf16.mxu0 0
        %870 = vmatpush1.bf16.xpose.msra.mxu0 0
        %871 = vmatprep.subr.bf16.mxu0 0
        %872 = vmatpush1.bf16.xpose.msra.mxu0 0
        %873 = vmatprep.subr.bf16.mxu0 0
        %874 = vmatpush1.bf16.xpose.msra.mxu0 0
        %875 = vmatprep.subr.bf16.mxu0 0
        %876 = vmatpush1.bf16.xpose.msra.mxu0 0
        %877 = vmatprep.subr.bf16.mxu0 0
        %878 = vmatpush1.bf16.xpose.msra.mxu0 0
        %879 = vmatprep.subr.bf16.mxu0 0
        %880 = vmatpush1.bf16.xpose.msra.mxu0 0
        %881 = vmatprep.mubr.bf16.mxu0 0
        %882 = vmatmul.mubr.bf16.gmra.mrb[0].mxu0 %v844
        %v883 = vpop.f32.mrb[0].mxu0
        %v884 = vadd.f32 %v503, %v883
        %v885 = vpop.f32.mrb[0].mxu0
        %v886 = vpop.f32.mrb[0].mxu0
        %v887 = vpop.f32.mrb[0].mxu0
        %888 = vdwg.mxu0
        %889 = vrot.lane.b32.xlu0 %v495, 96
        %v890 = vpop.permute.xlu0 %889
        %v892 = vsel %vm506, %v495, 0
        %v895 = vsel %vm506, %v890, 0
        %897 = vmatprep.subr.bf16.mxu0 0
        %898 = vmatpush1.bf16.xpose.msra.mxu0 %v895
        %899 = vmatprep.subr.bf16.mxu0 0
        %900 = vmatpush1.bf16.xpose.msra.mxu0 0
        %901 = vmatprep.subr.bf16.mxu0 0
        %902 = vmatpush1.bf16.xpose.msra.mxu0 0
        %903 = vmatprep.subr.bf16.mxu0 0
        %904 = vmatpush1.bf16.xpose.msra.mxu0 0
        %905 = vmatprep.subr.bf16.mxu0 0
        %906 = vmatpush1.bf16.xpose.msra.mxu0 0
        %907 = vmatprep.subr.bf16.mxu0 0
        %908 = vmatpush1.bf16.xpose.msra.mxu0 0
        %909 = vmatprep.subr.bf16.mxu0 0
        %910 = vmatpush1.bf16.xpose.msra.mxu0 0
        %911 = vmatprep.subr.bf16.mxu0 0
        %912 = vmatpush1.bf16.xpose.msra.mxu0 0
        %913 = vmatprep.subr.bf16.mxu0 0
        %914 = vmatpush1.bf16.xpose.msra.mxu0 0
        %915 = vmatprep.subr.bf16.mxu0 0
        %916 = vmatpush1.bf16.xpose.msra.mxu0 0
        %917 = vmatprep.subr.bf16.mxu0 0
        %918 = vmatpush1.bf16.xpose.msra.mxu0 0
        %919 = vmatprep.subr.bf16.mxu0 0
        %920 = vmatpush1.bf16.xpose.msra.mxu0 0
        %921 = vmatprep.subr.bf16.mxu0 0
        %922 = vmatpush1.bf16.xpose.msra.mxu0 0
        %923 = vmatprep.subr.bf16.mxu0 0
        %924 = vmatpush1.bf16.xpose.msra.mxu0 0
        %925 = vmatprep.subr.bf16.mxu0 0
        %926 = vmatpush1.bf16.xpose.msra.mxu0 0
        %927 = vmatprep.subr.bf16.mxu0 0
        %928 = vmatpush1.bf16.xpose.msra.mxu0 0
        %929 = vmatprep.mubr.bf16.mxu0 0
        %930 = vmatmul.mubr.bf16.gmra.mrb[0].mxu0 %v892
        %v931 = vpop.f32.mrb[0].mxu0
        %v932 = vadd.f32 %v503, %v931
        %v933 = vpop.f32.mrb[0].mxu0
        %v934 = vpop.f32.mrb[0].mxu0
        %v935 = vpop.f32.mrb[0].mxu0
        %936 = vdwg.mxu0
        %937 = vrot.lane.b32.xlu0 %v496, 96
        %v938 = vpop.permute.xlu0 %937
        %v940 = vsel %vm506, %v496, 0
        %v943 = vsel %vm506, %v938, 0
        %945 = vmatprep.subr.bf16.mxu0 0
        %946 = vmatpush1.bf16.xpose.msra.mxu0 %v943
        %947 = vmatprep.subr.bf16.mxu0 0
        %948 = vmatpush1.bf16.xpose.msra.mxu0 0
        %949 = vmatprep.subr.bf16.mxu0 0
        %950 = vmatpush1.bf16.xpose.msra.mxu0 0
        %951 = vmatprep.subr.bf16.mxu0 0
        %952 = vmatpush1.bf16.xpose.msra.mxu0 0
        %953 = vmatprep.subr.bf16.mxu0 0
        %954 = vmatpush1.bf16.xpose.msra.mxu0 0
        %955 = vmatprep.subr.bf16.mxu0 0
        %956 = vmatpush1.bf16.xpose.msra.mxu0 0
        %957 = vmatprep.subr.bf16.mxu0 0
        %958 = vmatpush1.bf16.xpose.msra.mxu0 0
        %959 = vmatprep.subr.bf16.mxu0 0
        %960 = vmatpush1.bf16.xpose.msra.mxu0 0
        %961 = vmatprep.subr.bf16.mxu0 0
        %962 = vmatpush1.bf16.xpose.msra.mxu0 0
        %963 = vmatprep.subr.bf16.mxu0 0
        %964 = vmatpush1.bf16.xpose.msra.mxu0 0
        %965 = vmatprep.subr.bf16.mxu0 0
        %966 = vmatpush1.bf16.xpose.msra.mxu0 0
        %967 = vmatprep.subr.bf16.mxu0 0
        %968 = vmatpush1.bf16.xpose.msra.mxu0 0
        %969 = vmatprep.subr.bf16.mxu0 0
        %970 = vmatpush1.bf16.xpose.msra.mxu0 0
        %971 = vmatprep.subr.bf16.mxu0 0
        %972 = vmatpush1.bf16.xpose.msra.mxu0 0
        %973 = vmatprep.subr.bf16.mxu0 0
        %974 = vmatpush1.bf16.xpose.msra.mxu0 0
        %975 = vmatprep.subr.bf16.mxu0 0
        %976 = vmatpush1.bf16.xpose.msra.mxu0 0
        %977 = vmatprep.mubr.bf16.mxu0 0
        %978 = vmatmul.mubr.bf16.gmra.mrb[0].mxu0 %v940
        %v979 = vpop.f32.mrb[0].mxu0
        %v980 = vadd.f32 %v503, %v979
        %v981 = vpop.f32.mrb[0].mxu0
        %v982 = vpop.f32.mrb[0].mxu0
        %v983 = vpop.f32.mrb[0].mxu0
        %984 = vdwg.mxu0
        %985 = vrot.lane.b32.xlu0 %v497, 96
        %v986 = vpop.permute.xlu0 %985
        %v988 = vsel %vm506, %v497, 0
        %v991 = vsel %vm506, %v986, 0
        %993 = vmatprep.subr.bf16.mxu0 0
        %994 = vmatpush1.bf16.xpose.msra.mxu0 %v991
        %995 = vmatprep.subr.bf16.mxu0 0
        %996 = vmatpush1.bf16.xpose.msra.mxu0 0
        %997 = vmatprep.subr.bf16.mxu0 0
        %998 = vmatpush1.bf16.xpose.msra.mxu0 0
        %999 = vmatprep.subr.bf16.mxu0 0
        %1000 = vmatpush1.bf16.xpose.msra.mxu0 0
        %1001 = vmatprep.subr.bf16.mxu0 0
        %1002 = vmatpush1.bf16.xpose.msra.mxu0 0
        %1003 = vmatprep.subr.bf16.mxu0 0
        %1004 = vmatpush1.bf16.xpose.msra.mxu0 0
        %1005 = vmatprep.subr.bf16.mxu0 0
        %1006 = vmatpush1.bf16.xpose.msra.mxu0 0
        %1007 = vmatprep.subr.bf16.mxu0 0
        %1008 = vmatpush1.bf16.xpose.msra.mxu0 0
        %1009 = vmatprep.subr.bf16.mxu0 0
        %1010 = vmatpush1.bf16.xpose.msra.mxu0 0
        %1011 = vmatprep.subr.bf16.mxu0 0
        %1012 = vmatpush1.bf16.xpose.msra.mxu0 0
        %1013 = vmatprep.subr.bf16.mxu0 0
        %1014 = vmatpush1.bf16.xpose.msra.mxu0 0
        %1015 = vmatprep.subr.bf16.mxu0 0
        %1016 = vmatpush1.bf16.xpose.msra.mxu0 0
        %1017 = vmatprep.subr.bf16.mxu0 0
        %1018 = vmatpush1.bf16.xpose.msra.mxu0 0
        %1019 = vmatprep.subr.bf16.mxu0 0
        %1020 = vmatpush1.bf16.xpose.msra.mxu0 0
        %1021 = vmatprep.subr.bf16.mxu0 0
        %1022 = vmatpush1.bf16.xpose.msra.mxu0 0
        %1023 = vmatprep.subr.bf16.mxu0 0
        %1024 = vmatpush1.bf16.xpose.msra.mxu0 0
        %1025 = vmatprep.mubr.bf16.mxu0 0
        %1026 = vmatmul.mubr.bf16.gmra.mrb[0].mxu0 %v988
        %v1027 = vpop.f32.mrb[0].mxu0
        %v1028 = vadd.f32 %v503, %v1027
        %v1029 = vpop.f32.mrb[0].mxu0
        %v1030 = vpop.f32.mrb[0].mxu0
        %v1031 = vpop.f32.mrb[0].mxu0
        %1032 = vdwg.mxu0
        %1033 = vrot.lane.b32.xlu0 %v498, 96
        %v1034 = vpop.permute.xlu0 %1033
        %v1036 = vsel %vm506, %v498, 0
        %v1039 = vsel %vm506, %v1034, 0
        %1041 = vmatprep.subr.bf16.mxu0 0
        %1042 = vmatpush1.bf16.xpose.msra.mxu0 %v1039
        %1043 = vmatprep.subr.bf16.mxu0 0
        %1044 = vmatpush1.bf16.xpose.msra.mxu0 0
        %1045 = vmatprep.subr.bf16.mxu0 0
        %1046 = vmatpush1.bf16.xpose.msra.mxu0 0
        %1047 = vmatprep.subr.bf16.mxu0 0
        %1048 = vmatpush1.bf16.xpose.msra.mxu0 0
        %1049 = vmatprep.subr.bf16.mxu0 0
        %1050 = vmatpush1.bf16.xpose.msra.mxu0 0
        %1051 = vmatprep.subr.bf16.mxu0 0
        %1052 = vmatpush1.bf16.xpose.msra.mxu0 0
        %1053 = vmatprep.subr.bf16.mxu0 0
        %1054 = vmatpush1.bf16.xpose.msra.mxu0 0
        %1055 = vmatprep.subr.bf16.mxu0 0
        %1056 = vmatpush1.bf16.xpose.msra.mxu0 0
        %1057 = vmatprep.subr.bf16.mxu0 0
        %1058 = vmatpush1.bf16.xpose.msra.mxu0 0
        %1059 = vmatprep.subr.bf16.mxu0 0
        %1060 = vmatpush1.bf16.xpose.msra.mxu0 0
        %1061 = vmatprep.subr.bf16.mxu0 0
        %1062 = vmatpush1.bf16.xpose.msra.mxu0 0
        %1063 = vmatprep.subr.bf16.mxu0 0
        %1064 = vmatpush1.bf16.xpose.msra.mxu0 0
        %1065 = vmatprep.subr.bf16.mxu0 0
        %1066 = vmatpush1.bf16.xpose.msra.mxu0 0
        %1067 = vmatprep.subr.bf16.mxu0 0
        %1068 = vmatpush1.bf16.xpose.msra.mxu0 0
        %1069 = vmatprep.subr.bf16.mxu0 0
        %1070 = vmatpush1.bf16.xpose.msra.mxu0 0
        %1071 = vmatprep.subr.bf16.mxu0 0
        %1072 = vmatpush1.bf16.xpose.msra.mxu0 0
        %1073 = vmatprep.mubr.bf16.mxu0 0
        %1074 = vmatmul.mubr.bf16.gmra.mrb[0].mxu0 %v1036
        %v1075 = vpop.f32.mrb[0].mxu0
        %v1076 = vadd.f32 %v503, %v1075
        %v1077 = vpop.f32.mrb[0].mxu0
        %v1078 = vpop.f32.mrb[0].mxu0
        %v1079 = vpop.f32.mrb[0].mxu0
        %1080 = vdwg.mxu0
        %1081 = vrot.lane.b32.xlu0 %v499, 96
        %v1082 = vpop.permute.xlu0 %1081
        %v1084 = vsel %vm506, %v499, 0
        %v1087 = vsel %vm506, %v1082, 0
        %1089 = vmatprep.subr.bf16.mxu0 0
        %1090 = vmatpush1.bf16.xpose.msra.mxu0 %v1087
        %1091 = vmatprep.subr.bf16.mxu0 0
        %1092 = vmatpush1.bf16.xpose.msra.mxu0 0
        %1093 = vmatprep.subr.bf16.mxu0 0
        %1094 = vmatpush1.bf16.xpose.msra.mxu0 0
        %1095 = vmatprep.subr.bf16.mxu0 0
        %1096 = vmatpush1.bf16.xpose.msra.mxu0 0
        %1097 = vmatprep.subr.bf16.mxu0 0
        %1098 = vmatpush1.bf16.xpose.msra.mxu0 0
        %1099 = vmatprep.subr.bf16.mxu0 0
        %1100 = vmatpush1.bf16.xpose.msra.mxu0 0
        %1101 = vmatprep.subr.bf16.mxu0 0
        %1102 = vmatpush1.bf16.xpose.msra.mxu0 0
        %1103 = vmatprep.subr.bf16.mxu0 0
        %1104 = vmatpush1.bf16.xpose.msra.mxu0 0
        %1105 = vmatprep.subr.bf16.mxu0 0
        %1106 = vmatpush1.bf16.xpose.msra.mxu0 0
        %1107 = vmatprep.subr.bf16.mxu0 0
        %1108 = vmatpush1.bf16.xpose.msra.mxu0 0
        %1109 = vmatprep.subr.bf16.mxu0 0
        %1110 = vmatpush1.bf16.xpose.msra.mxu0 0
        %1111 = vmatprep.subr.bf16.mxu0 0
        %1112 = vmatpush1.bf16.xpose.msra.mxu0 0
        %1113 = vmatprep.subr.bf16.mxu0 0
        %1114 = vmatpush1.bf16.xpose.msra.mxu0 0
        %1115 = vmatprep.subr.bf16.mxu0 0
        %1116 = vmatpush1.bf16.xpose.msra.mxu0 0
        %1117 = vmatprep.subr.bf16.mxu0 0
        %1118 = vmatpush1.bf16.xpose.msra.mxu0 0
        %1119 = vmatprep.subr.bf16.mxu0 0
        %1120 = vmatpush1.bf16.xpose.msra.mxu0 0
        %1121 = vmatprep.mubr.bf16.mxu0 0
        %1122 = vmatmul.mubr.bf16.gmra.mrb[0].mxu0 %v1084
        %v1123 = vpop.f32.mrb[0].mxu0
        %v1124 = vadd.f32 %v503, %v1123
        %v1125 = vpop.f32.mrb[0].mxu0
        %v1126 = vpop.f32.mrb[0].mxu0
        %v1127 = vpop.f32.mrb[0].mxu0
        %1128 = vdwg.mxu0
        %1129 = vrot.lane.b32.xlu0 %v500, 96
        %v1130 = vpop.permute.xlu0 %1129
        %v1132 = vsel %vm506, %v500, 0
        %v1135 = vsel %vm506, %v1130, 0
        %1137 = vmatprep.subr.bf16.mxu0 0
        %1138 = vmatpush1.bf16.xpose.msra.mxu0 %v1135
        %1139 = vmatprep.subr.bf16.mxu0 0
        %1140 = vmatpush1.bf16.xpose.msra.mxu0 0
        %1141 = vmatprep.subr.bf16.mxu0 0
        %1142 = vmatpush1.bf16.xpose.msra.mxu0 0
        %1143 = vmatprep.subr.bf16.mxu0 0
        %1144 = vmatpush1.bf16.xpose.msra.mxu0 0
        %1145 = vmatprep.subr.bf16.mxu0 0
        %1146 = vmatpush1.bf16.xpose.msra.mxu0 0
        %1147 = vmatprep.subr.bf16.mxu0 0
        %1148 = vmatpush1.bf16.xpose.msra.mxu0 0
        %1149 = vmatprep.subr.bf16.mxu0 0
        %1150 = vmatpush1.bf16.xpose.msra.mxu0 0
        %1151 = vmatprep.subr.bf16.mxu0 0
        %1152 = vmatpush1.bf16.xpose.msra.mxu0 0
        %1153 = vmatprep.subr.bf16.mxu0 0
        %1154 = vmatpush1.bf16.xpose.msra.mxu0 0
        %1155 = vmatprep.subr.bf16.mxu0 0
        %1156 = vmatpush1.bf16.xpose.msra.mxu0 0
        %1157 = vmatprep.subr.bf16.mxu0 0
        %1158 = vmatpush1.bf16.xpose.msra.mxu0 0
        %1159 = vmatprep.subr.bf16.mxu0 0
        %1160 = vmatpush1.bf16.xpose.msra.mxu0 0
        %1161 = vmatprep.subr.bf16.mxu0 0
        %1162 = vmatpush1.bf16.xpose.msra.mxu0 0
        %1163 = vmatprep.subr.bf16.mxu0 0
        %1164 = vmatpush1.bf16.xpose.msra.mxu0 0
        %1165 = vmatprep.subr.bf16.mxu0 0
        %1166 = vmatpush1.bf16.xpose.msra.mxu0 0
        %1167 = vmatprep.subr.bf16.mxu0 0
        %1168 = vmatpush1.bf16.xpose.msra.mxu0 0
        %1169 = vmatprep.mubr.bf16.mxu0 0
        %1170 = vmatmul.mubr.bf16.gmra.mrb[0].mxu0 %v1132
        %v1171 = vpop.f32.mrb[0].mxu0
        %v1172 = vadd.f32 %v503, %v1171
        %v1173 = vpop.f32.mrb[0].mxu0
        %v1174 = vpop.f32.mrb[0].mxu0
        %v1175 = vpop.f32.mrb[0].mxu0
        %1176 = vdwg.mxu0
        %1177 = vrot.lane.b32.xlu0 %v501, 96
        %v1178 = vpop.permute.xlu0 %1177
        %v1180 = vsel %vm506, %v501, 0
        %v1183 = vsel %vm506, %v1178, 0
        %1185 = vmatprep.subr.bf16.mxu0 0
        %1186 = vmatpush1.bf16.xpose.msra.mxu0 %v1183
        %1187 = vmatprep.subr.bf16.mxu0 0
        %1188 = vmatpush1.bf16.xpose.msra.mxu0 0
        %1189 = vmatprep.subr.bf16.mxu0 0
        %1190 = vmatpush1.bf16.xpose.msra.mxu0 0
        %1191 = vmatprep.subr.bf16.mxu0 0
        %1192 = vmatpush1.bf16.xpose.msra.mxu0 0
        %1193 = vmatprep.subr.bf16.mxu0 0
        %1194 = vmatpush1.bf16.xpose.msra.mxu0 0
        %1195 = vmatprep.subr.bf16.mxu0 0
        %1196 = vmatpush1.bf16.xpose.msra.mxu0 0
        %1197 = vmatprep.subr.bf16.mxu0 0
        %1198 = vmatpush1.bf16.xpose.msra.mxu0 0
        %1199 = vmatprep.subr.bf16.mxu0 0
        %1200 = vmatpush1.bf16.xpose.msra.mxu0 0
        %1201 = vmatprep.subr.bf16.mxu0 0
        %1202 = vmatpush1.bf16.xpose.msra.mxu0 0
        %1203 = vmatprep.subr.bf16.mxu0 0
        %1204 = vmatpush1.bf16.xpose.msra.mxu0 0
        %1205 = vmatprep.subr.bf16.mxu0 0
        %1206 = vmatpush1.bf16.xpose.msra.mxu0 0
        %1207 = vmatprep.subr.bf16.mxu0 0
        %1208 = vmatpush1.bf16.xpose.msra.mxu0 0
        %1209 = vmatprep.subr.bf16.mxu0 0
        %1210 = vmatpush1.bf16.xpose.msra.mxu0 0
        %1211 = vmatprep.subr.bf16.mxu0 0
        %1212 = vmatpush1.bf16.xpose.msra.mxu0 0
        %1213 = vmatprep.subr.bf16.mxu0 0
        %1214 = vmatpush1.bf16.xpose.msra.mxu0 0
        %1215 = vmatprep.subr.bf16.mxu0 0
        %1216 = vmatpush1.bf16.xpose.msra.mxu0 0
        %1217 = vmatprep.mubr.bf16.mxu0 0
        %1218 = vmatmul.mubr.bf16.gmra.mrb[0].mxu0 %v1180
        %v1219 = vpop.f32.mrb[0].mxu0
        %v1220 = vadd.f32 %v503, %v1219
        %v1221 = vpop.f32.mrb[0].mxu0
        %v1222 = vpop.f32.mrb[0].mxu0
        %v1223 = vpop.f32.mrb[0].mxu0
        %1224 = vdwg.mxu0
        %1225 = vrot.lane.b32.xlu0 %v502, 96
        %v1226 = vpop.permute.xlu0 %1225
        %v1228 = vsel %vm506, %v502, 0
        %v1231 = vsel %vm506, %v1226, 0
        %1233 = vmatprep.subr.bf16.mxu0 0
        %1234 = vmatpush1.bf16.xpose.msra.mxu0 %v1231
        %1235 = vmatprep.subr.bf16.mxu0 0
        %1236 = vmatpush1.bf16.xpose.msra.mxu0 0
        %1237 = vmatprep.subr.bf16.mxu0 0
        %1238 = vmatpush1.bf16.xpose.msra.mxu0 0
        %1239 = vmatprep.subr.bf16.mxu0 0
        %1240 = vmatpush1.bf16.xpose.msra.mxu0 0
        %1241 = vmatprep.subr.bf16.mxu0 0
        %1242 = vmatpush1.bf16.xpose.msra.mxu0 0
        %1243 = vmatprep.subr.bf16.mxu0 0
        %1244 = vmatpush1.bf16.xpose.msra.mxu0 0
        %1245 = vmatprep.subr.bf16.mxu0 0
        %1246 = vmatpush1.bf16.xpose.msra.mxu0 0
        %1247 = vmatprep.subr.bf16.mxu0 0
        %1248 = vmatpush1.bf16.xpose.msra.mxu0 0
        %1249 = vmatprep.subr.bf16.mxu0 0
        %1250 = vmatpush1.bf16.xpose.msra.mxu0 0
        %1251 = vmatprep.subr.bf16.mxu0 0
        %1252 = vmatpush1.bf16.xpose.msra.mxu0 0
        %1253 = vmatprep.subr.bf16.mxu0 0
        %1254 = vmatpush1.bf16.xpose.msra.mxu0 0
        %1255 = vmatprep.subr.bf16.mxu0 0
        %1256 = vmatpush1.bf16.xpose.msra.mxu0 0
        %1257 = vmatprep.subr.bf16.mxu0 0
        %1258 = vmatpush1.bf16.xpose.msra.mxu0 0
        %1259 = vmatprep.subr.bf16.mxu0 0
        %1260 = vmatpush1.bf16.xpose.msra.mxu0 0
        %1261 = vmatprep.subr.bf16.mxu0 0
        %1262 = vmatpush1.bf16.xpose.msra.mxu0 0
        %1263 = vmatprep.subr.bf16.mxu0 0
        %1264 = vmatpush1.bf16.xpose.msra.mxu0 0
        %1265 = vmatprep.mubr.bf16.mxu0 0
        %1266 = vmatmul.mubr.bf16.gmra.mrb[0].mxu0 %v1228
        %v1267 = vpop.f32.mrb[0].mxu0
        %v1268 = vadd.f32 %v503, %v1267
        %v1269 = vpop.f32.mrb[0].mxu0
        %v1270 = vpop.f32.mrb[0].mxu0
        %v1271 = vpop.f32.mrb[0].mxu0
        %1272 = vdwg.mxu0
        %v1273 = vsel %vm506, %v548, -inf
        %1274 = vmax.xlane.f32.xlu0 %v1273
        %v1275 = vpop.xlane.xlu0 %1274
        %v1276 = vsel %vm506, %v596, -inf
        %1277 = vmax.xlane.f32.xlu0 %v1276
        %v1278 = vpop.xlane.xlu0 %1277
        %v1279 = vsel %vm506, %v644, -inf
        %1280 = vmax.xlane.f32.xlu0 %v1279
        %v1281 = vpop.xlane.xlu0 %1280
        %v1282 = vsel %vm506, %v692, -inf
        %1283 = vmax.xlane.f32.xlu0 %v1282
        %v1284 = vpop.xlane.xlu0 %1283
        %v1285 = vsel %vm506, %v740, -inf
        %1286 = vmax.xlane.f32.xlu0 %v1285
        %v1287 = vpop.xlane.xlu0 %1286
        %v1288 = vsel %vm506, %v788, -inf
        %1289 = vmax.xlane.f32.xlu0 %v1288
        %v1290 = vpop.xlane.xlu0 %1289
        %v1291 = vsel %vm506, %v836, -inf
        %1292 = vmax.xlane.f32.xlu0 %v1291
        %v1293 = vpop.xlane.xlu0 %1292
        %v1294 = vsel %vm506, %v884, -inf
        %1295 = vmax.xlane.f32.xlu0 %v1294
        %v1296 = vpop.xlane.xlu0 %1295
        %v1297 = vsel %vm506, %v932, -inf
        %1298 = vmax.xlane.f32.xlu0 %v1297
        %v1299 = vpop.xlane.xlu0 %1298
        %v1300 = vsel %vm506, %v980, -inf
        %1301 = vmax.xlane.f32.xlu0 %v1300
        %v1302 = vpop.xlane.xlu0 %1301
        %v1303 = vsel %vm506, %v1028, -inf
        %1304 = vmax.xlane.f32.xlu0 %v1303
        %v1305 = vpop.xlane.xlu0 %1304
        %v1306 = vsel %vm506, %v1076, -inf
        %1307 = vmax.xlane.f32.xlu0 %v1306
        %v1308 = vpop.xlane.xlu0 %1307
        %v1309 = vsel %vm506, %v1124, -inf
        %1310 = vmax.xlane.f32.xlu0 %v1309
        %v1311 = vpop.xlane.xlu0 %1310
        %v1312 = vsel %vm506, %v1172, -inf
        %1313 = vmax.xlane.f32.xlu0 %v1312
        %v1314 = vpop.xlane.xlu0 %1313
        %v1315 = vsel %vm506, %v1220, -inf
        %1316 = vmax.xlane.f32.xlu0 %v1315
        %v1317 = vpop.xlane.xlu0 %1316
        %v1318 = vsel %vm506, %v1268, -inf
        %1319 = vmax.xlane.f32.xlu0 %v1318
        %v1320 = vpop.xlane.xlu0 %1319
        %v1321 = vsub.f32 %v548, %v1275
        %v1322 = vsub.f32 %v596, %v1278
        %v1323 = vsub.f32 %v644, %v1281
        %v1324 = vsub.f32 %v692, %v1284
        %v1325 = vsub.f32 %v740, %v1287
        %v1326 = vsub.f32 %v788, %v1290
        %v1327 = vsub.f32 %v836, %v1293
        %v1328 = vsub.f32 %v884, %v1296
        %v1329 = vsub.f32 %v932, %v1299
        %v1330 = vsub.f32 %v980, %v1302
        %v1331 = vsub.f32 %v1028, %v1305
        %v1332 = vsub.f32 %v1076, %v1308
        %v1333 = vsub.f32 %v1124, %v1311
        %v1334 = vsub.f32 %v1172, %v1314
        %v1335 = vsub.f32 %v1220, %v1317
        %v1336 = vsub.f32 %v1268, %v1320
        %v1337 = vmul.f32 %v1321, 1.442695
        %v1338 = vpow.pop %v1337
        %v1339 = vmul.f32 %v1322, 1.442695
        %v1340 = vpow.pop %v1339
        %v1341 = vmul.f32 %v1323, 1.442695
        %v1342 = vpow.pop %v1341
        %v1343 = vmul.f32 %v1324, 1.442695
        %v1344 = vpow.pop %v1343
        %v1345 = vmul.f32 %v1325, 1.442695
        %v1346 = vpow.pop %v1345
        %v1347 = vmul.f32 %v1326, 1.442695
        %v1348 = vpow.pop %v1347
        %v1349 = vmul.f32 %v1327, 1.442695
        %v1350 = vpow.pop %v1349
        %v1351 = vmul.f32 %v1328, 1.442695
        %v1352 = vpow.pop %v1351
        %v1353 = vmul.f32 %v1329, 1.442695
        %v1354 = vpow.pop %v1353
        %v1355 = vmul.f32 %v1330, 1.442695
        %v1356 = vpow.pop %v1355
        %v1357 = vmul.f32 %v1331, 1.442695
        %v1358 = vpow.pop %v1357
        %v1359 = vmul.f32 %v1332, 1.442695
        %v1360 = vpow.pop %v1359
        %v1361 = vmul.f32 %v1333, 1.442695
        %v1362 = vpow.pop %v1361
        %v1363 = vmul.f32 %v1334, 1.442695
        %v1364 = vpow.pop %v1363
        %v1365 = vmul.f32 %v1335, 1.442695
        %v1366 = vpow.pop %v1365
        %v1367 = vmul.f32 %v1336, 1.442695
        %v1368 = vpow.pop %v1367
        %v1369 = vsel %vm506, %v1338, 0.0
        %1370 = vadd.xlane.f32.xlu0 %v1369
        %v1371 = vpop.xlane.xlu0 %1370
        %v1372 = vsel %vm506, %v1340, 0.0
        %1373 = vadd.xlane.f32.xlu0 %v1372
        %v1374 = vpop.xlane.xlu0 %1373
        %v1375 = vsel %vm506, %v1342, 0.0
        %1376 = vadd.xlane.f32.xlu0 %v1375
        %v1377 = vpop.xlane.xlu0 %1376
        %v1378 = vsel %vm506, %v1344, 0.0
        %1379 = vadd.xlane.f32.xlu0 %v1378
        %v1380 = vpop.xlane.xlu0 %1379
        %v1381 = vsel %vm506, %v1346, 0.0
        %1382 = vadd.xlane.f32.xlu0 %v1381
        %v1383 = vpop.xlane.xlu0 %1382
        %v1384 = vsel %vm506, %v1348, 0.0
        %1385 = vadd.xlane.f32.xlu0 %v1384
        %v1386 = vpop.xlane.xlu0 %1385
        %v1387 = vsel %vm506, %v1350, 0.0
        %1388 = vadd.xlane.f32.xlu0 %v1387
        %v1389 = vpop.xlane.xlu0 %1388
        %v1390 = vsel %vm506, %v1352, 0.0
        %1391 = vadd.xlane.f32.xlu0 %v1390
        %v1392 = vpop.xlane.xlu0 %1391
        %v1393 = vsel %vm506, %v1354, 0.0
        %1394 = vadd.xlane.f32.xlu0 %v1393
        %v1395 = vpop.xlane.xlu0 %1394
        %v1396 = vsel %vm506, %v1356, 0.0
        %1397 = vadd.xlane.f32.xlu0 %v1396
        %v1398 = vpop.xlane.xlu0 %1397
        %v1399 = vsel %vm506, %v1358, 0.0
        %1400 = vadd.xlane.f32.xlu0 %v1399
        %v1401 = vpop.xlane.xlu0 %1400
        %v1402 = vsel %vm506, %v1360, 0.0
        %1403 = vadd.xlane.f32.xlu0 %v1402
        %v1404 = vpop.xlane.xlu0 %1403
        %v1405 = vsel %vm506, %v1362, 0.0
        %1406 = vadd.xlane.f32.xlu0 %v1405
        %v1407 = vpop.xlane.xlu0 %1406
        %v1408 = vsel %vm506, %v1364, 0.0
        %1409 = vadd.xlane.f32.xlu0 %v1408
        %v1410 = vpop.xlane.xlu0 %1409
        %v1411 = vsel %vm506, %v1366, 0.0
        %1412 = vadd.xlane.f32.xlu0 %v1411
        %v1413 = vpop.xlane.xlu0 %1412
        %v1414 = vsel %vm506, %v1368, 0.0
        %1415 = vadd.xlane.f32.xlu0 %v1414
        %v1416 = vpop.xlane.xlu0 %1415
        %v1417 = vrcp.pop %v1371
        %v1418 = vrcp.pop %v1374
        %v1419 = vrcp.pop %v1377
        %v1420 = vrcp.pop %v1380
        %v1421 = vrcp.pop %v1383
        %v1422 = vrcp.pop %v1386
        %v1423 = vrcp.pop %v1389
        %v1424 = vrcp.pop %v1392
        %v1425 = vrcp.pop %v1395
        %v1426 = vrcp.pop %v1398
        %v1427 = vrcp.pop %v1401
        %v1428 = vrcp.pop %v1404
        %v1429 = vrcp.pop %v1407
        %v1430 = vrcp.pop %v1410
        %v1431 = vrcp.pop %v1413
        %v1432 = vrcp.pop %v1416
        %v1433 = vmul.f32 %v1338, %v1417
        %v1434 = vmul.f32 %v1340, %v1418
        %v1435 = vmul.f32 %v1342, %v1419
        %v1436 = vmul.f32 %v1344, %v1420
        %v1437 = vmul.f32 %v1346, %v1421
        %v1438 = vmul.f32 %v1348, %v1422
        %v1439 = vmul.f32 %v1350, %v1423
        %v1440 = vmul.f32 %v1352, %v1424
        %v1441 = vmul.f32 %v1354, %v1425
        %v1442 = vmul.f32 %v1356, %v1426
        %v1443 = vmul.f32 %v1358, %v1427
        %v1444 = vmul.f32 %v1360, %v1428
        %v1445 = vmul.f32 %v1362, %v1429
        %v1446 = vmul.f32 %v1364, %v1430
        %v1447 = vmul.f32 %v1366, %v1431
        %v1448 = vmul.f32 %v1368, %v1432
        %v1449 = vpack.c.bf16 %v1433, %v1433
        %v1450 = vpack.c.bf16 %v1434, %v1434
        %v1451 = vpack.c.bf16 %v1435, %v1435
        %v1452 = vpack.c.bf16 %v1436, %v1436
        %v1453 = vpack.c.bf16 %v1437, %v1437
        %v1454 = vpack.c.bf16 %v1438, %v1438
        %v1455 = vpack.c.bf16 %v1439, %v1439
        %v1456 = vpack.c.bf16 %v1440, %v1440
        %v1457 = vpack.c.bf16 %v1441, %v1441
        %v1458 = vpack.c.bf16 %v1442, %v1442
        %v1459 = vpack.c.bf16 %v1443, %v1443
        %v1460 = vpack.c.bf16 %v1444, %v1444
        %v1461 = vpack.c.bf16 %v1445, %v1445
        %v1462 = vpack.c.bf16 %v1446, %v1446
        %v1463 = vpack.c.bf16 %v1447, %v1447
        %v1464 = vpack.c.bf16 %v1448, %v1448
        %1465 = vrot.lane.b32.xlu0 %v487, 64
        %v1466 = vpop.permute.xlu0 %1465
        %v1468 = vsel %vm506, %v1449, 0
        %vm1470 = vcmask 1043456
        %v1472 = vsel %vm1470, %v1466, 0
        %1474 = vmatprep.subr.bf16.mxu0 0
        %1475 = vmatpush1.bf16.msra.mxu0 %v1472
        %1476 = vmatprep.subr.bf16.mxu0 0
        %1477 = vmatpush1.bf16.msra.mxu0 0
        %1478 = vmatprep.subr.bf16.mxu0 0
        %1479 = vmatpush1.bf16.msra.mxu0 0
        %1480 = vmatprep.subr.bf16.mxu0 0
        %1481 = vmatpush1.bf16.msra.mxu0 0
        %1482 = vmatprep.subr.bf16.mxu0 0
        %1483 = vmatpush1.bf16.msra.mxu0 0
        %1484 = vmatprep.subr.bf16.mxu0 0
        %1485 = vmatpush1.bf16.msra.mxu0 0
        %1486 = vmatprep.subr.bf16.mxu0 0
        %1487 = vmatpush1.bf16.msra.mxu0 0
        %1488 = vmatprep.subr.bf16.mxu0 0
        %1489 = vmatpush1.bf16.msra.mxu0 0
        %1490 = vmatprep.subr.bf16.mxu0 0
        %1491 = vmatpush1.bf16.msra.mxu0 0
        %1492 = vmatprep.subr.bf16.mxu0 0
        %1493 = vmatpush1.bf16.msra.mxu0 0
        %1494 = vmatprep.subr.bf16.mxu0 0
        %1495 = vmatpush1.bf16.msra.mxu0 0
        %1496 = vmatprep.subr.bf16.mxu0 0
        %1497 = vmatpush1.bf16.msra.mxu0 0
        %1498 = vmatprep.subr.bf16.mxu0 0
        %1499 = vmatpush1.bf16.msra.mxu0 0
        %1500 = vmatprep.subr.bf16.mxu0 0
        %1501 = vmatpush1.bf16.msra.mxu0 0
        %1502 = vmatprep.subr.bf16.mxu0 0
        %1503 = vmatpush1.bf16.msra.mxu0 0
        %1504 = vmatprep.subr.bf16.mxu0 0
        %1505 = vmatpush1.bf16.msra.mxu0 0
        %1506 = vmatprep.mubr.bf16.mxu0 0
        %1507 = vmatmul.mubr.bf16.gmra.mrb[0].mxu0 %v1468
        %v1508 = vpop.f32.mrb[0].mxu0
        %v1509 = vadd.f32 0.0, %v1508
        %v1510 = vpop.f32.mrb[0].mxu0
        %v1511 = vpop.f32.mrb[0].mxu0
        %v1512 = vpop.f32.mrb[0].mxu0
        %1513 = vdwg.mxu0
        %1514 = vrot.lane.b32.xlu0 %v488, 64
        %v1515 = vpop.permute.xlu0 %1514
        %v1517 = vsel %vm506, %v1450, 0
        %v1520 = vsel %vm1470, %v1515, 0
        %1522 = vmatprep.subr.bf16.mxu0 0
        %1523 = vmatpush1.bf16.msra.mxu0 %v1520
        %1524 = vmatprep.subr.bf16.mxu0 0
        %1525 = vmatpush1.bf16.msra.mxu0 0
        %1526 = vmatprep.subr.bf16.mxu0 0
        %1527 = vmatpush1.bf16.msra.mxu0 0
        %1528 = vmatprep.subr.bf16.mxu0 0
        %1529 = vmatpush1.bf16.msra.mxu0 0
        %1530 = vmatprep.subr.bf16.mxu0 0
        %1531 = vmatpush1.bf16.msra.mxu0 0
        %1532 = vmatprep.subr.bf16.mxu0 0
        %1533 = vmatpush1.bf16.msra.mxu0 0
        %1534 = vmatprep.subr.bf16.mxu0 0
        %1535 = vmatpush1.bf16.msra.mxu0 0
        %1536 = vmatprep.subr.bf16.mxu0 0
        %1537 = vmatpush1.bf16.msra.mxu0 0
        %1538 = vmatprep.subr.bf16.mxu0 0
        %1539 = vmatpush1.bf16.msra.mxu0 0
        %1540 = vmatprep.subr.bf16.mxu0 0
        %1541 = vmatpush1.bf16.msra.mxu0 0
        %1542 = vmatprep.subr.bf16.mxu0 0
        %1543 = vmatpush1.bf16.msra.mxu0 0
        %1544 = vmatprep.subr.bf16.mxu0 0
        %1545 = vmatpush1.bf16.msra.mxu0 0
        %1546 = vmatprep.subr.bf16.mxu0 0
        %1547 = vmatpush1.bf16.msra.mxu0 0
        %1548 = vmatprep.subr.bf16.mxu0 0
        %1549 = vmatpush1.bf16.msra.mxu0 0
        %1550 = vmatprep.subr.bf16.mxu0 0
        %1551 = vmatpush1.bf16.msra.mxu0 0
        %1552 = vmatprep.subr.bf16.mxu0 0
        %1553 = vmatpush1.bf16.msra.mxu0 0
        %1554 = vmatprep.mubr.bf16.mxu0 0
        %1555 = vmatmul.mubr.bf16.gmra.mrb[0].mxu0 %v1517
        %v1556 = vpop.f32.mrb[0].mxu0
        %v1557 = vadd.f32 0.0, %v1556
        %v1558 = vpop.f32.mrb[0].mxu0
        %v1559 = vpop.f32.mrb[0].mxu0
        %v1560 = vpop.f32.mrb[0].mxu0
        %1561 = vdwg.mxu0
        %1562 = vrot.lane.b32.xlu0 %v489, 64
        %v1563 = vpop.permute.xlu0 %1562
        %v1565 = vsel %vm506, %v1451, 0
        %v1568 = vsel %vm1470, %v1563, 0
        %1570 = vmatprep.subr.bf16.mxu0 0
        %1571 = vmatpush1.bf16.msra.mxu0 %v1568
        %1572 = vmatprep.subr.bf16.mxu0 0
        %1573 = vmatpush1.bf16.msra.mxu0 0
        %1574 = vmatprep.subr.bf16.mxu0 0
        %1575 = vmatpush1.bf16.msra.mxu0 0
        %1576 = vmatprep.subr.bf16.mxu0 0
        %1577 = vmatpush1.bf16.msra.mxu0 0
        %1578 = vmatprep.subr.bf16.mxu0 0
        %1579 = vmatpush1.bf16.msra.mxu0 0
        %1580 = vmatprep.subr.bf16.mxu0 0
        %1581 = vmatpush1.bf16.msra.mxu0 0
        %1582 = vmatprep.subr.bf16.mxu0 0
        %1583 = vmatpush1.bf16.msra.mxu0 0
        %1584 = vmatprep.subr.bf16.mxu0 0
        %1585 = vmatpush1.bf16.msra.mxu0 0
        %1586 = vmatprep.subr.bf16.mxu0 0
        %1587 = vmatpush1.bf16.msra.mxu0 0
        %1588 = vmatprep.subr.bf16.mxu0 0
        %1589 = vmatpush1.bf16.msra.mxu0 0
        %1590 = vmatprep.subr.bf16.mxu0 0
        %1591 = vmatpush1.bf16.msra.mxu0 0
        %1592 = vmatprep.subr.bf16.mxu0 0
        %1593 = vmatpush1.bf16.msra.mxu0 0
        %1594 = vmatprep.subr.bf16.mxu0 0
        %1595 = vmatpush1.bf16.msra.mxu0 0
        %1596 = vmatprep.subr.bf16.mxu0 0
        %1597 = vmatpush1.bf16.msra.mxu0 0
        %1598 = vmatprep.subr.bf16.mxu0 0
        %1599 = vmatpush1.bf16.msra.mxu0 0
        %1600 = vmatprep.subr.bf16.mxu0 0
        %1601 = vmatpush1.bf16.msra.mxu0 0
        %1602 = vmatprep.mubr.bf16.mxu0 0
        %1603 = vmatmul.mubr.bf16.gmra.mrb[0].mxu0 %v1565
        %v1604 = vpop.f32.mrb[0].mxu0
        %v1605 = vadd.f32 0.0, %v1604
        %v1606 = vpop.f32.mrb[0].mxu0
        %v1607 = vpop.f32.mrb[0].mxu0
        %v1608 = vpop.f32.mrb[0].mxu0
        %1609 = vdwg.mxu0
        %1610 = vrot.lane.b32.xlu0 %v490, 64
        %v1611 = vpop.permute.xlu0 %1610
        %v1613 = vsel %vm506, %v1452, 0
        %v1616 = vsel %vm1470, %v1611, 0
        %1618 = vmatprep.subr.bf16.mxu0 0
        %1619 = vmatpush1.bf16.msra.mxu0 %v1616
        %1620 = vmatprep.subr.bf16.mxu0 0
        %1621 = vmatpush1.bf16.msra.mxu0 0
        %1622 = vmatprep.subr.bf16.mxu0 0
        %1623 = vmatpush1.bf16.msra.mxu0 0
        %1624 = vmatprep.subr.bf16.mxu0 0
        %1625 = vmatpush1.bf16.msra.mxu0 0
        %1626 = vmatprep.subr.bf16.mxu0 0
        %1627 = vmatpush1.bf16.msra.mxu0 0
        %1628 = vmatprep.subr.bf16.mxu0 0
        %1629 = vmatpush1.bf16.msra.mxu0 0
        %1630 = vmatprep.subr.bf16.mxu0 0
        %1631 = vmatpush1.bf16.msra.mxu0 0
        %1632 = vmatprep.subr.bf16.mxu0 0
        %1633 = vmatpush1.bf16.msra.mxu0 0
        %1634 = vmatprep.subr.bf16.mxu0 0
        %1635 = vmatpush1.bf16.msra.mxu0 0
        %1636 = vmatprep.subr.bf16.mxu0 0
        %1637 = vmatpush1.bf16.msra.mxu0 0
        %1638 = vmatprep.subr.bf16.mxu0 0
        %1639 = vmatpush1.bf16.msra.mxu0 0
        %1640 = vmatprep.subr.bf16.mxu0 0
        %1641 = vmatpush1.bf16.msra.mxu0 0
        %1642 = vmatprep.subr.bf16.mxu0 0
        %1643 = vmatpush1.bf16.msra.mxu0 0
        %1644 = vmatprep.subr.bf16.mxu0 0
        %1645 = vmatpush1.bf16.msra.mxu0 0
        %1646 = vmatprep.subr.bf16.mxu0 0
        %1647 = vmatpush1.bf16.msra.mxu0 0
        %1648 = vmatprep.subr.bf16.mxu0 0
        %1649 = vmatpush1.bf16.msra.mxu0 0
        %1650 = vmatprep.mubr.bf16.mxu0 0
        %1651 = vmatmul.mubr.bf16.gmra.mrb[0].mxu0 %v1613
        %v1652 = vpop.f32.mrb[0].mxu0
        %v1653 = vadd.f32 0.0, %v1652
        %v1654 = vpop.f32.mrb[0].mxu0
        %v1655 = vpop.f32.mrb[0].mxu0
        %v1656 = vpop.f32.mrb[0].mxu0
        %1657 = vdwg.mxu0
        %1658 = vrot.lane.b32.xlu0 %v491, 64
        %v1659 = vpop.permute.xlu0 %1658
        %v1661 = vsel %vm506, %v1453, 0
        %v1664 = vsel %vm1470, %v1659, 0
        %1666 = vmatprep.subr.bf16.mxu0 0
        %1667 = vmatpush1.bf16.msra.mxu0 %v1664
        %1668 = vmatprep.subr.bf16.mxu0 0
        %1669 = vmatpush1.bf16.msra.mxu0 0
        %1670 = vmatprep.subr.bf16.mxu0 0
        %1671 = vmatpush1.bf16.msra.mxu0 0
        %1672 = vmatprep.subr.bf16.mxu0 0
        %1673 = vmatpush1.bf16.msra.mxu0 0
        %1674 = vmatprep.subr.bf16.mxu0 0
        %1675 = vmatpush1.bf16.msra.mxu0 0
        %1676 = vmatprep.subr.bf16.mxu0 0
        %1677 = vmatpush1.bf16.msra.mxu0 0
        %1678 = vmatprep.subr.bf16.mxu0 0
        %1679 = vmatpush1.bf16.msra.mxu0 0
        %1680 = vmatprep.subr.bf16.mxu0 0
        %1681 = vmatpush1.bf16.msra.mxu0 0
        %1682 = vmatprep.subr.bf16.mxu0 0
        %1683 = vmatpush1.bf16.msra.mxu0 0
        %1684 = vmatprep.subr.bf16.mxu0 0
        %1685 = vmatpush1.bf16.msra.mxu0 0
        %1686 = vmatprep.subr.bf16.mxu0 0
        %1687 = vmatpush1.bf16.msra.mxu0 0
        %1688 = vmatprep.subr.bf16.mxu0 0
        %1689 = vmatpush1.bf16.msra.mxu0 0
        %1690 = vmatprep.subr.bf16.mxu0 0
        %1691 = vmatpush1.bf16.msra.mxu0 0
        %1692 = vmatprep.subr.bf16.mxu0 0
        %1693 = vmatpush1.bf16.msra.mxu0 0
        %1694 = vmatprep.subr.bf16.mxu0 0
        %1695 = vmatpush1.bf16.msra.mxu0 0
        %1696 = vmatprep.subr.bf16.mxu0 0
        %1697 = vmatpush1.bf16.msra.mxu0 0
        %1698 = vmatprep.mubr.bf16.mxu0 0
        %1699 = vmatmul.mubr.bf16.gmra.mrb[0].mxu0 %v1661
        %v1700 = vpop.f32.mrb[0].mxu0
        %v1701 = vadd.f32 0.0, %v1700
        %v1702 = vpop.f32.mrb[0].mxu0
        %v1703 = vpop.f32.mrb[0].mxu0
        %v1704 = vpop.f32.mrb[0].mxu0
        %1705 = vdwg.mxu0
        %1706 = vrot.lane.b32.xlu0 %v492, 64
        %v1707 = vpop.permute.xlu0 %1706
        %v1709 = vsel %vm506, %v1454, 0
        %v1712 = vsel %vm1470, %v1707, 0
        %1714 = vmatprep.subr.bf16.mxu0 0
        %1715 = vmatpush1.bf16.msra.mxu0 %v1712
        %1716 = vmatprep.subr.bf16.mxu0 0
        %1717 = vmatpush1.bf16.msra.mxu0 0
        %1718 = vmatprep.subr.bf16.mxu0 0
        %1719 = vmatpush1.bf16.msra.mxu0 0
        %1720 = vmatprep.subr.bf16.mxu0 0
        %1721 = vmatpush1.bf16.msra.mxu0 0
        %1722 = vmatprep.subr.bf16.mxu0 0
        %1723 = vmatpush1.bf16.msra.mxu0 0
        %1724 = vmatprep.subr.bf16.mxu0 0
        %1725 = vmatpush1.bf16.msra.mxu0 0
        %1726 = vmatprep.subr.bf16.mxu0 0
        %1727 = vmatpush1.bf16.msra.mxu0 0
        %1728 = vmatprep.subr.bf16.mxu0 0
        %1729 = vmatpush1.bf16.msra.mxu0 0
        %1730 = vmatprep.subr.bf16.mxu0 0
        %1731 = vmatpush1.bf16.msra.mxu0 0
        %1732 = vmatprep.subr.bf16.mxu0 0
        %1733 = vmatpush1.bf16.msra.mxu0 0
        %1734 = vmatprep.subr.bf16.mxu0 0
        %1735 = vmatpush1.bf16.msra.mxu0 0
        %1736 = vmatprep.subr.bf16.mxu0 0
        %1737 = vmatpush1.bf16.msra.mxu0 0
        %1738 = vmatprep.subr.bf16.mxu0 0
        %1739 = vmatpush1.bf16.msra.mxu0 0
        %1740 = vmatprep.subr.bf16.mxu0 0
        %1741 = vmatpush1.bf16.msra.mxu0 0
        %1742 = vmatprep.subr.bf16.mxu0 0
        %1743 = vmatpush1.bf16.msra.mxu0 0
        %1744 = vmatprep.subr.bf16.mxu0 0
        %1745 = vmatpush1.bf16.msra.mxu0 0
        %1746 = vmatprep.mubr.bf16.mxu0 0
        %1747 = vmatmul.mubr.bf16.gmra.mrb[0].mxu0 %v1709
        %v1748 = vpop.f32.mrb[0].mxu0
        %v1749 = vadd.f32 0.0, %v1748
        %v1750 = vpop.f32.mrb[0].mxu0
        %v1751 = vpop.f32.mrb[0].mxu0
        %v1752 = vpop.f32.mrb[0].mxu0
        %1753 = vdwg.mxu0
        %1754 = vrot.lane.b32.xlu0 %v493, 64
        %v1755 = vpop.permute.xlu0 %1754
        %v1757 = vsel %vm506, %v1455, 0
        %v1760 = vsel %vm1470, %v1755, 0
        %1762 = vmatprep.subr.bf16.mxu0 0
        %1763 = vmatpush1.bf16.msra.mxu0 %v1760
        %1764 = vmatprep.subr.bf16.mxu0 0
        %1765 = vmatpush1.bf16.msra.mxu0 0
        %1766 = vmatprep.subr.bf16.mxu0 0
        %1767 = vmatpush1.bf16.msra.mxu0 0
        %1768 = vmatprep.subr.bf16.mxu0 0
        %1769 = vmatpush1.bf16.msra.mxu0 0
        %1770 = vmatprep.subr.bf16.mxu0 0
        %1771 = vmatpush1.bf16.msra.mxu0 0
        %1772 = vmatprep.subr.bf16.mxu0 0
        %1773 = vmatpush1.bf16.msra.mxu0 0
        %1774 = vmatprep.subr.bf16.mxu0 0
        %1775 = vmatpush1.bf16.msra.mxu0 0
        %1776 = vmatprep.subr.bf16.mxu0 0
        %1777 = vmatpush1.bf16.msra.mxu0 0
        %1778 = vmatprep.subr.bf16.mxu0 0
        %1779 = vmatpush1.bf16.msra.mxu0 0
        %1780 = vmatprep.subr.bf16.mxu0 0
        %1781 = vmatpush1.bf16.msra.mxu0 0
        %1782 = vmatprep.subr.bf16.mxu0 0
        %1783 = vmatpush1.bf16.msra.mxu0 0
        %1784 = vmatprep.subr.bf16.mxu0 0
        %1785 = vmatpush1.bf16.msra.mxu0 0
        %1786 = vmatprep.subr.bf16.mxu0 0
        %1787 = vmatpush1.bf16.msra.mxu0 0
        %1788 = vmatprep.subr.bf16.mxu0 0
        %1789 = vmatpush1.bf16.msra.mxu0 0
        %1790 = vmatprep.subr.bf16.mxu0 0
        %1791 = vmatpush1.bf16.msra.mxu0 0
        %1792 = vmatprep.subr.bf16.mxu0 0
        %1793 = vmatpush1.bf16.msra.mxu0 0
        %1794 = vmatprep.mubr.bf16.mxu0 0
        %1795 = vmatmul.mubr.bf16.gmra.mrb[0].mxu0 %v1757
        %v1796 = vpop.f32.mrb[0].mxu0
        %v1797 = vadd.f32 0.0, %v1796
        %v1798 = vpop.f32.mrb[0].mxu0
        %v1799 = vpop.f32.mrb[0].mxu0
        %v1800 = vpop.f32.mrb[0].mxu0
        %1801 = vdwg.mxu0
        %1802 = vrot.lane.b32.xlu0 %v494, 64
        %v1803 = vpop.permute.xlu0 %1802
        %v1805 = vsel %vm506, %v1456, 0
        %v1808 = vsel %vm1470, %v1803, 0
        %1810 = vmatprep.subr.bf16.mxu0 0
        %1811 = vmatpush1.bf16.msra.mxu0 %v1808
        %1812 = vmatprep.subr.bf16.mxu0 0
        %1813 = vmatpush1.bf16.msra.mxu0 0
        %1814 = vmatprep.subr.bf16.mxu0 0
        %1815 = vmatpush1.bf16.msra.mxu0 0
        %1816 = vmatprep.subr.bf16.mxu0 0
        %1817 = vmatpush1.bf16.msra.mxu0 0
        %1818 = vmatprep.subr.bf16.mxu0 0
        %1819 = vmatpush1.bf16.msra.mxu0 0
        %1820 = vmatprep.subr.bf16.mxu0 0
        %1821 = vmatpush1.bf16.msra.mxu0 0
        %1822 = vmatprep.subr.bf16.mxu0 0
        %1823 = vmatpush1.bf16.msra.mxu0 0
        %1824 = vmatprep.subr.bf16.mxu0 0
        %1825 = vmatpush1.bf16.msra.mxu0 0
        %1826 = vmatprep.subr.bf16.mxu0 0
        %1827 = vmatpush1.bf16.msra.mxu0 0
        %1828 = vmatprep.subr.bf16.mxu0 0
        %1829 = vmatpush1.bf16.msra.mxu0 0
        %1830 = vmatprep.subr.bf16.mxu0 0
        %1831 = vmatpush1.bf16.msra.mxu0 0
        %1832 = vmatprep.subr.bf16.mxu0 0
        %1833 = vmatpush1.bf16.msra.mxu0 0
        %1834 = vmatprep.subr.bf16.mxu0 0
        %1835 = vmatpush1.bf16.msra.mxu0 0
        %1836 = vmatprep.subr.bf16.mxu0 0
        %1837 = vmatpush1.bf16.msra.mxu0 0
        %1838 = vmatprep.subr.bf16.mxu0 0
        %1839 = vmatpush1.bf16.msra.mxu0 0
        %1840 = vmatprep.subr.bf16.mxu0 0
        %1841 = vmatpush1.bf16.msra.mxu0 0
        %1842 = vmatprep.mubr.bf16.mxu0 0
        %1843 = vmatmul.mubr.bf16.gmra.mrb[0].mxu0 %v1805
        %v1844 = vpop.f32.mrb[0].mxu0
        %v1845 = vadd.f32 0.0, %v1844
        %v1846 = vpop.f32.mrb[0].mxu0
        %v1847 = vpop.f32.mrb[0].mxu0
        %v1848 = vpop.f32.mrb[0].mxu0
        %1849 = vdwg.mxu0
        %1850 = vrot.lane.b32.xlu0 %v495, 64
        %v1851 = vpop.permute.xlu0 %1850
        %v1853 = vsel %vm506, %v1457, 0
        %v1856 = vsel %vm1470, %v1851, 0
        %1858 = vmatprep.subr.bf16.mxu0 0
        %1859 = vmatpush1.bf16.msra.mxu0 %v1856
        %1860 = vmatprep.subr.bf16.mxu0 0
        %1861 = vmatpush1.bf16.msra.mxu0 0
        %1862 = vmatprep.subr.bf16.mxu0 0
        %1863 = vmatpush1.bf16.msra.mxu0 0
        %1864 = vmatprep.subr.bf16.mxu0 0
        %1865 = vmatpush1.bf16.msra.mxu0 0
        %1866 = vmatprep.subr.bf16.mxu0 0
        %1867 = vmatpush1.bf16.msra.mxu0 0
        %1868 = vmatprep.subr.bf16.mxu0 0
        %1869 = vmatpush1.bf16.msra.mxu0 0
        %1870 = vmatprep.subr.bf16.mxu0 0
        %1871 = vmatpush1.bf16.msra.mxu0 0
        %1872 = vmatprep.subr.bf16.mxu0 0
        %1873 = vmatpush1.bf16.msra.mxu0 0
        %1874 = vmatprep.subr.bf16.mxu0 0
        %1875 = vmatpush1.bf16.msra.mxu0 0
        %1876 = vmatprep.subr.bf16.mxu0 0
        %1877 = vmatpush1.bf16.msra.mxu0 0
        %1878 = vmatprep.subr.bf16.mxu0 0
        %1879 = vmatpush1.bf16.msra.mxu0 0
        %1880 = vmatprep.subr.bf16.mxu0 0
        %1881 = vmatpush1.bf16.msra.mxu0 0
        %1882 = vmatprep.subr.bf16.mxu0 0
        %1883 = vmatpush1.bf16.msra.mxu0 0
        %1884 = vmatprep.subr.bf16.mxu0 0
        %1885 = vmatpush1.bf16.msra.mxu0 0
        %1886 = vmatprep.subr.bf16.mxu0 0
        %1887 = vmatpush1.bf16.msra.mxu0 0
        %1888 = vmatprep.subr.bf16.mxu0 0
        %1889 = vmatpush1.bf16.msra.mxu0 0
        %1890 = vmatprep.mubr.bf16.mxu0 0
        %1891 = vmatmul.mubr.bf16.gmra.mrb[0].mxu0 %v1853
        %v1892 = vpop.f32.mrb[0].mxu0
        %v1893 = vadd.f32 0.0, %v1892
        %v1894 = vpop.f32.mrb[0].mxu0
        %v1895 = vpop.f32.mrb[0].mxu0
        %v1896 = vpop.f32.mrb[0].mxu0
        %1897 = vdwg.mxu0
        %1898 = vrot.lane.b32.xlu0 %v496, 64
        %v1899 = vpop.permute.xlu0 %1898
        %v1901 = vsel %vm506, %v1458, 0
        %v1904 = vsel %vm1470, %v1899, 0
        %1906 = vmatprep.subr.bf16.mxu0 0
        %1907 = vmatpush1.bf16.msra.mxu0 %v1904
        %1908 = vmatprep.subr.bf16.mxu0 0
        %1909 = vmatpush1.bf16.msra.mxu0 0
        %1910 = vmatprep.subr.bf16.mxu0 0
        %1911 = vmatpush1.bf16.msra.mxu0 0
        %1912 = vmatprep.subr.bf16.mxu0 0
        %1913 = vmatpush1.bf16.msra.mxu0 0
        %1914 = vmatprep.subr.bf16.mxu0 0
        %1915 = vmatpush1.bf16.msra.mxu0 0
        %1916 = vmatprep.subr.bf16.mxu0 0
        %1917 = vmatpush1.bf16.msra.mxu0 0
        %1918 = vmatprep.subr.bf16.mxu0 0
        %1919 = vmatpush1.bf16.msra.mxu0 0
        %1920 = vmatprep.subr.bf16.mxu0 0
        %1921 = vmatpush1.bf16.msra.mxu0 0
        %1922 = vmatprep.subr.bf16.mxu0 0
        %1923 = vmatpush1.bf16.msra.mxu0 0
        %1924 = vmatprep.subr.bf16.mxu0 0
        %1925 = vmatpush1.bf16.msra.mxu0 0
        %1926 = vmatprep.subr.bf16.mxu0 0
        %1927 = vmatpush1.bf16.msra.mxu0 0
        %1928 = vmatprep.subr.bf16.mxu0 0
        %1929 = vmatpush1.bf16.msra.mxu0 0
        %1930 = vmatprep.subr.bf16.mxu0 0
        %1931 = vmatpush1.bf16.msra.mxu0 0
        %1932 = vmatprep.subr.bf16.mxu0 0
        %1933 = vmatpush1.bf16.msra.mxu0 0
        %1934 = vmatprep.subr.bf16.mxu0 0
        %1935 = vmatpush1.bf16.msra.mxu0 0
        %1936 = vmatprep.subr.bf16.mxu0 0
        %1937 = vmatpush1.bf16.msra.mxu0 0
        %1938 = vmatprep.mubr.bf16.mxu0 0
        %1939 = vmatmul.mubr.bf16.gmra.mrb[0].mxu0 %v1901
        %v1940 = vpop.f32.mrb[0].mxu0
        %v1941 = vadd.f32 0.0, %v1940
        %v1942 = vpop.f32.mrb[0].mxu0
        %v1943 = vpop.f32.mrb[0].mxu0
        %v1944 = vpop.f32.mrb[0].mxu0
        %1945 = vdwg.mxu0
        %1946 = vrot.lane.b32.xlu0 %v497, 64
        %v1947 = vpop.permute.xlu0 %1946
        %v1949 = vsel %vm506, %v1459, 0
        %v1952 = vsel %vm1470, %v1947, 0
        %1954 = vmatprep.subr.bf16.mxu0 0
        %1955 = vmatpush1.bf16.msra.mxu0 %v1952
        %1956 = vmatprep.subr.bf16.mxu0 0
        %1957 = vmatpush1.bf16.msra.mxu0 0
        %1958 = vmatprep.subr.bf16.mxu0 0
        %1959 = vmatpush1.bf16.msra.mxu0 0
        %1960 = vmatprep.subr.bf16.mxu0 0
        %1961 = vmatpush1.bf16.msra.mxu0 0
        %1962 = vmatprep.subr.bf16.mxu0 0
        %1963 = vmatpush1.bf16.msra.mxu0 0
        %1964 = vmatprep.subr.bf16.mxu0 0
        %1965 = vmatpush1.bf16.msra.mxu0 0
        %1966 = vmatprep.subr.bf16.mxu0 0
        %1967 = vmatpush1.bf16.msra.mxu0 0
        %1968 = vmatprep.subr.bf16.mxu0 0
        %1969 = vmatpush1.bf16.msra.mxu0 0
        %1970 = vmatprep.subr.bf16.mxu0 0
        %1971 = vmatpush1.bf16.msra.mxu0 0
        %1972 = vmatprep.subr.bf16.mxu0 0
        %1973 = vmatpush1.bf16.msra.mxu0 0
        %1974 = vmatprep.subr.bf16.mxu0 0
        %1975 = vmatpush1.bf16.msra.mxu0 0
        %1976 = vmatprep.subr.bf16.mxu0 0
        %1977 = vmatpush1.bf16.msra.mxu0 0
        %1978 = vmatprep.subr.bf16.mxu0 0
        %1979 = vmatpush1.bf16.msra.mxu0 0
        %1980 = vmatprep.subr.bf16.mxu0 0
        %1981 = vmatpush1.bf16.msra.mxu0 0
        %1982 = vmatprep.subr.bf16.mxu0 0
        %1983 = vmatpush1.bf16.msra.mxu0 0
        %1984 = vmatprep.subr.bf16.mxu0 0
        %1985 = vmatpush1.bf16.msra.mxu0 0
        %1986 = vmatprep.mubr.bf16.mxu0 0
        %1987 = vmatmul.mubr.bf16.gmra.mrb[0].mxu0 %v1949
        %v1988 = vpop.f32.mrb[0].mxu0
        %v1989 = vadd.f32 0.0, %v1988
        %v1990 = vpop.f32.mrb[0].mxu0
        %v1991 = vpop.f32.mrb[0].mxu0
        %v1992 = vpop.f32.mrb[0].mxu0
        %1993 = vdwg.mxu0
        %1994 = vrot.lane.b32.xlu0 %v498, 64
        %v1995 = vpop.permute.xlu0 %1994
        %v1997 = vsel %vm506, %v1460, 0
        %v2000 = vsel %vm1470, %v1995, 0
        %2002 = vmatprep.subr.bf16.mxu0 0
        %2003 = vmatpush1.bf16.msra.mxu0 %v2000
        %2004 = vmatprep.subr.bf16.mxu0 0
        %2005 = vmatpush1.bf16.msra.mxu0 0
        %2006 = vmatprep.subr.bf16.mxu0 0
        %2007 = vmatpush1.bf16.msra.mxu0 0
        %2008 = vmatprep.subr.bf16.mxu0 0
        %2009 = vmatpush1.bf16.msra.mxu0 0
        %2010 = vmatprep.subr.bf16.mxu0 0
        %2011 = vmatpush1.bf16.msra.mxu0 0
        %2012 = vmatprep.subr.bf16.mxu0 0
        %2013 = vmatpush1.bf16.msra.mxu0 0
        %2014 = vmatprep.subr.bf16.mxu0 0
        %2015 = vmatpush1.bf16.msra.mxu0 0
        %2016 = vmatprep.subr.bf16.mxu0 0
        %2017 = vmatpush1.bf16.msra.mxu0 0
        %2018 = vmatprep.subr.bf16.mxu0 0
        %2019 = vmatpush1.bf16.msra.mxu0 0
        %2020 = vmatprep.subr.bf16.mxu0 0
        %2021 = vmatpush1.bf16.msra.mxu0 0
        %2022 = vmatprep.subr.bf16.mxu0 0
        %2023 = vmatpush1.bf16.msra.mxu0 0
        %2024 = vmatprep.subr.bf16.mxu0 0
        %2025 = vmatpush1.bf16.msra.mxu0 0
        %2026 = vmatprep.subr.bf16.mxu0 0
        %2027 = vmatpush1.bf16.msra.mxu0 0
        %2028 = vmatprep.subr.bf16.mxu0 0
        %2029 = vmatpush1.bf16.msra.mxu0 0
        %2030 = vmatprep.subr.bf16.mxu0 0
        %2031 = vmatpush1.bf16.msra.mxu0 0
        %2032 = vmatprep.subr.bf16.mxu0 0
        %2033 = vmatpush1.bf16.msra.mxu0 0
        %2034 = vmatprep.mubr.bf16.mxu0 0
        %2035 = vmatmul.mubr.bf16.gmra.mrb[0].mxu0 %v1997
        %v2036 = vpop.f32.mrb[0].mxu0
        %v2037 = vadd.f32 0.0, %v2036
        %v2038 = vpop.f32.mrb[0].mxu0
        %v2039 = vpop.f32.mrb[0].mxu0
        %v2040 = vpop.f32.mrb[0].mxu0
        %2041 = vdwg.mxu0
        %2042 = vrot.lane.b32.xlu0 %v499, 64
        %v2043 = vpop.permute.xlu0 %2042
        %v2045 = vsel %vm506, %v1461, 0
        %v2048 = vsel %vm1470, %v2043, 0
        %2050 = vmatprep.subr.bf16.mxu0 0
        %2051 = vmatpush1.bf16.msra.mxu0 %v2048
        %2052 = vmatprep.subr.bf16.mxu0 0
        %2053 = vmatpush1.bf16.msra.mxu0 0
        %2054 = vmatprep.subr.bf16.mxu0 0
        %2055 = vmatpush1.bf16.msra.mxu0 0
        %2056 = vmatprep.subr.bf16.mxu0 0
        %2057 = vmatpush1.bf16.msra.mxu0 0
        %2058 = vmatprep.subr.bf16.mxu0 0
        %2059 = vmatpush1.bf16.msra.mxu0 0
        %2060 = vmatprep.subr.bf16.mxu0 0
        %2061 = vmatpush1.bf16.msra.mxu0 0
        %2062 = vmatprep.subr.bf16.mxu0 0
        %2063 = vmatpush1.bf16.msra.mxu0 0
        %2064 = vmatprep.subr.bf16.mxu0 0
        %2065 = vmatpush1.bf16.msra.mxu0 0
        %2066 = vmatprep.subr.bf16.mxu0 0
        %2067 = vmatpush1.bf16.msra.mxu0 0
        %2068 = vmatprep.subr.bf16.mxu0 0
        %2069 = vmatpush1.bf16.msra.mxu0 0
        %2070 = vmatprep.subr.bf16.mxu0 0
        %2071 = vmatpush1.bf16.msra.mxu0 0
        %2072 = vmatprep.subr.bf16.mxu0 0
        %2073 = vmatpush1.bf16.msra.mxu0 0
        %2074 = vmatprep.subr.bf16.mxu0 0
        %2075 = vmatpush1.bf16.msra.mxu0 0
        %2076 = vmatprep.subr.bf16.mxu0 0
        %2077 = vmatpush1.bf16.msra.mxu0 0
        %2078 = vmatprep.subr.bf16.mxu0 0
        %2079 = vmatpush1.bf16.msra.mxu0 0
        %2080 = vmatprep.subr.bf16.mxu0 0
        %2081 = vmatpush1.bf16.msra.mxu0 0
        %2082 = vmatprep.mubr.bf16.mxu0 0
        %2083 = vmatmul.mubr.bf16.gmra.mrb[0].mxu0 %v2045
        %v2084 = vpop.f32.mrb[0].mxu0
        %v2085 = vadd.f32 0.0, %v2084
        %v2086 = vpop.f32.mrb[0].mxu0
        %v2087 = vpop.f32.mrb[0].mxu0
        %v2088 = vpop.f32.mrb[0].mxu0
        %2089 = vdwg.mxu0
        %2090 = vrot.lane.b32.xlu0 %v500, 64
        %v2091 = vpop.permute.xlu0 %2090
        %v2093 = vsel %vm506, %v1462, 0
        %v2096 = vsel %vm1470, %v2091, 0
        %2098 = vmatprep.subr.bf16.mxu0 0
        %2099 = vmatpush1.bf16.msra.mxu0 %v2096
        %2100 = vmatprep.subr.bf16.mxu0 0
        %2101 = vmatpush1.bf16.msra.mxu0 0
        %2102 = vmatprep.subr.bf16.mxu0 0
        %2103 = vmatpush1.bf16.msra.mxu0 0
        %2104 = vmatprep.subr.bf16.mxu0 0
        %2105 = vmatpush1.bf16.msra.mxu0 0
        %2106 = vmatprep.subr.bf16.mxu0 0
        %2107 = vmatpush1.bf16.msra.mxu0 0
        %2108 = vmatprep.subr.bf16.mxu0 0
        %2109 = vmatpush1.bf16.msra.mxu0 0
        %2110 = vmatprep.subr.bf16.mxu0 0
        %2111 = vmatpush1.bf16.msra.mxu0 0
        %2112 = vmatprep.subr.bf16.mxu0 0
        %2113 = vmatpush1.bf16.msra.mxu0 0
        %2114 = vmatprep.subr.bf16.mxu0 0
        %2115 = vmatpush1.bf16.msra.mxu0 0
        %2116 = vmatprep.subr.bf16.mxu0 0
        %2117 = vmatpush1.bf16.msra.mxu0 0
        %2118 = vmatprep.subr.bf16.mxu0 0
        %2119 = vmatpush1.bf16.msra.mxu0 0
        %2120 = vmatprep.subr.bf16.mxu0 0
        %2121 = vmatpush1.bf16.msra.mxu0 0
        %2122 = vmatprep.subr.bf16.mxu0 0
        %2123 = vmatpush1.bf16.msra.mxu0 0
        %2124 = vmatprep.subr.bf16.mxu0 0
        %2125 = vmatpush1.bf16.msra.mxu0 0
        %2126 = vmatprep.subr.bf16.mxu0 0
        %2127 = vmatpush1.bf16.msra.mxu0 0
        %2128 = vmatprep.subr.bf16.mxu0 0
        %2129 = vmatpush1.bf16.msra.mxu0 0
        %2130 = vmatprep.mubr.bf16.mxu0 0
        %2131 = vmatmul.mubr.bf16.gmra.mrb[0].mxu0 %v2093
        %v2132 = vpop.f32.mrb[0].mxu0
        %v2133 = vadd.f32 0.0, %v2132
        %v2134 = vpop.f32.mrb[0].mxu0
        %v2135 = vpop.f32.mrb[0].mxu0
        %v2136 = vpop.f32.mrb[0].mxu0
        %2137 = vdwg.mxu0
        %2138 = vrot.lane.b32.xlu0 %v501, 64
        %v2139 = vpop.permute.xlu0 %2138
        %v2141 = vsel %vm506, %v1463, 0
        %v2144 = vsel %vm1470, %v2139, 0
        %2146 = vmatprep.subr.bf16.mxu0 0
        %2147 = vmatpush1.bf16.msra.mxu0 %v2144
        %2148 = vmatprep.subr.bf16.mxu0 0
        %2149 = vmatpush1.bf16.msra.mxu0 0
        %2150 = vmatprep.subr.bf16.mxu0 0
        %2151 = vmatpush1.bf16.msra.mxu0 0
        %2152 = vmatprep.subr.bf16.mxu0 0
        %2153 = vmatpush1.bf16.msra.mxu0 0
        %2154 = vmatprep.subr.bf16.mxu0 0
        %2155 = vmatpush1.bf16.msra.mxu0 0
        %2156 = vmatprep.subr.bf16.mxu0 0
        %2157 = vmatpush1.bf16.msra.mxu0 0
        %2158 = vmatprep.subr.bf16.mxu0 0
        %2159 = vmatpush1.bf16.msra.mxu0 0
        %2160 = vmatprep.subr.bf16.mxu0 0
        %2161 = vmatpush1.bf16.msra.mxu0 0
        %2162 = vmatprep.subr.bf16.mxu0 0
        %2163 = vmatpush1.bf16.msra.mxu0 0
        %2164 = vmatprep.subr.bf16.mxu0 0
        %2165 = vmatpush1.bf16.msra.mxu0 0
        %2166 = vmatprep.subr.bf16.mxu0 0
        %2167 = vmatpush1.bf16.msra.mxu0 0
        %2168 = vmatprep.subr.bf16.mxu0 0
        %2169 = vmatpush1.bf16.msra.mxu0 0
        %2170 = vmatprep.subr.bf16.mxu0 0
        %2171 = vmatpush1.bf16.msra.mxu0 0
        %2172 = vmatprep.subr.bf16.mxu0 0
        %2173 = vmatpush1.bf16.msra.mxu0 0
        %2174 = vmatprep.subr.bf16.mxu0 0
        %2175 = vmatpush1.bf16.msra.mxu0 0
        %2176 = vmatprep.subr.bf16.mxu0 0
        %2177 = vmatpush1.bf16.msra.mxu0 0
        %2178 = vmatprep.mubr.bf16.mxu0 0
        %2179 = vmatmul.mubr.bf16.gmra.mrb[0].mxu0 %v2141
        %v2180 = vpop.f32.mrb[0].mxu0
        %v2181 = vadd.f32 0.0, %v2180
        %v2182 = vpop.f32.mrb[0].mxu0
        %v2183 = vpop.f32.mrb[0].mxu0
        %v2184 = vpop.f32.mrb[0].mxu0
        %2185 = vdwg.mxu0
        %2186 = vrot.lane.b32.xlu0 %v502, 64
        %v2187 = vpop.permute.xlu0 %2186
        %v2189 = vsel %vm506, %v1464, 0
        %v2192 = vsel %vm1470, %v2187, 0
        %2194 = vmatprep.subr.bf16.mxu0 0
        %2195 = vmatpush1.bf16.msra.mxu0 %v2192
        %2196 = vmatprep.subr.bf16.mxu0 0
        %2197 = vmatpush1.bf16.msra.mxu0 0
        %2198 = vmatprep.subr.bf16.mxu0 0
        %2199 = vmatpush1.bf16.msra.mxu0 0
        %2200 = vmatprep.subr.bf16.mxu0 0
        %2201 = vmatpush1.bf16.msra.mxu0 0
        %2202 = vmatprep.subr.bf16.mxu0 0
        %2203 = vmatpush1.bf16.msra.mxu0 0
        %2204 = vmatprep.subr.bf16.mxu0 0
        %2205 = vmatpush1.bf16.msra.mxu0 0
        %2206 = vmatprep.subr.bf16.mxu0 0
        %2207 = vmatpush1.bf16.msra.mxu0 0
        %2208 = vmatprep.subr.bf16.mxu0 0
        %2209 = vmatpush1.bf16.msra.mxu0 0
        %2210 = vmatprep.subr.bf16.mxu0 0
        %2211 = vmatpush1.bf16.msra.mxu0 0
        %2212 = vmatprep.subr.bf16.mxu0 0
        %2213 = vmatpush1.bf16.msra.mxu0 0
        %2214 = vmatprep.subr.bf16.mxu0 0
        %2215 = vmatpush1.bf16.msra.mxu0 0
        %2216 = vmatprep.subr.bf16.mxu0 0
        %2217 = vmatpush1.bf16.msra.mxu0 0
        %2218 = vmatprep.subr.bf16.mxu0 0
        %2219 = vmatpush1.bf16.msra.mxu0 0
        %2220 = vmatprep.subr.bf16.mxu0 0
        %2221 = vmatpush1.bf16.msra.mxu0 0
        %2222 = vmatprep.subr.bf16.mxu0 0
        %2223 = vmatpush1.bf16.msra.mxu0 0
        %2224 = vmatprep.subr.bf16.mxu0 0
        %2225 = vmatpush1.bf16.msra.mxu0 0
        %2226 = vmatprep.mubr.bf16.mxu0 0
        %2227 = vmatmul.mubr.bf16.gmra.mrb[0].mxu0 %v2189
        %v2228 = vpop.f32.mrb[0].mxu0
        %v2229 = vadd.f32 0.0, %v2228
        %v2230 = vpop.f32.mrb[0].mxu0
        %v2231 = vpop.f32.mrb[0].mxu0
        %v2232 = vpop.f32.mrb[0].mxu0
        %2233 = vdwg.mxu0
        %s2234 = scalar_lea.vmem %s3, 8
        %v2235 = vld [vmem:[%s2234] sm:$0xff]
        %2236 = vrot.lane.b32.xlu0 %v487, 120
        %v2237 = vpop.permute.xlu0 %2236
        %2238 = vrot.lane.b32.xlu0 %v487, 88
        %v2239 = vpop.permute.xlu0 %2238
        %v2241 = vsel %vm506, %v2237, 0
        %v2244 = vsel %vm506, %v2239, 0
        %2246 = vmatprep.subr.bf16.mxu0 0
        %2247 = vmatpush1.bf16.xpose.msra.mxu0 %v2244
        %2248 = vmatprep.subr.bf16.mxu0 0
        %2249 = vmatpush1.bf16.xpose.msra.mxu0 0
        %2250 = vmatprep.subr.bf16.mxu0 0
        %2251 = vmatpush1.bf16.xpose.msra.mxu0 0
        %2252 = vmatprep.subr.bf16.mxu0 0
        %2253 = vmatpush1.bf16.xpose.msra.mxu0 0
        %2254 = vmatprep.subr.bf16.mxu0 0
        %2255 = vmatpush1.bf16.xpose.msra.mxu0 0
        %2256 = vmatprep.subr.bf16.mxu0 0
        %2257 = vmatpush1.bf16.xpose.msra.mxu0 0
        %2258 = vmatprep.subr.bf16.mxu0 0
        %2259 = vmatpush1.bf16.xpose.msra.mxu0 0
        %2260 = vmatprep.subr.bf16.mxu0 0
        %2261 = vmatpush1.bf16.xpose.msra.mxu0 0
        %2262 = vmatprep.subr.bf16.mxu0 0
        %2263 = vmatpush1.bf16.xpose.msra.mxu0 0
        %2264 = vmatprep.subr.bf16.mxu0 0
        %2265 = vmatpush1.bf16.xpose.msra.mxu0 0
        %2266 = vmatprep.subr.bf16.mxu0 0
        %2267 = vmatpush1.bf16.xpose.msra.mxu0 0
        %2268 = vmatprep.subr.bf16.mxu0 0
        %2269 = vmatpush1.bf16.xpose.msra.mxu0 0
        %2270 = vmatprep.subr.bf16.mxu0 0
        %2271 = vmatpush1.bf16.xpose.msra.mxu0 0
        %2272 = vmatprep.subr.bf16.mxu0 0
        %2273 = vmatpush1.bf16.xpose.msra.mxu0 0
        %2274 = vmatprep.subr.bf16.mxu0 0
        %2275 = vmatpush1.bf16.xpose.msra.mxu0 0
        %2276 = vmatprep.subr.bf16.mxu0 0
        %2277 = vmatpush1.bf16.xpose.msra.mxu0 0
        %2278 = vmatprep.mubr.bf16.mxu0 0
        %2279 = vmatmul.mubr.bf16.gmra.mrb[0].mxu0 %v2241
        %v2280 = vpop.f32.mrb[0].mxu0
        %v2281 = vadd.f32 %v2235, %v2280
        %v2282 = vpop.f32.mrb[0].mxu0
        %v2283 = vpop.f32.mrb[0].mxu0
        %v2284 = vpop.f32.mrb[0].mxu0
        %2285 = vdwg.mxu0
        %2286 = vrot.lane.b32.xlu0 %v488, 120
        %v2287 = vpop.permute.xlu0 %2286
        %2288 = vrot.lane.b32.xlu0 %v488, 88
        %v2289 = vpop.permute.xlu0 %2288
        %v2291 = vsel %vm506, %v2287, 0
        %v2294 = vsel %vm506, %v2289, 0
        %2296 = vmatprep.subr.bf16.mxu0 0
        %2297 = vmatpush1.bf16.xpose.msra.mxu0 %v2294
        %2298 = vmatprep.subr.bf16.mxu0 0
        %2299 = vmatpush1.bf16.xpose.msra.mxu0 0
        %2300 = vmatprep.subr.bf16.mxu0 0
        %2301 = vmatpush1.bf16.xpose.msra.mxu0 0
        %2302 = vmatprep.subr.bf16.mxu0 0
        %2303 = vmatpush1.bf16.xpose.msra.mxu0 0
        %2304 = vmatprep.subr.bf16.mxu0 0
        %2305 = vmatpush1.bf16.xpose.msra.mxu0 0
        %2306 = vmatprep.subr.bf16.mxu0 0
        %2307 = vmatpush1.bf16.xpose.msra.mxu0 0
        %2308 = vmatprep.subr.bf16.mxu0 0
        %2309 = vmatpush1.bf16.xpose.msra.mxu0 0
        %2310 = vmatprep.subr.bf16.mxu0 0
        %2311 = vmatpush1.bf16.xpose.msra.mxu0 0
        %2312 = vmatprep.subr.bf16.mxu0 0
        %2313 = vmatpush1.bf16.xpose.msra.mxu0 0
        %2314 = vmatprep.subr.bf16.mxu0 0
        %2315 = vmatpush1.bf16.xpose.msra.mxu0 0
        %2316 = vmatprep.subr.bf16.mxu0 0
        %2317 = vmatpush1.bf16.xpose.msra.mxu0 0
        %2318 = vmatprep.subr.bf16.mxu0 0
        %2319 = vmatpush1.bf16.xpose.msra.mxu0 0
        %2320 = vmatprep.subr.bf16.mxu0 0
        %2321 = vmatpush1.bf16.xpose.msra.mxu0 0
        %2322 = vmatprep.subr.bf16.mxu0 0
        %2323 = vmatpush1.bf16.xpose.msra.mxu0 0
        %2324 = vmatprep.subr.bf16.mxu0 0
        %2325 = vmatpush1.bf16.xpose.msra.mxu0 0
        %2326 = vmatprep.subr.bf16.mxu0 0
        %2327 = vmatpush1.bf16.xpose.msra.mxu0 0
        %2328 = vmatprep.mubr.bf16.mxu0 0
        %2329 = vmatmul.mubr.bf16.gmra.mrb[0].mxu0 %v2291
        %v2330 = vpop.f32.mrb[0].mxu0
        %v2331 = vadd.f32 %v2235, %v2330
        %v2332 = vpop.f32.mrb[0].mxu0
        %v2333 = vpop.f32.mrb[0].mxu0
        %v2334 = vpop.f32.mrb[0].mxu0
        %2335 = vdwg.mxu0
        %2336 = vrot.lane.b32.xlu0 %v489, 120
        %v2337 = vpop.permute.xlu0 %2336
        %2338 = vrot.lane.b32.xlu0 %v489, 88
        %v2339 = vpop.permute.xlu0 %2338
        %v2341 = vsel %vm506, %v2337, 0
        %v2344 = vsel %vm506, %v2339, 0
        %2346 = vmatprep.subr.bf16.mxu0 0
        %2347 = vmatpush1.bf16.xpose.msra.mxu0 %v2344
        %2348 = vmatprep.subr.bf16.mxu0 0
        %2349 = vmatpush1.bf16.xpose.msra.mxu0 0
        %2350 = vmatprep.subr.bf16.mxu0 0
        %2351 = vmatpush1.bf16.xpose.msra.mxu0 0
        %2352 = vmatprep.subr.bf16.mxu0 0
        %2353 = vmatpush1.bf16.xpose.msra.mxu0 0
        %2354 = vmatprep.subr.bf16.mxu0 0
        %2355 = vmatpush1.bf16.xpose.msra.mxu0 0
        %2356 = vmatprep.subr.bf16.mxu0 0
        %2357 = vmatpush1.bf16.xpose.msra.mxu0 0
        %2358 = vmatprep.subr.bf16.mxu0 0
        %2359 = vmatpush1.bf16.xpose.msra.mxu0 0
        %2360 = vmatprep.subr.bf16.mxu0 0
        %2361 = vmatpush1.bf16.xpose.msra.mxu0 0
        %2362 = vmatprep.subr.bf16.mxu0 0
        %2363 = vmatpush1.bf16.xpose.msra.mxu0 0
        %2364 = vmatprep.subr.bf16.mxu0 0
        %2365 = vmatpush1.bf16.xpose.msra.mxu0 0
        %2366 = vmatprep.subr.bf16.mxu0 0
        %2367 = vmatpush1.bf16.xpose.msra.mxu0 0
        %2368 = vmatprep.subr.bf16.mxu0 0
        %2369 = vmatpush1.bf16.xpose.msra.mxu0 0
        %2370 = vmatprep.subr.bf16.mxu0 0
        %2371 = vmatpush1.bf16.xpose.msra.mxu0 0
        %2372 = vmatprep.subr.bf16.mxu0 0
        %2373 = vmatpush1.bf16.xpose.msra.mxu0 0
        %2374 = vmatprep.subr.bf16.mxu0 0
        %2375 = vmatpush1.bf16.xpose.msra.mxu0 0
        %2376 = vmatprep.subr.bf16.mxu0 0
        %2377 = vmatpush1.bf16.xpose.msra.mxu0 0
        %2378 = vmatprep.mubr.bf16.mxu0 0
        %2379 = vmatmul.mubr.bf16.gmra.mrb[0].mxu0 %v2341
        %v2380 = vpop.f32.mrb[0].mxu0
        %v2381 = vadd.f32 %v2235, %v2380
        %v2382 = vpop.f32.mrb[0].mxu0
        %v2383 = vpop.f32.mrb[0].mxu0
        %v2384 = vpop.f32.mrb[0].mxu0
        %2385 = vdwg.mxu0
        %2386 = vrot.lane.b32.xlu0 %v490, 120
        %v2387 = vpop.permute.xlu0 %2386
        %2388 = vrot.lane.b32.xlu0 %v490, 88
        %v2389 = vpop.permute.xlu0 %2388
        %v2391 = vsel %vm506, %v2387, 0
        %v2394 = vsel %vm506, %v2389, 0
        %2396 = vmatprep.subr.bf16.mxu0 0
        %2397 = vmatpush1.bf16.xpose.msra.mxu0 %v2394
        %2398 = vmatprep.subr.bf16.mxu0 0
        %2399 = vmatpush1.bf16.xpose.msra.mxu0 0
        %2400 = vmatprep.subr.bf16.mxu0 0
        %2401 = vmatpush1.bf16.xpose.msra.mxu0 0
        %2402 = vmatprep.subr.bf16.mxu0 0
        %2403 = vmatpush1.bf16.xpose.msra.mxu0 0
        %2404 = vmatprep.subr.bf16.mxu0 0
        %2405 = vmatpush1.bf16.xpose.msra.mxu0 0
        %2406 = vmatprep.subr.bf16.mxu0 0
        %2407 = vmatpush1.bf16.xpose.msra.mxu0 0
        %2408 = vmatprep.subr.bf16.mxu0 0
        %2409 = vmatpush1.bf16.xpose.msra.mxu0 0
        %2410 = vmatprep.subr.bf16.mxu0 0
        %2411 = vmatpush1.bf16.xpose.msra.mxu0 0
        %2412 = vmatprep.subr.bf16.mxu0 0
        %2413 = vmatpush1.bf16.xpose.msra.mxu0 0
        %2414 = vmatprep.subr.bf16.mxu0 0
        %2415 = vmatpush1.bf16.xpose.msra.mxu0 0
        %2416 = vmatprep.subr.bf16.mxu0 0
        %2417 = vmatpush1.bf16.xpose.msra.mxu0 0
        %2418 = vmatprep.subr.bf16.mxu0 0
        %2419 = vmatpush1.bf16.xpose.msra.mxu0 0
        %2420 = vmatprep.subr.bf16.mxu0 0
        %2421 = vmatpush1.bf16.xpose.msra.mxu0 0
        %2422 = vmatprep.subr.bf16.mxu0 0
        %2423 = vmatpush1.bf16.xpose.msra.mxu0 0
        %2424 = vmatprep.subr.bf16.mxu0 0
        %2425 = vmatpush1.bf16.xpose.msra.mxu0 0
        %2426 = vmatprep.subr.bf16.mxu0 0
        %2427 = vmatpush1.bf16.xpose.msra.mxu0 0
        %2428 = vmatprep.mubr.bf16.mxu0 0
        %2429 = vmatmul.mubr.bf16.gmra.mrb[0].mxu0 %v2391
        %v2430 = vpop.f32.mrb[0].mxu0
        %v2431 = vadd.f32 %v2235, %v2430
        %v2432 = vpop.f32.mrb[0].mxu0
        %v2433 = vpop.f32.mrb[0].mxu0
        %v2434 = vpop.f32.mrb[0].mxu0
        %2435 = vdwg.mxu0
        %2436 = vrot.lane.b32.xlu0 %v491, 120
        %v2437 = vpop.permute.xlu0 %2436
        %2438 = vrot.lane.b32.xlu0 %v491, 88
        %v2439 = vpop.permute.xlu0 %2438
        %v2441 = vsel %vm506, %v2437, 0
        %v2444 = vsel %vm506, %v2439, 0
        %2446 = vmatprep.subr.bf16.mxu0 0
        %2447 = vmatpush1.bf16.xpose.msra.mxu0 %v2444
        %2448 = vmatprep.subr.bf16.mxu0 0
        %2449 = vmatpush1.bf16.xpose.msra.mxu0 0
        %2450 = vmatprep.subr.bf16.mxu0 0
        %2451 = vmatpush1.bf16.xpose.msra.mxu0 0
        %2452 = vmatprep.subr.bf16.mxu0 0
        %2453 = vmatpush1.bf16.xpose.msra.mxu0 0
        %2454 = vmatprep.subr.bf16.mxu0 0
        %2455 = vmatpush1.bf16.xpose.msra.mxu0 0
        %2456 = vmatprep.subr.bf16.mxu0 0
        %2457 = vmatpush1.bf16.xpose.msra.mxu0 0
        %2458 = vmatprep.subr.bf16.mxu0 0
        %2459 = vmatpush1.bf16.xpose.msra.mxu0 0
        %2460 = vmatprep.subr.bf16.mxu0 0
        %2461 = vmatpush1.bf16.xpose.msra.mxu0 0
        %2462 = vmatprep.subr.bf16.mxu0 0
        %2463 = vmatpush1.bf16.xpose.msra.mxu0 0
        %2464 = vmatprep.subr.bf16.mxu0 0
        %2465 = vmatpush1.bf16.xpose.msra.mxu0 0
        %2466 = vmatprep.subr.bf16.mxu0 0
        %2467 = vmatpush1.bf16.xpose.msra.mxu0 0
        %2468 = vmatprep.subr.bf16.mxu0 0
        %2469 = vmatpush1.bf16.xpose.msra.mxu0 0
        %2470 = vmatprep.subr.bf16.mxu0 0
        %2471 = vmatpush1.bf16.xpose.msra.mxu0 0
        %2472 = vmatprep.subr.bf16.mxu0 0
        %2473 = vmatpush1.bf16.xpose.msra.mxu0 0
        %2474 = vmatprep.subr.bf16.mxu0 0
        %2475 = vmatpush1.bf16.xpose.msra.mxu0 0
        %2476 = vmatprep.subr.bf16.mxu0 0
        %2477 = vmatpush1.bf16.xpose.msra.mxu0 0
        %2478 = vmatprep.mubr.bf16.mxu0 0
        %2479 = vmatmul.mubr.bf16.gmra.mrb[0].mxu0 %v2441
        %v2480 = vpop.f32.mrb[0].mxu0
        %v2481 = vadd.f32 %v2235, %v2480
        %v2482 = vpop.f32.mrb[0].mxu0
        %v2483 = vpop.f32.mrb[0].mxu0
        %v2484 = vpop.f32.mrb[0].mxu0
        %2485 = vdwg.mxu0
        %2486 = vrot.lane.b32.xlu0 %v492, 120
        %v2487 = vpop.permute.xlu0 %2486
        %2488 = vrot.lane.b32.xlu0 %v492, 88
        %v2489 = vpop.permute.xlu0 %2488
        %v2491 = vsel %vm506, %v2487, 0
        %v2494 = vsel %vm506, %v2489, 0
        %2496 = vmatprep.subr.bf16.mxu0 0
        %2497 = vmatpush1.bf16.xpose.msra.mxu0 %v2494
        %2498 = vmatprep.subr.bf16.mxu0 0
        %2499 = vmatpush1.bf16.xpose.msra.mxu0 0
        %2500 = vmatprep.subr.bf16.mxu0 0
        %2501 = vmatpush1.bf16.xpose.msra.mxu0 0
        %2502 = vmatprep.subr.bf16.mxu0 0
        %2503 = vmatpush1.bf16.xpose.msra.mxu0 0
        %2504 = vmatprep.subr.bf16.mxu0 0
        %2505 = vmatpush1.bf16.xpose.msra.mxu0 0
        %2506 = vmatprep.subr.bf16.mxu0 0
        %2507 = vmatpush1.bf16.xpose.msra.mxu0 0
        %2508 = vmatprep.subr.bf16.mxu0 0
        %2509 = vmatpush1.bf16.xpose.msra.mxu0 0
        %2510 = vmatprep.subr.bf16.mxu0 0
        %2511 = vmatpush1.bf16.xpose.msra.mxu0 0
        %2512 = vmatprep.subr.bf16.mxu0 0
        %2513 = vmatpush1.bf16.xpose.msra.mxu0 0
        %2514 = vmatprep.subr.bf16.mxu0 0
        %2515 = vmatpush1.bf16.xpose.msra.mxu0 0
        %2516 = vmatprep.subr.bf16.mxu0 0
        %2517 = vmatpush1.bf16.xpose.msra.mxu0 0
        %2518 = vmatprep.subr.bf16.mxu0 0
        %2519 = vmatpush1.bf16.xpose.msra.mxu0 0
        %2520 = vmatprep.subr.bf16.mxu0 0
        %2521 = vmatpush1.bf16.xpose.msra.mxu0 0
        %2522 = vmatprep.subr.bf16.mxu0 0
        %2523 = vmatpush1.bf16.xpose.msra.mxu0 0
        %2524 = vmatprep.subr.bf16.mxu0 0
        %2525 = vmatpush1.bf16.xpose.msra.mxu0 0
        %2526 = vmatprep.subr.bf16.mxu0 0
        %2527 = vmatpush1.bf16.xpose.msra.mxu0 0
        %2528 = vmatprep.mubr.bf16.mxu0 0
        %2529 = vmatmul.mubr.bf16.gmra.mrb[0].mxu0 %v2491
        %v2530 = vpop.f32.mrb[0].mxu0
        %v2531 = vadd.f32 %v2235, %v2530
        %v2532 = vpop.f32.mrb[0].mxu0
        %v2533 = vpop.f32.mrb[0].mxu0
        %v2534 = vpop.f32.mrb[0].mxu0
        %2535 = vdwg.mxu0
        %2536 = vrot.lane.b32.xlu0 %v493, 120
        %v2537 = vpop.permute.xlu0 %2536
        %2538 = vrot.lane.b32.xlu0 %v493, 88
        %v2539 = vpop.permute.xlu0 %2538
        %v2541 = vsel %vm506, %v2537, 0
        %v2544 = vsel %vm506, %v2539, 0
        %2546 = vmatprep.subr.bf16.mxu0 0
        %2547 = vmatpush1.bf16.xpose.msra.mxu0 %v2544
        %2548 = vmatprep.subr.bf16.mxu0 0
        %2549 = vmatpush1.bf16.xpose.msra.mxu0 0
        %2550 = vmatprep.subr.bf16.mxu0 0
        %2551 = vmatpush1.bf16.xpose.msra.mxu0 0
        %2552 = vmatprep.subr.bf16.mxu0 0
        %2553 = vmatpush1.bf16.xpose.msra.mxu0 0
        %2554 = vmatprep.subr.bf16.mxu0 0
        %2555 = vmatpush1.bf16.xpose.msra.mxu0 0
        %2556 = vmatprep.subr.bf16.mxu0 0
        %2557 = vmatpush1.bf16.xpose.msra.mxu0 0
        %2558 = vmatprep.subr.bf16.mxu0 0
        %2559 = vmatpush1.bf16.xpose.msra.mxu0 0
        %2560 = vmatprep.subr.bf16.mxu0 0
        %2561 = vmatpush1.bf16.xpose.msra.mxu0 0
        %2562 = vmatprep.subr.bf16.mxu0 0
        %2563 = vmatpush1.bf16.xpose.msra.mxu0 0
        %2564 = vmatprep.subr.bf16.mxu0 0
        %2565 = vmatpush1.bf16.xpose.msra.mxu0 0
        %2566 = vmatprep.subr.bf16.mxu0 0
        %2567 = vmatpush1.bf16.xpose.msra.mxu0 0
        %2568 = vmatprep.subr.bf16.mxu0 0
        %2569 = vmatpush1.bf16.xpose.msra.mxu0 0
        %2570 = vmatprep.subr.bf16.mxu0 0
        %2571 = vmatpush1.bf16.xpose.msra.mxu0 0
        %2572 = vmatprep.subr.bf16.mxu0 0
        %2573 = vmatpush1.bf16.xpose.msra.mxu0 0
        %2574 = vmatprep.subr.bf16.mxu0 0
        %2575 = vmatpush1.bf16.xpose.msra.mxu0 0
        %2576 = vmatprep.subr.bf16.mxu0 0
        %2577 = vmatpush1.bf16.xpose.msra.mxu0 0
        %2578 = vmatprep.mubr.bf16.mxu0 0
        %2579 = vmatmul.mubr.bf16.gmra.mrb[0].mxu0 %v2541
        %v2580 = vpop.f32.mrb[0].mxu0
        %v2581 = vadd.f32 %v2235, %v2580
        %v2582 = vpop.f32.mrb[0].mxu0
        %v2583 = vpop.f32.mrb[0].mxu0
        %v2584 = vpop.f32.mrb[0].mxu0
        %2585 = vdwg.mxu0
        %2586 = vrot.lane.b32.xlu0 %v494, 120
        %v2587 = vpop.permute.xlu0 %2586
        %2588 = vrot.lane.b32.xlu0 %v494, 88
        %v2589 = vpop.permute.xlu0 %2588
        %v2591 = vsel %vm506, %v2587, 0
        %v2594 = vsel %vm506, %v2589, 0
        %2596 = vmatprep.subr.bf16.mxu0 0
        %2597 = vmatpush1.bf16.xpose.msra.mxu0 %v2594
        %2598 = vmatprep.subr.bf16.mxu0 0
        %2599 = vmatpush1.bf16.xpose.msra.mxu0 0
        %2600 = vmatprep.subr.bf16.mxu0 0
        %2601 = vmatpush1.bf16.xpose.msra.mxu0 0
        %2602 = vmatprep.subr.bf16.mxu0 0
        %2603 = vmatpush1.bf16.xpose.msra.mxu0 0
        %2604 = vmatprep.subr.bf16.mxu0 0
        %2605 = vmatpush1.bf16.xpose.msra.mxu0 0
        %2606 = vmatprep.subr.bf16.mxu0 0
        %2607 = vmatpush1.bf16.xpose.msra.mxu0 0
        %2608 = vmatprep.subr.bf16.mxu0 0
        %2609 = vmatpush1.bf16.xpose.msra.mxu0 0
        %2610 = vmatprep.subr.bf16.mxu0 0
        %2611 = vmatpush1.bf16.xpose.msra.mxu0 0
        %2612 = vmatprep.subr.bf16.mxu0 0
        %2613 = vmatpush1.bf16.xpose.msra.mxu0 0
        %2614 = vmatprep.subr.bf16.mxu0 0
        %2615 = vmatpush1.bf16.xpose.msra.mxu0 0
        %2616 = vmatprep.subr.bf16.mxu0 0
        %2617 = vmatpush1.bf16.xpose.msra.mxu0 0
        %2618 = vmatprep.subr.bf16.mxu0 0
        %2619 = vmatpush1.bf16.xpose.msra.mxu0 0
        %2620 = vmatprep.subr.bf16.mxu0 0
        %2621 = vmatpush1.bf16.xpose.msra.mxu0 0
        %2622 = vmatprep.subr.bf16.mxu0 0
        %2623 = vmatpush1.bf16.xpose.msra.mxu0 0
        %2624 = vmatprep.subr.bf16.mxu0 0
        %2625 = vmatpush1.bf16.xpose.msra.mxu0 0
        %2626 = vmatprep.subr.bf16.mxu0 0
        %2627 = vmatpush1.bf16.xpose.msra.mxu0 0
        %2628 = vmatprep.mubr.bf16.mxu0 0
        %2629 = vmatmul.mubr.bf16.gmra.mrb[0].mxu0 %v2591
        %v2630 = vpop.f32.mrb[0].mxu0
        %v2631 = vadd.f32 %v2235, %v2630
        %v2632 = vpop.f32.mrb[0].mxu0
        %v2633 = vpop.f32.mrb[0].mxu0
        %v2634 = vpop.f32.mrb[0].mxu0
        %2635 = vdwg.mxu0
        %2636 = vrot.lane.b32.xlu0 %v495, 120
        %v2637 = vpop.permute.xlu0 %2636
        %2638 = vrot.lane.b32.xlu0 %v495, 88
        %v2639 = vpop.permute.xlu0 %2638
        %v2641 = vsel %vm506, %v2637, 0
        %v2644 = vsel %vm506, %v2639, 0
        %2646 = vmatprep.subr.bf16.mxu0 0
        %2647 = vmatpush1.bf16.xpose.msra.mxu0 %v2644
        %2648 = vmatprep.subr.bf16.mxu0 0
        %2649 = vmatpush1.bf16.xpose.msra.mxu0 0
        %2650 = vmatprep.subr.bf16.mxu0 0
        %2651 = vmatpush1.bf16.xpose.msra.mxu0 0
        %2652 = vmatprep.subr.bf16.mxu0 0
        %2653 = vmatpush1.bf16.xpose.msra.mxu0 0
        %2654 = vmatprep.subr.bf16.mxu0 0
        %2655 = vmatpush1.bf16.xpose.msra.mxu0 0
        %2656 = vmatprep.subr.bf16.mxu0 0
        %2657 = vmatpush1.bf16.xpose.msra.mxu0 0
        %2658 = vmatprep.subr.bf16.mxu0 0
        %2659 = vmatpush1.bf16.xpose.msra.mxu0 0
        %2660 = vmatprep.subr.bf16.mxu0 0
        %2661 = vmatpush1.bf16.xpose.msra.mxu0 0
        %2662 = vmatprep.subr.bf16.mxu0 0
        %2663 = vmatpush1.bf16.xpose.msra.mxu0 0
        %2664 = vmatprep.subr.bf16.mxu0 0
        %2665 = vmatpush1.bf16.xpose.msra.mxu0 0
        %2666 = vmatprep.subr.bf16.mxu0 0
        %2667 = vmatpush1.bf16.xpose.msra.mxu0 0
        %2668 = vmatprep.subr.bf16.mxu0 0
        %2669 = vmatpush1.bf16.xpose.msra.mxu0 0
        %2670 = vmatprep.subr.bf16.mxu0 0
        %2671 = vmatpush1.bf16.xpose.msra.mxu0 0
        %2672 = vmatprep.subr.bf16.mxu0 0
        %2673 = vmatpush1.bf16.xpose.msra.mxu0 0
        %2674 = vmatprep.subr.bf16.mxu0 0
        %2675 = vmatpush1.bf16.xpose.msra.mxu0 0
        %2676 = vmatprep.subr.bf16.mxu0 0
        %2677 = vmatpush1.bf16.xpose.msra.mxu0 0
        %2678 = vmatprep.mubr.bf16.mxu0 0
        %2679 = vmatmul.mubr.bf16.gmra.mrb[0].mxu0 %v2641
        %v2680 = vpop.f32.mrb[0].mxu0
        %v2681 = vadd.f32 %v2235, %v2680
        %v2682 = vpop.f32.mrb[0].mxu0
        %v2683 = vpop.f32.mrb[0].mxu0
        %v2684 = vpop.f32.mrb[0].mxu0
        %2685 = vdwg.mxu0
        %2686 = vrot.lane.b32.xlu0 %v496, 120
        %v2687 = vpop.permute.xlu0 %2686
        %2688 = vrot.lane.b32.xlu0 %v496, 88
        %v2689 = vpop.permute.xlu0 %2688
        %v2691 = vsel %vm506, %v2687, 0
        %v2694 = vsel %vm506, %v2689, 0
        %2696 = vmatprep.subr.bf16.mxu0 0
        %2697 = vmatpush1.bf16.xpose.msra.mxu0 %v2694
        %2698 = vmatprep.subr.bf16.mxu0 0
        %2699 = vmatpush1.bf16.xpose.msra.mxu0 0
        %2700 = vmatprep.subr.bf16.mxu0 0
        %2701 = vmatpush1.bf16.xpose.msra.mxu0 0
        %2702 = vmatprep.subr.bf16.mxu0 0
        %2703 = vmatpush1.bf16.xpose.msra.mxu0 0
        %2704 = vmatprep.subr.bf16.mxu0 0
        %2705 = vmatpush1.bf16.xpose.msra.mxu0 0
        %2706 = vmatprep.subr.bf16.mxu0 0
        %2707 = vmatpush1.bf16.xpose.msra.mxu0 0
        %2708 = vmatprep.subr.bf16.mxu0 0
        %2709 = vmatpush1.bf16.xpose.msra.mxu0 0
        %2710 = vmatprep.subr.bf16.mxu0 0
        %2711 = vmatpush1.bf16.xpose.msra.mxu0 0
        %2712 = vmatprep.subr.bf16.mxu0 0
        %2713 = vmatpush1.bf16.xpose.msra.mxu0 0
        %2714 = vmatprep.subr.bf16.mxu0 0
        %2715 = vmatpush1.bf16.xpose.msra.mxu0 0
        %2716 = vmatprep.subr.bf16.mxu0 0
        %2717 = vmatpush1.bf16.xpose.msra.mxu0 0
        %2718 = vmatprep.subr.bf16.mxu0 0
        %2719 = vmatpush1.bf16.xpose.msra.mxu0 0
        %2720 = vmatprep.subr.bf16.mxu0 0
        %2721 = vmatpush1.bf16.xpose.msra.mxu0 0
        %2722 = vmatprep.subr.bf16.mxu0 0
        %2723 = vmatpush1.bf16.xpose.msra.mxu0 0
        %2724 = vmatprep.subr.bf16.mxu0 0
        %2725 = vmatpush1.bf16.xpose.msra.mxu0 0
        %2726 = vmatprep.subr.bf16.mxu0 0
        %2727 = vmatpush1.bf16.xpose.msra.mxu0 0
        %2728 = vmatprep.mubr.bf16.mxu0 0
        %2729 = vmatmul.mubr.bf16.gmra.mrb[0].mxu0 %v2691
        %v2730 = vpop.f32.mrb[0].mxu0
        %v2731 = vadd.f32 %v2235, %v2730
        %v2732 = vpop.f32.mrb[0].mxu0
        %v2733 = vpop.f32.mrb[0].mxu0
        %v2734 = vpop.f32.mrb[0].mxu0
        %2735 = vdwg.mxu0
        %2736 = vrot.lane.b32.xlu0 %v497, 120
        %v2737 = vpop.permute.xlu0 %2736
        %2738 = vrot.lane.b32.xlu0 %v497, 88
        %v2739 = vpop.permute.xlu0 %2738
        %v2741 = vsel %vm506, %v2737, 0
        %v2744 = vsel %vm506, %v2739, 0
        %2746 = vmatprep.subr.bf16.mxu0 0
        %2747 = vmatpush1.bf16.xpose.msra.mxu0 %v2744
        %2748 = vmatprep.subr.bf16.mxu0 0
        %2749 = vmatpush1.bf16.xpose.msra.mxu0 0
        %2750 = vmatprep.subr.bf16.mxu0 0
        %2751 = vmatpush1.bf16.xpose.msra.mxu0 0
        %2752 = vmatprep.subr.bf16.mxu0 0
        %2753 = vmatpush1.bf16.xpose.msra.mxu0 0
        %2754 = vmatprep.subr.bf16.mxu0 0
        %2755 = vmatpush1.bf16.xpose.msra.mxu0 0
        %2756 = vmatprep.subr.bf16.mxu0 0
        %2757 = vmatpush1.bf16.xpose.msra.mxu0 0
        %2758 = vmatprep.subr.bf16.mxu0 0
        %2759 = vmatpush1.bf16.xpose.msra.mxu0 0
        %2760 = vmatprep.subr.bf16.mxu0 0
        %2761 = vmatpush1.bf16.xpose.msra.mxu0 0
        %2762 = vmatprep.subr.bf16.mxu0 0
        %2763 = vmatpush1.bf16.xpose.msra.mxu0 0
        %2764 = vmatprep.subr.bf16.mxu0 0
        %2765 = vmatpush1.bf16.xpose.msra.mxu0 0
        %2766 = vmatprep.subr.bf16.mxu0 0
        %2767 = vmatpush1.bf16.xpose.msra.mxu0 0
        %2768 = vmatprep.subr.bf16.mxu0 0
        %2769 = vmatpush1.bf16.xpose.msra.mxu0 0
        %2770 = vmatprep.subr.bf16.mxu0 0
        %2771 = vmatpush1.bf16.xpose.msra.mxu0 0
        %2772 = vmatprep.subr.bf16.mxu0 0
        %2773 = vmatpush1.bf16.xpose.msra.mxu0 0
        %2774 = vmatprep.subr.bf16.mxu0 0
        %2775 = vmatpush1.bf16.xpose.msra.mxu0 0
        %2776 = vmatprep.subr.bf16.mxu0 0
        %2777 = vmatpush1.bf16.xpose.msra.mxu0 0
        %2778 = vmatprep.mubr.bf16.mxu0 0
        %2779 = vmatmul.mubr.bf16.gmra.mrb[0].mxu0 %v2741
        %v2780 = vpop.f32.mrb[0].mxu0
        %v2781 = vadd.f32 %v2235, %v2780
        %v2782 = vpop.f32.mrb[0].mxu0
        %v2783 = vpop.f32.mrb[0].mxu0
        %v2784 = vpop.f32.mrb[0].mxu0
        %2785 = vdwg.mxu0
        %2786 = vrot.lane.b32.xlu0 %v498, 120
        %v2787 = vpop.permute.xlu0 %2786
        %2788 = vrot.lane.b32.xlu0 %v498, 88
        %v2789 = vpop.permute.xlu0 %2788
        %v2791 = vsel %vm506, %v2787, 0
        %v2794 = vsel %vm506, %v2789, 0
        %2796 = vmatprep.subr.bf16.mxu0 0
        %2797 = vmatpush1.bf16.xpose.msra.mxu0 %v2794
        %2798 = vmatprep.subr.bf16.mxu0 0
        %2799 = vmatpush1.bf16.xpose.msra.mxu0 0
        %2800 = vmatprep.subr.bf16.mxu0 0
        %2801 = vmatpush1.bf16.xpose.msra.mxu0 0
        %2802 = vmatprep.subr.bf16.mxu0 0
        %2803 = vmatpush1.bf16.xpose.msra.mxu0 0
        %2804 = vmatprep.subr.bf16.mxu0 0
        %2805 = vmatpush1.bf16.xpose.msra.mxu0 0
        %2806 = vmatprep.subr.bf16.mxu0 0
        %2807 = vmatpush1.bf16.xpose.msra.mxu0 0
        %2808 = vmatprep.subr.bf16.mxu0 0
        %2809 = vmatpush1.bf16.xpose.msra.mxu0 0
        %2810 = vmatprep.subr.bf16.mxu0 0
        %2811 = vmatpush1.bf16.xpose.msra.mxu0 0
        %2812 = vmatprep.subr.bf16.mxu0 0
        %2813 = vmatpush1.bf16.xpose.msra.mxu0 0
        %2814 = vmatprep.subr.bf16.mxu0 0
        %2815 = vmatpush1.bf16.xpose.msra.mxu0 0
        %2816 = vmatprep.subr.bf16.mxu0 0
        %2817 = vmatpush1.bf16.xpose.msra.mxu0 0
        %2818 = vmatprep.subr.bf16.mxu0 0
        %2819 = vmatpush1.bf16.xpose.msra.mxu0 0
        %2820 = vmatprep.subr.bf16.mxu0 0
        %2821 = vmatpush1.bf16.xpose.msra.mxu0 0
        %2822 = vmatprep.subr.bf16.mxu0 0
        %2823 = vmatpush1.bf16.xpose.msra.mxu0 0
        %2824 = vmatprep.subr.bf16.mxu0 0
        %2825 = vmatpush1.bf16.xpose.msra.mxu0 0
        %2826 = vmatprep.subr.bf16.mxu0 0
        %2827 = vmatpush1.bf16.xpose.msra.mxu0 0
        %2828 = vmatprep.mubr.bf16.mxu0 0
        %2829 = vmatmul.mubr.bf16.gmra.mrb[0].mxu0 %v2791
        %v2830 = vpop.f32.mrb[0].mxu0
        %v2831 = vadd.f32 %v2235, %v2830
        %v2832 = vpop.f32.mrb[0].mxu0
        %v2833 = vpop.f32.mrb[0].mxu0
        %v2834 = vpop.f32.mrb[0].mxu0
        %2835 = vdwg.mxu0
        %2836 = vrot.lane.b32.xlu0 %v499, 120
        %v2837 = vpop.permute.xlu0 %2836
        %2838 = vrot.lane.b32.xlu0 %v499, 88
        %v2839 = vpop.permute.xlu0 %2838
        %v2841 = vsel %vm506, %v2837, 0
        %v2844 = vsel %vm506, %v2839, 0
        %2846 = vmatprep.subr.bf16.mxu0 0
        %2847 = vmatpush1.bf16.xpose.msra.mxu0 %v2844
        %2848 = vmatprep.subr.bf16.mxu0 0
        %2849 = vmatpush1.bf16.xpose.msra.mxu0 0
        %2850 = vmatprep.subr.bf16.mxu0 0
        %2851 = vmatpush1.bf16.xpose.msra.mxu0 0
        %2852 = vmatprep.subr.bf16.mxu0 0
        %2853 = vmatpush1.bf16.xpose.msra.mxu0 0
        %2854 = vmatprep.subr.bf16.mxu0 0
        %2855 = vmatpush1.bf16.xpose.msra.mxu0 0
        %2856 = vmatprep.subr.bf16.mxu0 0
        %2857 = vmatpush1.bf16.xpose.msra.mxu0 0
        %2858 = vmatprep.subr.bf16.mxu0 0
        %2859 = vmatpush1.bf16.xpose.msra.mxu0 0
        %2860 = vmatprep.subr.bf16.mxu0 0
        %2861 = vmatpush1.bf16.xpose.msra.mxu0 0
        %2862 = vmatprep.subr.bf16.mxu0 0
        %2863 = vmatpush1.bf16.xpose.msra.mxu0 0
        %2864 = vmatprep.subr.bf16.mxu0 0
        %2865 = vmatpush1.bf16.xpose.msra.mxu0 0
        %2866 = vmatprep.subr.bf16.mxu0 0
        %2867 = vmatpush1.bf16.xpose.msra.mxu0 0
        %2868 = vmatprep.subr.bf16.mxu0 0
        %2869 = vmatpush1.bf16.xpose.msra.mxu0 0
        %2870 = vmatprep.subr.bf16.mxu0 0
        %2871 = vmatpush1.bf16.xpose.msra.mxu0 0
        %2872 = vmatprep.subr.bf16.mxu0 0
        %2873 = vmatpush1.bf16.xpose.msra.mxu0 0
        %2874 = vmatprep.subr.bf16.mxu0 0
        %2875 = vmatpush1.bf16.xpose.msra.mxu0 0
        %2876 = vmatprep.subr.bf16.mxu0 0
        %2877 = vmatpush1.bf16.xpose.msra.mxu0 0
        %2878 = vmatprep.mubr.bf16.mxu0 0
        %2879 = vmatmul.mubr.bf16.gmra.mrb[0].mxu0 %v2841
        %v2880 = vpop.f32.mrb[0].mxu0
        %v2881 = vadd.f32 %v2235, %v2880
        %v2882 = vpop.f32.mrb[0].mxu0
        %v2883 = vpop.f32.mrb[0].mxu0
        %v2884 = vpop.f32.mrb[0].mxu0
        %2885 = vdwg.mxu0
        %2886 = vrot.lane.b32.xlu0 %v500, 120
        %v2887 = vpop.permute.xlu0 %2886
        %2888 = vrot.lane.b32.xlu0 %v500, 88
        %v2889 = vpop.permute.xlu0 %2888
        %v2891 = vsel %vm506, %v2887, 0
        %v2894 = vsel %vm506, %v2889, 0
        %2896 = vmatprep.subr.bf16.mxu0 0
        %2897 = vmatpush1.bf16.xpose.msra.mxu0 %v2894
        %2898 = vmatprep.subr.bf16.mxu0 0
        %2899 = vmatpush1.bf16.xpose.msra.mxu0 0
        %2900 = vmatprep.subr.bf16.mxu0 0
        %2901 = vmatpush1.bf16.xpose.msra.mxu0 0
        %2902 = vmatprep.subr.bf16.mxu0 0
        %2903 = vmatpush1.bf16.xpose.msra.mxu0 0
        %2904 = vmatprep.subr.bf16.mxu0 0
        %2905 = vmatpush1.bf16.xpose.msra.mxu0 0
        %2906 = vmatprep.subr.bf16.mxu0 0
        %2907 = vmatpush1.bf16.xpose.msra.mxu0 0
        %2908 = vmatprep.subr.bf16.mxu0 0
        %2909 = vmatpush1.bf16.xpose.msra.mxu0 0
        %2910 = vmatprep.subr.bf16.mxu0 0
        %2911 = vmatpush1.bf16.xpose.msra.mxu0 0
        %2912 = vmatprep.subr.bf16.mxu0 0
        %2913 = vmatpush1.bf16.xpose.msra.mxu0 0
        %2914 = vmatprep.subr.bf16.mxu0 0
        %2915 = vmatpush1.bf16.xpose.msra.mxu0 0
        %2916 = vmatprep.subr.bf16.mxu0 0
        %2917 = vmatpush1.bf16.xpose.msra.mxu0 0
        %2918 = vmatprep.subr.bf16.mxu0 0
        %2919 = vmatpush1.bf16.xpose.msra.mxu0 0
        %2920 = vmatprep.subr.bf16.mxu0 0
        %2921 = vmatpush1.bf16.xpose.msra.mxu0 0
        %2922 = vmatprep.subr.bf16.mxu0 0
        %2923 = vmatpush1.bf16.xpose.msra.mxu0 0
        %2924 = vmatprep.subr.bf16.mxu0 0
        %2925 = vmatpush1.bf16.xpose.msra.mxu0 0
        %2926 = vmatprep.subr.bf16.mxu0 0
        %2927 = vmatpush1.bf16.xpose.msra.mxu0 0
        %2928 = vmatprep.mubr.bf16.mxu0 0
        %2929 = vmatmul.mubr.bf16.gmra.mrb[0].mxu0 %v2891
        %v2930 = vpop.f32.mrb[0].mxu0
        %v2931 = vadd.f32 %v2235, %v2930
        %v2932 = vpop.f32.mrb[0].mxu0
        %v2933 = vpop.f32.mrb[0].mxu0
        %v2934 = vpop.f32.mrb[0].mxu0
        %2935 = vdwg.mxu0
        %2936 = vrot.lane.b32.xlu0 %v501, 120
        %v2937 = vpop.permute.xlu0 %2936
        %2938 = vrot.lane.b32.xlu0 %v501, 88
        %v2939 = vpop.permute.xlu0 %2938
        %v2941 = vsel %vm506, %v2937, 0
        %v2944 = vsel %vm506, %v2939, 0
        %2946 = vmatprep.subr.bf16.mxu0 0
        %2947 = vmatpush1.bf16.xpose.msra.mxu0 %v2944
        %2948 = vmatprep.subr.bf16.mxu0 0
        %2949 = vmatpush1.bf16.xpose.msra.mxu0 0
        %2950 = vmatprep.subr.bf16.mxu0 0
        %2951 = vmatpush1.bf16.xpose.msra.mxu0 0
        %2952 = vmatprep.subr.bf16.mxu0 0
        %2953 = vmatpush1.bf16.xpose.msra.mxu0 0
        %2954 = vmatprep.subr.bf16.mxu0 0
        %2955 = vmatpush1.bf16.xpose.msra.mxu0 0
        %2956 = vmatprep.subr.bf16.mxu0 0
        %2957 = vmatpush1.bf16.xpose.msra.mxu0 0
        %2958 = vmatprep.subr.bf16.mxu0 0
        %2959 = vmatpush1.bf16.xpose.msra.mxu0 0
        %2960 = vmatprep.subr.bf16.mxu0 0
        %2961 = vmatpush1.bf16.xpose.msra.mxu0 0
        %2962 = vmatprep.subr.bf16.mxu0 0
        %2963 = vmatpush1.bf16.xpose.msra.mxu0 0
        %2964 = vmatprep.subr.bf16.mxu0 0
        %2965 = vmatpush1.bf16.xpose.msra.mxu0 0
        %2966 = vmatprep.subr.bf16.mxu0 0
        %2967 = vmatpush1.bf16.xpose.msra.mxu0 0
        %2968 = vmatprep.subr.bf16.mxu0 0
        %2969 = vmatpush1.bf16.xpose.msra.mxu0 0
        %2970 = vmatprep.subr.bf16.mxu0 0
        %2971 = vmatpush1.bf16.xpose.msra.mxu0 0
        %2972 = vmatprep.subr.bf16.mxu0 0
        %2973 = vmatpush1.bf16.xpose.msra.mxu0 0
        %2974 = vmatprep.subr.bf16.mxu0 0
        %2975 = vmatpush1.bf16.xpose.msra.mxu0 0
        %2976 = vmatprep.subr.bf16.mxu0 0
        %2977 = vmatpush1.bf16.xpose.msra.mxu0 0
        %2978 = vmatprep.mubr.bf16.mxu0 0
        %2979 = vmatmul.mubr.bf16.gmra.mrb[0].mxu0 %v2941
        %v2980 = vpop.f32.mrb[0].mxu0
        %v2981 = vadd.f32 %v2235, %v2980
        %v2982 = vpop.f32.mrb[0].mxu0
        %v2983 = vpop.f32.mrb[0].mxu0
        %v2984 = vpop.f32.mrb[0].mxu0
        %2985 = vdwg.mxu0
        %2986 = vrot.lane.b32.xlu0 %v502, 120
        %v2987 = vpop.permute.xlu0 %2986
        %2988 = vrot.lane.b32.xlu0 %v502, 88
        %v2989 = vpop.permute.xlu0 %2988
        %v2991 = vsel %vm506, %v2987, 0
        %v2994 = vsel %vm506, %v2989, 0
        %2996 = vmatprep.subr.bf16.mxu0 0
        %2997 = vmatpush1.bf16.xpose.msra.mxu0 %v2994
        %2998 = vmatprep.subr.bf16.mxu0 0
        %2999 = vmatpush1.bf16.xpose.msra.mxu0 0
        %3000 = vmatprep.subr.bf16.mxu0 0
        %3001 = vmatpush1.bf16.xpose.msra.mxu0 0
        %3002 = vmatprep.subr.bf16.mxu0 0
        %3003 = vmatpush1.bf16.xpose.msra.mxu0 0
        %3004 = vmatprep.subr.bf16.mxu0 0
        %3005 = vmatpush1.bf16.xpose.msra.mxu0 0
        %3006 = vmatprep.subr.bf16.mxu0 0
        %3007 = vmatpush1.bf16.xpose.msra.mxu0 0
        %3008 = vmatprep.subr.bf16.mxu0 0
        %3009 = vmatpush1.bf16.xpose.msra.mxu0 0
        %3010 = vmatprep.subr.bf16.mxu0 0
        %3011 = vmatpush1.bf16.xpose.msra.mxu0 0
        %3012 = vmatprep.subr.bf16.mxu0 0
        %3013 = vmatpush1.bf16.xpose.msra.mxu0 0
        %3014 = vmatprep.subr.bf16.mxu0 0
        %3015 = vmatpush1.bf16.xpose.msra.mxu0 0
        %3016 = vmatprep.subr.bf16.mxu0 0
        %3017 = vmatpush1.bf16.xpose.msra.mxu0 0
        %3018 = vmatprep.subr.bf16.mxu0 0
        %3019 = vmatpush1.bf16.xpose.msra.mxu0 0
        %3020 = vmatprep.subr.bf16.mxu0 0
        %3021 = vmatpush1.bf16.xpose.msra.mxu0 0
        %3022 = vmatprep.subr.bf16.mxu0 0
        %3023 = vmatpush1.bf16.xpose.msra.mxu0 0
        %3024 = vmatprep.subr.bf16.mxu0 0
        %3025 = vmatpush1.bf16.xpose.msra.mxu0 0
        %3026 = vmatprep.subr.bf16.mxu0 0
        %3027 = vmatpush1.bf16.xpose.msra.mxu0 0
        %3028 = vmatprep.mubr.bf16.mxu0 0
        %3029 = vmatmul.mubr.bf16.gmra.mrb[0].mxu0 %v2991
        %v3030 = vpop.f32.mrb[0].mxu0
        %v3031 = vadd.f32 %v2235, %v3030
        %v3032 = vpop.f32.mrb[0].mxu0
        %v3033 = vpop.f32.mrb[0].mxu0
        %v3034 = vpop.f32.mrb[0].mxu0
        %3035 = vdwg.mxu0
        %v3036 = vsel %vm506, %v2281, -inf
        %3037 = vmax.xlane.f32.xlu0 %v3036
        %v3038 = vpop.xlane.xlu0 %3037
        %v3039 = vsel %vm506, %v2331, -inf
        %3040 = vmax.xlane.f32.xlu0 %v3039
        %v3041 = vpop.xlane.xlu0 %3040
        %v3042 = vsel %vm506, %v2381, -inf
        %3043 = vmax.xlane.f32.xlu0 %v3042
        %v3044 = vpop.xlane.xlu0 %3043
        %v3045 = vsel %vm506, %v2431, -inf
        %3046 = vmax.xlane.f32.xlu0 %v3045
        %v3047 = vpop.xlane.xlu0 %3046
        %v3048 = vsel %vm506, %v2481, -inf
        %3049 = vmax.xlane.f32.xlu0 %v3048
        %v3050 = vpop.xlane.xlu0 %3049
        %v3051 = vsel %vm506, %v2531, -inf
        %3052 = vmax.xlane.f32.xlu0 %v3051
        %v3053 = vpop.xlane.xlu0 %3052
        %v3054 = vsel %vm506, %v2581, -inf
        %3055 = vmax.xlane.f32.xlu0 %v3054
        %v3056 = vpop.xlane.xlu0 %3055
        %v3057 = vsel %vm506, %v2631, -inf
        %3058 = vmax.xlane.f32.xlu0 %v3057
        %v3059 = vpop.xlane.xlu0 %3058
        %v3060 = vsel %vm506, %v2681, -inf
        %3061 = vmax.xlane.f32.xlu0 %v3060
        %v3062 = vpop.xlane.xlu0 %3061
        %v3063 = vsel %vm506, %v2731, -inf
        %3064 = vmax.xlane.f32.xlu0 %v3063
        %v3065 = vpop.xlane.xlu0 %3064
        %v3066 = vsel %vm506, %v2781, -inf
        %3067 = vmax.xlane.f32.xlu0 %v3066
        %v3068 = vpop.xlane.xlu0 %3067
        %v3069 = vsel %vm506, %v2831, -inf
        %3070 = vmax.xlane.f32.xlu0 %v3069
        %v3071 = vpop.xlane.xlu0 %3070
        %v3072 = vsel %vm506, %v2881, -inf
        %3073 = vmax.xlane.f32.xlu0 %v3072
        %v3074 = vpop.xlane.xlu0 %3073
        %v3075 = vsel %vm506, %v2931, -inf
        %3076 = vmax.xlane.f32.xlu0 %v3075
        %v3077 = vpop.xlane.xlu0 %3076
        %v3078 = vsel %vm506, %v2981, -inf
        %3079 = vmax.xlane.f32.xlu0 %v3078
        %v3080 = vpop.xlane.xlu0 %3079
        %v3081 = vsel %vm506, %v3031, -inf
        %3082 = vmax.xlane.f32.xlu0 %v3081
        %v3083 = vpop.xlane.xlu0 %3082
        %v3084 = vsub.f32 %v2281, %v3038
        %v3085 = vsub.f32 %v2331, %v3041
        %v3086 = vsub.f32 %v2381, %v3044
        %v3087 = vsub.f32 %v2431, %v3047
        %v3088 = vsub.f32 %v2481, %v3050
        %v3089 = vsub.f32 %v2531, %v3053
        %v3090 = vsub.f32 %v2581, %v3056
        %v3091 = vsub.f32 %v2631, %v3059
        %v3092 = vsub.f32 %v2681, %v3062
        %v3093 = vsub.f32 %v2731, %v3065
        %v3094 = vsub.f32 %v2781, %v3068
        %v3095 = vsub.f32 %v2831, %v3071
        %v3096 = vsub.f32 %v2881, %v3074
        %v3097 = vsub.f32 %v2931, %v3077
        %v3098 = vsub.f32 %v2981, %v3080
        %v3099 = vsub.f32 %v3031, %v3083
        %v3100 = vmul.f32 %v3084, 1.442695
        %v3101 = vpow.pop %v3100
        %v3102 = vmul.f32 %v3085, 1.442695
        %v3103 = vpow.pop %v3102
        %v3104 = vmul.f32 %v3086, 1.442695
        %v3105 = vpow.pop %v3104
        %v3106 = vmul.f32 %v3087, 1.442695
        %v3107 = vpow.pop %v3106
        %v3108 = vmul.f32 %v3088, 1.442695
        %v3109 = vpow.pop %v3108
        %v3110 = vmul.f32 %v3089, 1.442695
        %v3111 = vpow.pop %v3110
        %v3112 = vmul.f32 %v3090, 1.442695
        %v3113 = vpow.pop %v3112
        %v3114 = vmul.f32 %v3091, 1.442695
        %v3115 = vpow.pop %v3114
        %v3116 = vmul.f32 %v3092, 1.442695
        %v3117 = vpow.pop %v3116
        %v3118 = vmul.f32 %v3093, 1.442695
        %v3119 = vpow.pop %v3118
        %v3120 = vmul.f32 %v3094, 1.442695
        %v3121 = vpow.pop %v3120
        %v3122 = vmul.f32 %v3095, 1.442695
        %v3123 = vpow.pop %v3122
        %v3124 = vmul.f32 %v3096, 1.442695
        %v3125 = vpow.pop %v3124
        %v3126 = vmul.f32 %v3097, 1.442695
        %v3127 = vpow.pop %v3126
        %v3128 = vmul.f32 %v3098, 1.442695
        %v3129 = vpow.pop %v3128
        %v3130 = vmul.f32 %v3099, 1.442695
        %v3131 = vpow.pop %v3130
        %v3132 = vsel %vm506, %v3101, 0.0
        %3133 = vadd.xlane.f32.xlu0 %v3132
        %v3134 = vpop.xlane.xlu0 %3133
        %v3135 = vsel %vm506, %v3103, 0.0
        %3136 = vadd.xlane.f32.xlu0 %v3135
        %v3137 = vpop.xlane.xlu0 %3136
        %v3138 = vsel %vm506, %v3105, 0.0
        %3139 = vadd.xlane.f32.xlu0 %v3138
        %v3140 = vpop.xlane.xlu0 %3139
        %v3141 = vsel %vm506, %v3107, 0.0
        %3142 = vadd.xlane.f32.xlu0 %v3141
        %v3143 = vpop.xlane.xlu0 %3142
        %v3144 = vsel %vm506, %v3109, 0.0
        %3145 = vadd.xlane.f32.xlu0 %v3144
        %v3146 = vpop.xlane.xlu0 %3145
        %v3147 = vsel %vm506, %v3111, 0.0
        %3148 = vadd.xlane.f32.xlu0 %v3147
        %v3149 = vpop.xlane.xlu0 %3148
        %v3150 = vsel %vm506, %v3113, 0.0
        %3151 = vadd.xlane.f32.xlu0 %v3150
        %v3152 = vpop.xlane.xlu0 %3151
        %v3153 = vsel %vm506, %v3115, 0.0
        %3154 = vadd.xlane.f32.xlu0 %v3153
        %v3155 = vpop.xlane.xlu0 %3154
        %v3156 = vsel %vm506, %v3117, 0.0
        %3157 = vadd.xlane.f32.xlu0 %v3156
        %v3158 = vpop.xlane.xlu0 %3157
        %v3159 = vsel %vm506, %v3119, 0.0
        %3160 = vadd.xlane.f32.xlu0 %v3159
        %v3161 = vpop.xlane.xlu0 %3160
        %v3162 = vsel %vm506, %v3121, 0.0
        %3163 = vadd.xlane.f32.xlu0 %v3162
        %v3164 = vpop.xlane.xlu0 %3163
        %v3165 = vsel %vm506, %v3123, 0.0
        %3166 = vadd.xlane.f32.xlu0 %v3165
        %v3167 = vpop.xlane.xlu0 %3166
        %v3168 = vsel %vm506, %v3125, 0.0
        %3169 = vadd.xlane.f32.xlu0 %v3168
        %v3170 = vpop.xlane.xlu0 %3169
        %v3171 = vsel %vm506, %v3127, 0.0
        %3172 = vadd.xlane.f32.xlu0 %v3171
        %v3173 = vpop.xlane.xlu0 %3172
        %v3174 = vsel %vm506, %v3129, 0.0
        %3175 = vadd.xlane.f32.xlu0 %v3174
        %v3176 = vpop.xlane.xlu0 %3175
        %v3177 = vsel %vm506, %v3131, 0.0
        %3178 = vadd.xlane.f32.xlu0 %v3177
        %v3179 = vpop.xlane.xlu0 %3178
        %v3180 = vrcp.pop %v3134
        %v3181 = vrcp.pop %v3137
        %v3182 = vrcp.pop %v3140
        %v3183 = vrcp.pop %v3143
        %v3184 = vrcp.pop %v3146
        %v3185 = vrcp.pop %v3149
        %v3186 = vrcp.pop %v3152
        %v3187 = vrcp.pop %v3155
        %v3188 = vrcp.pop %v3158
        %v3189 = vrcp.pop %v3161
        %v3190 = vrcp.pop %v3164
        %v3191 = vrcp.pop %v3167
        %v3192 = vrcp.pop %v3170
        %v3193 = vrcp.pop %v3173
        %v3194 = vrcp.pop %v3176
        %v3195 = vrcp.pop %v3179
        %v3196 = vmul.f32 %v3101, %v3180
        %v3197 = vmul.f32 %v3103, %v3181
        %v3198 = vmul.f32 %v3105, %v3182
        %v3199 = vmul.f32 %v3107, %v3183
        %v3200 = vmul.f32 %v3109, %v3184
        %v3201 = vmul.f32 %v3111, %v3185
        %v3202 = vmul.f32 %v3113, %v3186
        %v3203 = vmul.f32 %v3115, %v3187
        %v3204 = vmul.f32 %v3117, %v3188
        %v3205 = vmul.f32 %v3119, %v3189
        %v3206 = vmul.f32 %v3121, %v3190
        %v3207 = vmul.f32 %v3123, %v3191
        %v3208 = vmul.f32 %v3125, %v3192
        %v3209 = vmul.f32 %v3127, %v3193
        %v3210 = vmul.f32 %v3129, %v3194
        %v3211 = vmul.f32 %v3131, %v3195
        %v3212 = vpack.c.bf16 %v3196, %v3196
        %v3213 = vpack.c.bf16 %v3197, %v3197
        %v3214 = vpack.c.bf16 %v3198, %v3198
        %v3215 = vpack.c.bf16 %v3199, %v3199
        %v3216 = vpack.c.bf16 %v3200, %v3200
        %v3217 = vpack.c.bf16 %v3201, %v3201
        %v3218 = vpack.c.bf16 %v3202, %v3202
        %v3219 = vpack.c.bf16 %v3203, %v3203
        %v3220 = vpack.c.bf16 %v3204, %v3204
        %v3221 = vpack.c.bf16 %v3205, %v3205
        %v3222 = vpack.c.bf16 %v3206, %v3206
        %v3223 = vpack.c.bf16 %v3207, %v3207
        %v3224 = vpack.c.bf16 %v3208, %v3208
        %v3225 = vpack.c.bf16 %v3209, %v3209
        %v3226 = vpack.c.bf16 %v3210, %v3210
        %v3227 = vpack.c.bf16 %v3211, %v3211
        %3228 = vrot.lane.b32.xlu0 %v487, 56
        %v3229 = vpop.permute.xlu0 %3228
        %v3231 = vsel %vm506, %v3212, 0
        %v3234 = vsel %vm1470, %v3229, 0
        %3236 = vmatprep.subr.bf16.mxu0 0
        %3237 = vmatpush1.bf16.msra.mxu0 %v3234
        %3238 = vmatprep.subr.bf16.mxu0 0
        %3239 = vmatpush1.bf16.msra.mxu0 0
        %3240 = vmatprep.subr.bf16.mxu0 0
        %3241 = vmatpush1.bf16.msra.mxu0 0
        %3242 = vmatprep.subr.bf16.mxu0 0
        %3243 = vmatpush1.bf16.msra.mxu0 0
        %3244 = vmatprep.subr.bf16.mxu0 0
        %3245 = vmatpush1.bf16.msra.mxu0 0
        %3246 = vmatprep.subr.bf16.mxu0 0
        %3247 = vmatpush1.bf16.msra.mxu0 0
        %3248 = vmatprep.subr.bf16.mxu0 0
        %3249 = vmatpush1.bf16.msra.mxu0 0
        %3250 = vmatprep.subr.bf16.mxu0 0
        %3251 = vmatpush1.bf16.msra.mxu0 0
        %3252 = vmatprep.subr.bf16.mxu0 0
        %3253 = vmatpush1.bf16.msra.mxu0 0
        %3254 = vmatprep.subr.bf16.mxu0 0
        %3255 = vmatpush1.bf16.msra.mxu0 0
        %3256 = vmatprep.subr.bf16.mxu0 0
        %3257 = vmatpush1.bf16.msra.mxu0 0
        %3258 = vmatprep.subr.bf16.mxu0 0
        %3259 = vmatpush1.bf16.msra.mxu0 0
        %3260 = vmatprep.subr.bf16.mxu0 0
        %3261 = vmatpush1.bf16.msra.mxu0 0
        %3262 = vmatprep.subr.bf16.mxu0 0
        %3263 = vmatpush1.bf16.msra.mxu0 0
        %3264 = vmatprep.subr.bf16.mxu0 0
        %3265 = vmatpush1.bf16.msra.mxu0 0
        %3266 = vmatprep.subr.bf16.mxu0 0
        %3267 = vmatpush1.bf16.msra.mxu0 0
        %3268 = vmatprep.mubr.bf16.mxu0 0
        %3269 = vmatmul.mubr.bf16.gmra.mrb[0].mxu0 %v3231
        %v3270 = vpop.f32.mrb[0].mxu0
        %v3271 = vadd.f32 0.0, %v3270
        %v3272 = vpop.f32.mrb[0].mxu0
        %v3273 = vpop.f32.mrb[0].mxu0
        %v3274 = vpop.f32.mrb[0].mxu0
        %3275 = vdwg.mxu0
        %3276 = vrot.lane.b32.xlu0 %v488, 56
        %v3277 = vpop.permute.xlu0 %3276
        %v3279 = vsel %vm506, %v3213, 0
        %v3282 = vsel %vm1470, %v3277, 0
        %3284 = vmatprep.subr.bf16.mxu0 0
        %3285 = vmatpush1.bf16.msra.mxu0 %v3282
        %3286 = vmatprep.subr.bf16.mxu0 0
        %3287 = vmatpush1.bf16.msra.mxu0 0
        %3288 = vmatprep.subr.bf16.mxu0 0
        %3289 = vmatpush1.bf16.msra.mxu0 0
        %3290 = vmatprep.subr.bf16.mxu0 0
        %3291 = vmatpush1.bf16.msra.mxu0 0
        %3292 = vmatprep.subr.bf16.mxu0 0
        %3293 = vmatpush1.bf16.msra.mxu0 0
        %3294 = vmatprep.subr.bf16.mxu0 0
        %3295 = vmatpush1.bf16.msra.mxu0 0
        %3296 = vmatprep.subr.bf16.mxu0 0
        %3297 = vmatpush1.bf16.msra.mxu0 0
        %3298 = vmatprep.subr.bf16.mxu0 0
        %3299 = vmatpush1.bf16.msra.mxu0 0
        %3300 = vmatprep.subr.bf16.mxu0 0
        %3301 = vmatpush1.bf16.msra.mxu0 0
        %3302 = vmatprep.subr.bf16.mxu0 0
        %3303 = vmatpush1.bf16.msra.mxu0 0
        %3304 = vmatprep.subr.bf16.mxu0 0
        %3305 = vmatpush1.bf16.msra.mxu0 0
        %3306 = vmatprep.subr.bf16.mxu0 0
        %3307 = vmatpush1.bf16.msra.mxu0 0
        %3308 = vmatprep.subr.bf16.mxu0 0
        %3309 = vmatpush1.bf16.msra.mxu0 0
        %3310 = vmatprep.subr.bf16.mxu0 0
        %3311 = vmatpush1.bf16.msra.mxu0 0
        %3312 = vmatprep.subr.bf16.mxu0 0
        %3313 = vmatpush1.bf16.msra.mxu0 0
        %3314 = vmatprep.subr.bf16.mxu0 0
        %3315 = vmatpush1.bf16.msra.mxu0 0
        %3316 = vmatprep.mubr.bf16.mxu0 0
        %3317 = vmatmul.mubr.bf16.gmra.mrb[0].mxu0 %v3279
        %v3318 = vpop.f32.mrb[0].mxu0
        %v3319 = vadd.f32 0.0, %v3318
        %v3320 = vpop.f32.mrb[0].mxu0
        %v3321 = vpop.f32.mrb[0].mxu0
        %v3322 = vpop.f32.mrb[0].mxu0
        %3323 = vdwg.mxu0
        %3324 = vrot.lane.b32.xlu0 %v489, 56
        %v3325 = vpop.permute.xlu0 %3324
        %v3327 = vsel %vm506, %v3214, 0
        %v3330 = vsel %vm1470, %v3325, 0
        %3332 = vmatprep.subr.bf16.mxu0 0
        %3333 = vmatpush1.bf16.msra.mxu0 %v3330
        %3334 = vmatprep.subr.bf16.mxu0 0
        %3335 = vmatpush1.bf16.msra.mxu0 0
        %3336 = vmatprep.subr.bf16.mxu0 0
        %3337 = vmatpush1.bf16.msra.mxu0 0
        %3338 = vmatprep.subr.bf16.mxu0 0
        %3339 = vmatpush1.bf16.msra.mxu0 0
        %3340 = vmatprep.subr.bf16.mxu0 0
        %3341 = vmatpush1.bf16.msra.mxu0 0
        %3342 = vmatprep.subr.bf16.mxu0 0
        %3343 = vmatpush1.bf16.msra.mxu0 0
        %3344 = vmatprep.subr.bf16.mxu0 0
        %3345 = vmatpush1.bf16.msra.mxu0 0
        %3346 = vmatprep.subr.bf16.mxu0 0
        %3347 = vmatpush1.bf16.msra.mxu0 0
        %3348 = vmatprep.subr.bf16.mxu0 0
        %3349 = vmatpush1.bf16.msra.mxu0 0
        %3350 = vmatprep.subr.bf16.mxu0 0
        %3351 = vmatpush1.bf16.msra.mxu0 0
        %3352 = vmatprep.subr.bf16.mxu0 0
        %3353 = vmatpush1.bf16.msra.mxu0 0
        %3354 = vmatprep.subr.bf16.mxu0 0
        %3355 = vmatpush1.bf16.msra.mxu0 0
        %3356 = vmatprep.subr.bf16.mxu0 0
        %3357 = vmatpush1.bf16.msra.mxu0 0
        %3358 = vmatprep.subr.bf16.mxu0 0
        %3359 = vmatpush1.bf16.msra.mxu0 0
        %3360 = vmatprep.subr.bf16.mxu0 0
        %3361 = vmatpush1.bf16.msra.mxu0 0
        %3362 = vmatprep.subr.bf16.mxu0 0
        %3363 = vmatpush1.bf16.msra.mxu0 0
        %3364 = vmatprep.mubr.bf16.mxu0 0
        %3365 = vmatmul.mubr.bf16.gmra.mrb[0].mxu0 %v3327
        %v3366 = vpop.f32.mrb[0].mxu0
        %v3367 = vadd.f32 0.0, %v3366
        %v3368 = vpop.f32.mrb[0].mxu0
        %v3369 = vpop.f32.mrb[0].mxu0
        %v3370 = vpop.f32.mrb[0].mxu0
        %3371 = vdwg.mxu0
        %3372 = vrot.lane.b32.xlu0 %v490, 56
        %v3373 = vpop.permute.xlu0 %3372
        %v3375 = vsel %vm506, %v3215, 0
        %v3378 = vsel %vm1470, %v3373, 0
        %3380 = vmatprep.subr.bf16.mxu0 0
        %3381 = vmatpush1.bf16.msra.mxu0 %v3378
        %3382 = vmatprep.subr.bf16.mxu0 0
        %3383 = vmatpush1.bf16.msra.mxu0 0
        %3384 = vmatprep.subr.bf16.mxu0 0
        %3385 = vmatpush1.bf16.msra.mxu0 0
        %3386 = vmatprep.subr.bf16.mxu0 0
        %3387 = vmatpush1.bf16.msra.mxu0 0
        %3388 = vmatprep.subr.bf16.mxu0 0
        %3389 = vmatpush1.bf16.msra.mxu0 0
        %3390 = vmatprep.subr.bf16.mxu0 0
        %3391 = vmatpush1.bf16.msra.mxu0 0
        %3392 = vmatprep.subr.bf16.mxu0 0
        %3393 = vmatpush1.bf16.msra.mxu0 0
        %3394 = vmatprep.subr.bf16.mxu0 0
        %3395 = vmatpush1.bf16.msra.mxu0 0
        %3396 = vmatprep.subr.bf16.mxu0 0
        %3397 = vmatpush1.bf16.msra.mxu0 0
        %3398 = vmatprep.subr.bf16.mxu0 0
        %3399 = vmatpush1.bf16.msra.mxu0 0
        %3400 = vmatprep.subr.bf16.mxu0 0
        %3401 = vmatpush1.bf16.msra.mxu0 0
        %3402 = vmatprep.subr.bf16.mxu0 0
        %3403 = vmatpush1.bf16.msra.mxu0 0
        %3404 = vmatprep.subr.bf16.mxu0 0
        %3405 = vmatpush1.bf16.msra.mxu0 0
        %3406 = vmatprep.subr.bf16.mxu0 0
        %3407 = vmatpush1.bf16.msra.mxu0 0
        %3408 = vmatprep.subr.bf16.mxu0 0
        %3409 = vmatpush1.bf16.msra.mxu0 0
        %3410 = vmatprep.subr.bf16.mxu0 0
        %3411 = vmatpush1.bf16.msra.mxu0 0
        %3412 = vmatprep.mubr.bf16.mxu0 0
        %3413 = vmatmul.mubr.bf16.gmra.mrb[0].mxu0 %v3375
        %v3414 = vpop.f32.mrb[0].mxu0
        %v3415 = vadd.f32 0.0, %v3414
        %v3416 = vpop.f32.mrb[0].mxu0
        %v3417 = vpop.f32.mrb[0].mxu0
        %v3418 = vpop.f32.mrb[0].mxu0
        %3419 = vdwg.mxu0
        %3420 = vrot.lane.b32.xlu0 %v491, 56
        %v3421 = vpop.permute.xlu0 %3420
        %v3423 = vsel %vm506, %v3216, 0
        %v3426 = vsel %vm1470, %v3421, 0
        %3428 = vmatprep.subr.bf16.mxu0 0
        %3429 = vmatpush1.bf16.msra.mxu0 %v3426
        %3430 = vmatprep.subr.bf16.mxu0 0
        %3431 = vmatpush1.bf16.msra.mxu0 0
        %3432 = vmatprep.subr.bf16.mxu0 0
        %3433 = vmatpush1.bf16.msra.mxu0 0
        %3434 = vmatprep.subr.bf16.mxu0 0
        %3435 = vmatpush1.bf16.msra.mxu0 0
        %3436 = vmatprep.subr.bf16.mxu0 0
        %3437 = vmatpush1.bf16.msra.mxu0 0
        %3438 = vmatprep.subr.bf16.mxu0 0
        %3439 = vmatpush1.bf16.msra.mxu0 0
        %3440 = vmatprep.subr.bf16.mxu0 0
        %3441 = vmatpush1.bf16.msra.mxu0 0
        %3442 = vmatprep.subr.bf16.mxu0 0
        %3443 = vmatpush1.bf16.msra.mxu0 0
        %3444 = vmatprep.subr.bf16.mxu0 0
        %3445 = vmatpush1.bf16.msra.mxu0 0
        %3446 = vmatprep.subr.bf16.mxu0 0
        %3447 = vmatpush1.bf16.msra.mxu0 0
        %3448 = vmatprep.subr.bf16.mxu0 0
        %3449 = vmatpush1.bf16.msra.mxu0 0
        %3450 = vmatprep.subr.bf16.mxu0 0
        %3451 = vmatpush1.bf16.msra.mxu0 0
        %3452 = vmatprep.subr.bf16.mxu0 0
        %3453 = vmatpush1.bf16.msra.mxu0 0
        %3454 = vmatprep.subr.bf16.mxu0 0
        %3455 = vmatpush1.bf16.msra.mxu0 0
        %3456 = vmatprep.subr.bf16.mxu0 0
        %3457 = vmatpush1.bf16.msra.mxu0 0
        %3458 = vmatprep.subr.bf16.mxu0 0
        %3459 = vmatpush1.bf16.msra.mxu0 0
        %3460 = vmatprep.mubr.bf16.mxu0 0
        %3461 = vmatmul.mubr.bf16.gmra.mrb[0].mxu0 %v3423
        %v3462 = vpop.f32.mrb[0].mxu0
        %v3463 = vadd.f32 0.0, %v3462
        %v3464 = vpop.f32.mrb[0].mxu0
        %v3465 = vpop.f32.mrb[0].mxu0
        %v3466 = vpop.f32.mrb[0].mxu0
        %3467 = vdwg.mxu0
        %3468 = vrot.lane.b32.xlu0 %v492, 56
        %v3469 = vpop.permute.xlu0 %3468
        %v3471 = vsel %vm506, %v3217, 0
        %v3474 = vsel %vm1470, %v3469, 0
        %3476 = vmatprep.subr.bf16.mxu0 0
        %3477 = vmatpush1.bf16.msra.mxu0 %v3474
        %3478 = vmatprep.subr.bf16.mxu0 0
        %3479 = vmatpush1.bf16.msra.mxu0 0
        %3480 = vmatprep.subr.bf16.mxu0 0
        %3481 = vmatpush1.bf16.msra.mxu0 0
        %3482 = vmatprep.subr.bf16.mxu0 0
        %3483 = vmatpush1.bf16.msra.mxu0 0
        %3484 = vmatprep.subr.bf16.mxu0 0
        %3485 = vmatpush1.bf16.msra.mxu0 0
        %3486 = vmatprep.subr.bf16.mxu0 0
        %3487 = vmatpush1.bf16.msra.mxu0 0
        %3488 = vmatprep.subr.bf16.mxu0 0
        %3489 = vmatpush1.bf16.msra.mxu0 0
        %3490 = vmatprep.subr.bf16.mxu0 0
        %3491 = vmatpush1.bf16.msra.mxu0 0
        %3492 = vmatprep.subr.bf16.mxu0 0
        %3493 = vmatpush1.bf16.msra.mxu0 0
        %3494 = vmatprep.subr.bf16.mxu0 0
        %3495 = vmatpush1.bf16.msra.mxu0 0
        %3496 = vmatprep.subr.bf16.mxu0 0
        %3497 = vmatpush1.bf16.msra.mxu0 0
        %3498 = vmatprep.subr.bf16.mxu0 0
        %3499 = vmatpush1.bf16.msra.mxu0 0
        %3500 = vmatprep.subr.bf16.mxu0 0
        %3501 = vmatpush1.bf16.msra.mxu0 0
        %3502 = vmatprep.subr.bf16.mxu0 0
        %3503 = vmatpush1.bf16.msra.mxu0 0
        %3504 = vmatprep.subr.bf16.mxu0 0
        %3505 = vmatpush1.bf16.msra.mxu0 0
        %3506 = vmatprep.subr.bf16.mxu0 0
        %3507 = vmatpush1.bf16.msra.mxu0 0
        %3508 = vmatprep.mubr.bf16.mxu0 0
        %3509 = vmatmul.mubr.bf16.gmra.mrb[0].mxu0 %v3471
        %v3510 = vpop.f32.mrb[0].mxu0
        %v3511 = vadd.f32 0.0, %v3510
        %v3512 = vpop.f32.mrb[0].mxu0
        %v3513 = vpop.f32.mrb[0].mxu0
        %v3514 = vpop.f32.mrb[0].mxu0
        %3515 = vdwg.mxu0
        %3516 = vrot.lane.b32.xlu0 %v493, 56
        %v3517 = vpop.permute.xlu0 %3516
        %v3519 = vsel %vm506, %v3218, 0
        %v3522 = vsel %vm1470, %v3517, 0
        %3524 = vmatprep.subr.bf16.mxu0 0
        %3525 = vmatpush1.bf16.msra.mxu0 %v3522
        %3526 = vmatprep.subr.bf16.mxu0 0
        %3527 = vmatpush1.bf16.msra.mxu0 0
        %3528 = vmatprep.subr.bf16.mxu0 0
        %3529 = vmatpush1.bf16.msra.mxu0 0
        %3530 = vmatprep.subr.bf16.mxu0 0
        %3531 = vmatpush1.bf16.msra.mxu0 0
        %3532 = vmatprep.subr.bf16.mxu0 0
        %3533 = vmatpush1.bf16.msra.mxu0 0
        %3534 = vmatprep.subr.bf16.mxu0 0
        %3535 = vmatpush1.bf16.msra.mxu0 0
        %3536 = vmatprep.subr.bf16.mxu0 0
        %3537 = vmatpush1.bf16.msra.mxu0 0
        %3538 = vmatprep.subr.bf16.mxu0 0
        %3539 = vmatpush1.bf16.msra.mxu0 0
        %3540 = vmatprep.subr.bf16.mxu0 0
        %3541 = vmatpush1.bf16.msra.mxu0 0
        %3542 = vmatprep.subr.bf16.mxu0 0
        %3543 = vmatpush1.bf16.msra.mxu0 0
        %3544 = vmatprep.subr.bf16.mxu0 0
        %3545 = vmatpush1.bf16.msra.mxu0 0
        %3546 = vmatprep.subr.bf16.mxu0 0
        %3547 = vmatpush1.bf16.msra.mxu0 0
        %3548 = vmatprep.subr.bf16.mxu0 0
        %3549 = vmatpush1.bf16.msra.mxu0 0
        %3550 = vmatprep.subr.bf16.mxu0 0
        %3551 = vmatpush1.bf16.msra.mxu0 0
        %3552 = vmatprep.subr.bf16.mxu0 0
        %3553 = vmatpush1.bf16.msra.mxu0 0
        %3554 = vmatprep.subr.bf16.mxu0 0
        %3555 = vmatpush1.bf16.msra.mxu0 0
        %3556 = vmatprep.mubr.bf16.mxu0 0
        %3557 = vmatmul.mubr.bf16.gmra.mrb[0].mxu0 %v3519
        %v3558 = vpop.f32.mrb[0].mxu0
        %v3559 = vadd.f32 0.0, %v3558
        %v3560 = vpop.f32.mrb[0].mxu0
        %v3561 = vpop.f32.mrb[0].mxu0
        %v3562 = vpop.f32.mrb[0].mxu0
        %3563 = vdwg.mxu0
        %3564 = vrot.lane.b32.xlu0 %v494, 56
        %v3565 = vpop.permute.xlu0 %3564
        %v3567 = vsel %vm506, %v3219, 0
        %v3570 = vsel %vm1470, %v3565, 0
        %3572 = vmatprep.subr.bf16.mxu0 0
        %3573 = vmatpush1.bf16.msra.mxu0 %v3570
        %3574 = vmatprep.subr.bf16.mxu0 0
        %3575 = vmatpush1.bf16.msra.mxu0 0
        %3576 = vmatprep.subr.bf16.mxu0 0
        %3577 = vmatpush1.bf16.msra.mxu0 0
        %3578 = vmatprep.subr.bf16.mxu0 0
        %3579 = vmatpush1.bf16.msra.mxu0 0
        %3580 = vmatprep.subr.bf16.mxu0 0
        %3581 = vmatpush1.bf16.msra.mxu0 0
        %3582 = vmatprep.subr.bf16.mxu0 0
        %3583 = vmatpush1.bf16.msra.mxu0 0
        %3584 = vmatprep.subr.bf16.mxu0 0
        %3585 = vmatpush1.bf16.msra.mxu0 0
        %3586 = vmatprep.subr.bf16.mxu0 0
        %3587 = vmatpush1.bf16.msra.mxu0 0
        %3588 = vmatprep.subr.bf16.mxu0 0
        %3589 = vmatpush1.bf16.msra.mxu0 0
        %3590 = vmatprep.subr.bf16.mxu0 0
        %3591 = vmatpush1.bf16.msra.mxu0 0
        %3592 = vmatprep.subr.bf16.mxu0 0
        %3593 = vmatpush1.bf16.msra.mxu0 0
        %3594 = vmatprep.subr.bf16.mxu0 0
        %3595 = vmatpush1.bf16.msra.mxu0 0
        %3596 = vmatprep.subr.bf16.mxu0 0
        %3597 = vmatpush1.bf16.msra.mxu0 0
        %3598 = vmatprep.subr.bf16.mxu0 0
        %3599 = vmatpush1.bf16.msra.mxu0 0
        %3600 = vmatprep.subr.bf16.mxu0 0
        %3601 = vmatpush1.bf16.msra.mxu0 0
        %3602 = vmatprep.subr.bf16.mxu0 0
        %3603 = vmatpush1.bf16.msra.mxu0 0
        %3604 = vmatprep.mubr.bf16.mxu0 0
        %3605 = vmatmul.mubr.bf16.gmra.mrb[0].mxu0 %v3567
        %v3606 = vpop.f32.mrb[0].mxu0
        %v3607 = vadd.f32 0.0, %v3606
        %v3608 = vpop.f32.mrb[0].mxu0
        %v3609 = vpop.f32.mrb[0].mxu0
        %v3610 = vpop.f32.mrb[0].mxu0
        %3611 = vdwg.mxu0
        %3612 = vrot.lane.b32.xlu0 %v495, 56
        %v3613 = vpop.permute.xlu0 %3612
        %v3615 = vsel %vm506, %v3220, 0
        %v3618 = vsel %vm1470, %v3613, 0
        %3620 = vmatprep.subr.bf16.mxu0 0
        %3621 = vmatpush1.bf16.msra.mxu0 %v3618
        %3622 = vmatprep.subr.bf16.mxu0 0
        %3623 = vmatpush1.bf16.msra.mxu0 0
        %3624 = vmatprep.subr.bf16.mxu0 0
        %3625 = vmatpush1.bf16.msra.mxu0 0
        %3626 = vmatprep.subr.bf16.mxu0 0
        %3627 = vmatpush1.bf16.msra.mxu0 0
        %3628 = vmatprep.subr.bf16.mxu0 0
        %3629 = vmatpush1.bf16.msra.mxu0 0
        %3630 = vmatprep.subr.bf16.mxu0 0
        %3631 = vmatpush1.bf16.msra.mxu0 0
        %3632 = vmatprep.subr.bf16.mxu0 0
        %3633 = vmatpush1.bf16.msra.mxu0 0
        %3634 = vmatprep.subr.bf16.mxu0 0
        %3635 = vmatpush1.bf16.msra.mxu0 0
        %3636 = vmatprep.subr.bf16.mxu0 0
        %3637 = vmatpush1.bf16.msra.mxu0 0
        %3638 = vmatprep.subr.bf16.mxu0 0
        %3639 = vmatpush1.bf16.msra.mxu0 0
        %3640 = vmatprep.subr.bf16.mxu0 0
        %3641 = vmatpush1.bf16.msra.mxu0 0
        %3642 = vmatprep.subr.bf16.mxu0 0
        %3643 = vmatpush1.bf16.msra.mxu0 0
        %3644 = vmatprep.subr.bf16.mxu0 0
        %3645 = vmatpush1.bf16.msra.mxu0 0
        %3646 = vmatprep.subr.bf16.mxu0 0
        %3647 = vmatpush1.bf16.msra.mxu0 0
        %3648 = vmatprep.subr.bf16.mxu0 0
        %3649 = vmatpush1.bf16.msra.mxu0 0
        %3650 = vmatprep.subr.bf16.mxu0 0
        %3651 = vmatpush1.bf16.msra.mxu0 0
        %3652 = vmatprep.mubr.bf16.mxu0 0
        %3653 = vmatmul.mubr.bf16.gmra.mrb[0].mxu0 %v3615
        %v3654 = vpop.f32.mrb[0].mxu0
        %v3655 = vadd.f32 0.0, %v3654
        %v3656 = vpop.f32.mrb[0].mxu0
        %v3657 = vpop.f32.mrb[0].mxu0
        %v3658 = vpop.f32.mrb[0].mxu0
        %3659 = vdwg.mxu0
        %3660 = vrot.lane.b32.xlu0 %v496, 56
        %v3661 = vpop.permute.xlu0 %3660
        %v3663 = vsel %vm506, %v3221, 0
        %v3666 = vsel %vm1470, %v3661, 0
        %3668 = vmatprep.subr.bf16.mxu0 0
        %3669 = vmatpush1.bf16.msra.mxu0 %v3666
        %3670 = vmatprep.subr.bf16.mxu0 0
        %3671 = vmatpush1.bf16.msra.mxu0 0
        %3672 = vmatprep.subr.bf16.mxu0 0
        %3673 = vmatpush1.bf16.msra.mxu0 0
        %3674 = vmatprep.subr.bf16.mxu0 0
        %3675 = vmatpush1.bf16.msra.mxu0 0
        %3676 = vmatprep.subr.bf16.mxu0 0
        %3677 = vmatpush1.bf16.msra.mxu0 0
        %3678 = vmatprep.subr.bf16.mxu0 0
        %3679 = vmatpush1.bf16.msra.mxu0 0
        %3680 = vmatprep.subr.bf16.mxu0 0
        %3681 = vmatpush1.bf16.msra.mxu0 0
        %3682 = vmatprep.subr.bf16.mxu0 0
        %3683 = vmatpush1.bf16.msra.mxu0 0
        %3684 = vmatprep.subr.bf16.mxu0 0
        %3685 = vmatpush1.bf16.msra.mxu0 0
        %3686 = vmatprep.subr.bf16.mxu0 0
        %3687 = vmatpush1.bf16.msra.mxu0 0
        %3688 = vmatprep.subr.bf16.mxu0 0
        %3689 = vmatpush1.bf16.msra.mxu0 0
        %3690 = vmatprep.subr.bf16.mxu0 0
        %3691 = vmatpush1.bf16.msra.mxu0 0
        %3692 = vmatprep.subr.bf16.mxu0 0
        %3693 = vmatpush1.bf16.msra.mxu0 0
        %3694 = vmatprep.subr.bf16.mxu0 0
        %3695 = vmatpush1.bf16.msra.mxu0 0
        %3696 = vmatprep.subr.bf16.mxu0 0
        %3697 = vmatpush1.bf16.msra.mxu0 0
        %3698 = vmatprep.subr.bf16.mxu0 0
        %3699 = vmatpush1.bf16.msra.mxu0 0
        %3700 = vmatprep.mubr.bf16.mxu0 0
        %3701 = vmatmul.mubr.bf16.gmra.mrb[0].mxu0 %v3663
        %v3702 = vpop.f32.mrb[0].mxu0
        %v3703 = vadd.f32 0.0, %v3702
        %v3704 = vpop.f32.mrb[0].mxu0
        %v3705 = vpop.f32.mrb[0].mxu0
        %v3706 = vpop.f32.mrb[0].mxu0
        %3707 = vdwg.mxu0
        %3708 = vrot.lane.b32.xlu0 %v497, 56
        %v3709 = vpop.permute.xlu0 %3708
        %v3711 = vsel %vm506, %v3222, 0
        %v3714 = vsel %vm1470, %v3709, 0
        %3716 = vmatprep.subr.bf16.mxu0 0
        %3717 = vmatpush1.bf16.msra.mxu0 %v3714
        %3718 = vmatprep.subr.bf16.mxu0 0
        %3719 = vmatpush1.bf16.msra.mxu0 0
        %3720 = vmatprep.subr.bf16.mxu0 0
        %3721 = vmatpush1.bf16.msra.mxu0 0
        %3722 = vmatprep.subr.bf16.mxu0 0
        %3723 = vmatpush1.bf16.msra.mxu0 0
        %3724 = vmatprep.subr.bf16.mxu0 0
        %3725 = vmatpush1.bf16.msra.mxu0 0
        %3726 = vmatprep.subr.bf16.mxu0 0
        %3727 = vmatpush1.bf16.msra.mxu0 0
        %3728 = vmatprep.subr.bf16.mxu0 0
        %3729 = vmatpush1.bf16.msra.mxu0 0
        %3730 = vmatprep.subr.bf16.mxu0 0
        %3731 = vmatpush1.bf16.msra.mxu0 0
        %3732 = vmatprep.subr.bf16.mxu0 0
        %3733 = vmatpush1.bf16.msra.mxu0 0
        %3734 = vmatprep.subr.bf16.mxu0 0
        %3735 = vmatpush1.bf16.msra.mxu0 0
        %3736 = vmatprep.subr.bf16.mxu0 0
        %3737 = vmatpush1.bf16.msra.mxu0 0
        %3738 = vmatprep.subr.bf16.mxu0 0
        %3739 = vmatpush1.bf16.msra.mxu0 0
        %3740 = vmatprep.subr.bf16.mxu0 0
        %3741 = vmatpush1.bf16.msra.mxu0 0
        %3742 = vmatprep.subr.bf16.mxu0 0
        %3743 = vmatpush1.bf16.msra.mxu0 0
        %3744 = vmatprep.subr.bf16.mxu0 0
        %3745 = vmatpush1.bf16.msra.mxu0 0
        %3746 = vmatprep.subr.bf16.mxu0 0
        %3747 = vmatpush1.bf16.msra.mxu0 0
        %3748 = vmatprep.mubr.bf16.mxu0 0
        %3749 = vmatmul.mubr.bf16.gmra.mrb[0].mxu0 %v3711
        %v3750 = vpop.f32.mrb[0].mxu0
        %v3751 = vadd.f32 0.0, %v3750
        %v3752 = vpop.f32.mrb[0].mxu0
        %v3753 = vpop.f32.mrb[0].mxu0
        %v3754 = vpop.f32.mrb[0].mxu0
        %3755 = vdwg.mxu0
        %3756 = vrot.lane.b32.xlu0 %v498, 56
        %v3757 = vpop.permute.xlu0 %3756
        %v3759 = vsel %vm506, %v3223, 0
        %v3762 = vsel %vm1470, %v3757, 0
        %3764 = vmatprep.subr.bf16.mxu0 0
        %3765 = vmatpush1.bf16.msra.mxu0 %v3762
        %3766 = vmatprep.subr.bf16.mxu0 0
        %3767 = vmatpush1.bf16.msra.mxu0 0
        %3768 = vmatprep.subr.bf16.mxu0 0
        %3769 = vmatpush1.bf16.msra.mxu0 0
        %3770 = vmatprep.subr.bf16.mxu0 0
        %3771 = vmatpush1.bf16.msra.mxu0 0
        %3772 = vmatprep.subr.bf16.mxu0 0
        %3773 = vmatpush1.bf16.msra.mxu0 0
        %3774 = vmatprep.subr.bf16.mxu0 0
        %3775 = vmatpush1.bf16.msra.mxu0 0
        %3776 = vmatprep.subr.bf16.mxu0 0
        %3777 = vmatpush1.bf16.msra.mxu0 0
        %3778 = vmatprep.subr.bf16.mxu0 0
        %3779 = vmatpush1.bf16.msra.mxu0 0
        %3780 = vmatprep.subr.bf16.mxu0 0
        %3781 = vmatpush1.bf16.msra.mxu0 0
        %3782 = vmatprep.subr.bf16.mxu0 0
        %3783 = vmatpush1.bf16.msra.mxu0 0
        %3784 = vmatprep.subr.bf16.mxu0 0
        %3785 = vmatpush1.bf16.msra.mxu0 0
        %3786 = vmatprep.subr.bf16.mxu0 0
        %3787 = vmatpush1.bf16.msra.mxu0 0
        %3788 = vmatprep.subr.bf16.mxu0 0
        %3789 = vmatpush1.bf16.msra.mxu0 0
        %3790 = vmatprep.subr.bf16.mxu0 0
        %3791 = vmatpush1.bf16.msra.mxu0 0
        %3792 = vmatprep.subr.bf16.mxu0 0
        %3793 = vmatpush1.bf16.msra.mxu0 0
        %3794 = vmatprep.subr.bf16.mxu0 0
        %3795 = vmatpush1.bf16.msra.mxu0 0
        %3796 = vmatprep.mubr.bf16.mxu0 0
        %3797 = vmatmul.mubr.bf16.gmra.mrb[0].mxu0 %v3759
        %v3798 = vpop.f32.mrb[0].mxu0
        %v3799 = vadd.f32 0.0, %v3798
        %v3800 = vpop.f32.mrb[0].mxu0
        %v3801 = vpop.f32.mrb[0].mxu0
        %v3802 = vpop.f32.mrb[0].mxu0
        %3803 = vdwg.mxu0
        %3804 = vrot.lane.b32.xlu0 %v499, 56
        %v3805 = vpop.permute.xlu0 %3804
        %v3807 = vsel %vm506, %v3224, 0
        %v3810 = vsel %vm1470, %v3805, 0
        %3812 = vmatprep.subr.bf16.mxu0 0
        %3813 = vmatpush1.bf16.msra.mxu0 %v3810
        %3814 = vmatprep.subr.bf16.mxu0 0
        %3815 = vmatpush1.bf16.msra.mxu0 0
        %3816 = vmatprep.subr.bf16.mxu0 0
        %3817 = vmatpush1.bf16.msra.mxu0 0
        %3818 = vmatprep.subr.bf16.mxu0 0
        %3819 = vmatpush1.bf16.msra.mxu0 0
        %3820 = vmatprep.subr.bf16.mxu0 0
        %3821 = vmatpush1.bf16.msra.mxu0 0
        %3822 = vmatprep.subr.bf16.mxu0 0
        %3823 = vmatpush1.bf16.msra.mxu0 0
        %3824 = vmatprep.subr.bf16.mxu0 0
        %3825 = vmatpush1.bf16.msra.mxu0 0
        %3826 = vmatprep.subr.bf16.mxu0 0
        %3827 = vmatpush1.bf16.msra.mxu0 0
        %3828 = vmatprep.subr.bf16.mxu0 0
        %3829 = vmatpush1.bf16.msra.mxu0 0
        %3830 = vmatprep.subr.bf16.mxu0 0
        %3831 = vmatpush1.bf16.msra.mxu0 0
        %3832 = vmatprep.subr.bf16.mxu0 0
        %3833 = vmatpush1.bf16.msra.mxu0 0
        %3834 = vmatprep.subr.bf16.mxu0 0
        %3835 = vmatpush1.bf16.msra.mxu0 0
        %3836 = vmatprep.subr.bf16.mxu0 0
        %3837 = vmatpush1.bf16.msra.mxu0 0
        %3838 = vmatprep.subr.bf16.mxu0 0
        %3839 = vmatpush1.bf16.msra.mxu0 0
        %3840 = vmatprep.subr.bf16.mxu0 0
        %3841 = vmatpush1.bf16.msra.mxu0 0
        %3842 = vmatprep.subr.bf16.mxu0 0
        %3843 = vmatpush1.bf16.msra.mxu0 0
        %3844 = vmatprep.mubr.bf16.mxu0 0
        %3845 = vmatmul.mubr.bf16.gmra.mrb[0].mxu0 %v3807
        %v3846 = vpop.f32.mrb[0].mxu0
        %v3847 = vadd.f32 0.0, %v3846
        %v3848 = vpop.f32.mrb[0].mxu0
        %v3849 = vpop.f32.mrb[0].mxu0
        %v3850 = vpop.f32.mrb[0].mxu0
        %3851 = vdwg.mxu0
        %3852 = vrot.lane.b32.xlu0 %v500, 56
        %v3853 = vpop.permute.xlu0 %3852
        %v3855 = vsel %vm506, %v3225, 0
        %v3858 = vsel %vm1470, %v3853, 0
        %3860 = vmatprep.subr.bf16.mxu0 0
        %3861 = vmatpush1.bf16.msra.mxu0 %v3858
        %3862 = vmatprep.subr.bf16.mxu0 0
        %3863 = vmatpush1.bf16.msra.mxu0 0
        %3864 = vmatprep.subr.bf16.mxu0 0
        %3865 = vmatpush1.bf16.msra.mxu0 0
        %3866 = vmatprep.subr.bf16.mxu0 0
        %3867 = vmatpush1.bf16.msra.mxu0 0
        %3868 = vmatprep.subr.bf16.mxu0 0
        %3869 = vmatpush1.bf16.msra.mxu0 0
        %3870 = vmatprep.subr.bf16.mxu0 0
        %3871 = vmatpush1.bf16.msra.mxu0 0
        %3872 = vmatprep.subr.bf16.mxu0 0
        %3873 = vmatpush1.bf16.msra.mxu0 0
        %3874 = vmatprep.subr.bf16.mxu0 0
        %3875 = vmatpush1.bf16.msra.mxu0 0
        %3876 = vmatprep.subr.bf16.mxu0 0
        %3877 = vmatpush1.bf16.msra.mxu0 0
        %3878 = vmatprep.subr.bf16.mxu0 0
        %3879 = vmatpush1.bf16.msra.mxu0 0
        %3880 = vmatprep.subr.bf16.mxu0 0
        %3881 = vmatpush1.bf16.msra.mxu0 0
        %3882 = vmatprep.subr.bf16.mxu0 0
        %3883 = vmatpush1.bf16.msra.mxu0 0
        %3884 = vmatprep.subr.bf16.mxu0 0
        %3885 = vmatpush1.bf16.msra.mxu0 0
        %3886 = vmatprep.subr.bf16.mxu0 0
        %3887 = vmatpush1.bf16.msra.mxu0 0
        %3888 = vmatprep.subr.bf16.mxu0 0
        %3889 = vmatpush1.bf16.msra.mxu0 0
        %3890 = vmatprep.subr.bf16.mxu0 0
        %3891 = vmatpush1.bf16.msra.mxu0 0
        %3892 = vmatprep.mubr.bf16.mxu0 0
        %3893 = vmatmul.mubr.bf16.gmra.mrb[0].mxu0 %v3855
        %v3894 = vpop.f32.mrb[0].mxu0
        %v3895 = vadd.f32 0.0, %v3894
        %v3896 = vpop.f32.mrb[0].mxu0
        %v3897 = vpop.f32.mrb[0].mxu0
        %v3898 = vpop.f32.mrb[0].mxu0
        %3899 = vdwg.mxu0
        %3900 = vrot.lane.b32.xlu0 %v501, 56
        %v3901 = vpop.permute.xlu0 %3900
        %v3903 = vsel %vm506, %v3226, 0
        %v3906 = vsel %vm1470, %v3901, 0
        %3908 = vmatprep.subr.bf16.mxu0 0
        %3909 = vmatpush1.bf16.msra.mxu0 %v3906
        %3910 = vmatprep.subr.bf16.mxu0 0
        %3911 = vmatpush1.bf16.msra.mxu0 0
        %3912 = vmatprep.subr.bf16.mxu0 0
        %3913 = vmatpush1.bf16.msra.mxu0 0
        %3914 = vmatprep.subr.bf16.mxu0 0
        %3915 = vmatpush1.bf16.msra.mxu0 0
        %3916 = vmatprep.subr.bf16.mxu0 0
        %3917 = vmatpush1.bf16.msra.mxu0 0
        %3918 = vmatprep.subr.bf16.mxu0 0
        %3919 = vmatpush1.bf16.msra.mxu0 0
        %3920 = vmatprep.subr.bf16.mxu0 0
        %3921 = vmatpush1.bf16.msra.mxu0 0
        %3922 = vmatprep.subr.bf16.mxu0 0
        %3923 = vmatpush1.bf16.msra.mxu0 0
        %3924 = vmatprep.subr.bf16.mxu0 0
        %3925 = vmatpush1.bf16.msra.mxu0 0
        %3926 = vmatprep.subr.bf16.mxu0 0
        %3927 = vmatpush1.bf16.msra.mxu0 0
        %3928 = vmatprep.subr.bf16.mxu0 0
        %3929 = vmatpush1.bf16.msra.mxu0 0
        %3930 = vmatprep.subr.bf16.mxu0 0
        %3931 = vmatpush1.bf16.msra.mxu0 0
        %3932 = vmatprep.subr.bf16.mxu0 0
        %3933 = vmatpush1.bf16.msra.mxu0 0
        %3934 = vmatprep.subr.bf16.mxu0 0
        %3935 = vmatpush1.bf16.msra.mxu0 0
        %3936 = vmatprep.subr.bf16.mxu0 0
        %3937 = vmatpush1.bf16.msra.mxu0 0
        %3938 = vmatprep.subr.bf16.mxu0 0
        %3939 = vmatpush1.bf16.msra.mxu0 0
        %3940 = vmatprep.mubr.bf16.mxu0 0
        %3941 = vmatmul.mubr.bf16.gmra.mrb[0].mxu0 %v3903
        %v3942 = vpop.f32.mrb[0].mxu0
        %v3943 = vadd.f32 0.0, %v3942
        %v3944 = vpop.f32.mrb[0].mxu0
        %v3945 = vpop.f32.mrb[0].mxu0
        %v3946 = vpop.f32.mrb[0].mxu0
        %3947 = vdwg.mxu0
        %3948 = vrot.lane.b32.xlu0 %v502, 56
        %v3949 = vpop.permute.xlu0 %3948
        %v3951 = vsel %vm506, %v3227, 0
        %v3954 = vsel %vm1470, %v3949, 0
        %3956 = vmatprep.subr.bf16.mxu0 0
        %3957 = vmatpush1.bf16.msra.mxu0 %v3954
        %3958 = vmatprep.subr.bf16.mxu0 0
        %3959 = vmatpush1.bf16.msra.mxu0 0
        %3960 = vmatprep.subr.bf16.mxu0 0
        %3961 = vmatpush1.bf16.msra.mxu0 0
        %3962 = vmatprep.subr.bf16.mxu0 0
        %3963 = vmatpush1.bf16.msra.mxu0 0
        %3964 = vmatprep.subr.bf16.mxu0 0
        %3965 = vmatpush1.bf16.msra.mxu0 0
        %3966 = vmatprep.subr.bf16.mxu0 0
        %3967 = vmatpush1.bf16.msra.mxu0 0
        %3968 = vmatprep.subr.bf16.mxu0 0
        %3969 = vmatpush1.bf16.msra.mxu0 0
        %3970 = vmatprep.subr.bf16.mxu0 0
        %3971 = vmatpush1.bf16.msra.mxu0 0
        %3972 = vmatprep.subr.bf16.mxu0 0
        %3973 = vmatpush1.bf16.msra.mxu0 0
        %3974 = vmatprep.subr.bf16.mxu0 0
        %3975 = vmatpush1.bf16.msra.mxu0 0
        %3976 = vmatprep.subr.bf16.mxu0 0
        %3977 = vmatpush1.bf16.msra.mxu0 0
        %3978 = vmatprep.subr.bf16.mxu0 0
        %3979 = vmatpush1.bf16.msra.mxu0 0
        %3980 = vmatprep.subr.bf16.mxu0 0
        %3981 = vmatpush1.bf16.msra.mxu0 0
        %3982 = vmatprep.subr.bf16.mxu0 0
        %3983 = vmatpush1.bf16.msra.mxu0 0
        %3984 = vmatprep.subr.bf16.mxu0 0
        %3985 = vmatpush1.bf16.msra.mxu0 0
        %3986 = vmatprep.subr.bf16.mxu0 0
        %3987 = vmatpush1.bf16.msra.mxu0 0
        %3988 = vmatprep.mubr.bf16.mxu0 0
        %3989 = vmatmul.mubr.bf16.gmra.mrb[0].mxu0 %v3951
        %v3990 = vpop.f32.mrb[0].mxu0
        %v3991 = vadd.f32 0.0, %v3990
        %v3992 = vpop.f32.mrb[0].mxu0
        %v3993 = vpop.f32.mrb[0].mxu0
        %v3994 = vpop.f32.mrb[0].mxu0
        %3995 = vdwg.mxu0
        %s3996 = scalar_lea.vmem %s3, 16
        %v3997 = vld [vmem:[%s3996] sm:$0xff]
        %3998 = vrot.lane.b32.xlu0 %v487, 112
        %v3999 = vpop.permute.xlu0 %3998
        %4000 = vrot.lane.b32.xlu0 %v487, 80
        %v4001 = vpop.permute.xlu0 %4000
        %v4003 = vsel %vm506, %v3999, 0
        %v4006 = vsel %vm506, %v4001, 0
        %4008 = vmatprep.subr.bf16.mxu0 0
        %4009 = vmatpush1.bf16.xpose.msra.mxu0 %v4006
        %4010 = vmatprep.subr.bf16.mxu0 0
        %4011 = vmatpush1.bf16.xpose.msra.mxu0 0
        %4012 = vmatprep.subr.bf16.mxu0 0
        %4013 = vmatpush1.bf16.xpose.msra.mxu0 0
        %4014 = vmatprep.subr.bf16.mxu0 0
        %4015 = vmatpush1.bf16.xpose.msra.mxu0 0
        %4016 = vmatprep.subr.bf16.mxu0 0
        %4017 = vmatpush1.bf16.xpose.msra.mxu0 0
        %4018 = vmatprep.subr.bf16.mxu0 0
        %4019 = vmatpush1.bf16.xpose.msra.mxu0 0
        %4020 = vmatprep.subr.bf16.mxu0 0
        %4021 = vmatpush1.bf16.xpose.msra.mxu0 0
        %4022 = vmatprep.subr.bf16.mxu0 0
        %4023 = vmatpush1.bf16.xpose.msra.mxu0 0
        %4024 = vmatprep.subr.bf16.mxu0 0
        %4025 = vmatpush1.bf16.xpose.msra.mxu0 0
        %4026 = vmatprep.subr.bf16.mxu0 0
        %4027 = vmatpush1.bf16.xpose.msra.mxu0 0
        %4028 = vmatprep.subr.bf16.mxu0 0
        %4029 = vmatpush1.bf16.xpose.msra.mxu0 0
        %4030 = vmatprep.subr.bf16.mxu0 0
        %4031 = vmatpush1.bf16.xpose.msra.mxu0 0
        %4032 = vmatprep.subr.bf16.mxu0 0
        %4033 = vmatpush1.bf16.xpose.msra.mxu0 0
        %4034 = vmatprep.subr.bf16.mxu0 0
        %4035 = vmatpush1.bf16.xpose.msra.mxu0 0
        %4036 = vmatprep.subr.bf16.mxu0 0
        %4037 = vmatpush1.bf16.xpose.msra.mxu0 0
        %4038 = vmatprep.subr.bf16.mxu0 0
        %4039 = vmatpush1.bf16.xpose.msra.mxu0 0
        %4040 = vmatprep.mubr.bf16.mxu0 0
        %4041 = vmatmul.mubr.bf16.gmra.mrb[0].mxu0 %v4003
        %v4042 = vpop.f32.mrb[0].mxu0
        %v4043 = vadd.f32 %v3997, %v4042
        %v4044 = vpop.f32.mrb[0].mxu0
        %v4045 = vpop.f32.mrb[0].mxu0
        %v4046 = vpop.f32.mrb[0].mxu0
        %4047 = vdwg.mxu0
        %4048 = vrot.lane.b32.xlu0 %v488, 112
        %v4049 = vpop.permute.xlu0 %4048
        %4050 = vrot.lane.b32.xlu0 %v488, 80
        %v4051 = vpop.permute.xlu0 %4050
        %v4053 = vsel %vm506, %v4049, 0
        %v4056 = vsel %vm506, %v4051, 0
        %4058 = vmatprep.subr.bf16.mxu0 0
        %4059 = vmatpush1.bf16.xpose.msra.mxu0 %v4056
        %4060 = vmatprep.subr.bf16.mxu0 0
        %4061 = vmatpush1.bf16.xpose.msra.mxu0 0
        %4062 = vmatprep.subr.bf16.mxu0 0
        %4063 = vmatpush1.bf16.xpose.msra.mxu0 0
        %4064 = vmatprep.subr.bf16.mxu0 0
        %4065 = vmatpush1.bf16.xpose.msra.mxu0 0
        %4066 = vmatprep.subr.bf16.mxu0 0
        %4067 = vmatpush1.bf16.xpose.msra.mxu0 0
        %4068 = vmatprep.subr.bf16.mxu0 0
        %4069 = vmatpush1.bf16.xpose.msra.mxu0 0
        %4070 = vmatprep.subr.bf16.mxu0 0
        %4071 = vmatpush1.bf16.xpose.msra.mxu0 0
        %4072 = vmatprep.subr.bf16.mxu0 0
        %4073 = vmatpush1.bf16.xpose.msra.mxu0 0
        %4074 = vmatprep.subr.bf16.mxu0 0
        %4075 = vmatpush1.bf16.xpose.msra.mxu0 0
        %4076 = vmatprep.subr.bf16.mxu0 0
        %4077 = vmatpush1.bf16.xpose.msra.mxu0 0
        %4078 = vmatprep.subr.bf16.mxu0 0
        %4079 = vmatpush1.bf16.xpose.msra.mxu0 0
        %4080 = vmatprep.subr.bf16.mxu0 0
        %4081 = vmatpush1.bf16.xpose.msra.mxu0 0
        %4082 = vmatprep.subr.bf16.mxu0 0
        %4083 = vmatpush1.bf16.xpose.msra.mxu0 0
        %4084 = vmatprep.subr.bf16.mxu0 0
        %4085 = vmatpush1.bf16.xpose.msra.mxu0 0
        %4086 = vmatprep.subr.bf16.mxu0 0
        %4087 = vmatpush1.bf16.xpose.msra.mxu0 0
        %4088 = vmatprep.subr.bf16.mxu0 0
        %4089 = vmatpush1.bf16.xpose.msra.mxu0 0
        %4090 = vmatprep.mubr.bf16.mxu0 0
        %4091 = vmatmul.mubr.bf16.gmra.mrb[0].mxu0 %v4053
        %v4092 = vpop.f32.mrb[0].mxu0
        %v4093 = vadd.f32 %v3997, %v4092
        %v4094 = vpop.f32.mrb[0].mxu0
        %v4095 = vpop.f32.mrb[0].mxu0
        %v4096 = vpop.f32.mrb[0].mxu0
        %4097 = vdwg.mxu0
        %4098 = vrot.lane.b32.xlu0 %v489, 112
        %v4099 = vpop.permute.xlu0 %4098
        %4100 = vrot.lane.b32.xlu0 %v489, 80
        %v4101 = vpop.permute.xlu0 %4100
        %v4103 = vsel %vm506, %v4099, 0
        %v4106 = vsel %vm506, %v4101, 0
        %4108 = vmatprep.subr.bf16.mxu0 0
        %4109 = vmatpush1.bf16.xpose.msra.mxu0 %v4106
        %4110 = vmatprep.subr.bf16.mxu0 0
        %4111 = vmatpush1.bf16.xpose.msra.mxu0 0
        %4112 = vmatprep.subr.bf16.mxu0 0
        %4113 = vmatpush1.bf16.xpose.msra.mxu0 0
        %4114 = vmatprep.subr.bf16.mxu0 0
        %4115 = vmatpush1.bf16.xpose.msra.mxu0 0
        %4116 = vmatprep.subr.bf16.mxu0 0
        %4117 = vmatpush1.bf16.xpose.msra.mxu0 0
        %4118 = vmatprep.subr.bf16.mxu0 0
        %4119 = vmatpush1.bf16.xpose.msra.mxu0 0
        %4120 = vmatprep.subr.bf16.mxu0 0
        %4121 = vmatpush1.bf16.xpose.msra.mxu0 0
        %4122 = vmatprep.subr.bf16.mxu0 0
        %4123 = vmatpush1.bf16.xpose.msra.mxu0 0
        %4124 = vmatprep.subr.bf16.mxu0 0
        %4125 = vmatpush1.bf16.xpose.msra.mxu0 0
        %4126 = vmatprep.subr.bf16.mxu0 0
        %4127 = vmatpush1.bf16.xpose.msra.mxu0 0
        %4128 = vmatprep.subr.bf16.mxu0 0
        %4129 = vmatpush1.bf16.xpose.msra.mxu0 0
        %4130 = vmatprep.subr.bf16.mxu0 0
        %4131 = vmatpush1.bf16.xpose.msra.mxu0 0
        %4132 = vmatprep.subr.bf16.mxu0 0
        %4133 = vmatpush1.bf16.xpose.msra.mxu0 0
        %4134 = vmatprep.subr.bf16.mxu0 0
        %4135 = vmatpush1.bf16.xpose.msra.mxu0 0
        %4136 = vmatprep.subr.bf16.mxu0 0
        %4137 = vmatpush1.bf16.xpose.msra.mxu0 0
        %4138 = vmatprep.subr.bf16.mxu0 0
        %4139 = vmatpush1.bf16.xpose.msra.mxu0 0
        %4140 = vmatprep.mubr.bf16.mxu0 0
        %4141 = vmatmul.mubr.bf16.gmra.mrb[0].mxu0 %v4103
        %v4142 = vpop.f32.mrb[0].mxu0
        %v4143 = vadd.f32 %v3997, %v4142
        %v4144 = vpop.f32.mrb[0].mxu0
        %v4145 = vpop.f32.mrb[0].mxu0
        %v4146 = vpop.f32.mrb[0].mxu0
        %4147 = vdwg.mxu0
        %4148 = vrot.lane.b32.xlu0 %v490, 112
        %v4149 = vpop.permute.xlu0 %4148
        %4150 = vrot.lane.b32.xlu0 %v490, 80
        %v4151 = vpop.permute.xlu0 %4150
        %v4153 = vsel %vm506, %v4149, 0
        %v4156 = vsel %vm506, %v4151, 0
        %4158 = vmatprep.subr.bf16.mxu0 0
        %4159 = vmatpush1.bf16.xpose.msra.mxu0 %v4156
        %4160 = vmatprep.subr.bf16.mxu0 0
        %4161 = vmatpush1.bf16.xpose.msra.mxu0 0
        %4162 = vmatprep.subr.bf16.mxu0 0
        %4163 = vmatpush1.bf16.xpose.msra.mxu0 0
        %4164 = vmatprep.subr.bf16.mxu0 0
        %4165 = vmatpush1.bf16.xpose.msra.mxu0 0
        %4166 = vmatprep.subr.bf16.mxu0 0
        %4167 = vmatpush1.bf16.xpose.msra.mxu0 0
        %4168 = vmatprep.subr.bf16.mxu0 0
        %4169 = vmatpush1.bf16.xpose.msra.mxu0 0
        %4170 = vmatprep.subr.bf16.mxu0 0
        %4171 = vmatpush1.bf16.xpose.msra.mxu0 0
        %4172 = vmatprep.subr.bf16.mxu0 0
        %4173 = vmatpush1.bf16.xpose.msra.mxu0 0
        %4174 = vmatprep.subr.bf16.mxu0 0
        %4175 = vmatpush1.bf16.xpose.msra.mxu0 0
        %4176 = vmatprep.subr.bf16.mxu0 0
        %4177 = vmatpush1.bf16.xpose.msra.mxu0 0
        %4178 = vmatprep.subr.bf16.mxu0 0
        %4179 = vmatpush1.bf16.xpose.msra.mxu0 0
        %4180 = vmatprep.subr.bf16.mxu0 0
        %4181 = vmatpush1.bf16.xpose.msra.mxu0 0
        %4182 = vmatprep.subr.bf16.mxu0 0
        %4183 = vmatpush1.bf16.xpose.msra.mxu0 0
        %4184 = vmatprep.subr.bf16.mxu0 0
        %4185 = vmatpush1.bf16.xpose.msra.mxu0 0
        %4186 = vmatprep.subr.bf16.mxu0 0
        %4187 = vmatpush1.bf16.xpose.msra.mxu0 0
        %4188 = vmatprep.subr.bf16.mxu0 0
        %4189 = vmatpush1.bf16.xpose.msra.mxu0 0
        %4190 = vmatprep.mubr.bf16.mxu0 0
        %4191 = vmatmul.mubr.bf16.gmra.mrb[0].mxu0 %v4153
        %v4192 = vpop.f32.mrb[0].mxu0
        %v4193 = vadd.f32 %v3997, %v4192
        %v4194 = vpop.f32.mrb[0].mxu0
        %v4195 = vpop.f32.mrb[0].mxu0
        %v4196 = vpop.f32.mrb[0].mxu0
        %4197 = vdwg.mxu0
        %4198 = vrot.lane.b32.xlu0 %v491, 112
        %v4199 = vpop.permute.xlu0 %4198
        %4200 = vrot.lane.b32.xlu0 %v491, 80
        %v4201 = vpop.permute.xlu0 %4200
        %v4203 = vsel %vm506, %v4199, 0
        %v4206 = vsel %vm506, %v4201, 0
        %4208 = vmatprep.subr.bf16.mxu0 0
        %4209 = vmatpush1.bf16.xpose.msra.mxu0 %v4206
        %4210 = vmatprep.subr.bf16.mxu0 0
        %4211 = vmatpush1.bf16.xpose.msra.mxu0 0
        %4212 = vmatprep.subr.bf16.mxu0 0
        %4213 = vmatpush1.bf16.xpose.msra.mxu0 0
        %4214 = vmatprep.subr.bf16.mxu0 0
        %4215 = vmatpush1.bf16.xpose.msra.mxu0 0
        %4216 = vmatprep.subr.bf16.mxu0 0
        %4217 = vmatpush1.bf16.xpose.msra.mxu0 0
        %4218 = vmatprep.subr.bf16.mxu0 0
        %4219 = vmatpush1.bf16.xpose.msra.mxu0 0
        %4220 = vmatprep.subr.bf16.mxu0 0
        %4221 = vmatpush1.bf16.xpose.msra.mxu0 0
        %4222 = vmatprep.subr.bf16.mxu0 0
        %4223 = vmatpush1.bf16.xpose.msra.mxu0 0
        %4224 = vmatprep.subr.bf16.mxu0 0
        %4225 = vmatpush1.bf16.xpose.msra.mxu0 0
        %4226 = vmatprep.subr.bf16.mxu0 0
        %4227 = vmatpush1.bf16.xpose.msra.mxu0 0
        %4228 = vmatprep.subr.bf16.mxu0 0
        %4229 = vmatpush1.bf16.xpose.msra.mxu0 0
        %4230 = vmatprep.subr.bf16.mxu0 0
        %4231 = vmatpush1.bf16.xpose.msra.mxu0 0
        %4232 = vmatprep.subr.bf16.mxu0 0
        %4233 = vmatpush1.bf16.xpose.msra.mxu0 0
        %4234 = vmatprep.subr.bf16.mxu0 0
        %4235 = vmatpush1.bf16.xpose.msra.mxu0 0
        %4236 = vmatprep.subr.bf16.mxu0 0
        %4237 = vmatpush1.bf16.xpose.msra.mxu0 0
        %4238 = vmatprep.subr.bf16.mxu0 0
        %4239 = vmatpush1.bf16.xpose.msra.mxu0 0
        %4240 = vmatprep.mubr.bf16.mxu0 0
        %4241 = vmatmul.mubr.bf16.gmra.mrb[0].mxu0 %v4203
        %v4242 = vpop.f32.mrb[0].mxu0
        %v4243 = vadd.f32 %v3997, %v4242
        %v4244 = vpop.f32.mrb[0].mxu0
        %v4245 = vpop.f32.mrb[0].mxu0
        %v4246 = vpop.f32.mrb[0].mxu0
        %4247 = vdwg.mxu0
        %4248 = vrot.lane.b32.xlu0 %v492, 112
        %v4249 = vpop.permute.xlu0 %4248
        %4250 = vrot.lane.b32.xlu0 %v492, 80
        %v4251 = vpop.permute.xlu0 %4250
        %v4253 = vsel %vm506, %v4249, 0
        %v4256 = vsel %vm506, %v4251, 0
        %4258 = vmatprep.subr.bf16.mxu0 0
        %4259 = vmatpush1.bf16.xpose.msra.mxu0 %v4256
        %4260 = vmatprep.subr.bf16.mxu0 0
        %4261 = vmatpush1.bf16.xpose.msra.mxu0 0
        %4262 = vmatprep.subr.bf16.mxu0 0
        %4263 = vmatpush1.bf16.xpose.msra.mxu0 0
        %4264 = vmatprep.subr.bf16.mxu0 0
        %4265 = vmatpush1.bf16.xpose.msra.mxu0 0
        %4266 = vmatprep.subr.bf16.mxu0 0
        %4267 = vmatpush1.bf16.xpose.msra.mxu0 0
        %4268 = vmatprep.subr.bf16.mxu0 0
        %4269 = vmatpush1.bf16.xpose.msra.mxu0 0
        %4270 = vmatprep.subr.bf16.mxu0 0
        %4271 = vmatpush1.bf16.xpose.msra.mxu0 0
        %4272 = vmatprep.subr.bf16.mxu0 0
        %4273 = vmatpush1.bf16.xpose.msra.mxu0 0
        %4274 = vmatprep.subr.bf16.mxu0 0
        %4275 = vmatpush1.bf16.xpose.msra.mxu0 0
        %4276 = vmatprep.subr.bf16.mxu0 0
        %4277 = vmatpush1.bf16.xpose.msra.mxu0 0
        %4278 = vmatprep.subr.bf16.mxu0 0
        %4279 = vmatpush1.bf16.xpose.msra.mxu0 0
        %4280 = vmatprep.subr.bf16.mxu0 0
        %4281 = vmatpush1.bf16.xpose.msra.mxu0 0
        %4282 = vmatprep.subr.bf16.mxu0 0
        %4283 = vmatpush1.bf16.xpose.msra.mxu0 0
        %4284 = vmatprep.subr.bf16.mxu0 0
        %4285 = vmatpush1.bf16.xpose.msra.mxu0 0
        %4286 = vmatprep.subr.bf16.mxu0 0
        %4287 = vmatpush1.bf16.xpose.msra.mxu0 0
        %4288 = vmatprep.subr.bf16.mxu0 0
        %4289 = vmatpush1.bf16.xpose.msra.mxu0 0
        %4290 = vmatprep.mubr.bf16.mxu0 0
        %4291 = vmatmul.mubr.bf16.gmra.mrb[0].mxu0 %v4253
        %v4292 = vpop.f32.mrb[0].mxu0
        %v4293 = vadd.f32 %v3997, %v4292
        %v4294 = vpop.f32.mrb[0].mxu0
        %v4295 = vpop.f32.mrb[0].mxu0
        %v4296 = vpop.f32.mrb[0].mxu0
        %4297 = vdwg.mxu0
        %4298 = vrot.lane.b32.xlu0 %v493, 112
        %v4299 = vpop.permute.xlu0 %4298
        %4300 = vrot.lane.b32.xlu0 %v493, 80
        %v4301 = vpop.permute.xlu0 %4300
        %v4303 = vsel %vm506, %v4299, 0
        %v4306 = vsel %vm506, %v4301, 0
        %4308 = vmatprep.subr.bf16.mxu0 0
        %4309 = vmatpush1.bf16.xpose.msra.mxu0 %v4306
        %4310 = vmatprep.subr.bf16.mxu0 0
        %4311 = vmatpush1.bf16.xpose.msra.mxu0 0
        %4312 = vmatprep.subr.bf16.mxu0 0
        %4313 = vmatpush1.bf16.xpose.msra.mxu0 0
        %4314 = vmatprep.subr.bf16.mxu0 0
        %4315 = vmatpush1.bf16.xpose.msra.mxu0 0
        %4316 = vmatprep.subr.bf16.mxu0 0
        %4317 = vmatpush1.bf16.xpose.msra.mxu0 0
        %4318 = vmatprep.subr.bf16.mxu0 0
        %4319 = vmatpush1.bf16.xpose.msra.mxu0 0
        %4320 = vmatprep.subr.bf16.mxu0 0
        %4321 = vmatpush1.bf16.xpose.msra.mxu0 0
        %4322 = vmatprep.subr.bf16.mxu0 0
        %4323 = vmatpush1.bf16.xpose.msra.mxu0 0
        %4324 = vmatprep.subr.bf16.mxu0 0
        %4325 = vmatpush1.bf16.xpose.msra.mxu0 0
        %4326 = vmatprep.subr.bf16.mxu0 0
        %4327 = vmatpush1.bf16.xpose.msra.mxu0 0
        %4328 = vmatprep.subr.bf16.mxu0 0
        %4329 = vmatpush1.bf16.xpose.msra.mxu0 0
        %4330 = vmatprep.subr.bf16.mxu0 0
        %4331 = vmatpush1.bf16.xpose.msra.mxu0 0
        %4332 = vmatprep.subr.bf16.mxu0 0
        %4333 = vmatpush1.bf16.xpose.msra.mxu0 0
        %4334 = vmatprep.subr.bf16.mxu0 0
        %4335 = vmatpush1.bf16.xpose.msra.mxu0 0
        %4336 = vmatprep.subr.bf16.mxu0 0
        %4337 = vmatpush1.bf16.xpose.msra.mxu0 0
        %4338 = vmatprep.subr.bf16.mxu0 0
        %4339 = vmatpush1.bf16.xpose.msra.mxu0 0
        %4340 = vmatprep.mubr.bf16.mxu0 0
        %4341 = vmatmul.mubr.bf16.gmra.mrb[0].mxu0 %v4303
        %v4342 = vpop.f32.mrb[0].mxu0
        %v4343 = vadd.f32 %v3997, %v4342
        %v4344 = vpop.f32.mrb[0].mxu0
        %v4345 = vpop.f32.mrb[0].mxu0
        %v4346 = vpop.f32.mrb[0].mxu0
        %4347 = vdwg.mxu0
        %4348 = vrot.lane.b32.xlu0 %v494, 112
        %v4349 = vpop.permute.xlu0 %4348
        %4350 = vrot.lane.b32.xlu0 %v494, 80
        %v4351 = vpop.permute.xlu0 %4350
        %v4353 = vsel %vm506, %v4349, 0
        %v4356 = vsel %vm506, %v4351, 0
        %4358 = vmatprep.subr.bf16.mxu0 0
        %4359 = vmatpush1.bf16.xpose.msra.mxu0 %v4356
        %4360 = vmatprep.subr.bf16.mxu0 0
        %4361 = vmatpush1.bf16.xpose.msra.mxu0 0
        %4362 = vmatprep.subr.bf16.mxu0 0
        %4363 = vmatpush1.bf16.xpose.msra.mxu0 0
        %4364 = vmatprep.subr.bf16.mxu0 0
        %4365 = vmatpush1.bf16.xpose.msra.mxu0 0
        %4366 = vmatprep.subr.bf16.mxu0 0
        %4367 = vmatpush1.bf16.xpose.msra.mxu0 0
        %4368 = vmatprep.subr.bf16.mxu0 0
        %4369 = vmatpush1.bf16.xpose.msra.mxu0 0
        %4370 = vmatprep.subr.bf16.mxu0 0
        %4371 = vmatpush1.bf16.xpose.msra.mxu0 0
        %4372 = vmatprep.subr.bf16.mxu0 0
        %4373 = vmatpush1.bf16.xpose.msra.mxu0 0
        %4374 = vmatprep.subr.bf16.mxu0 0
        %4375 = vmatpush1.bf16.xpose.msra.mxu0 0
        %4376 = vmatprep.subr.bf16.mxu0 0
        %4377 = vmatpush1.bf16.xpose.msra.mxu0 0
        %4378 = vmatprep.subr.bf16.mxu0 0
        %4379 = vmatpush1.bf16.xpose.msra.mxu0 0
        %4380 = vmatprep.subr.bf16.mxu0 0
        %4381 = vmatpush1.bf16.xpose.msra.mxu0 0
        %4382 = vmatprep.subr.bf16.mxu0 0
        %4383 = vmatpush1.bf16.xpose.msra.mxu0 0
        %4384 = vmatprep.subr.bf16.mxu0 0
        %4385 = vmatpush1.bf16.xpose.msra.mxu0 0
        %4386 = vmatprep.subr.bf16.mxu0 0
        %4387 = vmatpush1.bf16.xpose.msra.mxu0 0
        %4388 = vmatprep.subr.bf16.mxu0 0
        %4389 = vmatpush1.bf16.xpose.msra.mxu0 0
        %4390 = vmatprep.mubr.bf16.mxu0 0
        %4391 = vmatmul.mubr.bf16.gmra.mrb[0].mxu0 %v4353
        %v4392 = vpop.f32.mrb[0].mxu0
        %v4393 = vadd.f32 %v3997, %v4392
        %v4394 = vpop.f32.mrb[0].mxu0
        %v4395 = vpop.f32.mrb[0].mxu0
        %v4396 = vpop.f32.mrb[0].mxu0
        %4397 = vdwg.mxu0
        %4398 = vrot.lane.b32.xlu0 %v495, 112
        %v4399 = vpop.permute.xlu0 %4398
        %4400 = vrot.lane.b32.xlu0 %v495, 80
        %v4401 = vpop.permute.xlu0 %4400
        %v4403 = vsel %vm506, %v4399, 0
        %v4406 = vsel %vm506, %v4401, 0
        %4408 = vmatprep.subr.bf16.mxu0 0
        %4409 = vmatpush1.bf16.xpose.msra.mxu0 %v4406
        %4410 = vmatprep.subr.bf16.mxu0 0
        %4411 = vmatpush1.bf16.xpose.msra.mxu0 0
        %4412 = vmatprep.subr.bf16.mxu0 0
        %4413 = vmatpush1.bf16.xpose.msra.mxu0 0
        %4414 = vmatprep.subr.bf16.mxu0 0
        %4415 = vmatpush1.bf16.xpose.msra.mxu0 0
        %4416 = vmatprep.subr.bf16.mxu0 0
        %4417 = vmatpush1.bf16.xpose.msra.mxu0 0
        %4418 = vmatprep.subr.bf16.mxu0 0
        %4419 = vmatpush1.bf16.xpose.msra.mxu0 0
        %4420 = vmatprep.subr.bf16.mxu0 0
        %4421 = vmatpush1.bf16.xpose.msra.mxu0 0
        %4422 = vmatprep.subr.bf16.mxu0 0
        %4423 = vmatpush1.bf16.xpose.msra.mxu0 0
        %4424 = vmatprep.subr.bf16.mxu0 0
        %4425 = vmatpush1.bf16.xpose.msra.mxu0 0
        %4426 = vmatprep.subr.bf16.mxu0 0
        %4427 = vmatpush1.bf16.xpose.msra.mxu0 0
        %4428 = vmatprep.subr.bf16.mxu0 0
        %4429 = vmatpush1.bf16.xpose.msra.mxu0 0
        %4430 = vmatprep.subr.bf16.mxu0 0
        %4431 = vmatpush1.bf16.xpose.msra.mxu0 0
        %4432 = vmatprep.subr.bf16.mxu0 0
        %4433 = vmatpush1.bf16.xpose.msra.mxu0 0
        %4434 = vmatprep.subr.bf16.mxu0 0
        %4435 = vmatpush1.bf16.xpose.msra.mxu0 0
        %4436 = vmatprep.subr.bf16.mxu0 0
        %4437 = vmatpush1.bf16.xpose.msra.mxu0 0
        %4438 = vmatprep.subr.bf16.mxu0 0
        %4439 = vmatpush1.bf16.xpose.msra.mxu0 0
        %4440 = vmatprep.mubr.bf16.mxu0 0
        %4441 = vmatmul.mubr.bf16.gmra.mrb[0].mxu0 %v4403
        %v4442 = vpop.f32.mrb[0].mxu0
        %v4443 = vadd.f32 %v3997, %v4442
        %v4444 = vpop.f32.mrb[0].mxu0
        %v4445 = vpop.f32.mrb[0].mxu0
        %v4446 = vpop.f32.mrb[0].mxu0
        %4447 = vdwg.mxu0
        %4448 = vrot.lane.b32.xlu0 %v496, 112
        %v4449 = vpop.permute.xlu0 %4448
        %4450 = vrot.lane.b32.xlu0 %v496, 80
        %v4451 = vpop.permute.xlu0 %4450
        %v4453 = vsel %vm506, %v4449, 0
        %v4456 = vsel %vm506, %v4451, 0
        %4458 = vmatprep.subr.bf16.mxu0 0
        %4459 = vmatpush1.bf16.xpose.msra.mxu0 %v4456
        %4460 = vmatprep.subr.bf16.mxu0 0
        %4461 = vmatpush1.bf16.xpose.msra.mxu0 0
        %4462 = vmatprep.subr.bf16.mxu0 0
        %4463 = vmatpush1.bf16.xpose.msra.mxu0 0
        %4464 = vmatprep.subr.bf16.mxu0 0
        %4465 = vmatpush1.bf16.xpose.msra.mxu0 0
        %4466 = vmatprep.subr.bf16.mxu0 0
        %4467 = vmatpush1.bf16.xpose.msra.mxu0 0
        %4468 = vmatprep.subr.bf16.mxu0 0
        %4469 = vmatpush1.bf16.xpose.msra.mxu0 0
        %4470 = vmatprep.subr.bf16.mxu0 0
        %4471 = vmatpush1.bf16.xpose.msra.mxu0 0
        %4472 = vmatprep.subr.bf16.mxu0 0
        %4473 = vmatpush1.bf16.xpose.msra.mxu0 0
        %4474 = vmatprep.subr.bf16.mxu0 0
        %4475 = vmatpush1.bf16.xpose.msra.mxu0 0
        %4476 = vmatprep.subr.bf16.mxu0 0
        %4477 = vmatpush1.bf16.xpose.msra.mxu0 0
        %4478 = vmatprep.subr.bf16.mxu0 0
        %4479 = vmatpush1.bf16.xpose.msra.mxu0 0
        %4480 = vmatprep.subr.bf16.mxu0 0
        %4481 = vmatpush1.bf16.xpose.msra.mxu0 0
        %4482 = vmatprep.subr.bf16.mxu0 0
        %4483 = vmatpush1.bf16.xpose.msra.mxu0 0
        %4484 = vmatprep.subr.bf16.mxu0 0
        %4485 = vmatpush1.bf16.xpose.msra.mxu0 0
        %4486 = vmatprep.subr.bf16.mxu0 0
        %4487 = vmatpush1.bf16.xpose.msra.mxu0 0
        %4488 = vmatprep.subr.bf16.mxu0 0
        %4489 = vmatpush1.bf16.xpose.msra.mxu0 0
        %4490 = vmatprep.mubr.bf16.mxu0 0
        %4491 = vmatmul.mubr.bf16.gmra.mrb[0].mxu0 %v4453
        %v4492 = vpop.f32.mrb[0].mxu0
        %v4493 = vadd.f32 %v3997, %v4492
        %v4494 = vpop.f32.mrb[0].mxu0
        %v4495 = vpop.f32.mrb[0].mxu0
        %v4496 = vpop.f32.mrb[0].mxu0
        %4497 = vdwg.mxu0
        %4498 = vrot.lane.b32.xlu0 %v497, 112
        %v4499 = vpop.permute.xlu0 %4498
        %4500 = vrot.lane.b32.xlu0 %v497, 80
        %v4501 = vpop.permute.xlu0 %4500
        %v4503 = vsel %vm506, %v4499, 0
        %v4506 = vsel %vm506, %v4501, 0
        %4508 = vmatprep.subr.bf16.mxu0 0
        %4509 = vmatpush1.bf16.xpose.msra.mxu0 %v4506
        %4510 = vmatprep.subr.bf16.mxu0 0
        %4511 = vmatpush1.bf16.xpose.msra.mxu0 0
        %4512 = vmatprep.subr.bf16.mxu0 0
        %4513 = vmatpush1.bf16.xpose.msra.mxu0 0
        %4514 = vmatprep.subr.bf16.mxu0 0
        %4515 = vmatpush1.bf16.xpose.msra.mxu0 0
        %4516 = vmatprep.subr.bf16.mxu0 0
        %4517 = vmatpush1.bf16.xpose.msra.mxu0 0
        %4518 = vmatprep.subr.bf16.mxu0 0
        %4519 = vmatpush1.bf16.xpose.msra.mxu0 0
        %4520 = vmatprep.subr.bf16.mxu0 0
        %4521 = vmatpush1.bf16.xpose.msra.mxu0 0
        %4522 = vmatprep.subr.bf16.mxu0 0
        %4523 = vmatpush1.bf16.xpose.msra.mxu0 0
        %4524 = vmatprep.subr.bf16.mxu0 0
        %4525 = vmatpush1.bf16.xpose.msra.mxu0 0
        %4526 = vmatprep.subr.bf16.mxu0 0
        %4527 = vmatpush1.bf16.xpose.msra.mxu0 0
        %4528 = vmatprep.subr.bf16.mxu0 0
        %4529 = vmatpush1.bf16.xpose.msra.mxu0 0
        %4530 = vmatprep.subr.bf16.mxu0 0
        %4531 = vmatpush1.bf16.xpose.msra.mxu0 0
        %4532 = vmatprep.subr.bf16.mxu0 0
        %4533 = vmatpush1.bf16.xpose.msra.mxu0 0
        %4534 = vmatprep.subr.bf16.mxu0 0
        %4535 = vmatpush1.bf16.xpose.msra.mxu0 0
        %4536 = vmatprep.subr.bf16.mxu0 0
        %4537 = vmatpush1.bf16.xpose.msra.mxu0 0
        %4538 = vmatprep.subr.bf16.mxu0 0
        %4539 = vmatpush1.bf16.xpose.msra.mxu0 0
        %4540 = vmatprep.mubr.bf16.mxu0 0
        %4541 = vmatmul.mubr.bf16.gmra.mrb[0].mxu0 %v4503
        %v4542 = vpop.f32.mrb[0].mxu0
        %v4543 = vadd.f32 %v3997, %v4542
        %v4544 = vpop.f32.mrb[0].mxu0
        %v4545 = vpop.f32.mrb[0].mxu0
        %v4546 = vpop.f32.mrb[0].mxu0
        %4547 = vdwg.mxu0
        %4548 = vrot.lane.b32.xlu0 %v498, 112
        %v4549 = vpop.permute.xlu0 %4548
        %4550 = vrot.lane.b32.xlu0 %v498, 80
        %v4551 = vpop.permute.xlu0 %4550
        %v4553 = vsel %vm506, %v4549, 0
        %v4556 = vsel %vm506, %v4551, 0
        %4558 = vmatprep.subr.bf16.mxu0 0
        %4559 = vmatpush1.bf16.xpose.msra.mxu0 %v4556
        %4560 = vmatprep.subr.bf16.mxu0 0
        %4561 = vmatpush1.bf16.xpose.msra.mxu0 0
        %4562 = vmatprep.subr.bf16.mxu0 0
        %4563 = vmatpush1.bf16.xpose.msra.mxu0 0
        %4564 = vmatprep.subr.bf16.mxu0 0
        %4565 = vmatpush1.bf16.xpose.msra.mxu0 0
        %4566 = vmatprep.subr.bf16.mxu0 0
        %4567 = vmatpush1.bf16.xpose.msra.mxu0 0
        %4568 = vmatprep.subr.bf16.mxu0 0
        %4569 = vmatpush1.bf16.xpose.msra.mxu0 0
        %4570 = vmatprep.subr.bf16.mxu0 0
        %4571 = vmatpush1.bf16.xpose.msra.mxu0 0
        %4572 = vmatprep.subr.bf16.mxu0 0
        %4573 = vmatpush1.bf16.xpose.msra.mxu0 0
        %4574 = vmatprep.subr.bf16.mxu0 0
        %4575 = vmatpush1.bf16.xpose.msra.mxu0 0
        %4576 = vmatprep.subr.bf16.mxu0 0
        %4577 = vmatpush1.bf16.xpose.msra.mxu0 0
        %4578 = vmatprep.subr.bf16.mxu0 0
        %4579 = vmatpush1.bf16.xpose.msra.mxu0 0
        %4580 = vmatprep.subr.bf16.mxu0 0
        %4581 = vmatpush1.bf16.xpose.msra.mxu0 0
        %4582 = vmatprep.subr.bf16.mxu0 0
        %4583 = vmatpush1.bf16.xpose.msra.mxu0 0
        %4584 = vmatprep.subr.bf16.mxu0 0
        %4585 = vmatpush1.bf16.xpose.msra.mxu0 0
        %4586 = vmatprep.subr.bf16.mxu0 0
        %4587 = vmatpush1.bf16.xpose.msra.mxu0 0
        %4588 = vmatprep.subr.bf16.mxu0 0
        %4589 = vmatpush1.bf16.xpose.msra.mxu0 0
        %4590 = vmatprep.mubr.bf16.mxu0 0
        %4591 = vmatmul.mubr.bf16.gmra.mrb[0].mxu0 %v4553
        %v4592 = vpop.f32.mrb[0].mxu0
        %v4593 = vadd.f32 %v3997, %v4592
        %v4594 = vpop.f32.mrb[0].mxu0
        %v4595 = vpop.f32.mrb[0].mxu0
        %v4596 = vpop.f32.mrb[0].mxu0
        %4597 = vdwg.mxu0
        %4598 = vrot.lane.b32.xlu0 %v499, 112
        %v4599 = vpop.permute.xlu0 %4598
        %4600 = vrot.lane.b32.xlu0 %v499, 80
        %v4601 = vpop.permute.xlu0 %4600
        %v4603 = vsel %vm506, %v4599, 0
        %v4606 = vsel %vm506, %v4601, 0
        %4608 = vmatprep.subr.bf16.mxu0 0
        %4609 = vmatpush1.bf16.xpose.msra.mxu0 %v4606
        %4610 = vmatprep.subr.bf16.mxu0 0
        %4611 = vmatpush1.bf16.xpose.msra.mxu0 0
        %4612 = vmatprep.subr.bf16.mxu0 0
        %4613 = vmatpush1.bf16.xpose.msra.mxu0 0
        %4614 = vmatprep.subr.bf16.mxu0 0
        %4615 = vmatpush1.bf16.xpose.msra.mxu0 0
        %4616 = vmatprep.subr.bf16.mxu0 0
        %4617 = vmatpush1.bf16.xpose.msra.mxu0 0
        %4618 = vmatprep.subr.bf16.mxu0 0
        %4619 = vmatpush1.bf16.xpose.msra.mxu0 0
        %4620 = vmatprep.subr.bf16.mxu0 0
        %4621 = vmatpush1.bf16.xpose.msra.mxu0 0
        %4622 = vmatprep.subr.bf16.mxu0 0
        %4623 = vmatpush1.bf16.xpose.msra.mxu0 0
        %4624 = vmatprep.subr.bf16.mxu0 0
        %4625 = vmatpush1.bf16.xpose.msra.mxu0 0
        %4626 = vmatprep.subr.bf16.mxu0 0
        %4627 = vmatpush1.bf16.xpose.msra.mxu0 0
        %4628 = vmatprep.subr.bf16.mxu0 0
        %4629 = vmatpush1.bf16.xpose.msra.mxu0 0
        %4630 = vmatprep.subr.bf16.mxu0 0
        %4631 = vmatpush1.bf16.xpose.msra.mxu0 0
        %4632 = vmatprep.subr.bf16.mxu0 0
        %4633 = vmatpush1.bf16.xpose.msra.mxu0 0
        %4634 = vmatprep.subr.bf16.mxu0 0
        %4635 = vmatpush1.bf16.xpose.msra.mxu0 0
        %4636 = vmatprep.subr.bf16.mxu0 0
        %4637 = vmatpush1.bf16.xpose.msra.mxu0 0
        %4638 = vmatprep.subr.bf16.mxu0 0
        %4639 = vmatpush1.bf16.xpose.msra.mxu0 0
        %4640 = vmatprep.mubr.bf16.mxu0 0
        %4641 = vmatmul.mubr.bf16.gmra.mrb[0].mxu0 %v4603
        %v4642 = vpop.f32.mrb[0].mxu0
        %v4643 = vadd.f32 %v3997, %v4642
        %v4644 = vpop.f32.mrb[0].mxu0
        %v4645 = vpop.f32.mrb[0].mxu0
        %v4646 = vpop.f32.mrb[0].mxu0
        %4647 = vdwg.mxu0
        %4648 = vrot.lane.b32.xlu0 %v500, 112
        %v4649 = vpop.permute.xlu0 %4648
        %4650 = vrot.lane.b32.xlu0 %v500, 80
        %v4651 = vpop.permute.xlu0 %4650
        %v4653 = vsel %vm506, %v4649, 0
        %v4656 = vsel %vm506, %v4651, 0
        %4658 = vmatprep.subr.bf16.mxu0 0
        %4659 = vmatpush1.bf16.xpose.msra.mxu0 %v4656
        %4660 = vmatprep.subr.bf16.mxu0 0
        %4661 = vmatpush1.bf16.xpose.msra.mxu0 0
        %4662 = vmatprep.subr.bf16.mxu0 0
        %4663 = vmatpush1.bf16.xpose.msra.mxu0 0
        %4664 = vmatprep.subr.bf16.mxu0 0
        %4665 = vmatpush1.bf16.xpose.msra.mxu0 0
        %4666 = vmatprep.subr.bf16.mxu0 0
        %4667 = vmatpush1.bf16.xpose.msra.mxu0 0
        %4668 = vmatprep.subr.bf16.mxu0 0
        %4669 = vmatpush1.bf16.xpose.msra.mxu0 0
        %4670 = vmatprep.subr.bf16.mxu0 0
        %4671 = vmatpush1.bf16.xpose.msra.mxu0 0
        %4672 = vmatprep.subr.bf16.mxu0 0
        %4673 = vmatpush1.bf16.xpose.msra.mxu0 0
        %4674 = vmatprep.subr.bf16.mxu0 0
        %4675 = vmatpush1.bf16.xpose.msra.mxu0 0
        %4676 = vmatprep.subr.bf16.mxu0 0
        %4677 = vmatpush1.bf16.xpose.msra.mxu0 0
        %4678 = vmatprep.subr.bf16.mxu0 0
        %4679 = vmatpush1.bf16.xpose.msra.mxu0 0
        %4680 = vmatprep.subr.bf16.mxu0 0
        %4681 = vmatpush1.bf16.xpose.msra.mxu0 0
        %4682 = vmatprep.subr.bf16.mxu0 0
        %4683 = vmatpush1.bf16.xpose.msra.mxu0 0
        %4684 = vmatprep.subr.bf16.mxu0 0
        %4685 = vmatpush1.bf16.xpose.msra.mxu0 0
        %4686 = vmatprep.subr.bf16.mxu0 0
        %4687 = vmatpush1.bf16.xpose.msra.mxu0 0
        %4688 = vmatprep.subr.bf16.mxu0 0
        %4689 = vmatpush1.bf16.xpose.msra.mxu0 0
        %4690 = vmatprep.mubr.bf16.mxu0 0
        %4691 = vmatmul.mubr.bf16.gmra.mrb[0].mxu0 %v4653
        %v4692 = vpop.f32.mrb[0].mxu0
        %v4693 = vadd.f32 %v3997, %v4692
        %v4694 = vpop.f32.mrb[0].mxu0
        %v4695 = vpop.f32.mrb[0].mxu0
        %v4696 = vpop.f32.mrb[0].mxu0
        %4697 = vdwg.mxu0
        %4698 = vrot.lane.b32.xlu0 %v501, 112
        %v4699 = vpop.permute.xlu0 %4698
        %4700 = vrot.lane.b32.xlu0 %v501, 80
        %v4701 = vpop.permute.xlu0 %4700
        %v4703 = vsel %vm506, %v4699, 0
        %v4706 = vsel %vm506, %v4701, 0
        %4708 = vmatprep.subr.bf16.mxu0 0
        %4709 = vmatpush1.bf16.xpose.msra.mxu0 %v4706
        %4710 = vmatprep.subr.bf16.mxu0 0
        %4711 = vmatpush1.bf16.xpose.msra.mxu0 0
        %4712 = vmatprep.subr.bf16.mxu0 0
        %4713 = vmatpush1.bf16.xpose.msra.mxu0 0
        %4714 = vmatprep.subr.bf16.mxu0 0
        %4715 = vmatpush1.bf16.xpose.msra.mxu0 0
        %4716 = vmatprep.subr.bf16.mxu0 0
        %4717 = vmatpush1.bf16.xpose.msra.mxu0 0
        %4718 = vmatprep.subr.bf16.mxu0 0
        %4719 = vmatpush1.bf16.xpose.msra.mxu0 0
        %4720 = vmatprep.subr.bf16.mxu0 0
        %4721 = vmatpush1.bf16.xpose.msra.mxu0 0
        %4722 = vmatprep.subr.bf16.mxu0 0
        %4723 = vmatpush1.bf16.xpose.msra.mxu0 0
        %4724 = vmatprep.subr.bf16.mxu0 0
        %4725 = vmatpush1.bf16.xpose.msra.mxu0 0
        %4726 = vmatprep.subr.bf16.mxu0 0
        %4727 = vmatpush1.bf16.xpose.msra.mxu0 0
        %4728 = vmatprep.subr.bf16.mxu0 0
        %4729 = vmatpush1.bf16.xpose.msra.mxu0 0
        %4730 = vmatprep.subr.bf16.mxu0 0
        %4731 = vmatpush1.bf16.xpose.msra.mxu0 0
        %4732 = vmatprep.subr.bf16.mxu0 0
        %4733 = vmatpush1.bf16.xpose.msra.mxu0 0
        %4734 = vmatprep.subr.bf16.mxu0 0
        %4735 = vmatpush1.bf16.xpose.msra.mxu0 0
        %4736 = vmatprep.subr.bf16.mxu0 0
        %4737 = vmatpush1.bf16.xpose.msra.mxu0 0
        %4738 = vmatprep.subr.bf16.mxu0 0
        %4739 = vmatpush1.bf16.xpose.msra.mxu0 0
        %4740 = vmatprep.mubr.bf16.mxu0 0
        %4741 = vmatmul.mubr.bf16.gmra.mrb[0].mxu0 %v4703
        %v4742 = vpop.f32.mrb[0].mxu0
        %v4743 = vadd.f32 %v3997, %v4742
        %v4744 = vpop.f32.mrb[0].mxu0
        %v4745 = vpop.f32.mrb[0].mxu0
        %v4746 = vpop.f32.mrb[0].mxu0
        %4747 = vdwg.mxu0
        %4748 = vrot.lane.b32.xlu0 %v502, 112
        %v4749 = vpop.permute.xlu0 %4748
        %4750 = vrot.lane.b32.xlu0 %v502, 80
        %v4751 = vpop.permute.xlu0 %4750
        %v4753 = vsel %vm506, %v4749, 0
        %v4756 = vsel %vm506, %v4751, 0
        %4758 = vmatprep.subr.bf16.mxu0 0
        %4759 = vmatpush1.bf16.xpose.msra.mxu0 %v4756
        %4760 = vmatprep.subr.bf16.mxu0 0
        %4761 = vmatpush1.bf16.xpose.msra.mxu0 0
        %4762 = vmatprep.subr.bf16.mxu0 0
        %4763 = vmatpush1.bf16.xpose.msra.mxu0 0
        %4764 = vmatprep.subr.bf16.mxu0 0
        %4765 = vmatpush1.bf16.xpose.msra.mxu0 0
        %4766 = vmatprep.subr.bf16.mxu0 0
        %4767 = vmatpush1.bf16.xpose.msra.mxu0 0
        %4768 = vmatprep.subr.bf16.mxu0 0
        %4769 = vmatpush1.bf16.xpose.msra.mxu0 0
        %4770 = vmatprep.subr.bf16.mxu0 0
        %4771 = vmatpush1.bf16.xpose.msra.mxu0 0
        %4772 = vmatprep.subr.bf16.mxu0 0
        %4773 = vmatpush1.bf16.xpose.msra.mxu0 0
        %4774 = vmatprep.subr.bf16.mxu0 0
        %4775 = vmatpush1.bf16.xpose.msra.mxu0 0
        %4776 = vmatprep.subr.bf16.mxu0 0
        %4777 = vmatpush1.bf16.xpose.msra.mxu0 0
        %4778 = vmatprep.subr.bf16.mxu0 0
        %4779 = vmatpush1.bf16.xpose.msra.mxu0 0
        %4780 = vmatprep.subr.bf16.mxu0 0
        %4781 = vmatpush1.bf16.xpose.msra.mxu0 0
        %4782 = vmatprep.subr.bf16.mxu0 0
        %4783 = vmatpush1.bf16.xpose.msra.mxu0 0
        %4784 = vmatprep.subr.bf16.mxu0 0
        %4785 = vmatpush1.bf16.xpose.msra.mxu0 0
        %4786 = vmatprep.subr.bf16.mxu0 0
        %4787 = vmatpush1.bf16.xpose.msra.mxu0 0
        %4788 = vmatprep.subr.bf16.mxu0 0
        %4789 = vmatpush1.bf16.xpose.msra.mxu0 0
        %4790 = vmatprep.mubr.bf16.mxu0 0
        %4791 = vmatmul.mubr.bf16.gmra.mrb[0].mxu0 %v4753
        %v4792 = vpop.f32.mrb[0].mxu0
        %v4793 = vadd.f32 %v3997, %v4792
        %v4794 = vpop.f32.mrb[0].mxu0
        %v4795 = vpop.f32.mrb[0].mxu0
        %v4796 = vpop.f32.mrb[0].mxu0
        %4797 = vdwg.mxu0
        %v4798 = vsel %vm506, %v4043, -inf
        %4799 = vmax.xlane.f32.xlu0 %v4798
        %v4800 = vpop.xlane.xlu0 %4799
        %v4801 = vsel %vm506, %v4093, -inf
        %4802 = vmax.xlane.f32.xlu0 %v4801
        %v4803 = vpop.xlane.xlu0 %4802
        %v4804 = vsel %vm506, %v4143, -inf
        %4805 = vmax.xlane.f32.xlu0 %v4804
        %v4806 = vpop.xlane.xlu0 %4805
        %v4807 = vsel %vm506, %v4193, -inf
        %4808 = vmax.xlane.f32.xlu0 %v4807
        %v4809 = vpop.xlane.xlu0 %4808
        %v4810 = vsel %vm506, %v4243, -inf
        %4811 = vmax.xlane.f32.xlu0 %v4810
        %v4812 = vpop.xlane.xlu0 %4811
        %v4813 = vsel %vm506, %v4293, -inf
        %4814 = vmax.xlane.f32.xlu0 %v4813
        %v4815 = vpop.xlane.xlu0 %4814
        %v4816 = vsel %vm506, %v4343, -inf
        %4817 = vmax.xlane.f32.xlu0 %v4816
        %v4818 = vpop.xlane.xlu0 %4817
        %v4819 = vsel %vm506, %v4393, -inf
        %4820 = vmax.xlane.f32.xlu0 %v4819
        %v4821 = vpop.xlane.xlu0 %4820
        %v4822 = vsel %vm506, %v4443, -inf
        %4823 = vmax.xlane.f32.xlu0 %v4822
        %v4824 = vpop.xlane.xlu0 %4823
        %v4825 = vsel %vm506, %v4493, -inf
        %4826 = vmax.xlane.f32.xlu0 %v4825
        %v4827 = vpop.xlane.xlu0 %4826
        %v4828 = vsel %vm506, %v4543, -inf
        %4829 = vmax.xlane.f32.xlu0 %v4828
        %v4830 = vpop.xlane.xlu0 %4829
        %v4831 = vsel %vm506, %v4593, -inf
        %4832 = vmax.xlane.f32.xlu0 %v4831
        %v4833 = vpop.xlane.xlu0 %4832
        %v4834 = vsel %vm506, %v4643, -inf
        %4835 = vmax.xlane.f32.xlu0 %v4834
        %v4836 = vpop.xlane.xlu0 %4835
        %v4837 = vsel %vm506, %v4693, -inf
        %4838 = vmax.xlane.f32.xlu0 %v4837
        %v4839 = vpop.xlane.xlu0 %4838
        %v4840 = vsel %vm506, %v4743, -inf
        %4841 = vmax.xlane.f32.xlu0 %v4840
        %v4842 = vpop.xlane.xlu0 %4841
        %v4843 = vsel %vm506, %v4793, -inf
        %4844 = vmax.xlane.f32.xlu0 %v4843
        %v4845 = vpop.xlane.xlu0 %4844
        %v4846 = vsub.f32 %v4043, %v4800
        %v4847 = vsub.f32 %v4093, %v4803
        %v4848 = vsub.f32 %v4143, %v4806
        %v4849 = vsub.f32 %v4193, %v4809
        %v4850 = vsub.f32 %v4243, %v4812
        %v4851 = vsub.f32 %v4293, %v4815
        %v4852 = vsub.f32 %v4343, %v4818
        %v4853 = vsub.f32 %v4393, %v4821
        %v4854 = vsub.f32 %v4443, %v4824
        %v4855 = vsub.f32 %v4493, %v4827
        %v4856 = vsub.f32 %v4543, %v4830
        %v4857 = vsub.f32 %v4593, %v4833
        %v4858 = vsub.f32 %v4643, %v4836
        %v4859 = vsub.f32 %v4693, %v4839
        %v4860 = vsub.f32 %v4743, %v4842
        %v4861 = vsub.f32 %v4793, %v4845
        %v4862 = vmul.f32 %v4846, 1.442695
        %v4863 = vpow.pop %v4862
        %v4864 = vmul.f32 %v4847, 1.442695
        %v4865 = vpow.pop %v4864
        %v4866 = vmul.f32 %v4848, 1.442695
        %v4867 = vpow.pop %v4866
        %v4868 = vmul.f32 %v4849, 1.442695
        %v4869 = vpow.pop %v4868
        %v4870 = vmul.f32 %v4850, 1.442695
        %v4871 = vpow.pop %v4870
        %v4872 = vmul.f32 %v4851, 1.442695
        %v4873 = vpow.pop %v4872
        %v4874 = vmul.f32 %v4852, 1.442695
        %v4875 = vpow.pop %v4874
        %v4876 = vmul.f32 %v4853, 1.442695
        %v4877 = vpow.pop %v4876
        %v4878 = vmul.f32 %v4854, 1.442695
        %v4879 = vpow.pop %v4878
        %v4880 = vmul.f32 %v4855, 1.442695
        %v4881 = vpow.pop %v4880
        %v4882 = vmul.f32 %v4856, 1.442695
        %v4883 = vpow.pop %v4882
        %v4884 = vmul.f32 %v4857, 1.442695
        %v4885 = vpow.pop %v4884
        %v4886 = vmul.f32 %v4858, 1.442695
        %v4887 = vpow.pop %v4886
        %v4888 = vmul.f32 %v4859, 1.442695
        %v4889 = vpow.pop %v4888
        %v4890 = vmul.f32 %v4860, 1.442695
        %v4891 = vpow.pop %v4890
        %v4892 = vmul.f32 %v4861, 1.442695
        %v4893 = vpow.pop %v4892
        %v4894 = vsel %vm506, %v4863, 0.0
        %4895 = vadd.xlane.f32.xlu0 %v4894
        %v4896 = vpop.xlane.xlu0 %4895
        %v4897 = vsel %vm506, %v4865, 0.0
        %4898 = vadd.xlane.f32.xlu0 %v4897
        %v4899 = vpop.xlane.xlu0 %4898
        %v4900 = vsel %vm506, %v4867, 0.0
        %4901 = vadd.xlane.f32.xlu0 %v4900
        %v4902 = vpop.xlane.xlu0 %4901
        %v4903 = vsel %vm506, %v4869, 0.0
        %4904 = vadd.xlane.f32.xlu0 %v4903
        %v4905 = vpop.xlane.xlu0 %4904
        %v4906 = vsel %vm506, %v4871, 0.0
        %4907 = vadd.xlane.f32.xlu0 %v4906
        %v4908 = vpop.xlane.xlu0 %4907
        %v4909 = vsel %vm506, %v4873, 0.0
        %4910 = vadd.xlane.f32.xlu0 %v4909
        %v4911 = vpop.xlane.xlu0 %4910
        %v4912 = vsel %vm506, %v4875, 0.0
        %4913 = vadd.xlane.f32.xlu0 %v4912
        %v4914 = vpop.xlane.xlu0 %4913
        %v4915 = vsel %vm506, %v4877, 0.0
        %4916 = vadd.xlane.f32.xlu0 %v4915
        %v4917 = vpop.xlane.xlu0 %4916
        %v4918 = vsel %vm506, %v4879, 0.0
        %4919 = vadd.xlane.f32.xlu0 %v4918
        %v4920 = vpop.xlane.xlu0 %4919
        %v4921 = vsel %vm506, %v4881, 0.0
        %4922 = vadd.xlane.f32.xlu0 %v4921
        %v4923 = vpop.xlane.xlu0 %4922
        %v4924 = vsel %vm506, %v4883, 0.0
        %4925 = vadd.xlane.f32.xlu0 %v4924
        %v4926 = vpop.xlane.xlu0 %4925
        %v4927 = vsel %vm506, %v4885, 0.0
        %4928 = vadd.xlane.f32.xlu0 %v4927
        %v4929 = vpop.xlane.xlu0 %4928
        %v4930 = vsel %vm506, %v4887, 0.0
        %4931 = vadd.xlane.f32.xlu0 %v4930
        %v4932 = vpop.xlane.xlu0 %4931
        %v4933 = vsel %vm506, %v4889, 0.0
        %4934 = vadd.xlane.f32.xlu0 %v4933
        %v4935 = vpop.xlane.xlu0 %4934
        %v4936 = vsel %vm506, %v4891, 0.0
        %4937 = vadd.xlane.f32.xlu0 %v4936
        %v4938 = vpop.xlane.xlu0 %4937
        %v4939 = vsel %vm506, %v4893, 0.0
        %4940 = vadd.xlane.f32.xlu0 %v4939
        %v4941 = vpop.xlane.xlu0 %4940
        %v4942 = vrcp.pop %v4896
        %v4943 = vrcp.pop %v4899
        %v4944 = vrcp.pop %v4902
        %v4945 = vrcp.pop %v4905
        %v4946 = vrcp.pop %v4908
        %v4947 = vrcp.pop %v4911
        %v4948 = vrcp.pop %v4914
        %v4949 = vrcp.pop %v4917
        %v4950 = vrcp.pop %v4920
        %v4951 = vrcp.pop %v4923
        %v4952 = vrcp.pop %v4926
        %v4953 = vrcp.pop %v4929
        %v4954 = vrcp.pop %v4932
        %v4955 = vrcp.pop %v4935
        %v4956 = vrcp.pop %v4938
        %v4957 = vrcp.pop %v4941
        %v4958 = vmul.f32 %v4863, %v4942
        %v4959 = vmul.f32 %v4865, %v4943
        %v4960 = vmul.f32 %v4867, %v4944
        %v4961 = vmul.f32 %v4869, %v4945
        %v4962 = vmul.f32 %v4871, %v4946
        %v4963 = vmul.f32 %v4873, %v4947
        %v4964 = vmul.f32 %v4875, %v4948
        %v4965 = vmul.f32 %v4877, %v4949
        %v4966 = vmul.f32 %v4879, %v4950
        %v4967 = vmul.f32 %v4881, %v4951
        %v4968 = vmul.f32 %v4883, %v4952
        %v4969 = vmul.f32 %v4885, %v4953
        %v4970 = vmul.f32 %v4887, %v4954
        %v4971 = vmul.f32 %v4889, %v4955
        %v4972 = vmul.f32 %v4891, %v4956
        %v4973 = vmul.f32 %v4893, %v4957
        %v4974 = vpack.c.bf16 %v4958, %v4958
        %v4975 = vpack.c.bf16 %v4959, %v4959
        %v4976 = vpack.c.bf16 %v4960, %v4960
        %v4977 = vpack.c.bf16 %v4961, %v4961
        %v4978 = vpack.c.bf16 %v4962, %v4962
        %v4979 = vpack.c.bf16 %v4963, %v4963
        %v4980 = vpack.c.bf16 %v4964, %v4964
        %v4981 = vpack.c.bf16 %v4965, %v4965
        %v4982 = vpack.c.bf16 %v4966, %v4966
        %v4983 = vpack.c.bf16 %v4967, %v4967
        %v4984 = vpack.c.bf16 %v4968, %v4968
        %v4985 = vpack.c.bf16 %v4969, %v4969
        %v4986 = vpack.c.bf16 %v4970, %v4970
        %v4987 = vpack.c.bf16 %v4971, %v4971
        %v4988 = vpack.c.bf16 %v4972, %v4972
        %v4989 = vpack.c.bf16 %v4973, %v4973
        %4990 = vrot.lane.b32.xlu0 %v487, 48
        %v4991 = vpop.permute.xlu0 %4990
        %v4993 = vsel %vm506, %v4974, 0
        %v4996 = vsel %vm1470, %v4991, 0
        %4998 = vmatprep.subr.bf16.mxu0 0
        %4999 = vmatpush1.bf16.msra.mxu0 %v4996
        %5000 = vmatprep.subr.bf16.mxu0 0
        %5001 = vmatpush1.bf16.msra.mxu0 0
        %5002 = vmatprep.subr.bf16.mxu0 0
        %5003 = vmatpush1.bf16.msra.mxu0 0
        %5004 = vmatprep.subr.bf16.mxu0 0
        %5005 = vmatpush1.bf16.msra.mxu0 0
        %5006 = vmatprep.subr.bf16.mxu0 0
        %5007 = vmatpush1.bf16.msra.mxu0 0
        %5008 = vmatprep.subr.bf16.mxu0 0
        %5009 = vmatpush1.bf16.msra.mxu0 0
        %5010 = vmatprep.subr.bf16.mxu0 0
        %5011 = vmatpush1.bf16.msra.mxu0 0
        %5012 = vmatprep.subr.bf16.mxu0 0
        %5013 = vmatpush1.bf16.msra.mxu0 0
        %5014 = vmatprep.subr.bf16.mxu0 0
        %5015 = vmatpush1.bf16.msra.mxu0 0
        %5016 = vmatprep.subr.bf16.mxu0 0
        %5017 = vmatpush1.bf16.msra.mxu0 0
        %5018 = vmatprep.subr.bf16.mxu0 0
        %5019 = vmatpush1.bf16.msra.mxu0 0
        %5020 = vmatprep.subr.bf16.mxu0 0
        %5021 = vmatpush1.bf16.msra.mxu0 0
        %5022 = vmatprep.subr.bf16.mxu0 0
        %5023 = vmatpush1.bf16.msra.mxu0 0
        %5024 = vmatprep.subr.bf16.mxu0 0
        %5025 = vmatpush1.bf16.msra.mxu0 0
        %5026 = vmatprep.subr.bf16.mxu0 0
        %5027 = vmatpush1.bf16.msra.mxu0 0
        %5028 = vmatprep.subr.bf16.mxu0 0
        %5029 = vmatpush1.bf16.msra.mxu0 0
        %5030 = vmatprep.mubr.bf16.mxu0 0
        %5031 = vmatmul.mubr.bf16.gmra.mrb[0].mxu0 %v4993
        %v5032 = vpop.f32.mrb[0].mxu0
        %v5033 = vadd.f32 0.0, %v5032
        %v5034 = vpop.f32.mrb[0].mxu0
        %v5035 = vpop.f32.mrb[0].mxu0
        %v5036 = vpop.f32.mrb[0].mxu0
        %5037 = vdwg.mxu0
        %5038 = vrot.lane.b32.xlu0 %v488, 48
        %v5039 = vpop.permute.xlu0 %5038
        %v5041 = vsel %vm506, %v4975, 0
        %v5044 = vsel %vm1470, %v5039, 0
        %5046 = vmatprep.subr.bf16.mxu0 0
        %5047 = vmatpush1.bf16.msra.mxu0 %v5044
        %5048 = vmatprep.subr.bf16.mxu0 0
        %5049 = vmatpush1.bf16.msra.mxu0 0
        %5050 = vmatprep.subr.bf16.mxu0 0
        %5051 = vmatpush1.bf16.msra.mxu0 0
        %5052 = vmatprep.subr.bf16.mxu0 0
        %5053 = vmatpush1.bf16.msra.mxu0 0
        %5054 = vmatprep.subr.bf16.mxu0 0
        %5055 = vmatpush1.bf16.msra.mxu0 0
        %5056 = vmatprep.subr.bf16.mxu0 0
        %5057 = vmatpush1.bf16.msra.mxu0 0
        %5058 = vmatprep.subr.bf16.mxu0 0
        %5059 = vmatpush1.bf16.msra.mxu0 0
        %5060 = vmatprep.subr.bf16.mxu0 0
        %5061 = vmatpush1.bf16.msra.mxu0 0
        %5062 = vmatprep.subr.bf16.mxu0 0
        %5063 = vmatpush1.bf16.msra.mxu0 0
        %5064 = vmatprep.subr.bf16.mxu0 0
        %5065 = vmatpush1.bf16.msra.mxu0 0
        %5066 = vmatprep.subr.bf16.mxu0 0
        %5067 = vmatpush1.bf16.msra.mxu0 0
        %5068 = vmatprep.subr.bf16.mxu0 0
        %5069 = vmatpush1.bf16.msra.mxu0 0
        %5070 = vmatprep.subr.bf16.mxu0 0
        %5071 = vmatpush1.bf16.msra.mxu0 0
        %5072 = vmatprep.subr.bf16.mxu0 0
        %5073 = vmatpush1.bf16.msra.mxu0 0
        %5074 = vmatprep.subr.bf16.mxu0 0
        %5075 = vmatpush1.bf16.msra.mxu0 0
        %5076 = vmatprep.subr.bf16.mxu0 0
        %5077 = vmatpush1.bf16.msra.mxu0 0
        %5078 = vmatprep.mubr.bf16.mxu0 0
        %5079 = vmatmul.mubr.bf16.gmra.mrb[0].mxu0 %v5041
        %v5080 = vpop.f32.mrb[0].mxu0
        %v5081 = vadd.f32 0.0, %v5080
        %v5082 = vpop.f32.mrb[0].mxu0
        %v5083 = vpop.f32.mrb[0].mxu0
        %v5084 = vpop.f32.mrb[0].mxu0
        %5085 = vdwg.mxu0
        %5086 = vrot.lane.b32.xlu0 %v489, 48
        %v5087 = vpop.permute.xlu0 %5086
        %v5089 = vsel %vm506, %v4976, 0
        %v5092 = vsel %vm1470, %v5087, 0
        %5094 = vmatprep.subr.bf16.mxu0 0
        %5095 = vmatpush1.bf16.msra.mxu0 %v5092
        %5096 = vmatprep.subr.bf16.mxu0 0
        %5097 = vmatpush1.bf16.msra.mxu0 0
        %5098 = vmatprep.subr.bf16.mxu0 0
        %5099 = vmatpush1.bf16.msra.mxu0 0
        %5100 = vmatprep.subr.bf16.mxu0 0
        %5101 = vmatpush1.bf16.msra.mxu0 0
        %5102 = vmatprep.subr.bf16.mxu0 0
        %5103 = vmatpush1.bf16.msra.mxu0 0
        %5104 = vmatprep.subr.bf16.mxu0 0
        %5105 = vmatpush1.bf16.msra.mxu0 0
        %5106 = vmatprep.subr.bf16.mxu0 0
        %5107 = vmatpush1.bf16.msra.mxu0 0
        %5108 = vmatprep.subr.bf16.mxu0 0
        %5109 = vmatpush1.bf16.msra.mxu0 0
        %5110 = vmatprep.subr.bf16.mxu0 0
        %5111 = vmatpush1.bf16.msra.mxu0 0
        %5112 = vmatprep.subr.bf16.mxu0 0
        %5113 = vmatpush1.bf16.msra.mxu0 0
        %5114 = vmatprep.subr.bf16.mxu0 0
        %5115 = vmatpush1.bf16.msra.mxu0 0
        %5116 = vmatprep.subr.bf16.mxu0 0
        %5117 = vmatpush1.bf16.msra.mxu0 0
        %5118 = vmatprep.subr.bf16.mxu0 0
        %5119 = vmatpush1.bf16.msra.mxu0 0
        %5120 = vmatprep.subr.bf16.mxu0 0
        %5121 = vmatpush1.bf16.msra.mxu0 0
        %5122 = vmatprep.subr.bf16.mxu0 0
        %5123 = vmatpush1.bf16.msra.mxu0 0
        %5124 = vmatprep.subr.bf16.mxu0 0
        %5125 = vmatpush1.bf16.msra.mxu0 0
        %5126 = vmatprep.mubr.bf16.mxu0 0
        %5127 = vmatmul.mubr.bf16.gmra.mrb[0].mxu0 %v5089
        %v5128 = vpop.f32.mrb[0].mxu0
        %v5129 = vadd.f32 0.0, %v5128
        %v5130 = vpop.f32.mrb[0].mxu0
        %v5131 = vpop.f32.mrb[0].mxu0
        %v5132 = vpop.f32.mrb[0].mxu0
        %5133 = vdwg.mxu0
        %5134 = vrot.lane.b32.xlu0 %v490, 48
        %v5135 = vpop.permute.xlu0 %5134
        %v5137 = vsel %vm506, %v4977, 0
        %v5140 = vsel %vm1470, %v5135, 0
        %5142 = vmatprep.subr.bf16.mxu0 0
        %5143 = vmatpush1.bf16.msra.mxu0 %v5140
        %5144 = vmatprep.subr.bf16.mxu0 0
        %5145 = vmatpush1.bf16.msra.mxu0 0
        %5146 = vmatprep.subr.bf16.mxu0 0
        %5147 = vmatpush1.bf16.msra.mxu0 0
        %5148 = vmatprep.subr.bf16.mxu0 0
        %5149 = vmatpush1.bf16.msra.mxu0 0
        %5150 = vmatprep.subr.bf16.mxu0 0
        %5151 = vmatpush1.bf16.msra.mxu0 0
        %5152 = vmatprep.subr.bf16.mxu0 0
        %5153 = vmatpush1.bf16.msra.mxu0 0
        %5154 = vmatprep.subr.bf16.mxu0 0
        %5155 = vmatpush1.bf16.msra.mxu0 0
        %5156 = vmatprep.subr.bf16.mxu0 0
        %5157 = vmatpush1.bf16.msra.mxu0 0
        %5158 = vmatprep.subr.bf16.mxu0 0
        %5159 = vmatpush1.bf16.msra.mxu0 0
        %5160 = vmatprep.subr.bf16.mxu0 0
        %5161 = vmatpush1.bf16.msra.mxu0 0
        %5162 = vmatprep.subr.bf16.mxu0 0
        %5163 = vmatpush1.bf16.msra.mxu0 0
        %5164 = vmatprep.subr.bf16.mxu0 0
        %5165 = vmatpush1.bf16.msra.mxu0 0
        %5166 = vmatprep.subr.bf16.mxu0 0
        %5167 = vmatpush1.bf16.msra.mxu0 0
        %5168 = vmatprep.subr.bf16.mxu0 0
        %5169 = vmatpush1.bf16.msra.mxu0 0
        %5170 = vmatprep.subr.bf16.mxu0 0
        %5171 = vmatpush1.bf16.msra.mxu0 0
        %5172 = vmatprep.subr.bf16.mxu0 0
        %5173 = vmatpush1.bf16.msra.mxu0 0
        %5174 = vmatprep.mubr.bf16.mxu0 0
        %5175 = vmatmul.mubr.bf16.gmra.mrb[0].mxu0 %v5137
        %v5176 = vpop.f32.mrb[0].mxu0
        %v5177 = vadd.f32 0.0, %v5176
        %v5178 = vpop.f32.mrb[0].mxu0
        %v5179 = vpop.f32.mrb[0].mxu0
        %v5180 = vpop.f32.mrb[0].mxu0
        %5181 = vdwg.mxu0
        %5182 = vrot.lane.b32.xlu0 %v491, 48
        %v5183 = vpop.permute.xlu0 %5182
        %v5185 = vsel %vm506, %v4978, 0
        %v5188 = vsel %vm1470, %v5183, 0
        %5190 = vmatprep.subr.bf16.mxu0 0
        %5191 = vmatpush1.bf16.msra.mxu0 %v5188
        %5192 = vmatprep.subr.bf16.mxu0 0
        %5193 = vmatpush1.bf16.msra.mxu0 0
        %5194 = vmatprep.subr.bf16.mxu0 0
        %5195 = vmatpush1.bf16.msra.mxu0 0
        %5196 = vmatprep.subr.bf16.mxu0 0
        %5197 = vmatpush1.bf16.msra.mxu0 0
        %5198 = vmatprep.subr.bf16.mxu0 0
        %5199 = vmatpush1.bf16.msra.mxu0 0
        %5200 = vmatprep.subr.bf16.mxu0 0
        %5201 = vmatpush1.bf16.msra.mxu0 0
        %5202 = vmatprep.subr.bf16.mxu0 0
        %5203 = vmatpush1.bf16.msra.mxu0 0
        %5204 = vmatprep.subr.bf16.mxu0 0
        %5205 = vmatpush1.bf16.msra.mxu0 0
        %5206 = vmatprep.subr.bf16.mxu0 0
        %5207 = vmatpush1.bf16.msra.mxu0 0
        %5208 = vmatprep.subr.bf16.mxu0 0
        %5209 = vmatpush1.bf16.msra.mxu0 0
        %5210 = vmatprep.subr.bf16.mxu0 0
        %5211 = vmatpush1.bf16.msra.mxu0 0
        %5212 = vmatprep.subr.bf16.mxu0 0
        %5213 = vmatpush1.bf16.msra.mxu0 0
        %5214 = vmatprep.subr.bf16.mxu0 0
        %5215 = vmatpush1.bf16.msra.mxu0 0
        %5216 = vmatprep.subr.bf16.mxu0 0
        %5217 = vmatpush1.bf16.msra.mxu0 0
        %5218 = vmatprep.subr.bf16.mxu0 0
        %5219 = vmatpush1.bf16.msra.mxu0 0
        %5220 = vmatprep.subr.bf16.mxu0 0
        %5221 = vmatpush1.bf16.msra.mxu0 0
        %5222 = vmatprep.mubr.bf16.mxu0 0
        %5223 = vmatmul.mubr.bf16.gmra.mrb[0].mxu0 %v5185
        %v5224 = vpop.f32.mrb[0].mxu0
        %v5225 = vadd.f32 0.0, %v5224
        %v5226 = vpop.f32.mrb[0].mxu0
        %v5227 = vpop.f32.mrb[0].mxu0
        %v5228 = vpop.f32.mrb[0].mxu0
        %5229 = vdwg.mxu0
        %5230 = vrot.lane.b32.xlu0 %v492, 48
        %v5231 = vpop.permute.xlu0 %5230
        %v5233 = vsel %vm506, %v4979, 0
        %v5236 = vsel %vm1470, %v5231, 0
        %5238 = vmatprep.subr.bf16.mxu0 0
        %5239 = vmatpush1.bf16.msra.mxu0 %v5236
        %5240 = vmatprep.subr.bf16.mxu0 0
        %5241 = vmatpush1.bf16.msra.mxu0 0
        %5242 = vmatprep.subr.bf16.mxu0 0
        %5243 = vmatpush1.bf16.msra.mxu0 0
        %5244 = vmatprep.subr.bf16.mxu0 0
        %5245 = vmatpush1.bf16.msra.mxu0 0
        %5246 = vmatprep.subr.bf16.mxu0 0
        %5247 = vmatpush1.bf16.msra.mxu0 0
        %5248 = vmatprep.subr.bf16.mxu0 0
        %5249 = vmatpush1.bf16.msra.mxu0 0
        %5250 = vmatprep.subr.bf16.mxu0 0
        %5251 = vmatpush1.bf16.msra.mxu0 0
        %5252 = vmatprep.subr.bf16.mxu0 0
        %5253 = vmatpush1.bf16.msra.mxu0 0
        %5254 = vmatprep.subr.bf16.mxu0 0
        %5255 = vmatpush1.bf16.msra.mxu0 0
        %5256 = vmatprep.subr.bf16.mxu0 0
        %5257 = vmatpush1.bf16.msra.mxu0 0
        %5258 = vmatprep.subr.bf16.mxu0 0
        %5259 = vmatpush1.bf16.msra.mxu0 0
        %5260 = vmatprep.subr.bf16.mxu0 0
        %5261 = vmatpush1.bf16.msra.mxu0 0
        %5262 = vmatprep.subr.bf16.mxu0 0
        %5263 = vmatpush1.bf16.msra.mxu0 0
        %5264 = vmatprep.subr.bf16.mxu0 0
        %5265 = vmatpush1.bf16.msra.mxu0 0
        %5266 = vmatprep.subr.bf16.mxu0 0
        %5267 = vmatpush1.bf16.msra.mxu0 0
        %5268 = vmatprep.subr.bf16.mxu0 0
        %5269 = vmatpush1.bf16.msra.mxu0 0
        %5270 = vmatprep.mubr.bf16.mxu0 0
        %5271 = vmatmul.mubr.bf16.gmra.mrb[0].mxu0 %v5233
        %v5272 = vpop.f32.mrb[0].mxu0
        %v5273 = vadd.f32 0.0, %v5272
        %v5274 = vpop.f32.mrb[0].mxu0
        %v5275 = vpop.f32.mrb[0].mxu0
        %v5276 = vpop.f32.mrb[0].mxu0
        %5277 = vdwg.mxu0
        %5278 = vrot.lane.b32.xlu0 %v493, 48
        %v5279 = vpop.permute.xlu0 %5278
        %v5281 = vsel %vm506, %v4980, 0
        %v5284 = vsel %vm1470, %v5279, 0
        %5286 = vmatprep.subr.bf16.mxu0 0
        %5287 = vmatpush1.bf16.msra.mxu0 %v5284
        %5288 = vmatprep.subr.bf16.mxu0 0
        %5289 = vmatpush1.bf16.msra.mxu0 0
        %5290 = vmatprep.subr.bf16.mxu0 0
        %5291 = vmatpush1.bf16.msra.mxu0 0
        %5292 = vmatprep.subr.bf16.mxu0 0
        %5293 = vmatpush1.bf16.msra.mxu0 0
        %5294 = vmatprep.subr.bf16.mxu0 0
        %5295 = vmatpush1.bf16.msra.mxu0 0
        %5296 = vmatprep.subr.bf16.mxu0 0
        %5297 = vmatpush1.bf16.msra.mxu0 0
        %5298 = vmatprep.subr.bf16.mxu0 0
        %5299 = vmatpush1.bf16.msra.mxu0 0
        %5300 = vmatprep.subr.bf16.mxu0 0
        %5301 = vmatpush1.bf16.msra.mxu0 0
        %5302 = vmatprep.subr.bf16.mxu0 0
        %5303 = vmatpush1.bf16.msra.mxu0 0
        %5304 = vmatprep.subr.bf16.mxu0 0
        %5305 = vmatpush1.bf16.msra.mxu0 0
        %5306 = vmatprep.subr.bf16.mxu0 0
        %5307 = vmatpush1.bf16.msra.mxu0 0
        %5308 = vmatprep.subr.bf16.mxu0 0
        %5309 = vmatpush1.bf16.msra.mxu0 0
        %5310 = vmatprep.subr.bf16.mxu0 0
        %5311 = vmatpush1.bf16.msra.mxu0 0
        %5312 = vmatprep.subr.bf16.mxu0 0
        %5313 = vmatpush1.bf16.msra.mxu0 0
        %5314 = vmatprep.subr.bf16.mxu0 0
        %5315 = vmatpush1.bf16.msra.mxu0 0
        %5316 = vmatprep.subr.bf16.mxu0 0
        %5317 = vmatpush1.bf16.msra.mxu0 0
        %5318 = vmatprep.mubr.bf16.mxu0 0
        %5319 = vmatmul.mubr.bf16.gmra.mrb[0].mxu0 %v5281
        %v5320 = vpop.f32.mrb[0].mxu0
        %v5321 = vadd.f32 0.0, %v5320
        %v5322 = vpop.f32.mrb[0].mxu0
        %v5323 = vpop.f32.mrb[0].mxu0
        %v5324 = vpop.f32.mrb[0].mxu0
        %5325 = vdwg.mxu0
        %5326 = vrot.lane.b32.xlu0 %v494, 48
        %v5327 = vpop.permute.xlu0 %5326
        %v5329 = vsel %vm506, %v4981, 0
        %v5332 = vsel %vm1470, %v5327, 0
        %5334 = vmatprep.subr.bf16.mxu0 0
        %5335 = vmatpush1.bf16.msra.mxu0 %v5332
        %5336 = vmatprep.subr.bf16.mxu0 0
        %5337 = vmatpush1.bf16.msra.mxu0 0
        %5338 = vmatprep.subr.bf16.mxu0 0
        %5339 = vmatpush1.bf16.msra.mxu0 0
        %5340 = vmatprep.subr.bf16.mxu0 0
        %5341 = vmatpush1.bf16.msra.mxu0 0
        %5342 = vmatprep.subr.bf16.mxu0 0
        %5343 = vmatpush1.bf16.msra.mxu0 0
        %5344 = vmatprep.subr.bf16.mxu0 0
        %5345 = vmatpush1.bf16.msra.mxu0 0
        %5346 = vmatprep.subr.bf16.mxu0 0
        %5347 = vmatpush1.bf16.msra.mxu0 0
        %5348 = vmatprep.subr.bf16.mxu0 0
        %5349 = vmatpush1.bf16.msra.mxu0 0
        %5350 = vmatprep.subr.bf16.mxu0 0
        %5351 = vmatpush1.bf16.msra.mxu0 0
        %5352 = vmatprep.subr.bf16.mxu0 0
        %5353 = vmatpush1.bf16.msra.mxu0 0
        %5354 = vmatprep.subr.bf16.mxu0 0
        %5355 = vmatpush1.bf16.msra.mxu0 0
        %5356 = vmatprep.subr.bf16.mxu0 0
        %5357 = vmatpush1.bf16.msra.mxu0 0
        %5358 = vmatprep.subr.bf16.mxu0 0
        %5359 = vmatpush1.bf16.msra.mxu0 0
        %5360 = vmatprep.subr.bf16.mxu0 0
        %5361 = vmatpush1.bf16.msra.mxu0 0
        %5362 = vmatprep.subr.bf16.mxu0 0
        %5363 = vmatpush1.bf16.msra.mxu0 0
        %5364 = vmatprep.subr.bf16.mxu0 0
        %5365 = vmatpush1.bf16.msra.mxu0 0
        %5366 = vmatprep.mubr.bf16.mxu0 0
        %5367 = vmatmul.mubr.bf16.gmra.mrb[0].mxu0 %v5329
        %v5368 = vpop.f32.mrb[0].mxu0
        %v5369 = vadd.f32 0.0, %v5368
        %v5370 = vpop.f32.mrb[0].mxu0
        %v5371 = vpop.f32.mrb[0].mxu0
        %v5372 = vpop.f32.mrb[0].mxu0
        %5373 = vdwg.mxu0
        %5374 = vrot.lane.b32.xlu0 %v495, 48
        %v5375 = vpop.permute.xlu0 %5374
        %v5377 = vsel %vm506, %v4982, 0
        %v5380 = vsel %vm1470, %v5375, 0
        %5382 = vmatprep.subr.bf16.mxu0 0
        %5383 = vmatpush1.bf16.msra.mxu0 %v5380
        %5384 = vmatprep.subr.bf16.mxu0 0
        %5385 = vmatpush1.bf16.msra.mxu0 0
        %5386 = vmatprep.subr.bf16.mxu0 0
        %5387 = vmatpush1.bf16.msra.mxu0 0
        %5388 = vmatprep.subr.bf16.mxu0 0
        %5389 = vmatpush1.bf16.msra.mxu0 0
        %5390 = vmatprep.subr.bf16.mxu0 0
        %5391 = vmatpush1.bf16.msra.mxu0 0
        %5392 = vmatprep.subr.bf16.mxu0 0
        %5393 = vmatpush1.bf16.msra.mxu0 0
        %5394 = vmatprep.subr.bf16.mxu0 0
        %5395 = vmatpush1.bf16.msra.mxu0 0
        %5396 = vmatprep.subr.bf16.mxu0 0
        %5397 = vmatpush1.bf16.msra.mxu0 0
        %5398 = vmatprep.subr.bf16.mxu0 0
        %5399 = vmatpush1.bf16.msra.mxu0 0
        %5400 = vmatprep.subr.bf16.mxu0 0
        %5401 = vmatpush1.bf16.msra.mxu0 0
        %5402 = vmatprep.subr.bf16.mxu0 0
        %5403 = vmatpush1.bf16.msra.mxu0 0
        %5404 = vmatprep.subr.bf16.mxu0 0
        %5405 = vmatpush1.bf16.msra.mxu0 0
        %5406 = vmatprep.subr.bf16.mxu0 0
        %5407 = vmatpush1.bf16.msra.mxu0 0
        %5408 = vmatprep.subr.bf16.mxu0 0
        %5409 = vmatpush1.bf16.msra.mxu0 0
        %5410 = vmatprep.subr.bf16.mxu0 0
        %5411 = vmatpush1.bf16.msra.mxu0 0
        %5412 = vmatprep.subr.bf16.mxu0 0
        %5413 = vmatpush1.bf16.msra.mxu0 0
        %5414 = vmatprep.mubr.bf16.mxu0 0
        %5415 = vmatmul.mubr.bf16.gmra.mrb[0].mxu0 %v5377
        %v5416 = vpop.f32.mrb[0].mxu0
        %v5417 = vadd.f32 0.0, %v5416
        %v5418 = vpop.f32.mrb[0].mxu0
        %v5419 = vpop.f32.mrb[0].mxu0
        %v5420 = vpop.f32.mrb[0].mxu0
        %5421 = vdwg.mxu0
        %5422 = vrot.lane.b32.xlu0 %v496, 48
        %v5423 = vpop.permute.xlu0 %5422
        %v5425 = vsel %vm506, %v4983, 0
        %v5428 = vsel %vm1470, %v5423, 0
        %5430 = vmatprep.subr.bf16.mxu0 0
        %5431 = vmatpush1.bf16.msra.mxu0 %v5428
        %5432 = vmatprep.subr.bf16.mxu0 0
        %5433 = vmatpush1.bf16.msra.mxu0 0
        %5434 = vmatprep.subr.bf16.mxu0 0
        %5435 = vmatpush1.bf16.msra.mxu0 0
        %5436 = vmatprep.subr.bf16.mxu0 0
        %5437 = vmatpush1.bf16.msra.mxu0 0
        %5438 = vmatprep.subr.bf16.mxu0 0
        %5439 = vmatpush1.bf16.msra.mxu0 0
        %5440 = vmatprep.subr.bf16.mxu0 0
        %5441 = vmatpush1.bf16.msra.mxu0 0
        %5442 = vmatprep.subr.bf16.mxu0 0
        %5443 = vmatpush1.bf16.msra.mxu0 0
        %5444 = vmatprep.subr.bf16.mxu0 0
        %5445 = vmatpush1.bf16.msra.mxu0 0
        %5446 = vmatprep.subr.bf16.mxu0 0
        %5447 = vmatpush1.bf16.msra.mxu0 0
        %5448 = vmatprep.subr.bf16.mxu0 0
        %5449 = vmatpush1.bf16.msra.mxu0 0
        %5450 = vmatprep.subr.bf16.mxu0 0
        %5451 = vmatpush1.bf16.msra.mxu0 0
        %5452 = vmatprep.subr.bf16.mxu0 0
        %5453 = vmatpush1.bf16.msra.mxu0 0
        %5454 = vmatprep.subr.bf16.mxu0 0
        %5455 = vmatpush1.bf16.msra.mxu0 0
        %5456 = vmatprep.subr.bf16.mxu0 0
        %5457 = vmatpush1.bf16.msra.mxu0 0
        %5458 = vmatprep.subr.bf16.mxu0 0
        %5459 = vmatpush1.bf16.msra.mxu0 0
        %5460 = vmatprep.subr.bf16.mxu0 0
        %5461 = vmatpush1.bf16.msra.mxu0 0
        %5462 = vmatprep.mubr.bf16.mxu0 0
        %5463 = vmatmul.mubr.bf16.gmra.mrb[0].mxu0 %v5425
        %v5464 = vpop.f32.mrb[0].mxu0
        %v5465 = vadd.f32 0.0, %v5464
        %v5466 = vpop.f32.mrb[0].mxu0
        %v5467 = vpop.f32.mrb[0].mxu0
        %v5468 = vpop.f32.mrb[0].mxu0
        %5469 = vdwg.mxu0
        %5470 = vrot.lane.b32.xlu0 %v497, 48
        %v5471 = vpop.permute.xlu0 %5470
        %v5473 = vsel %vm506, %v4984, 0
        %v5476 = vsel %vm1470, %v5471, 0
        %5478 = vmatprep.subr.bf16.mxu0 0
        %5479 = vmatpush1.bf16.msra.mxu0 %v5476
        %5480 = vmatprep.subr.bf16.mxu0 0
        %5481 = vmatpush1.bf16.msra.mxu0 0
        %5482 = vmatprep.subr.bf16.mxu0 0
        %5483 = vmatpush1.bf16.msra.mxu0 0
        %5484 = vmatprep.subr.bf16.mxu0 0
        %5485 = vmatpush1.bf16.msra.mxu0 0
        %5486 = vmatprep.subr.bf16.mxu0 0
        %5487 = vmatpush1.bf16.msra.mxu0 0
        %5488 = vmatprep.subr.bf16.mxu0 0
        %5489 = vmatpush1.bf16.msra.mxu0 0
        %5490 = vmatprep.subr.bf16.mxu0 0
        %5491 = vmatpush1.bf16.msra.mxu0 0
        %5492 = vmatprep.subr.bf16.mxu0 0
        %5493 = vmatpush1.bf16.msra.mxu0 0
        %5494 = vmatprep.subr.bf16.mxu0 0
        %5495 = vmatpush1.bf16.msra.mxu0 0
        %5496 = vmatprep.subr.bf16.mxu0 0
        %5497 = vmatpush1.bf16.msra.mxu0 0
        %5498 = vmatprep.subr.bf16.mxu0 0
        %5499 = vmatpush1.bf16.msra.mxu0 0
        %5500 = vmatprep.subr.bf16.mxu0 0
        %5501 = vmatpush1.bf16.msra.mxu0 0
        %5502 = vmatprep.subr.bf16.mxu0 0
        %5503 = vmatpush1.bf16.msra.mxu0 0
        %5504 = vmatprep.subr.bf16.mxu0 0
        %5505 = vmatpush1.bf16.msra.mxu0 0
        %5506 = vmatprep.subr.bf16.mxu0 0
        %5507 = vmatpush1.bf16.msra.mxu0 0
        %5508 = vmatprep.subr.bf16.mxu0 0
        %5509 = vmatpush1.bf16.msra.mxu0 0
        %5510 = vmatprep.mubr.bf16.mxu0 0
        %5511 = vmatmul.mubr.bf16.gmra.mrb[0].mxu0 %v5473
        %v5512 = vpop.f32.mrb[0].mxu0
        %v5513 = vadd.f32 0.0, %v5512
        %v5514 = vpop.f32.mrb[0].mxu0
        %v5515 = vpop.f32.mrb[0].mxu0
        %v5516 = vpop.f32.mrb[0].mxu0
        %5517 = vdwg.mxu0
        %5518 = vrot.lane.b32.xlu0 %v498, 48
        %v5519 = vpop.permute.xlu0 %5518
        %v5521 = vsel %vm506, %v4985, 0
        %v5524 = vsel %vm1470, %v5519, 0
        %5526 = vmatprep.subr.bf16.mxu0 0
        %5527 = vmatpush1.bf16.msra.mxu0 %v5524
        %5528 = vmatprep.subr.bf16.mxu0 0
        %5529 = vmatpush1.bf16.msra.mxu0 0
        %5530 = vmatprep.subr.bf16.mxu0 0
        %5531 = vmatpush1.bf16.msra.mxu0 0
        %5532 = vmatprep.subr.bf16.mxu0 0
        %5533 = vmatpush1.bf16.msra.mxu0 0
        %5534 = vmatprep.subr.bf16.mxu0 0
        %5535 = vmatpush1.bf16.msra.mxu0 0
        %5536 = vmatprep.subr.bf16.mxu0 0
        %5537 = vmatpush1.bf16.msra.mxu0 0
        %5538 = vmatprep.subr.bf16.mxu0 0
        %5539 = vmatpush1.bf16.msra.mxu0 0
        %5540 = vmatprep.subr.bf16.mxu0 0
        %5541 = vmatpush1.bf16.msra.mxu0 0
        %5542 = vmatprep.subr.bf16.mxu0 0
        %5543 = vmatpush1.bf16.msra.mxu0 0
        %5544 = vmatprep.subr.bf16.mxu0 0
        %5545 = vmatpush1.bf16.msra.mxu0 0
        %5546 = vmatprep.subr.bf16.mxu0 0
        %5547 = vmatpush1.bf16.msra.mxu0 0
        %5548 = vmatprep.subr.bf16.mxu0 0
        %5549 = vmatpush1.bf16.msra.mxu0 0
        %5550 = vmatprep.subr.bf16.mxu0 0
        %5551 = vmatpush1.bf16.msra.mxu0 0
        %5552 = vmatprep.subr.bf16.mxu0 0
        %5553 = vmatpush1.bf16.msra.mxu0 0
        %5554 = vmatprep.subr.bf16.mxu0 0
        %5555 = vmatpush1.bf16.msra.mxu0 0
        %5556 = vmatprep.subr.bf16.mxu0 0
        %5557 = vmatpush1.bf16.msra.mxu0 0
        %5558 = vmatprep.mubr.bf16.mxu0 0
        %5559 = vmatmul.mubr.bf16.gmra.mrb[0].mxu0 %v5521
        %v5560 = vpop.f32.mrb[0].mxu0
        %v5561 = vadd.f32 0.0, %v5560
        %v5562 = vpop.f32.mrb[0].mxu0
        %v5563 = vpop.f32.mrb[0].mxu0
        %v5564 = vpop.f32.mrb[0].mxu0
        %5565 = vdwg.mxu0
        %5566 = vrot.lane.b32.xlu0 %v499, 48
        %v5567 = vpop.permute.xlu0 %5566
        %v5569 = vsel %vm506, %v4986, 0
        %v5572 = vsel %vm1470, %v5567, 0
        %5574 = vmatprep.subr.bf16.mxu0 0
        %5575 = vmatpush1.bf16.msra.mxu0 %v5572
        %5576 = vmatprep.subr.bf16.mxu0 0
        %5577 = vmatpush1.bf16.msra.mxu0 0
        %5578 = vmatprep.subr.bf16.mxu0 0
        %5579 = vmatpush1.bf16.msra.mxu0 0
        %5580 = vmatprep.subr.bf16.mxu0 0
        %5581 = vmatpush1.bf16.msra.mxu0 0
        %5582 = vmatprep.subr.bf16.mxu0 0
        %5583 = vmatpush1.bf16.msra.mxu0 0
        %5584 = vmatprep.subr.bf16.mxu0 0
        %5585 = vmatpush1.bf16.msra.mxu0 0
        %5586 = vmatprep.subr.bf16.mxu0 0
        %5587 = vmatpush1.bf16.msra.mxu0 0
        %5588 = vmatprep.subr.bf16.mxu0 0
        %5589 = vmatpush1.bf16.msra.mxu0 0
        %5590 = vmatprep.subr.bf16.mxu0 0
        %5591 = vmatpush1.bf16.msra.mxu0 0
        %5592 = vmatprep.subr.bf16.mxu0 0
        %5593 = vmatpush1.bf16.msra.mxu0 0
        %5594 = vmatprep.subr.bf16.mxu0 0
        %5595 = vmatpush1.bf16.msra.mxu0 0
        %5596 = vmatprep.subr.bf16.mxu0 0
        %5597 = vmatpush1.bf16.msra.mxu0 0
        %5598 = vmatprep.subr.bf16.mxu0 0
        %5599 = vmatpush1.bf16.msra.mxu0 0
        %5600 = vmatprep.subr.bf16.mxu0 0
        %5601 = vmatpush1.bf16.msra.mxu0 0
        %5602 = vmatprep.subr.bf16.mxu0 0
        %5603 = vmatpush1.bf16.msra.mxu0 0
        %5604 = vmatprep.subr.bf16.mxu0 0
        %5605 = vmatpush1.bf16.msra.mxu0 0
        %5606 = vmatprep.mubr.bf16.mxu0 0
        %5607 = vmatmul.mubr.bf16.gmra.mrb[0].mxu0 %v5569
        %v5608 = vpop.f32.mrb[0].mxu0
        %v5609 = vadd.f32 0.0, %v5608
        %v5610 = vpop.f32.mrb[0].mxu0
        %v5611 = vpop.f32.mrb[0].mxu0
        %v5612 = vpop.f32.mrb[0].mxu0
        %5613 = vdwg.mxu0
        %5614 = vrot.lane.b32.xlu0 %v500, 48
        %v5615 = vpop.permute.xlu0 %5614
        %v5617 = vsel %vm506, %v4987, 0
        %v5620 = vsel %vm1470, %v5615, 0
        %5622 = vmatprep.subr.bf16.mxu0 0
        %5623 = vmatpush1.bf16.msra.mxu0 %v5620
        %5624 = vmatprep.subr.bf16.mxu0 0
        %5625 = vmatpush1.bf16.msra.mxu0 0
        %5626 = vmatprep.subr.bf16.mxu0 0
        %5627 = vmatpush1.bf16.msra.mxu0 0
        %5628 = vmatprep.subr.bf16.mxu0 0
        %5629 = vmatpush1.bf16.msra.mxu0 0
        %5630 = vmatprep.subr.bf16.mxu0 0
        %5631 = vmatpush1.bf16.msra.mxu0 0
        %5632 = vmatprep.subr.bf16.mxu0 0
        %5633 = vmatpush1.bf16.msra.mxu0 0
        %5634 = vmatprep.subr.bf16.mxu0 0
        %5635 = vmatpush1.bf16.msra.mxu0 0
        %5636 = vmatprep.subr.bf16.mxu0 0
        %5637 = vmatpush1.bf16.msra.mxu0 0
        %5638 = vmatprep.subr.bf16.mxu0 0
        %5639 = vmatpush1.bf16.msra.mxu0 0
        %5640 = vmatprep.subr.bf16.mxu0 0
        %5641 = vmatpush1.bf16.msra.mxu0 0
        %5642 = vmatprep.subr.bf16.mxu0 0
        %5643 = vmatpush1.bf16.msra.mxu0 0
        %5644 = vmatprep.subr.bf16.mxu0 0
        %5645 = vmatpush1.bf16.msra.mxu0 0
        %5646 = vmatprep.subr.bf16.mxu0 0
        %5647 = vmatpush1.bf16.msra.mxu0 0
        %5648 = vmatprep.subr.bf16.mxu0 0
        %5649 = vmatpush1.bf16.msra.mxu0 0
        %5650 = vmatprep.subr.bf16.mxu0 0
        %5651 = vmatpush1.bf16.msra.mxu0 0
        %5652 = vmatprep.subr.bf16.mxu0 0
        %5653 = vmatpush1.bf16.msra.mxu0 0
        %5654 = vmatprep.mubr.bf16.mxu0 0
        %5655 = vmatmul.mubr.bf16.gmra.mrb[0].mxu0 %v5617
        %v5656 = vpop.f32.mrb[0].mxu0
        %v5657 = vadd.f32 0.0, %v5656
        %v5658 = vpop.f32.mrb[0].mxu0
        %v5659 = vpop.f32.mrb[0].mxu0
        %v5660 = vpop.f32.mrb[0].mxu0
        %5661 = vdwg.mxu0
        %5662 = vrot.lane.b32.xlu0 %v501, 48
        %v5663 = vpop.permute.xlu0 %5662
        %v5665 = vsel %vm506, %v4988, 0
        %v5668 = vsel %vm1470, %v5663, 0
        %5670 = vmatprep.subr.bf16.mxu0 0
        %5671 = vmatpush1.bf16.msra.mxu0 %v5668
        %5672 = vmatprep.subr.bf16.mxu0 0
        %5673 = vmatpush1.bf16.msra.mxu0 0
        %5674 = vmatprep.subr.bf16.mxu0 0
        %5675 = vmatpush1.bf16.msra.mxu0 0
        %5676 = vmatprep.subr.bf16.mxu0 0
        %5677 = vmatpush1.bf16.msra.mxu0 0
        %5678 = vmatprep.subr.bf16.mxu0 0
        %5679 = vmatpush1.bf16.msra.mxu0 0
        %5680 = vmatprep.subr.bf16.mxu0 0
        %5681 = vmatpush1.bf16.msra.mxu0 0
        %5682 = vmatprep.subr.bf16.mxu0 0
        %5683 = vmatpush1.bf16.msra.mxu0 0
        %5684 = vmatprep.subr.bf16.mxu0 0
        %5685 = vmatpush1.bf16.msra.mxu0 0
        %5686 = vmatprep.subr.bf16.mxu0 0
        %5687 = vmatpush1.bf16.msra.mxu0 0
        %5688 = vmatprep.subr.bf16.mxu0 0
        %5689 = vmatpush1.bf16.msra.mxu0 0
        %5690 = vmatprep.subr.bf16.mxu0 0
        %5691 = vmatpush1.bf16.msra.mxu0 0
        %5692 = vmatprep.subr.bf16.mxu0 0
        %5693 = vmatpush1.bf16.msra.mxu0 0
        %5694 = vmatprep.subr.bf16.mxu0 0
        %5695 = vmatpush1.bf16.msra.mxu0 0
        %5696 = vmatprep.subr.bf16.mxu0 0
        %5697 = vmatpush1.bf16.msra.mxu0 0
        %5698 = vmatprep.subr.bf16.mxu0 0
        %5699 = vmatpush1.bf16.msra.mxu0 0
        %5700 = vmatprep.subr.bf16.mxu0 0
        %5701 = vmatpush1.bf16.msra.mxu0 0
        %5702 = vmatprep.mubr.bf16.mxu0 0
        %5703 = vmatmul.mubr.bf16.gmra.mrb[0].mxu0 %v5665
        %v5704 = vpop.f32.mrb[0].mxu0
        %v5705 = vadd.f32 0.0, %v5704
        %v5706 = vpop.f32.mrb[0].mxu0
        %v5707 = vpop.f32.mrb[0].mxu0
        %v5708 = vpop.f32.mrb[0].mxu0
        %5709 = vdwg.mxu0
        %5710 = vrot.lane.b32.xlu0 %v502, 48
        %v5711 = vpop.permute.xlu0 %5710
        %v5713 = vsel %vm506, %v4989, 0
        %v5716 = vsel %vm1470, %v5711, 0
        %5718 = vmatprep.subr.bf16.mxu0 0
        %5719 = vmatpush1.bf16.msra.mxu0 %v5716
        %5720 = vmatprep.subr.bf16.mxu0 0
        %5721 = vmatpush1.bf16.msra.mxu0 0
        %5722 = vmatprep.subr.bf16.mxu0 0
        %5723 = vmatpush1.bf16.msra.mxu0 0
        %5724 = vmatprep.subr.bf16.mxu0 0
        %5725 = vmatpush1.bf16.msra.mxu0 0
        %5726 = vmatprep.subr.bf16.mxu0 0
        %5727 = vmatpush1.bf16.msra.mxu0 0
        %5728 = vmatprep.subr.bf16.mxu0 0
        %5729 = vmatpush1.bf16.msra.mxu0 0
        %5730 = vmatprep.subr.bf16.mxu0 0
        %5731 = vmatpush1.bf16.msra.mxu0 0
        %5732 = vmatprep.subr.bf16.mxu0 0
        %5733 = vmatpush1.bf16.msra.mxu0 0
        %5734 = vmatprep.subr.bf16.mxu0 0
        %5735 = vmatpush1.bf16.msra.mxu0 0
        %5736 = vmatprep.subr.bf16.mxu0 0
        %5737 = vmatpush1.bf16.msra.mxu0 0
        %5738 = vmatprep.subr.bf16.mxu0 0
        %5739 = vmatpush1.bf16.msra.mxu0 0
        %5740 = vmatprep.subr.bf16.mxu0 0
        %5741 = vmatpush1.bf16.msra.mxu0 0
        %5742 = vmatprep.subr.bf16.mxu0 0
        %5743 = vmatpush1.bf16.msra.mxu0 0
        %5744 = vmatprep.subr.bf16.mxu0 0
        %5745 = vmatpush1.bf16.msra.mxu0 0
        %5746 = vmatprep.subr.bf16.mxu0 0
        %5747 = vmatpush1.bf16.msra.mxu0 0
        %5748 = vmatprep.subr.bf16.mxu0 0
        %5749 = vmatpush1.bf16.msra.mxu0 0
        %5750 = vmatprep.mubr.bf16.mxu0 0
        %5751 = vmatmul.mubr.bf16.gmra.mrb[0].mxu0 %v5713
        %v5752 = vpop.f32.mrb[0].mxu0
        %v5753 = vadd.f32 0.0, %v5752
        %v5754 = vpop.f32.mrb[0].mxu0
        %v5755 = vpop.f32.mrb[0].mxu0
        %v5756 = vpop.f32.mrb[0].mxu0
        %5757 = vdwg.mxu0
        %s5758 = scalar_lea.vmem %s3, 24
        %v5759 = vld [vmem:[%s5758] sm:$0xff]
        %5760 = vrot.lane.b32.xlu0 %v487, 104
        %v5761 = vpop.permute.xlu0 %5760
        %5762 = vrot.lane.b32.xlu0 %v487, 72
        %v5763 = vpop.permute.xlu0 %5762
        %v5765 = vsel %vm506, %v5761, 0
        %v5768 = vsel %vm506, %v5763, 0
        %5770 = vmatprep.subr.bf16.mxu0 0
        %5771 = vmatpush1.bf16.xpose.msra.mxu0 %v5768
        %5772 = vmatprep.subr.bf16.mxu0 0
        %5773 = vmatpush1.bf16.xpose.msra.mxu0 0
        %5774 = vmatprep.subr.bf16.mxu0 0
        %5775 = vmatpush1.bf16.xpose.msra.mxu0 0
        %5776 = vmatprep.subr.bf16.mxu0 0
        %5777 = vmatpush1.bf16.xpose.msra.mxu0 0
        %5778 = vmatprep.subr.bf16.mxu0 0
        %5779 = vmatpush1.bf16.xpose.msra.mxu0 0
        %5780 = vmatprep.subr.bf16.mxu0 0
        %5781 = vmatpush1.bf16.xpose.msra.mxu0 0
        %5782 = vmatprep.subr.bf16.mxu0 0
        %5783 = vmatpush1.bf16.xpose.msra.mxu0 0
        %5784 = vmatprep.subr.bf16.mxu0 0
        %5785 = vmatpush1.bf16.xpose.msra.mxu0 0
        %5786 = vmatprep.subr.bf16.mxu0 0
        %5787 = vmatpush1.bf16.xpose.msra.mxu0 0
        %5788 = vmatprep.subr.bf16.mxu0 0
        %5789 = vmatpush1.bf16.xpose.msra.mxu0 0
        %5790 = vmatprep.subr.bf16.mxu0 0
        %5791 = vmatpush1.bf16.xpose.msra.mxu0 0
        %5792 = vmatprep.subr.bf16.mxu0 0
        %5793 = vmatpush1.bf16.xpose.msra.mxu0 0
        %5794 = vmatprep.subr.bf16.mxu0 0
        %5795 = vmatpush1.bf16.xpose.msra.mxu0 0
        %5796 = vmatprep.subr.bf16.mxu0 0
        %5797 = vmatpush1.bf16.xpose.msra.mxu0 0
        %5798 = vmatprep.subr.bf16.mxu0 0
        %5799 = vmatpush1.bf16.xpose.msra.mxu0 0
        %5800 = vmatprep.subr.bf16.mxu0 0
        %5801 = vmatpush1.bf16.xpose.msra.mxu0 0
        %5802 = vmatprep.mubr.bf16.mxu0 0
        %5803 = vmatmul.mubr.bf16.gmra.mrb[0].mxu0 %v5765
        %v5804 = vpop.f32.mrb[0].mxu0
        %v5805 = vadd.f32 %v5759, %v5804
        %v5806 = vpop.f32.mrb[0].mxu0
        %v5807 = vpop.f32.mrb[0].mxu0
        %v5808 = vpop.f32.mrb[0].mxu0
        %5809 = vdwg.mxu0
        %5810 = vrot.lane.b32.xlu0 %v488, 104
        %v5811 = vpop.permute.xlu0 %5810
        %5812 = vrot.lane.b32.xlu0 %v488, 72
        %v5813 = vpop.permute.xlu0 %5812
        %v5815 = vsel %vm506, %v5811, 0
        %v5818 = vsel %vm506, %v5813, 0
        %5820 = vmatprep.subr.bf16.mxu0 0
        %5821 = vmatpush1.bf16.xpose.msra.mxu0 %v5818
        %5822 = vmatprep.subr.bf16.mxu0 0
        %5823 = vmatpush1.bf16.xpose.msra.mxu0 0
        %5824 = vmatprep.subr.bf16.mxu0 0
        %5825 = vmatpush1.bf16.xpose.msra.mxu0 0
        %5826 = vmatprep.subr.bf16.mxu0 0
        %5827 = vmatpush1.bf16.xpose.msra.mxu0 0
        %5828 = vmatprep.subr.bf16.mxu0 0
        %5829 = vmatpush1.bf16.xpose.msra.mxu0 0
        %5830 = vmatprep.subr.bf16.mxu0 0
        %5831 = vmatpush1.bf16.xpose.msra.mxu0 0
        %5832 = vmatprep.subr.bf16.mxu0 0
        %5833 = vmatpush1.bf16.xpose.msra.mxu0 0
        %5834 = vmatprep.subr.bf16.mxu0 0
        %5835 = vmatpush1.bf16.xpose.msra.mxu0 0
        %5836 = vmatprep.subr.bf16.mxu0 0
        %5837 = vmatpush1.bf16.xpose.msra.mxu0 0
        %5838 = vmatprep.subr.bf16.mxu0 0
        %5839 = vmatpush1.bf16.xpose.msra.mxu0 0
        %5840 = vmatprep.subr.bf16.mxu0 0
        %5841 = vmatpush1.bf16.xpose.msra.mxu0 0
        %5842 = vmatprep.subr.bf16.mxu0 0
        %5843 = vmatpush1.bf16.xpose.msra.mxu0 0
        %5844 = vmatprep.subr.bf16.mxu0 0
        %5845 = vmatpush1.bf16.xpose.msra.mxu0 0
        %5846 = vmatprep.subr.bf16.mxu0 0
        %5847 = vmatpush1.bf16.xpose.msra.mxu0 0
        %5848 = vmatprep.subr.bf16.mxu0 0
        %5849 = vmatpush1.bf16.xpose.msra.mxu0 0
        %5850 = vmatprep.subr.bf16.mxu0 0
        %5851 = vmatpush1.bf16.xpose.msra.mxu0 0
        %5852 = vmatprep.mubr.bf16.mxu0 0
        %5853 = vmatmul.mubr.bf16.gmra.mrb[0].mxu0 %v5815
        %v5854 = vpop.f32.mrb[0].mxu0
        %v5855 = vadd.f32 %v5759, %v5854
        %v5856 = vpop.f32.mrb[0].mxu0
        %v5857 = vpop.f32.mrb[0].mxu0
        %v5858 = vpop.f32.mrb[0].mxu0
        %5859 = vdwg.mxu0
        %5860 = vrot.lane.b32.xlu0 %v489, 104
        %v5861 = vpop.permute.xlu0 %5860
        %5862 = vrot.lane.b32.xlu0 %v489, 72
        %v5863 = vpop.permute.xlu0 %5862
        %v5865 = vsel %vm506, %v5861, 0
        %v5868 = vsel %vm506, %v5863, 0
        %5870 = vmatprep.subr.bf16.mxu0 0
        %5871 = vmatpush1.bf16.xpose.msra.mxu0 %v5868
        %5872 = vmatprep.subr.bf16.mxu0 0
        %5873 = vmatpush1.bf16.xpose.msra.mxu0 0
        %5874 = vmatprep.subr.bf16.mxu0 0
        %5875 = vmatpush1.bf16.xpose.msra.mxu0 0
        %5876 = vmatprep.subr.bf16.mxu0 0
        %5877 = vmatpush1.bf16.xpose.msra.mxu0 0
        %5878 = vmatprep.subr.bf16.mxu0 0
        %5879 = vmatpush1.bf16.xpose.msra.mxu0 0
        %5880 = vmatprep.subr.bf16.mxu0 0
        %5881 = vmatpush1.bf16.xpose.msra.mxu0 0
        %5882 = vmatprep.subr.bf16.mxu0 0
        %5883 = vmatpush1.bf16.xpose.msra.mxu0 0
        %5884 = vmatprep.subr.bf16.mxu0 0
        %5885 = vmatpush1.bf16.xpose.msra.mxu0 0
        %5886 = vmatprep.subr.bf16.mxu0 0
        %5887 = vmatpush1.bf16.xpose.msra.mxu0 0
        %5888 = vmatprep.subr.bf16.mxu0 0
        %5889 = vmatpush1.bf16.xpose.msra.mxu0 0
        %5890 = vmatprep.subr.bf16.mxu0 0
        %5891 = vmatpush1.bf16.xpose.msra.mxu0 0
        %5892 = vmatprep.subr.bf16.mxu0 0
        %5893 = vmatpush1.bf16.xpose.msra.mxu0 0
        %5894 = vmatprep.subr.bf16.mxu0 0
        %5895 = vmatpush1.bf16.xpose.msra.mxu0 0
        %5896 = vmatprep.subr.bf16.mxu0 0
        %5897 = vmatpush1.bf16.xpose.msra.mxu0 0
        %5898 = vmatprep.subr.bf16.mxu0 0
        %5899 = vmatpush1.bf16.xpose.msra.mxu0 0
        %5900 = vmatprep.subr.bf16.mxu0 0
        %5901 = vmatpush1.bf16.xpose.msra.mxu0 0
        %5902 = vmatprep.mubr.bf16.mxu0 0
        %5903 = vmatmul.mubr.bf16.gmra.mrb[0].mxu0 %v5865
        %v5904 = vpop.f32.mrb[0].mxu0
        %v5905 = vadd.f32 %v5759, %v5904
        %v5906 = vpop.f32.mrb[0].mxu0
        %v5907 = vpop.f32.mrb[0].mxu0
        %v5908 = vpop.f32.mrb[0].mxu0
        %5909 = vdwg.mxu0
        %5910 = vrot.lane.b32.xlu0 %v490, 104
        %v5911 = vpop.permute.xlu0 %5910
        %5912 = vrot.lane.b32.xlu0 %v490, 72
        %v5913 = vpop.permute.xlu0 %5912
        %v5915 = vsel %vm506, %v5911, 0
        %v5918 = vsel %vm506, %v5913, 0
        %5920 = vmatprep.subr.bf16.mxu0 0
        %5921 = vmatpush1.bf16.xpose.msra.mxu0 %v5918
        %5922 = vmatprep.subr.bf16.mxu0 0
        %5923 = vmatpush1.bf16.xpose.msra.mxu0 0
        %5924 = vmatprep.subr.bf16.mxu0 0
        %5925 = vmatpush1.bf16.xpose.msra.mxu0 0
        %5926 = vmatprep.subr.bf16.mxu0 0
        %5927 = vmatpush1.bf16.xpose.msra.mxu0 0
        %5928 = vmatprep.subr.bf16.mxu0 0
        %5929 = vmatpush1.bf16.xpose.msra.mxu0 0
        %5930 = vmatprep.subr.bf16.mxu0 0
        %5931 = vmatpush1.bf16.xpose.msra.mxu0 0
        %5932 = vmatprep.subr.bf16.mxu0 0
        %5933 = vmatpush1.bf16.xpose.msra.mxu0 0
        %5934 = vmatprep.subr.bf16.mxu0 0
        %5935 = vmatpush1.bf16.xpose.msra.mxu0 0
        %5936 = vmatprep.subr.bf16.mxu0 0
        %5937 = vmatpush1.bf16.xpose.msra.mxu0 0
        %5938 = vmatprep.subr.bf16.mxu0 0
        %5939 = vmatpush1.bf16.xpose.msra.mxu0 0
        %5940 = vmatprep.subr.bf16.mxu0 0
        %5941 = vmatpush1.bf16.xpose.msra.mxu0 0
        %5942 = vmatprep.subr.bf16.mxu0 0
        %5943 = vmatpush1.bf16.xpose.msra.mxu0 0
        %5944 = vmatprep.subr.bf16.mxu0 0
        %5945 = vmatpush1.bf16.xpose.msra.mxu0 0
        %5946 = vmatprep.subr.bf16.mxu0 0
        %5947 = vmatpush1.bf16.xpose.msra.mxu0 0
        %5948 = vmatprep.subr.bf16.mxu0 0
        %5949 = vmatpush1.bf16.xpose.msra.mxu0 0
        %5950 = vmatprep.subr.bf16.mxu0 0
        %5951 = vmatpush1.bf16.xpose.msra.mxu0 0
        %5952 = vmatprep.mubr.bf16.mxu0 0
        %5953 = vmatmul.mubr.bf16.gmra.mrb[0].mxu0 %v5915
        %v5954 = vpop.f32.mrb[0].mxu0
        %v5955 = vadd.f32 %v5759, %v5954
        %v5956 = vpop.f32.mrb[0].mxu0
        %v5957 = vpop.f32.mrb[0].mxu0
        %v5958 = vpop.f32.mrb[0].mxu0
        %5959 = vdwg.mxu0
        %5960 = vrot.lane.b32.xlu0 %v491, 104
        %v5961 = vpop.permute.xlu0 %5960
        %5962 = vrot.lane.b32.xlu0 %v491, 72
        %v5963 = vpop.permute.xlu0 %5962
        %v5965 = vsel %vm506, %v5961, 0
        %v5968 = vsel %vm506, %v5963, 0
        %5970 = vmatprep.subr.bf16.mxu0 0
        %5971 = vmatpush1.bf16.xpose.msra.mxu0 %v5968
        %5972 = vmatprep.subr.bf16.mxu0 0
        %5973 = vmatpush1.bf16.xpose.msra.mxu0 0
        %5974 = vmatprep.subr.bf16.mxu0 0
        %5975 = vmatpush1.bf16.xpose.msra.mxu0 0
        %5976 = vmatprep.subr.bf16.mxu0 0
        %5977 = vmatpush1.bf16.xpose.msra.mxu0 0
        %5978 = vmatprep.subr.bf16.mxu0 0
        %5979 = vmatpush1.bf16.xpose.msra.mxu0 0
        %5980 = vmatprep.subr.bf16.mxu0 0
        %5981 = vmatpush1.bf16.xpose.msra.mxu0 0
        %5982 = vmatprep.subr.bf16.mxu0 0
        %5983 = vmatpush1.bf16.xpose.msra.mxu0 0
        %5984 = vmatprep.subr.bf16.mxu0 0
        %5985 = vmatpush1.bf16.xpose.msra.mxu0 0
        %5986 = vmatprep.subr.bf16.mxu0 0
        %5987 = vmatpush1.bf16.xpose.msra.mxu0 0
        %5988 = vmatprep.subr.bf16.mxu0 0
        %5989 = vmatpush1.bf16.xpose.msra.mxu0 0
        %5990 = vmatprep.subr.bf16.mxu0 0
        %5991 = vmatpush1.bf16.xpose.msra.mxu0 0
        %5992 = vmatprep.subr.bf16.mxu0 0
        %5993 = vmatpush1.bf16.xpose.msra.mxu0 0
        %5994 = vmatprep.subr.bf16.mxu0 0
        %5995 = vmatpush1.bf16.xpose.msra.mxu0 0
        %5996 = vmatprep.subr.bf16.mxu0 0
        %5997 = vmatpush1.bf16.xpose.msra.mxu0 0
        %5998 = vmatprep.subr.bf16.mxu0 0
        %5999 = vmatpush1.bf16.xpose.msra.mxu0 0
        %6000 = vmatprep.subr.bf16.mxu0 0
        %6001 = vmatpush1.bf16.xpose.msra.mxu0 0
        %6002 = vmatprep.mubr.bf16.mxu0 0
        %6003 = vmatmul.mubr.bf16.gmra.mrb[0].mxu0 %v5965
        %v6004 = vpop.f32.mrb[0].mxu0
        %v6005 = vadd.f32 %v5759, %v6004
        %v6006 = vpop.f32.mrb[0].mxu0
        %v6007 = vpop.f32.mrb[0].mxu0
        %v6008 = vpop.f32.mrb[0].mxu0
        %6009 = vdwg.mxu0
        %6010 = vrot.lane.b32.xlu0 %v492, 104
        %v6011 = vpop.permute.xlu0 %6010
        %6012 = vrot.lane.b32.xlu0 %v492, 72
        %v6013 = vpop.permute.xlu0 %6012
        %v6015 = vsel %vm506, %v6011, 0
        %v6018 = vsel %vm506, %v6013, 0
        %6020 = vmatprep.subr.bf16.mxu0 0
        %6021 = vmatpush1.bf16.xpose.msra.mxu0 %v6018
        %6022 = vmatprep.subr.bf16.mxu0 0
        %6023 = vmatpush1.bf16.xpose.msra.mxu0 0
        %6024 = vmatprep.subr.bf16.mxu0 0
        %6025 = vmatpush1.bf16.xpose.msra.mxu0 0
        %6026 = vmatprep.subr.bf16.mxu0 0
        %6027 = vmatpush1.bf16.xpose.msra.mxu0 0
        %6028 = vmatprep.subr.bf16.mxu0 0
        %6029 = vmatpush1.bf16.xpose.msra.mxu0 0
        %6030 = vmatprep.subr.bf16.mxu0 0
        %6031 = vmatpush1.bf16.xpose.msra.mxu0 0
        %6032 = vmatprep.subr.bf16.mxu0 0
        %6033 = vmatpush1.bf16.xpose.msra.mxu0 0
        %6034 = vmatprep.subr.bf16.mxu0 0
        %6035 = vmatpush1.bf16.xpose.msra.mxu0 0
        %6036 = vmatprep.subr.bf16.mxu0 0
        %6037 = vmatpush1.bf16.xpose.msra.mxu0 0
        %6038 = vmatprep.subr.bf16.mxu0 0
        %6039 = vmatpush1.bf16.xpose.msra.mxu0 0
        %6040 = vmatprep.subr.bf16.mxu0 0
        %6041 = vmatpush1.bf16.xpose.msra.mxu0 0
        %6042 = vmatprep.subr.bf16.mxu0 0
        %6043 = vmatpush1.bf16.xpose.msra.mxu0 0
        %6044 = vmatprep.subr.bf16.mxu0 0
        %6045 = vmatpush1.bf16.xpose.msra.mxu0 0
        %6046 = vmatprep.subr.bf16.mxu0 0
        %6047 = vmatpush1.bf16.xpose.msra.mxu0 0
        %6048 = vmatprep.subr.bf16.mxu0 0
        %6049 = vmatpush1.bf16.xpose.msra.mxu0 0
        %6050 = vmatprep.subr.bf16.mxu0 0
        %6051 = vmatpush1.bf16.xpose.msra.mxu0 0
        %6052 = vmatprep.mubr.bf16.mxu0 0
        %6053 = vmatmul.mubr.bf16.gmra.mrb[0].mxu0 %v6015
        %v6054 = vpop.f32.mrb[0].mxu0
        %v6055 = vadd.f32 %v5759, %v6054
        %v6056 = vpop.f32.mrb[0].mxu0
        %v6057 = vpop.f32.mrb[0].mxu0
        %v6058 = vpop.f32.mrb[0].mxu0
        %6059 = vdwg.mxu0
        %6060 = vrot.lane.b32.xlu0 %v493, 104
        %v6061 = vpop.permute.xlu0 %6060
        %6062 = vrot.lane.b32.xlu0 %v493, 72
        %v6063 = vpop.permute.xlu0 %6062
        %v6065 = vsel %vm506, %v6061, 0
        %v6068 = vsel %vm506, %v6063, 0
        %6070 = vmatprep.subr.bf16.mxu0 0
        %6071 = vmatpush1.bf16.xpose.msra.mxu0 %v6068
        %6072 = vmatprep.subr.bf16.mxu0 0
        %6073 = vmatpush1.bf16.xpose.msra.mxu0 0
        %6074 = vmatprep.subr.bf16.mxu0 0
        %6075 = vmatpush1.bf16.xpose.msra.mxu0 0
        %6076 = vmatprep.subr.bf16.mxu0 0
        %6077 = vmatpush1.bf16.xpose.msra.mxu0 0
        %6078 = vmatprep.subr.bf16.mxu0 0
        %6079 = vmatpush1.bf16.xpose.msra.mxu0 0
        %6080 = vmatprep.subr.bf16.mxu0 0
        %6081 = vmatpush1.bf16.xpose.msra.mxu0 0
        %6082 = vmatprep.subr.bf16.mxu0 0
        %6083 = vmatpush1.bf16.xpose.msra.mxu0 0
        %6084 = vmatprep.subr.bf16.mxu0 0
        %6085 = vmatpush1.bf16.xpose.msra.mxu0 0
        %6086 = vmatprep.subr.bf16.mxu0 0
        %6087 = vmatpush1.bf16.xpose.msra.mxu0 0
        %6088 = vmatprep.subr.bf16.mxu0 0
        %6089 = vmatpush1.bf16.xpose.msra.mxu0 0
        %6090 = vmatprep.subr.bf16.mxu0 0
        %6091 = vmatpush1.bf16.xpose.msra.mxu0 0
        %6092 = vmatprep.subr.bf16.mxu0 0
        %6093 = vmatpush1.bf16.xpose.msra.mxu0 0
        %6094 = vmatprep.subr.bf16.mxu0 0
        %6095 = vmatpush1.bf16.xpose.msra.mxu0 0
        %6096 = vmatprep.subr.bf16.mxu0 0
        %6097 = vmatpush1.bf16.xpose.msra.mxu0 0
        %6098 = vmatprep.subr.bf16.mxu0 0
        %6099 = vmatpush1.bf16.xpose.msra.mxu0 0
        %6100 = vmatprep.subr.bf16.mxu0 0
        %6101 = vmatpush1.bf16.xpose.msra.mxu0 0
        %6102 = vmatprep.mubr.bf16.mxu0 0
        %6103 = vmatmul.mubr.bf16.gmra.mrb[0].mxu0 %v6065
        %v6104 = vpop.f32.mrb[0].mxu0
        %v6105 = vadd.f32 %v5759, %v6104
        %v6106 = vpop.f32.mrb[0].mxu0
        %v6107 = vpop.f32.mrb[0].mxu0
        %v6108 = vpop.f32.mrb[0].mxu0
        %6109 = vdwg.mxu0
        %6110 = vrot.lane.b32.xlu0 %v494, 104
        %v6111 = vpop.permute.xlu0 %6110
        %6112 = vrot.lane.b32.xlu0 %v494, 72
        %v6113 = vpop.permute.xlu0 %6112
        %v6115 = vsel %vm506, %v6111, 0
        %v6118 = vsel %vm506, %v6113, 0
        %6120 = vmatprep.subr.bf16.mxu0 0
        %6121 = vmatpush1.bf16.xpose.msra.mxu0 %v6118
        %6122 = vmatprep.subr.bf16.mxu0 0
        %6123 = vmatpush1.bf16.xpose.msra.mxu0 0
        %6124 = vmatprep.subr.bf16.mxu0 0
        %6125 = vmatpush1.bf16.xpose.msra.mxu0 0
        %6126 = vmatprep.subr.bf16.mxu0 0
        %6127 = vmatpush1.bf16.xpose.msra.mxu0 0
        %6128 = vmatprep.subr.bf16.mxu0 0
        %6129 = vmatpush1.bf16.xpose.msra.mxu0 0
        %6130 = vmatprep.subr.bf16.mxu0 0
        %6131 = vmatpush1.bf16.xpose.msra.mxu0 0
        %6132 = vmatprep.subr.bf16.mxu0 0
        %6133 = vmatpush1.bf16.xpose.msra.mxu0 0
        %6134 = vmatprep.subr.bf16.mxu0 0
        %6135 = vmatpush1.bf16.xpose.msra.mxu0 0
        %6136 = vmatprep.subr.bf16.mxu0 0
        %6137 = vmatpush1.bf16.xpose.msra.mxu0 0
        %6138 = vmatprep.subr.bf16.mxu0 0
        %6139 = vmatpush1.bf16.xpose.msra.mxu0 0
        %6140 = vmatprep.subr.bf16.mxu0 0
        %6141 = vmatpush1.bf16.xpose.msra.mxu0 0
        %6142 = vmatprep.subr.bf16.mxu0 0
        %6143 = vmatpush1.bf16.xpose.msra.mxu0 0
        %6144 = vmatprep.subr.bf16.mxu0 0
        %6145 = vmatpush1.bf16.xpose.msra.mxu0 0
        %6146 = vmatprep.subr.bf16.mxu0 0
        %6147 = vmatpush1.bf16.xpose.msra.mxu0 0
        %6148 = vmatprep.subr.bf16.mxu0 0
        %6149 = vmatpush1.bf16.xpose.msra.mxu0 0
        %6150 = vmatprep.subr.bf16.mxu0 0
        %6151 = vmatpush1.bf16.xpose.msra.mxu0 0
        %6152 = vmatprep.mubr.bf16.mxu0 0
        %6153 = vmatmul.mubr.bf16.gmra.mrb[0].mxu0 %v6115
        %v6154 = vpop.f32.mrb[0].mxu0
        %v6155 = vadd.f32 %v5759, %v6154
        %v6156 = vpop.f32.mrb[0].mxu0
        %v6157 = vpop.f32.mrb[0].mxu0
        %v6158 = vpop.f32.mrb[0].mxu0
        %6159 = vdwg.mxu0
        %6160 = vrot.lane.b32.xlu0 %v495, 104
        %v6161 = vpop.permute.xlu0 %6160
        %6162 = vrot.lane.b32.xlu0 %v495, 72
        %v6163 = vpop.permute.xlu0 %6162
        %v6165 = vsel %vm506, %v6161, 0
        %v6168 = vsel %vm506, %v6163, 0
        %6170 = vmatprep.subr.bf16.mxu0 0
        %6171 = vmatpush1.bf16.xpose.msra.mxu0 %v6168
        %6172 = vmatprep.subr.bf16.mxu0 0
        %6173 = vmatpush1.bf16.xpose.msra.mxu0 0
        %6174 = vmatprep.subr.bf16.mxu0 0
        %6175 = vmatpush1.bf16.xpose.msra.mxu0 0
        %6176 = vmatprep.subr.bf16.mxu0 0
        %6177 = vmatpush1.bf16.xpose.msra.mxu0 0
        %6178 = vmatprep.subr.bf16.mxu0 0
        %6179 = vmatpush1.bf16.xpose.msra.mxu0 0
        %6180 = vmatprep.subr.bf16.mxu0 0
        %6181 = vmatpush1.bf16.xpose.msra.mxu0 0
        %6182 = vmatprep.subr.bf16.mxu0 0
        %6183 = vmatpush1.bf16.xpose.msra.mxu0 0
        %6184 = vmatprep.subr.bf16.mxu0 0
        %6185 = vmatpush1.bf16.xpose.msra.mxu0 0
        %6186 = vmatprep.subr.bf16.mxu0 0
        %6187 = vmatpush1.bf16.xpose.msra.mxu0 0
        %6188 = vmatprep.subr.bf16.mxu0 0
        %6189 = vmatpush1.bf16.xpose.msra.mxu0 0
        %6190 = vmatprep.subr.bf16.mxu0 0
        %6191 = vmatpush1.bf16.xpose.msra.mxu0 0
        %6192 = vmatprep.subr.bf16.mxu0 0
        %6193 = vmatpush1.bf16.xpose.msra.mxu0 0
        %6194 = vmatprep.subr.bf16.mxu0 0
        %6195 = vmatpush1.bf16.xpose.msra.mxu0 0
        %6196 = vmatprep.subr.bf16.mxu0 0
        %6197 = vmatpush1.bf16.xpose.msra.mxu0 0
        %6198 = vmatprep.subr.bf16.mxu0 0
        %6199 = vmatpush1.bf16.xpose.msra.mxu0 0
        %6200 = vmatprep.subr.bf16.mxu0 0
        %6201 = vmatpush1.bf16.xpose.msra.mxu0 0
        %6202 = vmatprep.mubr.bf16.mxu0 0
        %6203 = vmatmul.mubr.bf16.gmra.mrb[0].mxu0 %v6165
        %v6204 = vpop.f32.mrb[0].mxu0
        %v6205 = vadd.f32 %v5759, %v6204
        %v6206 = vpop.f32.mrb[0].mxu0
        %v6207 = vpop.f32.mrb[0].mxu0
        %v6208 = vpop.f32.mrb[0].mxu0
        %6209 = vdwg.mxu0
        %6210 = vrot.lane.b32.xlu0 %v496, 104
        %v6211 = vpop.permute.xlu0 %6210
        %6212 = vrot.lane.b32.xlu0 %v496, 72
        %v6213 = vpop.permute.xlu0 %6212
        %v6215 = vsel %vm506, %v6211, 0
        %v6218 = vsel %vm506, %v6213, 0
        %6220 = vmatprep.subr.bf16.mxu0 0
        %6221 = vmatpush1.bf16.xpose.msra.mxu0 %v6218
        %6222 = vmatprep.subr.bf16.mxu0 0
        %6223 = vmatpush1.bf16.xpose.msra.mxu0 0
        %6224 = vmatprep.subr.bf16.mxu0 0
        %6225 = vmatpush1.bf16.xpose.msra.mxu0 0
        %6226 = vmatprep.subr.bf16.mxu0 0
        %6227 = vmatpush1.bf16.xpose.msra.mxu0 0
        %6228 = vmatprep.subr.bf16.mxu0 0
        %6229 = vmatpush1.bf16.xpose.msra.mxu0 0
        %6230 = vmatprep.subr.bf16.mxu0 0
        %6231 = vmatpush1.bf16.xpose.msra.mxu0 0
        %6232 = vmatprep.subr.bf16.mxu0 0
        %6233 = vmatpush1.bf16.xpose.msra.mxu0 0
        %6234 = vmatprep.subr.bf16.mxu0 0
        %6235 = vmatpush1.bf16.xpose.msra.mxu0 0
        %6236 = vmatprep.subr.bf16.mxu0 0
        %6237 = vmatpush1.bf16.xpose.msra.mxu0 0
        %6238 = vmatprep.subr.bf16.mxu0 0
        %6239 = vmatpush1.bf16.xpose.msra.mxu0 0
        %6240 = vmatprep.subr.bf16.mxu0 0
        %6241 = vmatpush1.bf16.xpose.msra.mxu0 0
        %6242 = vmatprep.subr.bf16.mxu0 0
        %6243 = vmatpush1.bf16.xpose.msra.mxu0 0
        %6244 = vmatprep.subr.bf16.mxu0 0
        %6245 = vmatpush1.bf16.xpose.msra.mxu0 0
        %6246 = vmatprep.subr.bf16.mxu0 0
        %6247 = vmatpush1.bf16.xpose.msra.mxu0 0
        %6248 = vmatprep.subr.bf16.mxu0 0
        %6249 = vmatpush1.bf16.xpose.msra.mxu0 0
        %6250 = vmatprep.subr.bf16.mxu0 0
        %6251 = vmatpush1.bf16.xpose.msra.mxu0 0
        %6252 = vmatprep.mubr.bf16.mxu0 0
        %6253 = vmatmul.mubr.bf16.gmra.mrb[0].mxu0 %v6215
        %v6254 = vpop.f32.mrb[0].mxu0
        %v6255 = vadd.f32 %v5759, %v6254
        %v6256 = vpop.f32.mrb[0].mxu0
        %v6257 = vpop.f32.mrb[0].mxu0
        %v6258 = vpop.f32.mrb[0].mxu0
        %6259 = vdwg.mxu0
        %6260 = vrot.lane.b32.xlu0 %v497, 104
        %v6261 = vpop.permute.xlu0 %6260
        %6262 = vrot.lane.b32.xlu0 %v497, 72
        %v6263 = vpop.permute.xlu0 %6262
        %v6265 = vsel %vm506, %v6261, 0
        %v6268 = vsel %vm506, %v6263, 0
        %6270 = vmatprep.subr.bf16.mxu0 0
        %6271 = vmatpush1.bf16.xpose.msra.mxu0 %v6268
        %6272 = vmatprep.subr.bf16.mxu0 0
        %6273 = vmatpush1.bf16.xpose.msra.mxu0 0
        %6274 = vmatprep.subr.bf16.mxu0 0
        %6275 = vmatpush1.bf16.xpose.msra.mxu0 0
        %6276 = vmatprep.subr.bf16.mxu0 0
        %6277 = vmatpush1.bf16.xpose.msra.mxu0 0
        %6278 = vmatprep.subr.bf16.mxu0 0
        %6279 = vmatpush1.bf16.xpose.msra.mxu0 0
        %6280 = vmatprep.subr.bf16.mxu0 0
        %6281 = vmatpush1.bf16.xpose.msra.mxu0 0
        %6282 = vmatprep.subr.bf16.mxu0 0
        %6283 = vmatpush1.bf16.xpose.msra.mxu0 0
        %6284 = vmatprep.subr.bf16.mxu0 0
        %6285 = vmatpush1.bf16.xpose.msra.mxu0 0
        %6286 = vmatprep.subr.bf16.mxu0 0
        %6287 = vmatpush1.bf16.xpose.msra.mxu0 0
        %6288 = vmatprep.subr.bf16.mxu0 0
        %6289 = vmatpush1.bf16.xpose.msra.mxu0 0
        %6290 = vmatprep.subr.bf16.mxu0 0
        %6291 = vmatpush1.bf16.xpose.msra.mxu0 0
        %6292 = vmatprep.subr.bf16.mxu0 0
        %6293 = vmatpush1.bf16.xpose.msra.mxu0 0
        %6294 = vmatprep.subr.bf16.mxu0 0
        %6295 = vmatpush1.bf16.xpose.msra.mxu0 0
        %6296 = vmatprep.subr.bf16.mxu0 0
        %6297 = vmatpush1.bf16.xpose.msra.mxu0 0
        %6298 = vmatprep.subr.bf16.mxu0 0
        %6299 = vmatpush1.bf16.xpose.msra.mxu0 0
        %6300 = vmatprep.subr.bf16.mxu0 0
        %6301 = vmatpush1.bf16.xpose.msra.mxu0 0
        %6302 = vmatprep.mubr.bf16.mxu0 0
        %6303 = vmatmul.mubr.bf16.gmra.mrb[0].mxu0 %v6265
        %v6304 = vpop.f32.mrb[0].mxu0
        %v6305 = vadd.f32 %v5759, %v6304
        %v6306 = vpop.f32.mrb[0].mxu0
        %v6307 = vpop.f32.mrb[0].mxu0
        %v6308 = vpop.f32.mrb[0].mxu0
        %6309 = vdwg.mxu0
        %6310 = vrot.lane.b32.xlu0 %v498, 104
        %v6311 = vpop.permute.xlu0 %6310
        %6312 = vrot.lane.b32.xlu0 %v498, 72
        %v6313 = vpop.permute.xlu0 %6312
        %v6315 = vsel %vm506, %v6311, 0
        %v6318 = vsel %vm506, %v6313, 0
        %6320 = vmatprep.subr.bf16.mxu0 0
        %6321 = vmatpush1.bf16.xpose.msra.mxu0 %v6318
        %6322 = vmatprep.subr.bf16.mxu0 0
        %6323 = vmatpush1.bf16.xpose.msra.mxu0 0
        %6324 = vmatprep.subr.bf16.mxu0 0
        %6325 = vmatpush1.bf16.xpose.msra.mxu0 0
        %6326 = vmatprep.subr.bf16.mxu0 0
        %6327 = vmatpush1.bf16.xpose.msra.mxu0 0
        %6328 = vmatprep.subr.bf16.mxu0 0
        %6329 = vmatpush1.bf16.xpose.msra.mxu0 0
        %6330 = vmatprep.subr.bf16.mxu0 0
        %6331 = vmatpush1.bf16.xpose.msra.mxu0 0
        %6332 = vmatprep.subr.bf16.mxu0 0
        %6333 = vmatpush1.bf16.xpose.msra.mxu0 0
        %6334 = vmatprep.subr.bf16.mxu0 0
        %6335 = vmatpush1.bf16.xpose.msra.mxu0 0
        %6336 = vmatprep.subr.bf16.mxu0 0
        %6337 = vmatpush1.bf16.xpose.msra.mxu0 0
        %6338 = vmatprep.subr.bf16.mxu0 0
        %6339 = vmatpush1.bf16.xpose.msra.mxu0 0
        %6340 = vmatprep.subr.bf16.mxu0 0
        %6341 = vmatpush1.bf16.xpose.msra.mxu0 0
        %6342 = vmatprep.subr.bf16.mxu0 0
        %6343 = vmatpush1.bf16.xpose.msra.mxu0 0
        %6344 = vmatprep.subr.bf16.mxu0 0
        %6345 = vmatpush1.bf16.xpose.msra.mxu0 0
        %6346 = vmatprep.subr.bf16.mxu0 0
        %6347 = vmatpush1.bf16.xpose.msra.mxu0 0
        %6348 = vmatprep.subr.bf16.mxu0 0
        %6349 = vmatpush1.bf16.xpose.msra.mxu0 0
        %6350 = vmatprep.subr.bf16.mxu0 0
        %6351 = vmatpush1.bf16.xpose.msra.mxu0 0
        %6352 = vmatprep.mubr.bf16.mxu0 0
        %6353 = vmatmul.mubr.bf16.gmra.mrb[0].mxu0 %v6315
        %v6354 = vpop.f32.mrb[0].mxu0
        %v6355 = vadd.f32 %v5759, %v6354
        %v6356 = vpop.f32.mrb[0].mxu0
        %v6357 = vpop.f32.mrb[0].mxu0
        %v6358 = vpop.f32.mrb[0].mxu0
        %6359 = vdwg.mxu0
        %6360 = vrot.lane.b32.xlu0 %v499, 104
        %v6361 = vpop.permute.xlu0 %6360
        %6362 = vrot.lane.b32.xlu0 %v499, 72
        %v6363 = vpop.permute.xlu0 %6362
        %v6365 = vsel %vm506, %v6361, 0
        %v6368 = vsel %vm506, %v6363, 0
        %6370 = vmatprep.subr.bf16.mxu0 0
        %6371 = vmatpush1.bf16.xpose.msra.mxu0 %v6368
        %6372 = vmatprep.subr.bf16.mxu0 0
        %6373 = vmatpush1.bf16.xpose.msra.mxu0 0
        %6374 = vmatprep.subr.bf16.mxu0 0
        %6375 = vmatpush1.bf16.xpose.msra.mxu0 0
        %6376 = vmatprep.subr.bf16.mxu0 0
        %6377 = vmatpush1.bf16.xpose.msra.mxu0 0
        %6378 = vmatprep.subr.bf16.mxu0 0
        %6379 = vmatpush1.bf16.xpose.msra.mxu0 0
        %6380 = vmatprep.subr.bf16.mxu0 0
        %6381 = vmatpush1.bf16.xpose.msra.mxu0 0
        %6382 = vmatprep.subr.bf16.mxu0 0
        %6383 = vmatpush1.bf16.xpose.msra.mxu0 0
        %6384 = vmatprep.subr.bf16.mxu0 0
        %6385 = vmatpush1.bf16.xpose.msra.mxu0 0
        %6386 = vmatprep.subr.bf16.mxu0 0
        %6387 = vmatpush1.bf16.xpose.msra.mxu0 0
        %6388 = vmatprep.subr.bf16.mxu0 0
        %6389 = vmatpush1.bf16.xpose.msra.mxu0 0
        %6390 = vmatprep.subr.bf16.mxu0 0
        %6391 = vmatpush1.bf16.xpose.msra.mxu0 0
        %6392 = vmatprep.subr.bf16.mxu0 0
        %6393 = vmatpush1.bf16.xpose.msra.mxu0 0
        %6394 = vmatprep.subr.bf16.mxu0 0
        %6395 = vmatpush1.bf16.xpose.msra.mxu0 0
        %6396 = vmatprep.subr.bf16.mxu0 0
        %6397 = vmatpush1.bf16.xpose.msra.mxu0 0
        %6398 = vmatprep.subr.bf16.mxu0 0
        %6399 = vmatpush1.bf16.xpose.msra.mxu0 0
        %6400 = vmatprep.subr.bf16.mxu0 0
        %6401 = vmatpush1.bf16.xpose.msra.mxu0 0
        %6402 = vmatprep.mubr.bf16.mxu0 0
        %6403 = vmatmul.mubr.bf16.gmra.mrb[0].mxu0 %v6365
        %v6404 = vpop.f32.mrb[0].mxu0
        %v6405 = vadd.f32 %v5759, %v6404
        %v6406 = vpop.f32.mrb[0].mxu0
        %v6407 = vpop.f32.mrb[0].mxu0
        %v6408 = vpop.f32.mrb[0].mxu0
        %6409 = vdwg.mxu0
        %6410 = vrot.lane.b32.xlu0 %v500, 104
        %v6411 = vpop.permute.xlu0 %6410
        %6412 = vrot.lane.b32.xlu0 %v500, 72
        %v6413 = vpop.permute.xlu0 %6412
        %v6415 = vsel %vm506, %v6411, 0
        %v6418 = vsel %vm506, %v6413, 0
        %6420 = vmatprep.subr.bf16.mxu0 0
        %6421 = vmatpush1.bf16.xpose.msra.mxu0 %v6418
        %6422 = vmatprep.subr.bf16.mxu0 0
        %6423 = vmatpush1.bf16.xpose.msra.mxu0 0
        %6424 = vmatprep.subr.bf16.mxu0 0
        %6425 = vmatpush1.bf16.xpose.msra.mxu0 0
        %6426 = vmatprep.subr.bf16.mxu0 0
        %6427 = vmatpush1.bf16.xpose.msra.mxu0 0
        %6428 = vmatprep.subr.bf16.mxu0 0
        %6429 = vmatpush1.bf16.xpose.msra.mxu0 0
        %6430 = vmatprep.subr.bf16.mxu0 0
        %6431 = vmatpush1.bf16.xpose.msra.mxu0 0
        %6432 = vmatprep.subr.bf16.mxu0 0
        %6433 = vmatpush1.bf16.xpose.msra.mxu0 0
        %6434 = vmatprep.subr.bf16.mxu0 0
        %6435 = vmatpush1.bf16.xpose.msra.mxu0 0
        %6436 = vmatprep.subr.bf16.mxu0 0
        %6437 = vmatpush1.bf16.xpose.msra.mxu0 0
        %6438 = vmatprep.subr.bf16.mxu0 0
        %6439 = vmatpush1.bf16.xpose.msra.mxu0 0
        %6440 = vmatprep.subr.bf16.mxu0 0
        %6441 = vmatpush1.bf16.xpose.msra.mxu0 0
        %6442 = vmatprep.subr.bf16.mxu0 0
        %6443 = vmatpush1.bf16.xpose.msra.mxu0 0
        %6444 = vmatprep.subr.bf16.mxu0 0
        %6445 = vmatpush1.bf16.xpose.msra.mxu0 0
        %6446 = vmatprep.subr.bf16.mxu0 0
        %6447 = vmatpush1.bf16.xpose.msra.mxu0 0
        %6448 = vmatprep.subr.bf16.mxu0 0
        %6449 = vmatpush1.bf16.xpose.msra.mxu0 0
        %6450 = vmatprep.subr.bf16.mxu0 0
        %6451 = vmatpush1.bf16.xpose.msra.mxu0 0
        %6452 = vmatprep.mubr.bf16.mxu0 0
        %6453 = vmatmul.mubr.bf16.gmra.mrb[0].mxu0 %v6415
        %v6454 = vpop.f32.mrb[0].mxu0
        %v6455 = vadd.f32 %v5759, %v6454
        %v6456 = vpop.f32.mrb[0].mxu0
        %v6457 = vpop.f32.mrb[0].mxu0
        %v6458 = vpop.f32.mrb[0].mxu0
        %6459 = vdwg.mxu0
        %6460 = vrot.lane.b32.xlu0 %v501, 104
        %v6461 = vpop.permute.xlu0 %6460
        %6462 = vrot.lane.b32.xlu0 %v501, 72
        %v6463 = vpop.permute.xlu0 %6462
        %v6465 = vsel %vm506, %v6461, 0
        %v6468 = vsel %vm506, %v6463, 0
        %6470 = vmatprep.subr.bf16.mxu0 0
        %6471 = vmatpush1.bf16.xpose.msra.mxu0 %v6468
        %6472 = vmatprep.subr.bf16.mxu0 0
        %6473 = vmatpush1.bf16.xpose.msra.mxu0 0
        %6474 = vmatprep.subr.bf16.mxu0 0
        %6475 = vmatpush1.bf16.xpose.msra.mxu0 0
        %6476 = vmatprep.subr.bf16.mxu0 0
        %6477 = vmatpush1.bf16.xpose.msra.mxu0 0
        %6478 = vmatprep.subr.bf16.mxu0 0
        %6479 = vmatpush1.bf16.xpose.msra.mxu0 0
        %6480 = vmatprep.subr.bf16.mxu0 0
        %6481 = vmatpush1.bf16.xpose.msra.mxu0 0
        %6482 = vmatprep.subr.bf16.mxu0 0
        %6483 = vmatpush1.bf16.xpose.msra.mxu0 0
        %6484 = vmatprep.subr.bf16.mxu0 0
        %6485 = vmatpush1.bf16.xpose.msra.mxu0 0
        %6486 = vmatprep.subr.bf16.mxu0 0
        %6487 = vmatpush1.bf16.xpose.msra.mxu0 0
        %6488 = vmatprep.subr.bf16.mxu0 0
        %6489 = vmatpush1.bf16.xpose.msra.mxu0 0
        %6490 = vmatprep.subr.bf16.mxu0 0
        %6491 = vmatpush1.bf16.xpose.msra.mxu0 0
        %6492 = vmatprep.subr.bf16.mxu0 0
        %6493 = vmatpush1.bf16.xpose.msra.mxu0 0
        %6494 = vmatprep.subr.bf16.mxu0 0
        %6495 = vmatpush1.bf16.xpose.msra.mxu0 0
        %6496 = vmatprep.subr.bf16.mxu0 0
        %6497 = vmatpush1.bf16.xpose.msra.mxu0 0
        %6498 = vmatprep.subr.bf16.mxu0 0
        %6499 = vmatpush1.bf16.xpose.msra.mxu0 0
        %6500 = vmatprep.subr.bf16.mxu0 0
        %6501 = vmatpush1.bf16.xpose.msra.mxu0 0
        %6502 = vmatprep.mubr.bf16.mxu0 0
        %6503 = vmatmul.mubr.bf16.gmra.mrb[0].mxu0 %v6465
        %v6504 = vpop.f32.mrb[0].mxu0
        %v6505 = vadd.f32 %v5759, %v6504
        %v6506 = vpop.f32.mrb[0].mxu0
        %v6507 = vpop.f32.mrb[0].mxu0
        %v6508 = vpop.f32.mrb[0].mxu0
        %6509 = vdwg.mxu0
        %6510 = vrot.lane.b32.xlu0 %v502, 104
        %v6511 = vpop.permute.xlu0 %6510
        %6512 = vrot.lane.b32.xlu0 %v502, 72
        %v6513 = vpop.permute.xlu0 %6512
        %v6515 = vsel %vm506, %v6511, 0
        %v6518 = vsel %vm506, %v6513, 0
        %6520 = vmatprep.subr.bf16.mxu0 0
        %6521 = vmatpush1.bf16.xpose.msra.mxu0 %v6518
        %6522 = vmatprep.subr.bf16.mxu0 0
        %6523 = vmatpush1.bf16.xpose.msra.mxu0 0
        %6524 = vmatprep.subr.bf16.mxu0 0
        %6525 = vmatpush1.bf16.xpose.msra.mxu0 0
        %6526 = vmatprep.subr.bf16.mxu0 0
        %6527 = vmatpush1.bf16.xpose.msra.mxu0 0
        %6528 = vmatprep.subr.bf16.mxu0 0
        %6529 = vmatpush1.bf16.xpose.msra.mxu0 0
        %6530 = vmatprep.subr.bf16.mxu0 0
        %6531 = vmatpush1.bf16.xpose.msra.mxu0 0
        %6532 = vmatprep.subr.bf16.mxu0 0
        %6533 = vmatpush1.bf16.xpose.msra.mxu0 0
        %6534 = vmatprep.subr.bf16.mxu0 0
        %6535 = vmatpush1.bf16.xpose.msra.mxu0 0
        %6536 = vmatprep.subr.bf16.mxu0 0
        %6537 = vmatpush1.bf16.xpose.msra.mxu0 0
        %6538 = vmatprep.subr.bf16.mxu0 0
        %6539 = vmatpush1.bf16.xpose.msra.mxu0 0
        %6540 = vmatprep.subr.bf16.mxu0 0
        %6541 = vmatpush1.bf16.xpose.msra.mxu0 0
        %6542 = vmatprep.subr.bf16.mxu0 0
        %6543 = vmatpush1.bf16.xpose.msra.mxu0 0
        %6544 = vmatprep.subr.bf16.mxu0 0
        %6545 = vmatpush1.bf16.xpose.msra.mxu0 0
        %6546 = vmatprep.subr.bf16.mxu0 0
        %6547 = vmatpush1.bf16.xpose.msra.mxu0 0
        %6548 = vmatprep.subr.bf16.mxu0 0
        %6549 = vmatpush1.bf16.xpose.msra.mxu0 0
        %6550 = vmatprep.subr.bf16.mxu0 0
        %6551 = vmatpush1.bf16.xpose.msra.mxu0 0
        %6552 = vmatprep.mubr.bf16.mxu0 0
        %6553 = vmatmul.mubr.bf16.gmra.mrb[0].mxu0 %v6515
        %v6554 = vpop.f32.mrb[0].mxu0
        %v6555 = vadd.f32 %v5759, %v6554
        %v6556 = vpop.f32.mrb[0].mxu0
        %v6557 = vpop.f32.mrb[0].mxu0
        %v6558 = vpop.f32.mrb[0].mxu0
        %6559 = vdwg.mxu0
        %v6560 = vsel %vm506, %v5805, -inf
        %6561 = vmax.xlane.f32.xlu0 %v6560
        %v6562 = vpop.xlane.xlu0 %6561
        %v6563 = vsel %vm506, %v5855, -inf
        %6564 = vmax.xlane.f32.xlu0 %v6563
        %v6565 = vpop.xlane.xlu0 %6564
        %v6566 = vsel %vm506, %v5905, -inf
        %6567 = vmax.xlane.f32.xlu0 %v6566
        %v6568 = vpop.xlane.xlu0 %6567
        %v6569 = vsel %vm506, %v5955, -inf
        %6570 = vmax.xlane.f32.xlu0 %v6569
        %v6571 = vpop.xlane.xlu0 %6570
        %v6572 = vsel %vm506, %v6005, -inf
        %6573 = vmax.xlane.f32.xlu0 %v6572
        %v6574 = vpop.xlane.xlu0 %6573
        %v6575 = vsel %vm506, %v6055, -inf
        %6576 = vmax.xlane.f32.xlu0 %v6575
        %v6577 = vpop.xlane.xlu0 %6576
        %v6578 = vsel %vm506, %v6105, -inf
        %6579 = vmax.xlane.f32.xlu0 %v6578
        %v6580 = vpop.xlane.xlu0 %6579
        %v6581 = vsel %vm506, %v6155, -inf
        %6582 = vmax.xlane.f32.xlu0 %v6581
        %v6583 = vpop.xlane.xlu0 %6582
        %v6584 = vsel %vm506, %v6205, -inf
        %6585 = vmax.xlane.f32.xlu0 %v6584
        %v6586 = vpop.xlane.xlu0 %6585
        %v6587 = vsel %vm506, %v6255, -inf
        %6588 = vmax.xlane.f32.xlu0 %v6587
        %v6589 = vpop.xlane.xlu0 %6588
        %v6590 = vsel %vm506, %v6305, -inf
        %6591 = vmax.xlane.f32.xlu0 %v6590
        %v6592 = vpop.xlane.xlu0 %6591
        %v6593 = vsel %vm506, %v6355, -inf
        %6594 = vmax.xlane.f32.xlu0 %v6593
        %v6595 = vpop.xlane.xlu0 %6594
        %v6596 = vsel %vm506, %v6405, -inf
        %6597 = vmax.xlane.f32.xlu0 %v6596
        %v6598 = vpop.xlane.xlu0 %6597
        %v6599 = vsel %vm506, %v6455, -inf
        %6600 = vmax.xlane.f32.xlu0 %v6599
        %v6601 = vpop.xlane.xlu0 %6600
        %v6602 = vsel %vm506, %v6505, -inf
        %6603 = vmax.xlane.f32.xlu0 %v6602
        %v6604 = vpop.xlane.xlu0 %6603
        %v6605 = vsel %vm506, %v6555, -inf
        %6606 = vmax.xlane.f32.xlu0 %v6605
        %v6607 = vpop.xlane.xlu0 %6606
        %v6608 = vsub.f32 %v5805, %v6562
        %v6609 = vsub.f32 %v5855, %v6565
        %v6610 = vsub.f32 %v5905, %v6568
        %v6611 = vsub.f32 %v5955, %v6571
        %v6612 = vsub.f32 %v6005, %v6574
        %v6613 = vsub.f32 %v6055, %v6577
        %v6614 = vsub.f32 %v6105, %v6580
        %v6615 = vsub.f32 %v6155, %v6583
        %v6616 = vsub.f32 %v6205, %v6586
        %v6617 = vsub.f32 %v6255, %v6589
        %v6618 = vsub.f32 %v6305, %v6592
        %v6619 = vsub.f32 %v6355, %v6595
        %v6620 = vsub.f32 %v6405, %v6598
        %v6621 = vsub.f32 %v6455, %v6601
        %v6622 = vsub.f32 %v6505, %v6604
        %v6623 = vsub.f32 %v6555, %v6607
        %v6624 = vmul.f32 %v6608, 1.442695
        %v6625 = vpow.pop %v6624
        %v6626 = vmul.f32 %v6609, 1.442695
        %v6627 = vpow.pop %v6626
        %v6628 = vmul.f32 %v6610, 1.442695
        %v6629 = vpow.pop %v6628
        %v6630 = vmul.f32 %v6611, 1.442695
        %v6631 = vpow.pop %v6630
        %v6632 = vmul.f32 %v6612, 1.442695
        %v6633 = vpow.pop %v6632
        %v6634 = vmul.f32 %v6613, 1.442695
        %v6635 = vpow.pop %v6634
        %v6636 = vmul.f32 %v6614, 1.442695
        %v6637 = vpow.pop %v6636
        %v6638 = vmul.f32 %v6615, 1.442695
        %v6639 = vpow.pop %v6638
        %v6640 = vmul.f32 %v6616, 1.442695
        %v6641 = vpow.pop %v6640
        %v6642 = vmul.f32 %v6617, 1.442695
        %v6643 = vpow.pop %v6642
        %v6644 = vmul.f32 %v6618, 1.442695
        %v6645 = vpow.pop %v6644
        %v6646 = vmul.f32 %v6619, 1.442695
        %v6647 = vpow.pop %v6646
        %v6648 = vmul.f32 %v6620, 1.442695
        %v6649 = vpow.pop %v6648
        %v6650 = vmul.f32 %v6621, 1.442695
        %v6651 = vpow.pop %v6650
        %v6652 = vmul.f32 %v6622, 1.442695
        %v6653 = vpow.pop %v6652
        %v6654 = vmul.f32 %v6623, 1.442695
        %v6655 = vpow.pop %v6654
        %v6656 = vsel %vm506, %v6625, 0.0
        %6657 = vadd.xlane.f32.xlu0 %v6656
        %v6658 = vpop.xlane.xlu0 %6657
        %v6659 = vsel %vm506, %v6627, 0.0
        %6660 = vadd.xlane.f32.xlu0 %v6659
        %v6661 = vpop.xlane.xlu0 %6660
        %v6662 = vsel %vm506, %v6629, 0.0
        %6663 = vadd.xlane.f32.xlu0 %v6662
        %v6664 = vpop.xlane.xlu0 %6663
        %v6665 = vsel %vm506, %v6631, 0.0
        %6666 = vadd.xlane.f32.xlu0 %v6665
        %v6667 = vpop.xlane.xlu0 %6666
        %v6668 = vsel %vm506, %v6633, 0.0
        %6669 = vadd.xlane.f32.xlu0 %v6668
        %v6670 = vpop.xlane.xlu0 %6669
        %v6671 = vsel %vm506, %v6635, 0.0
        %6672 = vadd.xlane.f32.xlu0 %v6671
        %v6673 = vpop.xlane.xlu0 %6672
        %v6674 = vsel %vm506, %v6637, 0.0
        %6675 = vadd.xlane.f32.xlu0 %v6674
        %v6676 = vpop.xlane.xlu0 %6675
        %v6677 = vsel %vm506, %v6639, 0.0
        %6678 = vadd.xlane.f32.xlu0 %v6677
        %v6679 = vpop.xlane.xlu0 %6678
        %v6680 = vsel %vm506, %v6641, 0.0
        %6681 = vadd.xlane.f32.xlu0 %v6680
        %v6682 = vpop.xlane.xlu0 %6681
        %v6683 = vsel %vm506, %v6643, 0.0
        %6684 = vadd.xlane.f32.xlu0 %v6683
        %v6685 = vpop.xlane.xlu0 %6684
        %v6686 = vsel %vm506, %v6645, 0.0
        %6687 = vadd.xlane.f32.xlu0 %v6686
        %v6688 = vpop.xlane.xlu0 %6687
        %v6689 = vsel %vm506, %v6647, 0.0
        %6690 = vadd.xlane.f32.xlu0 %v6689
        %v6691 = vpop.xlane.xlu0 %6690
        %v6692 = vsel %vm506, %v6649, 0.0
        %6693 = vadd.xlane.f32.xlu0 %v6692
        %v6694 = vpop.xlane.xlu0 %6693
        %v6695 = vsel %vm506, %v6651, 0.0
        %6696 = vadd.xlane.f32.xlu0 %v6695
        %v6697 = vpop.xlane.xlu0 %6696
        %v6698 = vsel %vm506, %v6653, 0.0
        %6699 = vadd.xlane.f32.xlu0 %v6698
        %v6700 = vpop.xlane.xlu0 %6699
        %v6701 = vsel %vm506, %v6655, 0.0
        %6702 = vadd.xlane.f32.xlu0 %v6701
        %v6703 = vpop.xlane.xlu0 %6702
        %v6704 = vrcp.pop %v6658
        %v6705 = vrcp.pop %v6661
        %v6706 = vrcp.pop %v6664
        %v6707 = vrcp.pop %v6667
        %v6708 = vrcp.pop %v6670
        %v6709 = vrcp.pop %v6673
        %v6710 = vrcp.pop %v6676
        %v6711 = vrcp.pop %v6679
        %v6712 = vrcp.pop %v6682
        %v6713 = vrcp.pop %v6685
        %v6714 = vrcp.pop %v6688
        %v6715 = vrcp.pop %v6691
        %v6716 = vrcp.pop %v6694
        %v6717 = vrcp.pop %v6697
        %v6718 = vrcp.pop %v6700
        %v6719 = vrcp.pop %v6703
        %v6720 = vmul.f32 %v6625, %v6704
        %v6721 = vmul.f32 %v6627, %v6705
        %v6722 = vmul.f32 %v6629, %v6706
        %v6723 = vmul.f32 %v6631, %v6707
        %v6724 = vmul.f32 %v6633, %v6708
        %v6725 = vmul.f32 %v6635, %v6709
        %v6726 = vmul.f32 %v6637, %v6710
        %v6727 = vmul.f32 %v6639, %v6711
        %v6728 = vmul.f32 %v6641, %v6712
        %v6729 = vmul.f32 %v6643, %v6713
        %v6730 = vmul.f32 %v6645, %v6714
        %v6731 = vmul.f32 %v6647, %v6715
        %v6732 = vmul.f32 %v6649, %v6716
        %v6733 = vmul.f32 %v6651, %v6717
        %v6734 = vmul.f32 %v6653, %v6718
        %v6735 = vmul.f32 %v6655, %v6719
        %v6736 = vpack.c.bf16 %v6720, %v6720
        %v6737 = vpack.c.bf16 %v6721, %v6721
        %v6738 = vpack.c.bf16 %v6722, %v6722
        %v6739 = vpack.c.bf16 %v6723, %v6723
        %v6740 = vpack.c.bf16 %v6724, %v6724
        %v6741 = vpack.c.bf16 %v6725, %v6725
        %v6742 = vpack.c.bf16 %v6726, %v6726
        %v6743 = vpack.c.bf16 %v6727, %v6727
        %v6744 = vpack.c.bf16 %v6728, %v6728
        %v6745 = vpack.c.bf16 %v6729, %v6729
        %v6746 = vpack.c.bf16 %v6730, %v6730
        %v6747 = vpack.c.bf16 %v6731, %v6731
        %v6748 = vpack.c.bf16 %v6732, %v6732
        %v6749 = vpack.c.bf16 %v6733, %v6733
        %v6750 = vpack.c.bf16 %v6734, %v6734
        %v6751 = vpack.c.bf16 %v6735, %v6735
        %6752 = vrot.lane.b32.xlu0 %v487, 40
        %v6753 = vpop.permute.xlu0 %6752
        %v6755 = vsel %vm506, %v6736, 0
        %v6758 = vsel %vm1470, %v6753, 0
        %6760 = vmatprep.subr.bf16.mxu0 0
        %6761 = vmatpush1.bf16.msra.mxu0 %v6758
        %6762 = vmatprep.subr.bf16.mxu0 0
        %6763 = vmatpush1.bf16.msra.mxu0 0
        %6764 = vmatprep.subr.bf16.mxu0 0
        %6765 = vmatpush1.bf16.msra.mxu0 0
        %6766 = vmatprep.subr.bf16.mxu0 0
        %6767 = vmatpush1.bf16.msra.mxu0 0
        %6768 = vmatprep.subr.bf16.mxu0 0
        %6769 = vmatpush1.bf16.msra.mxu0 0
        %6770 = vmatprep.subr.bf16.mxu0 0
        %6771 = vmatpush1.bf16.msra.mxu0 0
        %6772 = vmatprep.subr.bf16.mxu0 0
        %6773 = vmatpush1.bf16.msra.mxu0 0
        %6774 = vmatprep.subr.bf16.mxu0 0
        %6775 = vmatpush1.bf16.msra.mxu0 0
        %6776 = vmatprep.subr.bf16.mxu0 0
        %6777 = vmatpush1.bf16.msra.mxu0 0
        %6778 = vmatprep.subr.bf16.mxu0 0
        %6779 = vmatpush1.bf16.msra.mxu0 0
        %6780 = vmatprep.subr.bf16.mxu0 0
        %6781 = vmatpush1.bf16.msra.mxu0 0
        %6782 = vmatprep.subr.bf16.mxu0 0
        %6783 = vmatpush1.bf16.msra.mxu0 0
        %6784 = vmatprep.subr.bf16.mxu0 0
        %6785 = vmatpush1.bf16.msra.mxu0 0
        %6786 = vmatprep.subr.bf16.mxu0 0
        %6787 = vmatpush1.bf16.msra.mxu0 0
        %6788 = vmatprep.subr.bf16.mxu0 0
        %6789 = vmatpush1.bf16.msra.mxu0 0
        %6790 = vmatprep.subr.bf16.mxu0 0
        %6791 = vmatpush1.bf16.msra.mxu0 0
        %6792 = vmatprep.mubr.bf16.mxu0 0
        %6793 = vmatmul.mubr.bf16.gmra.mrb[0].mxu0 %v6755
        %v6794 = vpop.f32.mrb[0].mxu0
        %v6795 = vadd.f32 0.0, %v6794
        %v6796 = vpop.f32.mrb[0].mxu0
        %v6797 = vpop.f32.mrb[0].mxu0
        %v6798 = vpop.f32.mrb[0].mxu0
        %6799 = vdwg.mxu0
        %6800 = vrot.lane.b32.xlu0 %v488, 40
        %v6801 = vpop.permute.xlu0 %6800
        %v6803 = vsel %vm506, %v6737, 0
        %v6806 = vsel %vm1470, %v6801, 0
        %6808 = vmatprep.subr.bf16.mxu0 0
        %6809 = vmatpush1.bf16.msra.mxu0 %v6806
        %6810 = vmatprep.subr.bf16.mxu0 0
        %6811 = vmatpush1.bf16.msra.mxu0 0
        %6812 = vmatprep.subr.bf16.mxu0 0
        %6813 = vmatpush1.bf16.msra.mxu0 0
        %6814 = vmatprep.subr.bf16.mxu0 0
        %6815 = vmatpush1.bf16.msra.mxu0 0
        %6816 = vmatprep.subr.bf16.mxu0 0
        %6817 = vmatpush1.bf16.msra.mxu0 0
        %6818 = vmatprep.subr.bf16.mxu0 0
        %6819 = vmatpush1.bf16.msra.mxu0 0
        %6820 = vmatprep.subr.bf16.mxu0 0
        %6821 = vmatpush1.bf16.msra.mxu0 0
        %6822 = vmatprep.subr.bf16.mxu0 0
        %6823 = vmatpush1.bf16.msra.mxu0 0
        %6824 = vmatprep.subr.bf16.mxu0 0
        %6825 = vmatpush1.bf16.msra.mxu0 0
        %6826 = vmatprep.subr.bf16.mxu0 0
        %6827 = vmatpush1.bf16.msra.mxu0 0
        %6828 = vmatprep.subr.bf16.mxu0 0
        %6829 = vmatpush1.bf16.msra.mxu0 0
        %6830 = vmatprep.subr.bf16.mxu0 0
        %6831 = vmatpush1.bf16.msra.mxu0 0
        %6832 = vmatprep.subr.bf16.mxu0 0
        %6833 = vmatpush1.bf16.msra.mxu0 0
        %6834 = vmatprep.subr.bf16.mxu0 0
        %6835 = vmatpush1.bf16.msra.mxu0 0
        %6836 = vmatprep.subr.bf16.mxu0 0
        %6837 = vmatpush1.bf16.msra.mxu0 0
        %6838 = vmatprep.subr.bf16.mxu0 0
        %6839 = vmatpush1.bf16.msra.mxu0 0
        %6840 = vmatprep.mubr.bf16.mxu0 0
        %6841 = vmatmul.mubr.bf16.gmra.mrb[0].mxu0 %v6803
        %v6842 = vpop.f32.mrb[0].mxu0
        %v6843 = vadd.f32 0.0, %v6842
        %v6844 = vpop.f32.mrb[0].mxu0
        %v6845 = vpop.f32.mrb[0].mxu0
        %v6846 = vpop.f32.mrb[0].mxu0
        %6847 = vdwg.mxu0
        %6848 = vrot.lane.b32.xlu0 %v489, 40
        %v6849 = vpop.permute.xlu0 %6848
        %v6851 = vsel %vm506, %v6738, 0
        %v6854 = vsel %vm1470, %v6849, 0
        %6856 = vmatprep.subr.bf16.mxu0 0
        %6857 = vmatpush1.bf16.msra.mxu0 %v6854
        %6858 = vmatprep.subr.bf16.mxu0 0
        %6859 = vmatpush1.bf16.msra.mxu0 0
        %6860 = vmatprep.subr.bf16.mxu0 0
        %6861 = vmatpush1.bf16.msra.mxu0 0
        %6862 = vmatprep.subr.bf16.mxu0 0
        %6863 = vmatpush1.bf16.msra.mxu0 0
        %6864 = vmatprep.subr.bf16.mxu0 0
        %6865 = vmatpush1.bf16.msra.mxu0 0
        %6866 = vmatprep.subr.bf16.mxu0 0
        %6867 = vmatpush1.bf16.msra.mxu0 0
        %6868 = vmatprep.subr.bf16.mxu0 0
        %6869 = vmatpush1.bf16.msra.mxu0 0
        %6870 = vmatprep.subr.bf16.mxu0 0
        %6871 = vmatpush1.bf16.msra.mxu0 0
        %6872 = vmatprep.subr.bf16.mxu0 0
        %6873 = vmatpush1.bf16.msra.mxu0 0
        %6874 = vmatprep.subr.bf16.mxu0 0
        %6875 = vmatpush1.bf16.msra.mxu0 0
        %6876 = vmatprep.subr.bf16.mxu0 0
        %6877 = vmatpush1.bf16.msra.mxu0 0
        %6878 = vmatprep.subr.bf16.mxu0 0
        %6879 = vmatpush1.bf16.msra.mxu0 0
        %6880 = vmatprep.subr.bf16.mxu0 0
        %6881 = vmatpush1.bf16.msra.mxu0 0
        %6882 = vmatprep.subr.bf16.mxu0 0
        %6883 = vmatpush1.bf16.msra.mxu0 0
        %6884 = vmatprep.subr.bf16.mxu0 0
        %6885 = vmatpush1.bf16.msra.mxu0 0
        %6886 = vmatprep.subr.bf16.mxu0 0
        %6887 = vmatpush1.bf16.msra.mxu0 0
        %6888 = vmatprep.mubr.bf16.mxu0 0
        %6889 = vmatmul.mubr.bf16.gmra.mrb[0].mxu0 %v6851
        %v6890 = vpop.f32.mrb[0].mxu0
        %v6891 = vadd.f32 0.0, %v6890
        %v6892 = vpop.f32.mrb[0].mxu0
        %v6893 = vpop.f32.mrb[0].mxu0
        %v6894 = vpop.f32.mrb[0].mxu0
        %6895 = vdwg.mxu0
        %6896 = vrot.lane.b32.xlu0 %v490, 40
        %v6897 = vpop.permute.xlu0 %6896
        %v6899 = vsel %vm506, %v6739, 0
        %v6902 = vsel %vm1470, %v6897, 0
        %6904 = vmatprep.subr.bf16.mxu0 0
        %6905 = vmatpush1.bf16.msra.mxu0 %v6902
        %6906 = vmatprep.subr.bf16.mxu0 0
        %6907 = vmatpush1.bf16.msra.mxu0 0
        %6908 = vmatprep.subr.bf16.mxu0 0
        %6909 = vmatpush1.bf16.msra.mxu0 0
        %6910 = vmatprep.subr.bf16.mxu0 0
        %6911 = vmatpush1.bf16.msra.mxu0 0
        %6912 = vmatprep.subr.bf16.mxu0 0
        %6913 = vmatpush1.bf16.msra.mxu0 0
        %6914 = vmatprep.subr.bf16.mxu0 0
        %6915 = vmatpush1.bf16.msra.mxu0 0
        %6916 = vmatprep.subr.bf16.mxu0 0
        %6917 = vmatpush1.bf16.msra.mxu0 0
        %6918 = vmatprep.subr.bf16.mxu0 0
        %6919 = vmatpush1.bf16.msra.mxu0 0
        %6920 = vmatprep.subr.bf16.mxu0 0
        %6921 = vmatpush1.bf16.msra.mxu0 0
        %6922 = vmatprep.subr.bf16.mxu0 0
        %6923 = vmatpush1.bf16.msra.mxu0 0
        %6924 = vmatprep.subr.bf16.mxu0 0
        %6925 = vmatpush1.bf16.msra.mxu0 0
        %6926 = vmatprep.subr.bf16.mxu0 0
        %6927 = vmatpush1.bf16.msra.mxu0 0
        %6928 = vmatprep.subr.bf16.mxu0 0
        %6929 = vmatpush1.bf16.msra.mxu0 0
        %6930 = vmatprep.subr.bf16.mxu0 0
        %6931 = vmatpush1.bf16.msra.mxu0 0
        %6932 = vmatprep.subr.bf16.mxu0 0
        %6933 = vmatpush1.bf16.msra.mxu0 0
        %6934 = vmatprep.subr.bf16.mxu0 0
        %6935 = vmatpush1.bf16.msra.mxu0 0
        %6936 = vmatprep.mubr.bf16.mxu0 0
        %6937 = vmatmul.mubr.bf16.gmra.mrb[0].mxu0 %v6899
        %v6938 = vpop.f32.mrb[0].mxu0
        %v6939 = vadd.f32 0.0, %v6938
        %v6940 = vpop.f32.mrb[0].mxu0
        %v6941 = vpop.f32.mrb[0].mxu0
        %v6942 = vpop.f32.mrb[0].mxu0
        %6943 = vdwg.mxu0
        %6944 = vrot.lane.b32.xlu0 %v491, 40
        %v6945 = vpop.permute.xlu0 %6944
        %v6947 = vsel %vm506, %v6740, 0
        %v6950 = vsel %vm1470, %v6945, 0
        %6952 = vmatprep.subr.bf16.mxu0 0
        %6953 = vmatpush1.bf16.msra.mxu0 %v6950
        %6954 = vmatprep.subr.bf16.mxu0 0
        %6955 = vmatpush1.bf16.msra.mxu0 0
        %6956 = vmatprep.subr.bf16.mxu0 0
        %6957 = vmatpush1.bf16.msra.mxu0 0
        %6958 = vmatprep.subr.bf16.mxu0 0
        %6959 = vmatpush1.bf16.msra.mxu0 0
        %6960 = vmatprep.subr.bf16.mxu0 0
        %6961 = vmatpush1.bf16.msra.mxu0 0
        %6962 = vmatprep.subr.bf16.mxu0 0
        %6963 = vmatpush1.bf16.msra.mxu0 0
        %6964 = vmatprep.subr.bf16.mxu0 0
        %6965 = vmatpush1.bf16.msra.mxu0 0
        %6966 = vmatprep.subr.bf16.mxu0 0
        %6967 = vmatpush1.bf16.msra.mxu0 0
        %6968 = vmatprep.subr.bf16.mxu0 0
        %6969 = vmatpush1.bf16.msra.mxu0 0
        %6970 = vmatprep.subr.bf16.mxu0 0
        %6971 = vmatpush1.bf16.msra.mxu0 0
        %6972 = vmatprep.subr.bf16.mxu0 0
        %6973 = vmatpush1.bf16.msra.mxu0 0
        %6974 = vmatprep.subr.bf16.mxu0 0
        %6975 = vmatpush1.bf16.msra.mxu0 0
        %6976 = vmatprep.subr.bf16.mxu0 0
        %6977 = vmatpush1.bf16.msra.mxu0 0
        %6978 = vmatprep.subr.bf16.mxu0 0
        %6979 = vmatpush1.bf16.msra.mxu0 0
        %6980 = vmatprep.subr.bf16.mxu0 0
        %6981 = vmatpush1.bf16.msra.mxu0 0
        %6982 = vmatprep.subr.bf16.mxu0 0
        %6983 = vmatpush1.bf16.msra.mxu0 0
        %6984 = vmatprep.mubr.bf16.mxu0 0
        %6985 = vmatmul.mubr.bf16.gmra.mrb[0].mxu0 %v6947
        %v6986 = vpop.f32.mrb[0].mxu0
        %v6987 = vadd.f32 0.0, %v6986
        %v6988 = vpop.f32.mrb[0].mxu0
        %v6989 = vpop.f32.mrb[0].mxu0
        %v6990 = vpop.f32.mrb[0].mxu0
        %6991 = vdwg.mxu0
        %6992 = vrot.lane.b32.xlu0 %v492, 40
        %v6993 = vpop.permute.xlu0 %6992
        %v6995 = vsel %vm506, %v6741, 0
        %v6998 = vsel %vm1470, %v6993, 0
        %7000 = vmatprep.subr.bf16.mxu0 0
        %7001 = vmatpush1.bf16.msra.mxu0 %v6998
        %7002 = vmatprep.subr.bf16.mxu0 0
        %7003 = vmatpush1.bf16.msra.mxu0 0
        %7004 = vmatprep.subr.bf16.mxu0 0
        %7005 = vmatpush1.bf16.msra.mxu0 0
        %7006 = vmatprep.subr.bf16.mxu0 0
        %7007 = vmatpush1.bf16.msra.mxu0 0
        %7008 = vmatprep.subr.bf16.mxu0 0
        %7009 = vmatpush1.bf16.msra.mxu0 0
        %7010 = vmatprep.subr.bf16.mxu0 0
        %7011 = vmatpush1.bf16.msra.mxu0 0
        %7012 = vmatprep.subr.bf16.mxu0 0
        %7013 = vmatpush1.bf16.msra.mxu0 0
        %7014 = vmatprep.subr.bf16.mxu0 0
        %7015 = vmatpush1.bf16.msra.mxu0 0
        %7016 = vmatprep.subr.bf16.mxu0 0
        %7017 = vmatpush1.bf16.msra.mxu0 0
        %7018 = vmatprep.subr.bf16.mxu0 0
        %7019 = vmatpush1.bf16.msra.mxu0 0
        %7020 = vmatprep.subr.bf16.mxu0 0
        %7021 = vmatpush1.bf16.msra.mxu0 0
        %7022 = vmatprep.subr.bf16.mxu0 0
        %7023 = vmatpush1.bf16.msra.mxu0 0
        %7024 = vmatprep.subr.bf16.mxu0 0
        %7025 = vmatpush1.bf16.msra.mxu0 0
        %7026 = vmatprep.subr.bf16.mxu0 0
        %7027 = vmatpush1.bf16.msra.mxu0 0
        %7028 = vmatprep.subr.bf16.mxu0 0
        %7029 = vmatpush1.bf16.msra.mxu0 0
        %7030 = vmatprep.subr.bf16.mxu0 0
        %7031 = vmatpush1.bf16.msra.mxu0 0
        %7032 = vmatprep.mubr.bf16.mxu0 0
        %7033 = vmatmul.mubr.bf16.gmra.mrb[0].mxu0 %v6995
        %v7034 = vpop.f32.mrb[0].mxu0
        %v7035 = vadd.f32 0.0, %v7034
        %v7036 = vpop.f32.mrb[0].mxu0
        %v7037 = vpop.f32.mrb[0].mxu0
        %v7038 = vpop.f32.mrb[0].mxu0
        %7039 = vdwg.mxu0
        %7040 = vrot.lane.b32.xlu0 %v493, 40
        %v7041 = vpop.permute.xlu0 %7040
        %v7043 = vsel %vm506, %v6742, 0
        %v7046 = vsel %vm1470, %v7041, 0
        %7048 = vmatprep.subr.bf16.mxu0 0
        %7049 = vmatpush1.bf16.msra.mxu0 %v7046
        %7050 = vmatprep.subr.bf16.mxu0 0
        %7051 = vmatpush1.bf16.msra.mxu0 0
        %7052 = vmatprep.subr.bf16.mxu0 0
        %7053 = vmatpush1.bf16.msra.mxu0 0
        %7054 = vmatprep.subr.bf16.mxu0 0
        %7055 = vmatpush1.bf16.msra.mxu0 0
        %7056 = vmatprep.subr.bf16.mxu0 0
        %7057 = vmatpush1.bf16.msra.mxu0 0
        %7058 = vmatprep.subr.bf16.mxu0 0
        %7059 = vmatpush1.bf16.msra.mxu0 0
        %7060 = vmatprep.subr.bf16.mxu0 0
        %7061 = vmatpush1.bf16.msra.mxu0 0
        %7062 = vmatprep.subr.bf16.mxu0 0
        %7063 = vmatpush1.bf16.msra.mxu0 0
        %7064 = vmatprep.subr.bf16.mxu0 0
        %7065 = vmatpush1.bf16.msra.mxu0 0
        %7066 = vmatprep.subr.bf16.mxu0 0
        %7067 = vmatpush1.bf16.msra.mxu0 0
        %7068 = vmatprep.subr.bf16.mxu0 0
        %7069 = vmatpush1.bf16.msra.mxu0 0
        %7070 = vmatprep.subr.bf16.mxu0 0
        %7071 = vmatpush1.bf16.msra.mxu0 0
        %7072 = vmatprep.subr.bf16.mxu0 0
        %7073 = vmatpush1.bf16.msra.mxu0 0
        %7074 = vmatprep.subr.bf16.mxu0 0
        %7075 = vmatpush1.bf16.msra.mxu0 0
        %7076 = vmatprep.subr.bf16.mxu0 0
        %7077 = vmatpush1.bf16.msra.mxu0 0
        %7078 = vmatprep.subr.bf16.mxu0 0
        %7079 = vmatpush1.bf16.msra.mxu0 0
        %7080 = vmatprep.mubr.bf16.mxu0 0
        %7081 = vmatmul.mubr.bf16.gmra.mrb[0].mxu0 %v7043
        %v7082 = vpop.f32.mrb[0].mxu0
        %v7083 = vadd.f32 0.0, %v7082
        %v7084 = vpop.f32.mrb[0].mxu0
        %v7085 = vpop.f32.mrb[0].mxu0
        %v7086 = vpop.f32.mrb[0].mxu0
        %7087 = vdwg.mxu0
        %7088 = vrot.lane.b32.xlu0 %v494, 40
        %v7089 = vpop.permute.xlu0 %7088
        %v7091 = vsel %vm506, %v6743, 0
        %v7094 = vsel %vm1470, %v7089, 0
        %7096 = vmatprep.subr.bf16.mxu0 0
        %7097 = vmatpush1.bf16.msra.mxu0 %v7094
        %7098 = vmatprep.subr.bf16.mxu0 0
        %7099 = vmatpush1.bf16.msra.mxu0 0
        %7100 = vmatprep.subr.bf16.mxu0 0
        %7101 = vmatpush1.bf16.msra.mxu0 0
        %7102 = vmatprep.subr.bf16.mxu0 0
        %7103 = vmatpush1.bf16.msra.mxu0 0
        %7104 = vmatprep.subr.bf16.mxu0 0
        %7105 = vmatpush1.bf16.msra.mxu0 0
        %7106 = vmatprep.subr.bf16.mxu0 0
        %7107 = vmatpush1.bf16.msra.mxu0 0
        %7108 = vmatprep.subr.bf16.mxu0 0
        %7109 = vmatpush1.bf16.msra.mxu0 0
        %7110 = vmatprep.subr.bf16.mxu0 0
        %7111 = vmatpush1.bf16.msra.mxu0 0
        %7112 = vmatprep.subr.bf16.mxu0 0
        %7113 = vmatpush1.bf16.msra.mxu0 0
        %7114 = vmatprep.subr.bf16.mxu0 0
        %7115 = vmatpush1.bf16.msra.mxu0 0
        %7116 = vmatprep.subr.bf16.mxu0 0
        %7117 = vmatpush1.bf16.msra.mxu0 0
        %7118 = vmatprep.subr.bf16.mxu0 0
        %7119 = vmatpush1.bf16.msra.mxu0 0
        %7120 = vmatprep.subr.bf16.mxu0 0
        %7121 = vmatpush1.bf16.msra.mxu0 0
        %7122 = vmatprep.subr.bf16.mxu0 0
        %7123 = vmatpush1.bf16.msra.mxu0 0
        %7124 = vmatprep.subr.bf16.mxu0 0
        %7125 = vmatpush1.bf16.msra.mxu0 0
        %7126 = vmatprep.subr.bf16.mxu0 0
        %7127 = vmatpush1.bf16.msra.mxu0 0
        %7128 = vmatprep.mubr.bf16.mxu0 0
        %7129 = vmatmul.mubr.bf16.gmra.mrb[0].mxu0 %v7091
        %v7130 = vpop.f32.mrb[0].mxu0
        %v7131 = vadd.f32 0.0, %v7130
        %v7132 = vpop.f32.mrb[0].mxu0
        %v7133 = vpop.f32.mrb[0].mxu0
        %v7134 = vpop.f32.mrb[0].mxu0
        %7135 = vdwg.mxu0
        %7136 = vrot.lane.b32.xlu0 %v495, 40
        %v7137 = vpop.permute.xlu0 %7136
        %v7139 = vsel %vm506, %v6744, 0
        %v7142 = vsel %vm1470, %v7137, 0
        %7144 = vmatprep.subr.bf16.mxu0 0
        %7145 = vmatpush1.bf16.msra.mxu0 %v7142
        %7146 = vmatprep.subr.bf16.mxu0 0
        %7147 = vmatpush1.bf16.msra.mxu0 0
        %7148 = vmatprep.subr.bf16.mxu0 0
        %7149 = vmatpush1.bf16.msra.mxu0 0
        %7150 = vmatprep.subr.bf16.mxu0 0
        %7151 = vmatpush1.bf16.msra.mxu0 0
        %7152 = vmatprep.subr.bf16.mxu0 0
        %7153 = vmatpush1.bf16.msra.mxu0 0
        %7154 = vmatprep.subr.bf16.mxu0 0
        %7155 = vmatpush1.bf16.msra.mxu0 0
        %7156 = vmatprep.subr.bf16.mxu0 0
        %7157 = vmatpush1.bf16.msra.mxu0 0
        %7158 = vmatprep.subr.bf16.mxu0 0
        %7159 = vmatpush1.bf16.msra.mxu0 0
        %7160 = vmatprep.subr.bf16.mxu0 0
        %7161 = vmatpush1.bf16.msra.mxu0 0
        %7162 = vmatprep.subr.bf16.mxu0 0
        %7163 = vmatpush1.bf16.msra.mxu0 0
        %7164 = vmatprep.subr.bf16.mxu0 0
        %7165 = vmatpush1.bf16.msra.mxu0 0
        %7166 = vmatprep.subr.bf16.mxu0 0
        %7167 = vmatpush1.bf16.msra.mxu0 0
        %7168 = vmatprep.subr.bf16.mxu0 0
        %7169 = vmatpush1.bf16.msra.mxu0 0
        %7170 = vmatprep.subr.bf16.mxu0 0
        %7171 = vmatpush1.bf16.msra.mxu0 0
        %7172 = vmatprep.subr.bf16.mxu0 0
        %7173 = vmatpush1.bf16.msra.mxu0 0
        %7174 = vmatprep.subr.bf16.mxu0 0
        %7175 = vmatpush1.bf16.msra.mxu0 0
        %7176 = vmatprep.mubr.bf16.mxu0 0
        %7177 = vmatmul.mubr.bf16.gmra.mrb[0].mxu0 %v7139
        %v7178 = vpop.f32.mrb[0].mxu0
        %v7179 = vadd.f32 0.0, %v7178
        %v7180 = vpop.f32.mrb[0].mxu0
        %v7181 = vpop.f32.mrb[0].mxu0
        %v7182 = vpop.f32.mrb[0].mxu0
        %7183 = vdwg.mxu0
        %7184 = vrot.lane.b32.xlu0 %v496, 40
        %v7185 = vpop.permute.xlu0 %7184
        %v7187 = vsel %vm506, %v6745, 0
        %v7190 = vsel %vm1470, %v7185, 0
        %7192 = vmatprep.subr.bf16.mxu0 0
        %7193 = vmatpush1.bf16.msra.mxu0 %v7190
        %7194 = vmatprep.subr.bf16.mxu0 0
        %7195 = vmatpush1.bf16.msra.mxu0 0
        %7196 = vmatprep.subr.bf16.mxu0 0
        %7197 = vmatpush1.bf16.msra.mxu0 0
        %7198 = vmatprep.subr.bf16.mxu0 0
        %7199 = vmatpush1.bf16.msra.mxu0 0
        %7200 = vmatprep.subr.bf16.mxu0 0
        %7201 = vmatpush1.bf16.msra.mxu0 0
        %7202 = vmatprep.subr.bf16.mxu0 0
        %7203 = vmatpush1.bf16.msra.mxu0 0
        %7204 = vmatprep.subr.bf16.mxu0 0
        %7205 = vmatpush1.bf16.msra.mxu0 0
        %7206 = vmatprep.subr.bf16.mxu0 0
        %7207 = vmatpush1.bf16.msra.mxu0 0
        %7208 = vmatprep.subr.bf16.mxu0 0
        %7209 = vmatpush1.bf16.msra.mxu0 0
        %7210 = vmatprep.subr.bf16.mxu0 0
        %7211 = vmatpush1.bf16.msra.mxu0 0
        %7212 = vmatprep.subr.bf16.mxu0 0
        %7213 = vmatpush1.bf16.msra.mxu0 0
        %7214 = vmatprep.subr.bf16.mxu0 0
        %7215 = vmatpush1.bf16.msra.mxu0 0
        %7216 = vmatprep.subr.bf16.mxu0 0
        %7217 = vmatpush1.bf16.msra.mxu0 0
        %7218 = vmatprep.subr.bf16.mxu0 0
        %7219 = vmatpush1.bf16.msra.mxu0 0
        %7220 = vmatprep.subr.bf16.mxu0 0
        %7221 = vmatpush1.bf16.msra.mxu0 0
        %7222 = vmatprep.subr.bf16.mxu0 0
        %7223 = vmatpush1.bf16.msra.mxu0 0
        %7224 = vmatprep.mubr.bf16.mxu0 0
        %7225 = vmatmul.mubr.bf16.gmra.mrb[0].mxu0 %v7187
        %v7226 = vpop.f32.mrb[0].mxu0
        %v7227 = vadd.f32 0.0, %v7226
        %v7228 = vpop.f32.mrb[0].mxu0
        %v7229 = vpop.f32.mrb[0].mxu0
        %v7230 = vpop.f32.mrb[0].mxu0
        %7231 = vdwg.mxu0
        %7232 = vrot.lane.b32.xlu0 %v497, 40
        %v7233 = vpop.permute.xlu0 %7232
        %v7235 = vsel %vm506, %v6746, 0
        %v7238 = vsel %vm1470, %v7233, 0
        %7240 = vmatprep.subr.bf16.mxu0 0
        %7241 = vmatpush1.bf16.msra.mxu0 %v7238
        %7242 = vmatprep.subr.bf16.mxu0 0
        %7243 = vmatpush1.bf16.msra.mxu0 0
        %7244 = vmatprep.subr.bf16.mxu0 0
        %7245 = vmatpush1.bf16.msra.mxu0 0
        %7246 = vmatprep.subr.bf16.mxu0 0
        %7247 = vmatpush1.bf16.msra.mxu0 0
        %7248 = vmatprep.subr.bf16.mxu0 0
        %7249 = vmatpush1.bf16.msra.mxu0 0
        %7250 = vmatprep.subr.bf16.mxu0 0
        %7251 = vmatpush1.bf16.msra.mxu0 0
        %7252 = vmatprep.subr.bf16.mxu0 0
        %7253 = vmatpush1.bf16.msra.mxu0 0
        %7254 = vmatprep.subr.bf16.mxu0 0
        %7255 = vmatpush1.bf16.msra.mxu0 0
        %7256 = vmatprep.subr.bf16.mxu0 0
        %7257 = vmatpush1.bf16.msra.mxu0 0
        %7258 = vmatprep.subr.bf16.mxu0 0
        %7259 = vmatpush1.bf16.msra.mxu0 0
        %7260 = vmatprep.subr.bf16.mxu0 0
        %7261 = vmatpush1.bf16.msra.mxu0 0
        %7262 = vmatprep.subr.bf16.mxu0 0
        %7263 = vmatpush1.bf16.msra.mxu0 0
        %7264 = vmatprep.subr.bf16.mxu0 0
        %7265 = vmatpush1.bf16.msra.mxu0 0
        %7266 = vmatprep.subr.bf16.mxu0 0
        %7267 = vmatpush1.bf16.msra.mxu0 0
        %7268 = vmatprep.subr.bf16.mxu0 0
        %7269 = vmatpush1.bf16.msra.mxu0 0
        %7270 = vmatprep.subr.bf16.mxu0 0
        %7271 = vmatpush1.bf16.msra.mxu0 0
        %7272 = vmatprep.mubr.bf16.mxu0 0
        %7273 = vmatmul.mubr.bf16.gmra.mrb[0].mxu0 %v7235
        %v7274 = vpop.f32.mrb[0].mxu0
        %v7275 = vadd.f32 0.0, %v7274
        %v7276 = vpop.f32.mrb[0].mxu0
        %v7277 = vpop.f32.mrb[0].mxu0
        %v7278 = vpop.f32.mrb[0].mxu0
        %7279 = vdwg.mxu0
        %7280 = vrot.lane.b32.xlu0 %v498, 40
        %v7281 = vpop.permute.xlu0 %7280
        %v7283 = vsel %vm506, %v6747, 0
        %v7286 = vsel %vm1470, %v7281, 0
        %7288 = vmatprep.subr.bf16.mxu0 0
        %7289 = vmatpush1.bf16.msra.mxu0 %v7286
        %7290 = vmatprep.subr.bf16.mxu0 0
        %7291 = vmatpush1.bf16.msra.mxu0 0
        %7292 = vmatprep.subr.bf16.mxu0 0
        %7293 = vmatpush1.bf16.msra.mxu0 0
        %7294 = vmatprep.subr.bf16.mxu0 0
        %7295 = vmatpush1.bf16.msra.mxu0 0
        %7296 = vmatprep.subr.bf16.mxu0 0
        %7297 = vmatpush1.bf16.msra.mxu0 0
        %7298 = vmatprep.subr.bf16.mxu0 0
        %7299 = vmatpush1.bf16.msra.mxu0 0
        %7300 = vmatprep.subr.bf16.mxu0 0
        %7301 = vmatpush1.bf16.msra.mxu0 0
        %7302 = vmatprep.subr.bf16.mxu0 0
        %7303 = vmatpush1.bf16.msra.mxu0 0
        %7304 = vmatprep.subr.bf16.mxu0 0
        %7305 = vmatpush1.bf16.msra.mxu0 0
        %7306 = vmatprep.subr.bf16.mxu0 0
        %7307 = vmatpush1.bf16.msra.mxu0 0
        %7308 = vmatprep.subr.bf16.mxu0 0
        %7309 = vmatpush1.bf16.msra.mxu0 0
        %7310 = vmatprep.subr.bf16.mxu0 0
        %7311 = vmatpush1.bf16.msra.mxu0 0
        %7312 = vmatprep.subr.bf16.mxu0 0
        %7313 = vmatpush1.bf16.msra.mxu0 0
        %7314 = vmatprep.subr.bf16.mxu0 0
        %7315 = vmatpush1.bf16.msra.mxu0 0
        %7316 = vmatprep.subr.bf16.mxu0 0
        %7317 = vmatpush1.bf16.msra.mxu0 0
        %7318 = vmatprep.subr.bf16.mxu0 0
        %7319 = vmatpush1.bf16.msra.mxu0 0
        %7320 = vmatprep.mubr.bf16.mxu0 0
        %7321 = vmatmul.mubr.bf16.gmra.mrb[0].mxu0 %v7283
        %v7322 = vpop.f32.mrb[0].mxu0
        %v7323 = vadd.f32 0.0, %v7322
        %v7324 = vpop.f32.mrb[0].mxu0
        %v7325 = vpop.f32.mrb[0].mxu0
        %v7326 = vpop.f32.mrb[0].mxu0
        %7327 = vdwg.mxu0
        %7328 = vrot.lane.b32.xlu0 %v499, 40
        %v7329 = vpop.permute.xlu0 %7328
        %v7331 = vsel %vm506, %v6748, 0
        %v7334 = vsel %vm1470, %v7329, 0
        %7336 = vmatprep.subr.bf16.mxu0 0
        %7337 = vmatpush1.bf16.msra.mxu0 %v7334
        %7338 = vmatprep.subr.bf16.mxu0 0
        %7339 = vmatpush1.bf16.msra.mxu0 0
        %7340 = vmatprep.subr.bf16.mxu0 0
        %7341 = vmatpush1.bf16.msra.mxu0 0
        %7342 = vmatprep.subr.bf16.mxu0 0
        %7343 = vmatpush1.bf16.msra.mxu0 0
        %7344 = vmatprep.subr.bf16.mxu0 0
        %7345 = vmatpush1.bf16.msra.mxu0 0
        %7346 = vmatprep.subr.bf16.mxu0 0
        %7347 = vmatpush1.bf16.msra.mxu0 0
        %7348 = vmatprep.subr.bf16.mxu0 0
        %7349 = vmatpush1.bf16.msra.mxu0 0
        %7350 = vmatprep.subr.bf16.mxu0 0
        %7351 = vmatpush1.bf16.msra.mxu0 0
        %7352 = vmatprep.subr.bf16.mxu0 0
        %7353 = vmatpush1.bf16.msra.mxu0 0
        %7354 = vmatprep.subr.bf16.mxu0 0
        %7355 = vmatpush1.bf16.msra.mxu0 0
        %7356 = vmatprep.subr.bf16.mxu0 0
        %7357 = vmatpush1.bf16.msra.mxu0 0
        %7358 = vmatprep.subr.bf16.mxu0 0
        %7359 = vmatpush1.bf16.msra.mxu0 0
        %7360 = vmatprep.subr.bf16.mxu0 0
        %7361 = vmatpush1.bf16.msra.mxu0 0
        %7362 = vmatprep.subr.bf16.mxu0 0
        %7363 = vmatpush1.bf16.msra.mxu0 0
        %7364 = vmatprep.subr.bf16.mxu0 0
        %7365 = vmatpush1.bf16.msra.mxu0 0
        %7366 = vmatprep.subr.bf16.mxu0 0
        %7367 = vmatpush1.bf16.msra.mxu0 0
        %7368 = vmatprep.mubr.bf16.mxu0 0
        %7369 = vmatmul.mubr.bf16.gmra.mrb[0].mxu0 %v7331
        %v7370 = vpop.f32.mrb[0].mxu0
        %v7371 = vadd.f32 0.0, %v7370
        %v7372 = vpop.f32.mrb[0].mxu0
        %v7373 = vpop.f32.mrb[0].mxu0
        %v7374 = vpop.f32.mrb[0].mxu0
        %7375 = vdwg.mxu0
        %7376 = vrot.lane.b32.xlu0 %v500, 40
        %v7377 = vpop.permute.xlu0 %7376
        %v7379 = vsel %vm506, %v6749, 0
        %v7382 = vsel %vm1470, %v7377, 0
        %7384 = vmatprep.subr.bf16.mxu0 0
        %7385 = vmatpush1.bf16.msra.mxu0 %v7382
        %7386 = vmatprep.subr.bf16.mxu0 0
        %7387 = vmatpush1.bf16.msra.mxu0 0
        %7388 = vmatprep.subr.bf16.mxu0 0
        %7389 = vmatpush1.bf16.msra.mxu0 0
        %7390 = vmatprep.subr.bf16.mxu0 0
        %7391 = vmatpush1.bf16.msra.mxu0 0
        %7392 = vmatprep.subr.bf16.mxu0 0
        %7393 = vmatpush1.bf16.msra.mxu0 0
        %7394 = vmatprep.subr.bf16.mxu0 0
        %7395 = vmatpush1.bf16.msra.mxu0 0
        %7396 = vmatprep.subr.bf16.mxu0 0
        %7397 = vmatpush1.bf16.msra.mxu0 0
        %7398 = vmatprep.subr.bf16.mxu0 0
        %7399 = vmatpush1.bf16.msra.mxu0 0
        %7400 = vmatprep.subr.bf16.mxu0 0
        %7401 = vmatpush1.bf16.msra.mxu0 0
        %7402 = vmatprep.subr.bf16.mxu0 0
        %7403 = vmatpush1.bf16.msra.mxu0 0
        %7404 = vmatprep.subr.bf16.mxu0 0
        %7405 = vmatpush1.bf16.msra.mxu0 0
        %7406 = vmatprep.subr.bf16.mxu0 0
        %7407 = vmatpush1.bf16.msra.mxu0 0
        %7408 = vmatprep.subr.bf16.mxu0 0
        %7409 = vmatpush1.bf16.msra.mxu0 0
        %7410 = vmatprep.subr.bf16.mxu0 0
        %7411 = vmatpush1.bf16.msra.mxu0 0
        %7412 = vmatprep.subr.bf16.mxu0 0
        %7413 = vmatpush1.bf16.msra.mxu0 0
        %7414 = vmatprep.subr.bf16.mxu0 0
        %7415 = vmatpush1.bf16.msra.mxu0 0
        %7416 = vmatprep.mubr.bf16.mxu0 0
        %7417 = vmatmul.mubr.bf16.gmra.mrb[0].mxu0 %v7379
        %v7418 = vpop.f32.mrb[0].mxu0
        %v7419 = vadd.f32 0.0, %v7418
        %v7420 = vpop.f32.mrb[0].mxu0
        %v7421 = vpop.f32.mrb[0].mxu0
        %v7422 = vpop.f32.mrb[0].mxu0
        %7423 = vdwg.mxu0
        %7424 = vrot.lane.b32.xlu0 %v501, 40
        %v7425 = vpop.permute.xlu0 %7424
        %v7427 = vsel %vm506, %v6750, 0
        %v7430 = vsel %vm1470, %v7425, 0
        %7432 = vmatprep.subr.bf16.mxu0 0
        %7433 = vmatpush1.bf16.msra.mxu0 %v7430
        %7434 = vmatprep.subr.bf16.mxu0 0
        %7435 = vmatpush1.bf16.msra.mxu0 0
        %7436 = vmatprep.subr.bf16.mxu0 0
        %7437 = vmatpush1.bf16.msra.mxu0 0
        %7438 = vmatprep.subr.bf16.mxu0 0
        %7439 = vmatpush1.bf16.msra.mxu0 0
        %7440 = vmatprep.subr.bf16.mxu0 0
        %7441 = vmatpush1.bf16.msra.mxu0 0
        %7442 = vmatprep.subr.bf16.mxu0 0
        %7443 = vmatpush1.bf16.msra.mxu0 0
        %7444 = vmatprep.subr.bf16.mxu0 0
        %7445 = vmatpush1.bf16.msra.mxu0 0
        %7446 = vmatprep.subr.bf16.mxu0 0
        %7447 = vmatpush1.bf16.msra.mxu0 0
        %7448 = vmatprep.subr.bf16.mxu0 0
        %7449 = vmatpush1.bf16.msra.mxu0 0
        %7450 = vmatprep.subr.bf16.mxu0 0
        %7451 = vmatpush1.bf16.msra.mxu0 0
        %7452 = vmatprep.subr.bf16.mxu0 0
        %7453 = vmatpush1.bf16.msra.mxu0 0
        %7454 = vmatprep.subr.bf16.mxu0 0
        %7455 = vmatpush1.bf16.msra.mxu0 0
        %7456 = vmatprep.subr.bf16.mxu0 0
        %7457 = vmatpush1.bf16.msra.mxu0 0
        %7458 = vmatprep.subr.bf16.mxu0 0
        %7459 = vmatpush1.bf16.msra.mxu0 0
        %7460 = vmatprep.subr.bf16.mxu0 0
        %7461 = vmatpush1.bf16.msra.mxu0 0
        %7462 = vmatprep.subr.bf16.mxu0 0
        %7463 = vmatpush1.bf16.msra.mxu0 0
        %7464 = vmatprep.mubr.bf16.mxu0 0
        %7465 = vmatmul.mubr.bf16.gmra.mrb[0].mxu0 %v7427
        %v7466 = vpop.f32.mrb[0].mxu0
        %v7467 = vadd.f32 0.0, %v7466
        %v7468 = vpop.f32.mrb[0].mxu0
        %v7469 = vpop.f32.mrb[0].mxu0
        %v7470 = vpop.f32.mrb[0].mxu0
        %7471 = vdwg.mxu0
        %7472 = vrot.lane.b32.xlu0 %v502, 40
        %v7473 = vpop.permute.xlu0 %7472
        %v7475 = vsel %vm506, %v6751, 0
        %v7478 = vsel %vm1470, %v7473, 0
        %7480 = vmatprep.subr.bf16.mxu0 0
        %7481 = vmatpush1.bf16.msra.mxu0 %v7478
        %7482 = vmatprep.subr.bf16.mxu0 0
        %7483 = vmatpush1.bf16.msra.mxu0 0
        %7484 = vmatprep.subr.bf16.mxu0 0
        %7485 = vmatpush1.bf16.msra.mxu0 0
        %7486 = vmatprep.subr.bf16.mxu0 0
        %7487 = vmatpush1.bf16.msra.mxu0 0
        %7488 = vmatprep.subr.bf16.mxu0 0
        %7489 = vmatpush1.bf16.msra.mxu0 0
        %7490 = vmatprep.subr.bf16.mxu0 0
        %7491 = vmatpush1.bf16.msra.mxu0 0
        %7492 = vmatprep.subr.bf16.mxu0 0
        %7493 = vmatpush1.bf16.msra.mxu0 0
        %7494 = vmatprep.subr.bf16.mxu0 0
        %7495 = vmatpush1.bf16.msra.mxu0 0
        %7496 = vmatprep.subr.bf16.mxu0 0
        %7497 = vmatpush1.bf16.msra.mxu0 0
        %7498 = vmatprep.subr.bf16.mxu0 0
        %7499 = vmatpush1.bf16.msra.mxu0 0
        %7500 = vmatprep.subr.bf16.mxu0 0
        %7501 = vmatpush1.bf16.msra.mxu0 0
        %7502 = vmatprep.subr.bf16.mxu0 0
        %7503 = vmatpush1.bf16.msra.mxu0 0
        %7504 = vmatprep.subr.bf16.mxu0 0
        %7505 = vmatpush1.bf16.msra.mxu0 0
        %7506 = vmatprep.subr.bf16.mxu0 0
        %7507 = vmatpush1.bf16.msra.mxu0 0
        %7508 = vmatprep.subr.bf16.mxu0 0
        %7509 = vmatpush1.bf16.msra.mxu0 0
        %7510 = vmatprep.subr.bf16.mxu0 0
        %7511 = vmatpush1.bf16.msra.mxu0 0
        %7512 = vmatprep.mubr.bf16.mxu0 0
        %7513 = vmatmul.mubr.bf16.gmra.mrb[0].mxu0 %v7475
        %v7514 = vpop.f32.mrb[0].mxu0
        %v7515 = vadd.f32 0.0, %v7514
        %v7516 = vpop.f32.mrb[0].mxu0
        %v7517 = vpop.f32.mrb[0].mxu0
        %v7518 = vpop.f32.mrb[0].mxu0
        %7519 = vdwg.mxu0
        %7536 = vrot.lane.b32.xlu0 %v3271, 8
        %v7537 = vpop.permute.xlu0 %7536
        %7538 = vrot.lane.b32.xlu0 %v3319, 8
        %v7539 = vpop.permute.xlu0 %7538
        %7540 = vrot.lane.b32.xlu0 %v3367, 8
        %v7541 = vpop.permute.xlu0 %7540
        %7542 = vrot.lane.b32.xlu0 %v3415, 8
        %v7543 = vpop.permute.xlu0 %7542
        %7544 = vrot.lane.b32.xlu0 %v3463, 8
        %v7545 = vpop.permute.xlu0 %7544
        %7546 = vrot.lane.b32.xlu0 %v3511, 8
        %v7547 = vpop.permute.xlu0 %7546
        %7548 = vrot.lane.b32.xlu0 %v3559, 8
        %v7549 = vpop.permute.xlu0 %7548
        %7550 = vrot.lane.b32.xlu0 %v3607, 8
        %v7551 = vpop.permute.xlu0 %7550
        %7552 = vrot.lane.b32.xlu0 %v3655, 8
        %v7553 = vpop.permute.xlu0 %7552
        %7554 = vrot.lane.b32.xlu0 %v3703, 8
        %v7555 = vpop.permute.xlu0 %7554
        %7556 = vrot.lane.b32.xlu0 %v3751, 8
        %v7557 = vpop.permute.xlu0 %7556
        %7558 = vrot.lane.b32.xlu0 %v3799, 8
        %v7559 = vpop.permute.xlu0 %7558
        %7560 = vrot.lane.b32.xlu0 %v3847, 8
        %v7561 = vpop.permute.xlu0 %7560
        %7562 = vrot.lane.b32.xlu0 %v3895, 8
        %v7563 = vpop.permute.xlu0 %7562
        %7564 = vrot.lane.b32.xlu0 %v3943, 8
        %v7565 = vpop.permute.xlu0 %7564
        %7566 = vrot.lane.b32.xlu0 %v3991, 8
        %v7567 = vpop.permute.xlu0 %7566
        %7600 = vrot.lane.b32.xlu0 %v5033, 16
        %v7601 = vpop.permute.xlu0 %7600
        %7602 = vrot.lane.b32.xlu0 %v5081, 16
        %v7603 = vpop.permute.xlu0 %7602
        %7604 = vrot.lane.b32.xlu0 %v5129, 16
        %v7605 = vpop.permute.xlu0 %7604
        %7606 = vrot.lane.b32.xlu0 %v5177, 16
        %v7607 = vpop.permute.xlu0 %7606
        %7608 = vrot.lane.b32.xlu0 %v5225, 16
        %v7609 = vpop.permute.xlu0 %7608
        %7610 = vrot.lane.b32.xlu0 %v5273, 16
        %v7611 = vpop.permute.xlu0 %7610
        %7612 = vrot.lane.b32.xlu0 %v5321, 16
        %v7613 = vpop.permute.xlu0 %7612
        %7614 = vrot.lane.b32.xlu0 %v5369, 16
        %v7615 = vpop.permute.xlu0 %7614
        %7616 = vrot.lane.b32.xlu0 %v5417, 16
        %v7617 = vpop.permute.xlu0 %7616
        %7618 = vrot.lane.b32.xlu0 %v5465, 16
        %v7619 = vpop.permute.xlu0 %7618
        %7620 = vrot.lane.b32.xlu0 %v5513, 16
        %v7621 = vpop.permute.xlu0 %7620
        %7622 = vrot.lane.b32.xlu0 %v5561, 16
        %v7623 = vpop.permute.xlu0 %7622
        %7624 = vrot.lane.b32.xlu0 %v5609, 16
        %v7625 = vpop.permute.xlu0 %7624
        %7626 = vrot.lane.b32.xlu0 %v5657, 16
        %v7627 = vpop.permute.xlu0 %7626
        %7628 = vrot.lane.b32.xlu0 %v5705, 16
        %v7629 = vpop.permute.xlu0 %7628
        %7630 = vrot.lane.b32.xlu0 %v5753, 16
        %v7631 = vpop.permute.xlu0 %7630
        %7664 = vrot.lane.b32.xlu0 %v6795, 24
        %v7665 = vpop.permute.xlu0 %7664
        %7666 = vrot.lane.b32.xlu0 %v6843, 24
        %v7667 = vpop.permute.xlu0 %7666
        %7668 = vrot.lane.b32.xlu0 %v6891, 24
        %v7669 = vpop.permute.xlu0 %7668
        %7670 = vrot.lane.b32.xlu0 %v6939, 24
        %v7671 = vpop.permute.xlu0 %7670
        %7672 = vrot.lane.b32.xlu0 %v6987, 24
        %v7673 = vpop.permute.xlu0 %7672
        %7674 = vrot.lane.b32.xlu0 %v7035, 24
        %v7675 = vpop.permute.xlu0 %7674
        %7676 = vrot.lane.b32.xlu0 %v7083, 24
        %v7677 = vpop.permute.xlu0 %7676
        %7678 = vrot.lane.b32.xlu0 %v7131, 24
        %v7679 = vpop.permute.xlu0 %7678
        %7680 = vrot.lane.b32.xlu0 %v7179, 24
        %v7681 = vpop.permute.xlu0 %7680
        %7682 = vrot.lane.b32.xlu0 %v7227, 24
        %v7683 = vpop.permute.xlu0 %7682
        %7684 = vrot.lane.b32.xlu0 %v7275, 24
        %v7685 = vpop.permute.xlu0 %7684
        %7686 = vrot.lane.b32.xlu0 %v7323, 24
        %v7687 = vpop.permute.xlu0 %7686
        %7688 = vrot.lane.b32.xlu0 %v7371, 24
        %v7689 = vpop.permute.xlu0 %7688
        %7690 = vrot.lane.b32.xlu0 %v7419, 24
        %v7691 = vpop.permute.xlu0 %7690
        %7692 = vrot.lane.b32.xlu0 %v7467, 24
        %v7693 = vpop.permute.xlu0 %7692
        %7694 = vrot.lane.b32.xlu0 %v7515, 24
        %v7695 = vpop.permute.xlu0 %7694
        %v7712 = vsel %vm506, %v1509, %v7537
        %v7713 = vsel %vm506, %v1557, %v7539
        %v7714 = vsel %vm506, %v1605, %v7541
        %v7715 = vsel %vm506, %v1653, %v7543
        %v7716 = vsel %vm506, %v1701, %v7545
        %v7717 = vsel %vm506, %v1749, %v7547
        %v7718 = vsel %vm506, %v1797, %v7549
        %v7719 = vsel %vm506, %v1845, %v7551
        %v7720 = vsel %vm506, %v1893, %v7553
        %v7721 = vsel %vm506, %v1941, %v7555
        %v7722 = vsel %vm506, %v1989, %v7557
        %v7723 = vsel %vm506, %v2037, %v7559
        %v7724 = vsel %vm506, %v2085, %v7561
        %v7725 = vsel %vm506, %v2133, %v7563
        %v7726 = vsel %vm506, %v2181, %v7565
        %v7727 = vsel %vm506, %v2229, %v7567
        %vm7728 = vcmask 130048
        %v7729 = vsel %vm7728, %v7712, %v7601
        %v7730 = vsel %vm7728, %v7713, %v7603
        %v7731 = vsel %vm7728, %v7714, %v7605
        %v7732 = vsel %vm7728, %v7715, %v7607
        %v7733 = vsel %vm7728, %v7716, %v7609
        %v7734 = vsel %vm7728, %v7717, %v7611
        %v7735 = vsel %vm7728, %v7718, %v7613
        %v7736 = vsel %vm7728, %v7719, %v7615
        %v7737 = vsel %vm7728, %v7720, %v7617
        %v7738 = vsel %vm7728, %v7721, %v7619
        %v7739 = vsel %vm7728, %v7722, %v7621
        %v7740 = vsel %vm7728, %v7723, %v7623
        %v7741 = vsel %vm7728, %v7724, %v7625
        %v7742 = vsel %vm7728, %v7725, %v7627
        %v7743 = vsel %vm7728, %v7726, %v7629
        %v7744 = vsel %vm7728, %v7727, %v7631
        %vm7745 = vcmask 195584
        %v7746 = vsel %vm7745, %v7729, %v7665
        %v7747 = vsel %vm7745, %v7730, %v7667
        %v7748 = vsel %vm7745, %v7731, %v7669
        %v7749 = vsel %vm7745, %v7732, %v7671
        %v7750 = vsel %vm7745, %v7733, %v7673
        %v7751 = vsel %vm7745, %v7734, %v7675
        %v7752 = vsel %vm7745, %v7735, %v7677
        %v7753 = vsel %vm7745, %v7736, %v7679
        %v7754 = vsel %vm7745, %v7737, %v7681
        %v7755 = vsel %vm7745, %v7738, %v7683
        %v7756 = vsel %vm7745, %v7739, %v7685
        %v7757 = vsel %vm7745, %v7740, %v7687
        %v7758 = vsel %vm7745, %v7741, %v7689
        %v7759 = vsel %vm7745, %v7742, %v7691
        %v7760 = vsel %vm7745, %v7743, %v7693
        %v7761 = vsel %vm7745, %v7744, %v7695
        %v7762 = vpack.c.bf16 %v7747, %v7746
        %v7763 = vpack.c.bf16 %v7749, %v7748
        %v7764 = vpack.c.bf16 %v7751, %v7750
        %v7765 = vpack.c.bf16 %v7753, %v7752
        %v7766 = vpack.c.bf16 %v7755, %v7754
        %v7767 = vpack.c.bf16 %v7757, %v7756
        %v7768 = vpack.c.bf16 %v7759, %v7758
        %v7769 = vpack.c.bf16 %v7761, %v7760
        %v7770 = vld [vmem:[%s4] sm:$0xf]
        %v7771 = vld [vmem:[%s4 + $0x4] sm:$0xf]
        %v7772 = vld [vmem:[%s4 + $0x8] sm:$0xf]
        %v7773 = vld [vmem:[%s4 + $0xc] sm:$0xf]
        %v7774 = vld [vmem:[%s5] sm:$0x1]
        %v7776 = vlaneseq
        %v7777 = vshrl.u32 %v7776, 7
        %v7778 = vsub.s32 0, %v7777
        %v7779 = vrot.slane %v7774, %v7778
        %v7785 = vunpack.c.l.b16 %v7770
        %v7786 = vunpack.c.l.b16 %v7771
        %v7787 = vunpack.c.l.b16 %v7772
        %v7788 = vunpack.c.l.b16 %v7773
        %v7789 = vpack.c.b16 %v7786, %v7785
        %v7790 = vpack.c.b16 %v7788, %v7787
        %v7794 = vsel %vm333, %v7762, 0
        %v7797 = vsel %vm333, %v7763, 0
        %v7800 = vsel %vm333, %v7764, 0
        %v7803 = vsel %vm333, %v7765, 0
        %v7806 = vsel %vm333, %v7766, 0
        %v7809 = vsel %vm333, %v7767, 0
        %v7812 = vsel %vm333, %v7768, 0
        %v7815 = vsel %vm333, %v7769, 0
        %7817 = vmatprep.subr.bf16.mxu0 0
        %7818 = vmatpush1.bf16.msra.mxu0 %v7789
        %7819 = vmatprep.subr.bf16.mxu0 0
        %7820 = vmatpush1.bf16.msra.mxu0 %v7790
        %7821 = vmatprep.subr.bf16.mxu0 0
        %7822 = vmatpush1.bf16.msra.mxu0 0
        %7823 = vmatprep.subr.bf16.mxu0 0
        %7824 = vmatpush1.bf16.msra.mxu0 0
        %7825 = vmatprep.subr.bf16.mxu0 0
        %7826 = vmatpush1.bf16.msra.mxu0 0
        %7827 = vmatprep.subr.bf16.mxu0 0
        %7828 = vmatpush1.bf16.msra.mxu0 0
        %7829 = vmatprep.subr.bf16.mxu0 0
        %7830 = vmatpush1.bf16.msra.mxu0 0
        %7831 = vmatprep.subr.bf16.mxu0 0
        %7832 = vmatpush1.bf16.msra.mxu0 0
        %7833 = vmatprep.subr.bf16.mxu0 0
        %7834 = vmatpush1.bf16.msra.mxu0 0
        %7835 = vmatprep.subr.bf16.mxu0 0
        %7836 = vmatpush1.bf16.msra.mxu0 0
        %7837 = vmatprep.subr.bf16.mxu0 0
        %7838 = vmatpush1.bf16.msra.mxu0 0
        %7839 = vmatprep.subr.bf16.mxu0 0
        %7840 = vmatpush1.bf16.msra.mxu0 0
        %7841 = vmatprep.subr.bf16.mxu0 0
        %7842 = vmatpush1.bf16.msra.mxu0 0
        %7843 = vmatprep.subr.bf16.mxu0 0
        %7844 = vmatpush1.bf16.msra.mxu0 0
        %7845 = vmatprep.subr.bf16.mxu0 0
        %7846 = vmatpush1.bf16.msra.mxu0 0
        %7847 = vmatprep.subr.bf16.mxu0 0
        %7848 = vmatpush1.bf16.msra.mxu0 0
        %7849 = vmatprep.mubr.bf16.mxu0 0
        %7850 = vmatmul.mubr.bf16.gmra.mrb[0].mxu0 %v7794
        %v7851 = vpop.f32.mrb[0].mxu0
        %v7852 = vadd.f32 %v7779, %v7851
        %v7853 = vpop.f32.mrb[0].mxu0
        %v7854 = vpop.f32.mrb[0].mxu0
        %v7855 = vadd.f32 %v7779, %v7854
        %v7856 = vpop.f32.mrb[0].mxu0
        %7857 = vmatprep.mubr.bf16.mxu0 0
        %7858 = vmatmul.mubr.bf16.gmra.mrb[0].mxu0 %v7797
        %v7859 = vpop.f32.mrb[0].mxu0
        %v7860 = vadd.f32 %v7779, %v7859
        %v7861 = vpop.f32.mrb[0].mxu0
        %v7862 = vpop.f32.mrb[0].mxu0
        %v7863 = vadd.f32 %v7779, %v7862
        %v7864 = vpop.f32.mrb[0].mxu0
        %7865 = vmatprep.mubr.bf16.mxu0 0
        %7866 = vmatmul.mubr.bf16.gmra.mrb[0].mxu0 %v7800
        %v7867 = vpop.f32.mrb[0].mxu0
        %v7868 = vadd.f32 %v7779, %v7867
        %v7869 = vpop.f32.mrb[0].mxu0
        %v7870 = vpop.f32.mrb[0].mxu0
        %v7871 = vadd.f32 %v7779, %v7870
        %v7872 = vpop.f32.mrb[0].mxu0
        %7873 = vmatprep.mubr.bf16.mxu0 0
        %7874 = vmatmul.mubr.bf16.gmra.mrb[0].mxu0 %v7803
        %v7875 = vpop.f32.mrb[0].mxu0
        %v7876 = vadd.f32 %v7779, %v7875
        %v7877 = vpop.f32.mrb[0].mxu0
        %v7878 = vpop.f32.mrb[0].mxu0
        %v7879 = vadd.f32 %v7779, %v7878
        %v7880 = vpop.f32.mrb[0].mxu0
        %7881 = vmatprep.mubr.bf16.mxu0 0
        %7882 = vmatmul.mubr.bf16.gmra.mrb[0].mxu0 %v7806
        %v7883 = vpop.f32.mrb[0].mxu0
        %v7884 = vadd.f32 %v7779, %v7883
        %v7885 = vpop.f32.mrb[0].mxu0
        %v7886 = vpop.f32.mrb[0].mxu0
        %v7887 = vadd.f32 %v7779, %v7886
        %v7888 = vpop.f32.mrb[0].mxu0
        %7889 = vmatprep.mubr.bf16.mxu0 0
        %7890 = vmatmul.mubr.bf16.gmra.mrb[0].mxu0 %v7809
        %v7891 = vpop.f32.mrb[0].mxu0
        %v7892 = vadd.f32 %v7779, %v7891
        %v7893 = vpop.f32.mrb[0].mxu0
        %v7894 = vpop.f32.mrb[0].mxu0
        %v7895 = vadd.f32 %v7779, %v7894
        %v7896 = vpop.f32.mrb[0].mxu0
        %7897 = vmatprep.mubr.bf16.mxu0 0
        %7898 = vmatmul.mubr.bf16.gmra.mrb[0].mxu0 %v7812
        %v7899 = vpop.f32.mrb[0].mxu0
        %v7900 = vadd.f32 %v7779, %v7899
        %v7901 = vpop.f32.mrb[0].mxu0
        %v7902 = vpop.f32.mrb[0].mxu0
        %v7903 = vadd.f32 %v7779, %v7902
        %v7904 = vpop.f32.mrb[0].mxu0
        %7905 = vmatprep.mubr.bf16.mxu0 0
        %7906 = vmatmul.mubr.bf16.gmra.mrb[0].mxu0 %v7815
        %v7907 = vpop.f32.mrb[0].mxu0
        %v7908 = vadd.f32 %v7779, %v7907
        %v7909 = vpop.f32.mrb[0].mxu0
        %v7910 = vpop.f32.mrb[0].mxu0
        %v7911 = vadd.f32 %v7779, %v7910
        %v7912 = vpop.f32.mrb[0].mxu0
        %7913 = vdwg.mxu0
        %7914 = vst [vmem:[%s245] sm:$0xff] %v7852
        %7915 = vst [vmem:[%s245 + $0x8] sm:$0xff] %v7855
        %7916 = vst [vmem:[%s245 + $0x10] sm:$0xff] %v7860
        %7917 = vst [vmem:[%s245 + $0x18] sm:$0xff] %v7863
        %7918 = vst [vmem:[%s245 + $0x20] sm:$0xff] %v7868
        %7919 = vst [vmem:[%s245 + $0x28] sm:$0xff] %v7871
        %7920 = vst [vmem:[%s245 + $0x30] sm:$0xff] %v7876
        %7921 = vst [vmem:[%s245 + $0x38] sm:$0xff] %v7879
        %7922 = vst [vmem:[%s245 + $0x40] sm:$0xff] %v7884
        %7923 = vst [vmem:[%s245 + $0x48] sm:$0xff] %v7887
        %7924 = vst [vmem:[%s245 + $0x50] sm:$0xff] %v7892
        %7925 = vst [vmem:[%s245 + $0x58] sm:$0xff] %v7895
        %7926 = vst [vmem:[%s245 + $0x60] sm:$0xff] %v7900
        %7927 = vst [vmem:[%s245 + $0x68] sm:$0xff] %v7903
        %7928 = vst [vmem:[%s245 + $0x70] sm:$0xff] %v7908
        %7929 = vst [vmem:[%s245 + $0x78] sm:$0xff] %v7911
        %s7930 = sand.u32 %s159, 1
        %s7931 = scalar_lea.sflag [#allocation3], %s7930
        %s7932 = sand.u32 %s159, 1
        %s7933 = smul.addr %s7932, 128
        %s7934 = scalar_lea.vmem [#allocation2], %s7933
        // Predicated region
        $region45: #{tpu_custom_call.1} parent=43 // pred_check
          %p7935 = pneg %p169
        $region46: #{tpu_custom_call.1} parent=43 // pred_check_branch
          %7937 = sbr.rel (%p7935) target = $region48
        $region47: #{tpu_custom_call.1} parent=43 // pred_region
          %s7938 = smul.u32 16, %s20
          %s7940 = ssub.s32 2048, 2048
          %7941 = vsyncadd %s7931, %s7940
          %s7942 = smul.addr %s7938, 128
          %s7943 = scalar_lea.hbm %s6, %s7942
          %s7944 = sshll.u32 %s7934, 4
          %s7945 = int_to_ptr.vmem [resolvable:$true] %s7944
          %7950 = dma.vmem_to_hbm [thread:$0]  %s7945, 2048, %s7943, %s7931, 128, 128, 8
        $region48: #{tpu_custom_call.1} parent=43 // pred_fallthru
          _
      $region44: #{tpu_custom_call.1} parent=5 // pred_fallthru
        _
      %p7951 = scmp.le.s32.totalorder 2, %s15
      // Predicated region
      $region49: #{tpu_custom_call.1} parent=5 // pred_check
        %p7952 = pneg %p7951
      $region50: #{tpu_custom_call.1} parent=5 // pred_check_branch
        %7954 = sbr.rel (%p7952) target = $region52
      $region51: #{tpu_custom_call.1} parent=5 // pred_region
        %s7955 = ssub.s32 %s15, 2
        // Predicated region
        $region53: #{tpu_custom_call.1} parent=51 // pred_check
          %p7956 = pneg %p175
        $region54: #{tpu_custom_call.1} parent=51 // pred_check_branch
          %7958 = sbr.rel (%p7956) target = $region56
        $region55: #{tpu_custom_call.1} parent=51 // pred_region
          %s7959 = sand.u32 %s160, 1
          %s7960 = scalar_lea.sflag [#allocation3], %s7959
          %s7961 = sand.u32 %s160, 1
          %s7962 = smul.addr %s7961, 128
          %s7963 = scalar_lea.vmem [#allocation2], %s7962
          %7964 = dma.done %s7960, 2048
        $region56: #{tpu_custom_call.1} parent=51 // pred_fallthru
          _
      $region52: #{tpu_custom_call.1} parent=5 // pred_fallthru
        _
    $region6: #{tpu_custom_call.1} parent=1 // loop_footer
      %s19 = sadd.s32 1, %s15
    $region7: #{tpu_custom_call.1} parent=1 // loop_footer_branch
      %14 = sbr.rel target = $region3
    $region8: #{tpu_custom_call.1} parent=1 // loop_exit
      _
    %7965 = vsyncpa [#allocation3], 1
    %s7966 = scalar_lea.sflag [#allocation3], 1
    %7967 = vsyncpa %s7966, 1

</llo_original>
